<compile_context>
chip_gen: v7x
topology: tpu7x:2x2x1
jax: 0.10.0
libtpu: 0.0.40
codegen_flags: <defaults>
</compile_context>

<pallas_src>
import math
import functools

import jax
import jax.numpy as jnp
from jax.experimental import pallas as pl
from jax.experimental.pallas import tpu as pltpu

EPS = 1e-6        # reference LayerNorm(embedding_dim, eps=1e-06)
NEG = -1e30       # finite "minus infinity"


# ---------------------------------------------------------------------------
# VMEM budgeting / tile selection
# ---------------------------------------------------------------------------

def _vmem_capacity_bytes():
    try:
        return int(pltpu.get_tpu_info().vmem_capacity_bytes)
    except Exception:
        return 64 * 1024 * 1024      # conservative: v7x per-TensorCore VMEM


_VMEM_CAP = _vmem_capacity_bytes()
_VMEM_LIMIT = int(_VMEM_CAP * 0.85)      # scoped limit handed to the compiler
_VMEM_BUDGET = int(_VMEM_CAP * 0.60)     # what the tile picker aims to stay under

_ROW_CANDS = (2048, 1024, 512, 256, 128, 64, 32, 16, 8)   # sublane (token) tiles
_LANE_CANDS = (4096, 2048, 1024, 512, 256, 128)           # lane (V / H) tiles


def _cparams(semantics):
    return pltpu.CompilerParams(dimension_semantics=tuple(semantics),
                                vmem_limit_bytes=_VMEM_LIMIT)


def _round_up(x, m):
    return ((x + m - 1) // m) * m


def _pad_rows(x2d):
    """Pad the token dim so tiles always divide evenly (review: cdiv/pad, no
    single full-M fallback).  Returns (padded array, original row count)."""
    M = x2d.shape[0]
    base = 256 if M >= 256 else (128 if M >= 128 else 8)
    Mp = _round_up(M, base)
    if Mp != M:
        x2d = jnp.pad(x2d, ((0, Mp - M), (0, 0)))
    return x2d, M


def _pick_tile(extent, bytes_per_unit, budget, cands=_ROW_CANDS, min_steps=2):
    """Largest candidate tile dividing `extent` whose footprint fits `budget`,
    preferring tiles that leave >= min_steps grid steps (pipelining / megacore)."""
    best = None
    for t in cands:
        if extent % t != 0 or t * bytes_per_unit > budget:
            continue
        if best is None:
            best = t
        if extent // t >= min_steps:
            return t
    return best if best is not None else extent


# ---------------------------------------------------------------------------
# in-kernel helpers
# ---------------------------------------------------------------------------

def _layernorm_f32(x, g, b):
    x = x.astype(jnp.float32)
    mu = jnp.mean(x, axis=-1, keepdims=True)
    var = jnp.mean(jnp.square(x - mu), axis=-1, keepdims=True)
    return (x - mu) * jax.lax.rsqrt(var + EPS) * g + b


def _mha_fc_acc(q, k, v, bias, wfc, n_heads, d_k, scale, D):
    """Multi-head attention + fused output projection.
    fc(concat_h ctx_h) == sum_h ctx_h @ W_fc[h*dk:(h+1)*dk, :]  ->  no lane
    concatenate; accumulation is a lane-dense (Sq, D) f32 tensor.
    TODO(synk): heads stay on the lane axis (d_k=32 slices); a head-major
    in-kernel relayout + batched dot_general was skipped for lowering safety."""
    Sq = q.shape[0]
    acc = jnp.zeros((Sq, D), jnp.float32)
    for hd in range(n_heads):
        sl = slice(hd * d_k, (hd + 1) * d_k)
        s = jax.lax.dot_general(q[:, sl], k[:, sl], (((1,), (1,)), ((), ())),
                                preferred_element_type=jnp.float32) * scale + bias
        m = jnp.max(s, axis=-1, keepdims=True)
        p = jnp.exp(s - m)
        p = p / jnp.sum(p, axis=-1, keepdims=True)          # exact softmax
        ctx = jnp.dot(p.astype(jnp.bfloat16), v[:, sl],
                      preferred_element_type=jnp.float32)
        acc = acc + jnp.dot(ctx.astype(jnp.bfloat16), wfc[sl, :],
                            preferred_element_type=jnp.float32)
    return acc


# ---------------------------------------------------------------------------
# kernels
# ---------------------------------------------------------------------------

def layernorm_kernel(x_ref, g_ref, b_ref, o_ref):
    o_ref[...] = _layernorm_f32(x_ref[...], g_ref[...], b_ref[...]).astype(o_ref.dtype)


def fused_self_attn_kernel(len_ref, x_ref, g_ref, b_ref, wqkv_ref, bqkv_ref,
                           wfc_ref, bfc_ref, o_ref, *, n_heads, d_k, causal):
    # x + fc(MHA(LN(x))) fully in VMEM; one batch element per grid step.
    # TODO(synk): flash-style Sq/Sk tiling for long sequences (scores held whole here).
    bidx = pl.program_id(0)
    x = x_ref[0].astype(jnp.float32)                      # (S, D)
    S, D = x.shape
    xn = _layernorm_f32(x, g_ref[...], b_ref[...]).astype(jnp.bfloat16)
    qkv = (jnp.dot(xn, wqkv_ref[...], preferred_element_type=jnp.float32)
           + bqkv_ref[...]).astype(jnp.bfloat16)          # (S, 3D), never leaves VMEM

    kv_pos = jax.lax.broadcasted_iota(jnp.int32, (S, S), 1)
    if causal:
        q_pos = jax.lax.broadcasted_iota(jnp.int32, (S, S), 0)
        bias = jnp.where(kv_pos > q_pos, NEG, 0.0).astype(jnp.float32)
    else:
        bias = jnp.where(kv_pos >= len_ref[bidx], NEG, 0.0).astype(jnp.float32)

    q, k, v = qkv[:, :D], qkv[:, D:2 * D], qkv[:, 2 * D:]
    acc = _mha_fc_acc(q, k, v, bias, wfc_ref[...], n_heads, d_k,
                      1.0 / math.sqrt(d_k), D)
    o_ref[0] = (x + acc + bfc_ref[...]).astype(o_ref.dtype)


def fused_cross_attn_kernel(len_ref, x_ref, mem_ref, g_ref, b_ref,
                            wq_ref, bq_ref, wkv_ref, bkv_ref, wfc_ref, bfc_ref,
                            o_ref, *, n_heads, d_k):
    bidx = pl.program_id(0)
    x = x_ref[0].astype(jnp.float32)                      # (Sq, D)
    Sq, D = x.shape
    mem = mem_ref[0].astype(jnp.bfloat16)                 # (Sk, D)
    Sk = mem.shape[0]

    xn = _layernorm_f32(x, g_ref[...], b_ref[...]).astype(jnp.bfloat16)
    q = (jnp.dot(xn, wq_ref[...], preferred_element_type=jnp.float32)
         + bq_ref[...]).astype(jnp.bfloat16)              # (Sq, D)
    kv = (jnp.dot(mem, wkv_ref[...], preferred_element_type=jnp.float32)
          + bkv_ref[...]).astype(jnp.bfloat16)            # (Sk, 2D)

    kv_pos = jax.lax.broadcasted_iota(jnp.int32, (Sq, Sk), 1)
    bias = jnp.where(kv_pos >= len_ref[bidx], NEG, 0.0).astype(jnp.float32)

    k, v = kv[:, :D], kv[:, D:]
    acc = _mha_fc_acc(q, k, v, bias, wfc_ref[...], n_heads, d_k,
                      1.0 / math.sqrt(d_k), D)
    o_ref[0] = (x + acc + bfc_ref[...]).astype(o_ref.dtype)


def ffn_kernel(x_ref, g_ref, b_ref, w1_ref, b1_ref, w2_ref, b2_ref, o_ref,
               xn_ref, acc_ref):
    # x + relu(LN(x) @ W1 + b1) @ W2 + b2, tiled over the hidden dim (grid axis 1).
    j = pl.program_id(1)

    @pl.when(j == 0)
    def _():
        xn_ref[...] = _layernorm_f32(x_ref[...], g_ref[...], b_ref[...]
                                     ).astype(jnp.bfloat16)
        acc_ref[...] = jnp.zeros(acc_ref.shape, jnp.float32)

    h = jnp.dot(xn_ref[...], w1_ref[...],
                preferred_element_type=jnp.float32) + b1_ref[...]
    h = jnp.maximum(h, 0.0).astype(jnp.bfloat16)
    acc_ref[...] += jnp.dot(h, w2_ref[...], preferred_element_type=jnp.float32)

    @pl.when(j == pl.num_programs(1) - 1)
    def _():
        o_ref[...] = (x_ref[...].astype(jnp.float32) + acc_ref[...] + b2_ref[...]
                      ).astype(o_ref.dtype)


def gen_lse_kernel(x_ref, g_ref, b_ref, wt_ref, lse_ref, xn_ref, m_ref, l_ref):
    # Pass 1 of the vocab-tiled generator: online logsumexp over V tiles.
    j = pl.program_id(1)

    @pl.when(j == 0)
    def _():
        xn_ref[...] = _layernorm_f32(x_ref[...], g_ref[...], b_ref[...]
                                     ).astype(jnp.bfloat16)
        m_ref[...] = jnp.full(m_ref.shape, -jnp.inf, jnp.float32)
        l_ref[...] = jnp.zeros(l_ref.shape, jnp.float32)

    logits = jax.lax.dot_general(xn_ref[...], wt_ref[...], (((1,), (1,)), ((), ())),
                                 preferred_element_type=jnp.float32)      # (TM, TV)
    m_new = jnp.maximum(m_ref[...], jnp.max(logits, axis=-1, keepdims=True))
    l_ref[...] = (l_ref[...] * jnp.exp(m_ref[...] - m_new)
                  + jnp.sum(jnp.exp(logits - m_new), axis=-1, keepdims=True))
    m_ref[...] = m_new

    @pl.when(j == pl.num_programs(1) - 1)
    def _():
        lse_ref[...] = m_ref[...] + jnp.log(l_ref[...])


def gen_logp_kernel(x_ref, g_ref, b_ref, wt_ref, lse_ref, o_ref):
    # Pass 2: recompute the logits tile and subtract the per-row logsumexp.
    xn = _layernorm_f32(x_ref[...], g_ref[...], b_ref[...]).astype(jnp.bfloat16)
    logits = jax.lax.dot_general(xn, wt_ref[...], (((1,), (1,)), ((), ())),
                                 preferred_element_type=jnp.float32)
    o_ref[...] = (logits - lse_ref[...]).astype(o_ref.dtype)


# ---------------------------------------------------------------------------
# pallas_call wrappers
# ---------------------------------------------------------------------------
# TODO(synk): mark constant-index weight blocks with pipeline_mode=pl.Buffered(1)
# once single-buffered pipeline_mode is verified on the target jax build.

def pallas_layernorm(x2d_in, g, b, out_dtype=jnp.bfloat16):
    x2d, M = _pad_rows(x2d_in)
    Mp, D = x2d.shape
    TM = _pick_tile(Mp, 2 * D * (x2d.dtype.itemsize + 2), _VMEM_BUDGET)
    out = pl.pallas_call(
        layernorm_kernel,
        grid=(Mp // TM,),
        in_specs=[pl.BlockSpec((TM, D), lambda i: (i, 0)),
                  pl.BlockSpec((1, D), lambda i: (0, 0)),
                  pl.BlockSpec((1, D), lambda i: (0, 0))],
        out_specs=pl.BlockSpec((TM, D), lambda i: (i, 0)),
        out_shape=jax.ShapeDtypeStruct((Mp, D), out_dtype),
        compiler_params=_cparams(("parallel",)),
    )(x2d, g.reshape(1, D), b.reshape(1, D))
    return out[:M]


def pallas_self_attention_block(p, x3d, lengths, n_heads, causal):
    B, S, D = x3d.shape
    kern = functools.partial(fused_self_attn_kernel, n_heads=n_heads,
                             d_k=D // n_heads, causal=causal)
    return pl.pallas_call(
        kern,
        grid_spec=pltpu.PrefetchScalarGridSpec(
            num_scalar_prefetch=1,
            grid=(B,),
            in_specs=[pl.BlockSpec((1, S, D), lambda b, lens: (b, 0, 0)),
                      pl.BlockSpec((1, D), lambda b, lens: (0, 0)),
                      pl.BlockSpec((1, D), lambda b, lens: (0, 0)),
                      pl.BlockSpec((D, 3 * D), lambda b, lens: (0, 0)),
                      pl.BlockSpec((1, 3 * D), lambda b, lens: (0, 0)),
                      pl.BlockSpec((D, D), lambda b, lens: (0, 0)),
                      pl.BlockSpec((1, D), lambda b, lens: (0, 0))],
            out_specs=pl.BlockSpec((1, S, D), lambda b, lens: (b, 0, 0)),
        ),
        out_shape=jax.ShapeDtypeStruct((B, S, D), jnp.bfloat16),
        compiler_params=_cparams(("parallel",)),
    )(lengths, x3d, p['ln_g'].reshape(1, D), p['ln_b'].reshape(1, D),
      p['w_qkv'], p['b_qkv'].reshape(1, 3 * D), p['w_fc'], p['b_fc'].reshape(1, D))


def pallas_cross_attention_block(p, x3d, mem3d, lengths, n_heads):
    B, Sq, D = x3d.shape
    Sk = mem3d.shape[1]
    kern = functools.partial(fused_cross_attn_kernel, n_heads=n_heads,
                             d_k=D // n_heads)
    return pl.pallas_call(
        kern,
        grid_spec=pltpu.PrefetchScalarGridSpec(
            num_scalar_prefetch=1,
            grid=(B,),
            in_specs=[pl.BlockSpec((1, Sq, D), lambda b, lens: (b, 0, 0)),
                      pl.BlockSpec((1, Sk, D), lambda b, lens: (b, 0, 0)),
                      pl.BlockSpec((1, D), lambda b, lens: (0, 0)),
                      pl.BlockSpec((1, D), lambda b, lens: (0, 0)),
                      pl.BlockSpec((D, D), lambda b, lens: (0, 0)),
                      pl.BlockSpec((1, D), lambda b, lens: (0, 0)),
                      pl.BlockSpec((D, 2 * D), lambda b, lens: (0, 0)),
                      pl.BlockSpec((1, 2 * D), lambda b, lens: (0, 0)),
                      pl.BlockSpec((D, D), lambda b, lens: (0, 0)),
                      pl.BlockSpec((1, D), lambda b, lens: (0, 0))],
            out_specs=pl.BlockSpec((1, Sq, D), lambda b, lens: (b, 0, 0)),
        ),
        out_shape=jax.ShapeDtypeStruct((B, Sq, D), jnp.bfloat16),
        compiler_params=_cparams(("parallel",)),
    )(lengths, x3d, mem3d, p['ln_g'].reshape(1, D), p['ln_b'].reshape(1, D),
      p['w_q'], p['b_q'].reshape(1, D), p['w_kv'], p['b_kv'].reshape(1, 2 * D),
      p['w_fc'], p['b_fc'].reshape(1, D))


def pallas_ffn_block(p, x3d):
    B, S, D = x3d.shape
    x2d, M = _pad_rows(x3d.reshape(B * S, D))
    Mp = x2d.shape[0]
    H = p['w1'].shape[1]

    TH = _pick_tile(H, 8 * D, _VMEM_BUDGET // 2, cands=_LANE_CANDS)
    row_bytes = 4 * 2 * D + 2 * D + 4 * D + 4 * TH     # x/out (x2 bufs) + xn + acc + h
    TM = _pick_tile(Mp, row_bytes, max(_VMEM_BUDGET - TH * 8 * D, _VMEM_BUDGET // 4))

    out = pl.pallas_call(
        ffn_kernel,
        grid=(Mp // TM, H // TH),
        in_specs=[pl.BlockSpec((TM, D), lambda i, j: (i, 0)),
                  pl.BlockSpec((1, D), lambda i, j: (0, 0)),
                  pl.BlockSpec((1, D), lambda i, j: (0, 0)),
                  pl.BlockSpec((D, TH), lambda i, j: (0, j)),
                  pl.BlockSpec((1, TH), lambda i, j: (0, j)),
                  pl.BlockSpec((TH, D), lambda i, j: (j, 0)),
                  pl.BlockSpec((1, D), lambda i, j: (0, 0))],
        out_specs=pl.BlockSpec((TM, D), lambda i, j: (i, 0)),
        out_shape=jax.ShapeDtypeStruct((Mp, D), jnp.bfloat16),
        scratch_shapes=[pltpu.VMEM((TM, D), jnp.bfloat16),
                        pltpu.VMEM((TM, D), jnp.float32)],
        compiler_params=_cparams(("parallel", "arbitrary")),
    )(x2d, p['ln_g'].reshape(1, D), p['ln_b'].reshape(1, D),
      p['w1'], p['b1'].reshape(1, H), p['w2'], p['b2'].reshape(1, D))
    return out[:M].reshape(B, S, D)


def pallas_generator(x2d_in, g, b, w_tied_bf16):
    """log_softmax(LN(x) @ W_tied^T) tiled over the vocab (two-pass logsumexp)."""
    x2d, M = _pad_rows(x2d_in)
    Mp, D = x2d.shape
    V = w_tied_bf16.shape[0]

    TV = _pick_tile(V, 4 * D, _VMEM_BUDGET // 2, cands=_LANE_CANDS)

    # pass 1: per-row LSE
    row1 = 4 * D + 2 * D + 8 + 4 * TV
    TM1 = _pick_tile(Mp, row1, _VMEM_BUDGET // 2)
    lse = pl.pallas_call(
        gen_lse_kernel,
        grid=(Mp // TM1, V // TV),
        in_specs=[pl.BlockSpec((TM1, D), lambda i, j: (i, 0)),
                  pl.BlockSpec((1, D), lambda i, j: (0, 0)),
                  pl.BlockSpec((1, D), lambda i, j: (0, 0)),
                  pl.BlockSpec((TV, D), lambda i, j: (j, 0))],
        out_specs=pl.BlockSpec((TM1, 1), lambda i, j: (i, 0)),
        out_shape=jax.ShapeDtypeStruct((Mp, 1), jnp.float32),
        scratch_shapes=[pltpu.VMEM((TM1, D), jnp.bfloat16),
                        pltpu.VMEM((TM1, 1), jnp.float32),
                        pltpu.VMEM((TM1, 1), jnp.float32)],
        compiler_params=_cparams(("parallel", "arbitrary")),
    )(x2d, g.reshape(1, D), b.reshape(1, D), w_tied_bf16)

    # pass 2: lane-dense (TM, TV) log-prob tiles
    row2 = 4 * D + 2 * 4 * TV
    TM2 = _pick_tile(Mp, row2, _VMEM_BUDGET // 2)
    logp = pl.pallas_call(
        gen_logp_kernel,
        grid=(Mp // TM2, V // TV),
        in_specs=[pl.BlockSpec((TM2, D), lambda i, j: (i, 0)),
                  pl.BlockSpec((1, D), lambda i, j: (0, 0)),
                  pl.BlockSpec((1, D), lambda i, j: (0, 0)),
                  pl.BlockSpec((TV, D), lambda i, j: (j, 0)),
                  pl.BlockSpec((TM2, 1), lambda i, j: (i, 0))],
        out_specs=pl.BlockSpec((TM2, TV), lambda i, j: (i, j)),
        out_shape=jax.ShapeDtypeStruct((Mp, V), jnp.float32),
        compiler_params=_cparams(("parallel", "parallel")),
    )(x2d, g.reshape(1, D), b.reshape(1, D), w_tied_bf16, lse)
    return logp[:M]


# ---------------------------------------------------------------------------
# full forward (residual stream bf16; weights bf16; LN params / biases f32)
# ---------------------------------------------------------------------------

def transformer_forward(params, inp_tokens, gold_tokens, inp_lengths, types=None,
                        *, n_heads):
    del types  # config = '' -> 'emb*' / 'out_bias' branches disabled
    B, S_enc = inp_tokens.shape
    S_dec = gold_tokens.shape[1]
    tok_w = params['token_embed']                 # (V, D) f32, tied with generator
    pos_w = params['pos_embed']
    D = tok_w.shape[1]
    lengths = inp_lengths.astype(jnp.int32)

    # --- embedding (plain JAX gathers) ---
    enc_x = (tok_w[inp_tokens] + pos_w[:S_enc][None, :, :]).astype(jnp.bfloat16)

    # --- encoder ---
    for lp in params['enc_layers']:
        enc_x = pallas_self_attention_block(lp['attn'], enc_x, lengths, n_heads,
                                            causal=False)
        enc_x = pallas_ffn_block(lp['ffn'], enc_x)
    memory = pallas_layernorm(enc_x.reshape(B * S_enc, D),
                              params['enc_norm']['g'], params['enc_norm']['b'],
                              out_dtype=jnp.bfloat16).reshape(B, S_enc, D)

    # --- decoder ---
    sos = jnp.broadcast_to(params['sos_token'][None, None, :], (B, 1, D))
    dec_emb = tok_w[gold_tokens[:, :-1]] + pos_w[:S_dec - 1][None, :, :]
    y = jnp.concatenate([sos, dec_emb], axis=1).astype(jnp.bfloat16)
    for lp in params['dec_layers']:
        y = pallas_self_attention_block(lp['self_attn'], y, lengths, n_heads,
                                        causal=True)
        y = pallas_cross_attention_block(lp['src_attn'], y, memory, lengths, n_heads)
        y = pallas_ffn_block(lp['ffn'], y)

    # --- generator (final LN fused; weights tied to the token embedding) ---
    logp = pallas_generator(y.reshape(B * S_dec, D),
                            params['dec_norm']['g'], params['dec_norm']['b'],
                            tok_w.astype(jnp.bfloat16))
    return logp.reshape(B, S_dec, tok_w.shape[0])


# TODO(synk): generate=True path (beam_search_decoder / incremental_forward) is
# host-side control-flow-heavy search and is not implemented as a kernel.


# ---------------------------------------------------------------------------
# parameter init (xavier uniform, biases zero; matmul weights stored bf16)
# ---------------------------------------------------------------------------

def xavier_uniform(key, shape):
    fan_in, fan_out = shape
    limit = math.sqrt(6.0 / (fan_in + fan_out))
    return jax.random.uniform(key, shape, jnp.float32, -limit, limit)


def init_params(key, vocab_size, d_model, n_heads, num_layers, max_length):
    D = d_model
    keys = iter(jax.random.split(key, 1024))

    def w(in_f, out_f):
        return xavier_uniform(next(keys), (in_f, out_f)).astype(jnp.bfloat16)

    def self_attn_p():
        return {'ln_g': jnp.ones((D,), jnp.float32), 'ln_b': jnp.zeros((D,), jnp.float32),
                'w_qkv': jnp.concatenate([w(D, D), w(D, D), w(D, D)], axis=1),
                'b_qkv': jnp.zeros((3 * D,), jnp.float32),
                'w_fc': w(D, D), 'b_fc': jnp.zeros((D,), jnp.float32)}

    def cross_attn_p():
        return {'ln_g': jnp.ones((D,), jnp.float32), 'ln_b': jnp.zeros((D,), jnp.float32),
                'w_q': w(D, D), 'b_q': jnp.zeros((D,), jnp.float32),
                'w_kv': jnp.concatenate([w(D, D), w(D, D)], axis=1),
                'b_kv': jnp.zeros((2 * D,), jnp.float32),
                'w_fc': w(D, D), 'b_fc': jnp.zeros((D,), jnp.float32)}

    def ffn_p():
        return {'ln_g': jnp.ones((D,), jnp.float32), 'ln_b': jnp.zeros((D,), jnp.float32),
                'w1': w(D, 4 * D), 'b1': jnp.zeros((4 * D,), jnp.float32),
                'w2': w(4 * D, D), 'b2': jnp.zeros((D,), jnp.float32)}

    def ln_p():
        return {'g': jnp.ones((D,), jnp.float32), 'b': jnp.zeros((D,), jnp.float32)}

    return {
        'token_embed': xavier_uniform(next(keys), (vocab_size, D)),   # tied w/ generator
        'pos_embed': xavier_uniform(next(keys), (max_length, D)),
        'sos_token': jax.random.normal(next(keys), (D,), jnp.float32),
        'enc_layers': [{'attn': self_attn_p(), 'ffn': ffn_p()} for _ in range(num_layers)],
        'enc_norm': ln_p(),
        'dec_layers': [{'self_attn': self_attn_p(), 'src_attn': cross_attn_p(),
                        'ffn': ffn_p()} for _ in range(num_layers)],
        'dec_norm': ln_p(),
    }


# ---------------------------------------------------------------------------

if __name__ == "__main__":
    # TPU-friendly small shapes: lane-dense d_model / vocab, seq multiples of 8.
    vocab_size, d_model, n_heads, num_layers, max_length = 256, 128, 4, 2, 32
    B, S_enc, S_dec = 2, 16, 16

    key = jax.random.PRNGKey(0)
    kp, k1, k2 = jax.random.split(key, 3)
    params = init_params(kp, vocab_size, d_model, n_heads, num_layers, max_length)

    inp_tokens = jax.random.randint(k1, (B, S_enc), 0, vocab_size, dtype=jnp.int32)
    gold_tokens = jax.random.randint(k2, (B, S_dec), 0, vocab_size, dtype=jnp.int32)
    inp_lengths = jnp.array([S_enc, 11], dtype=jnp.int32)

    fwd = jax.jit(functools.partial(transformer_forward, n_heads=n_heads))
    out = fwd(params, inp_tokens, gold_tokens, inp_lengths)
    out = jax.block_until_ready(out)

    assert out.shape == (B, S_dec, vocab_size), out.shape
    assert bool(jnp.all(jnp.isfinite(out)))
    # rows of log_softmax should sum to ~1 in prob space
    assert bool(jnp.allclose(jnp.sum(jnp.exp(out), axis=-1), 1.0, atol=1e-3))
    print("KERNEL_OK")
</pallas_src>

<mosaic_0001>
module attributes {stable_mosaic.version = 11 : i64} {
  func.func @layernorm_kernel(%arg0: i32, %arg1: memref<16x128xbf16, #tpu.memory_space<vmem>>, %arg2: memref<1x128xf32, #tpu.memory_space<vmem>>, %arg3: memref<1x128xf32, #tpu.memory_space<vmem>>, %arg4: memref<16x128xbf16, #tpu.memory_space<vmem>>) attributes {dimension_semantics = [#tpu.dimension_semantics<parallel>], iteration_bounds = array<i64: 2>, scalar_prefetch = 0 : i64, scratch_operands = 0 : i64, tpu.core_type = #tpu.core_type<tc>, window_params = [{transform_indices = @transform_0, window_bounds = array<i64: 16, 128>}, {pipeline_mode = #tpu.pipeline_mode<synchronous>, transform_indices = @transform_1, window_bounds = array<i64: 1, 128>}, {pipeline_mode = #tpu.pipeline_mode<synchronous>, transform_indices = @transform_2, window_bounds = array<i64: 1, 128>}, {transform_indices = @transform_3, window_bounds = array<i64: 16, 128>}]} {
    %c0 = arith.constant 0 : index
    %c0_0 = arith.constant 0 : index
    %0 = vector.load %arg1[%c0, %c0_0] : memref<16x128xbf16, #tpu.memory_space<vmem>>, vector<16x128xbf16>
    %c0_1 = arith.constant 0 : index
    %c0_2 = arith.constant 0 : index
    %1 = vector.load %arg2[%c0_1, %c0_2] : memref<1x128xf32, #tpu.memory_space<vmem>>, vector<1x128xf32>
    %c0_3 = arith.constant 0 : index
    %c0_4 = arith.constant 0 : index
    %2 = vector.load %arg3[%c0_3, %c0_4] : memref<1x128xf32, #tpu.memory_space<vmem>>, vector<1x128xf32>
    %3 = arith.extf %0 : vector<16x128xbf16> to vector<16x128xf32>
    %cst = arith.constant dense<0.000000e+00> : vector<16xf32>
    %4 = vector.multi_reduction <add>, %3, %cst [1] : vector<16x128xf32> to vector<16xf32>
    %5 = vector.shape_cast %4 : vector<16xf32> to vector<16x1xf32>
    %cst_5 = arith.constant 1.280000e+02 : f32
    %6 = vector.broadcast %cst_5 : f32 to vector<16x1xf32>
    %7 = arith.divf %5, %6 : vector<16x1xf32>
    %8 = vector.broadcast %7 : vector<16x1xf32> to vector<16x128xf32>
    %9 = arith.subf %3, %8 : vector<16x128xf32>
    %10 = arith.mulf %9, %9 : vector<16x128xf32>
    %cst_6 = arith.constant dense<0.000000e+00> : vector<16xf32>
    %11 = vector.multi_reduction <add>, %10, %cst_6 [1] : vector<16x128xf32> to vector<16xf32>
    %12 = vector.shape_cast %11 : vector<16xf32> to vector<16x1xf32>
    %cst_7 = arith.constant 1.280000e+02 : f32
    %13 = vector.broadcast %cst_7 : f32 to vector<16x1xf32>
    %14 = arith.divf %12, %13 : vector<16x1xf32>
    %15 = vector.broadcast %7 : vector<16x1xf32> to vector<16x128xf32>
    %16 = arith.subf %3, %15 : vector<16x128xf32>
    %cst_8 = arith.constant 9.99999997E-7 : f32
    %17 = vector.broadcast %cst_8 : f32 to vector<16x1xf32>
    %18 = arith.addf %14, %17 : vector<16x1xf32>
    %19 = math.rsqrt %18 : vector<16x1xf32>
    %20 = vector.broadcast %19 : vector<16x1xf32> to vector<16x128xf32>
    %21 = arith.mulf %16, %20 : vector<16x128xf32>
    %22 = vector.broadcast %1 : vector<1x128xf32> to vector<16x128xf32>
    %23 = arith.mulf %21, %22 : vector<16x128xf32>
    %24 = vector.broadcast %2 : vector<1x128xf32> to vector<16x128xf32>
    %25 = arith.addf %23, %24 : vector<16x128xf32>
    %26 = arith.truncf %25 : vector<16x128xf32> to vector<16x128xbf16>
    %c0_9 = arith.constant 0 : index
    %c0_10 = arith.constant 0 : index
    %27 = vector.load %arg4[%c0_9, %c0_10] : memref<16x128xbf16, #tpu.memory_space<vmem>>, vector<16x128xbf16>
    tpu.vector_store %arg4[%c0_9, %c0_10], %26 {strides = array<i32>} : memref<16x128xbf16, #tpu.memory_space<vmem>>, vector<16x128xbf16>,
    return
  }
  func.func @transform_0(%arg0: i32) -> (i32, i32) {
    %c0_i32 = arith.constant 0 : i32
    %c0_i32_0 = arith.constant 0 : i32
    return %arg0, %c0_i32 : i32, i32
  }
  func.func @transform_1(%arg0: i32) -> (i32, i32) {
    %c0_i32 = arith.constant 0 : i32
    %c0_i32_0 = arith.constant 0 : i32
    %c0_i32_1 = arith.constant 0 : i32
    return %c0_i32, %c0_i32_0 : i32, i32
  }
  func.func @transform_2(%arg0: i32) -> (i32, i32) {
    %c0_i32 = arith.constant 0 : i32
    %c0_i32_0 = arith.constant 0 : i32
    %c0_i32_1 = arith.constant 0 : i32
    return %c0_i32, %c0_i32_0 : i32, i32
  }
  func.func @transform_3(%arg0: i32) -> (i32, i32) {
    %c0_i32 = arith.constant 0 : i32
    %c0_i32_0 = arith.constant 0 : i32
    return %arg0, %c0_i32 : i32, i32
  }
}

module attributes {stable_mosaic.version = 11 : i64} {
  func.func @ffn_kernel(%arg0: i32, %arg1: i32, %arg2: memref<16x128xbf16, #tpu.memory_space<vmem>>, %arg3: memref<1x128xf32, #tpu.memory_space<vmem>>, %arg4: memref<1x128xf32, #tpu.memory_space<vmem>>, %arg5: memref<128x256xbf16, #tpu.memory_space<vmem>>, %arg6: memref<1x256xf32, #tpu.memory_space<vmem>>, %arg7: memref<256x128xbf16, #tpu.memory_space<vmem>>, %arg8: memref<1x128xf32, #tpu.memory_space<vmem>>, %arg9: memref<16x128xbf16, #tpu.memory_space<vmem>>, %arg10: memref<16x128xbf16, #tpu.memory_space<vmem>>, %arg11: memref<16x128xf32, #tpu.memory_space<vmem>>) attributes {dimension_semantics = [#tpu.dimension_semantics<parallel>, #tpu.dimension_semantics<arbitrary>], iteration_bounds = array<i64: 2, 2>, scalar_prefetch = 0 : i64, scratch_operands = 2 : i64, tpu.core_type = #tpu.core_type<tc>, window_params = [{transform_indices = @transform_0, window_bounds = array<i64: 16, 128>}, {pipeline_mode = #tpu.pipeline_mode<synchronous>, transform_indices = @transform_1, window_bounds = array<i64: 1, 128>}, {pipeline_mode = #tpu.pipeline_mode<synchronous>, transform_indices = @transform_2, window_bounds = array<i64: 1, 128>}, {transform_indices = @transform_3, window_bounds = array<i64: 128, 256>}, {transform_indices = @transform_4, window_bounds = array<i64: 1, 256>}, {transform_indices = @transform_5, window_bounds = array<i64: 256, 128>}, {pipeline_mode = #tpu.pipeline_mode<synchronous>, transform_indices = @transform_6, window_bounds = array<i64: 1, 128>}, {transform_indices = @transform_7, window_bounds = array<i64: 16, 128>}]} {
    %c0_i32 = arith.constant 0 : i32
    %0 = arith.cmpi eq, %arg1, %c0_i32 : i32
    %1 = arith.extui %0 : i1 to i32
    %c0_i32_0 = arith.constant 0 : i32
    %2 = arith.cmpi ne, %1, %c0_i32_0 : i32
    scf.if %2 {
      %c0_15 = arith.constant 0 : index
      %c0_16 = arith.constant 0 : index
      %20 = vector.load %arg2[%c0_15, %c0_16] : memref<16x128xbf16, #tpu.memory_space<vmem>>, vector<16x128xbf16>
      %c0_17 = arith.constant 0 : index
      %c0_18 = arith.constant 0 : index
      %21 = vector.load %arg3[%c0_17, %c0_18] : memref<1x128xf32, #tpu.memory_space<vmem>>, vector<1x128xf32>
      %c0_19 = arith.constant 0 : index
      %c0_20 = arith.constant 0 : index
      %22 = vector.load %arg4[%c0_19, %c0_20] : memref<1x128xf32, #tpu.memory_space<vmem>>, vector<1x128xf32>
      %23 = arith.extf %20 : vector<16x128xbf16> to vector<16x128xf32>
      %cst_21 = arith.constant dense<0.000000e+00> : vector<16xf32>
      %24 = vector.multi_reduction <add>, %23, %cst_21 [1] : vector<16x128xf32> to vector<16xf32>
      %25 = vector.shape_cast %24 : vector<16xf32> to vector<16x1xf32>
      %cst_22 = arith.constant 1.280000e+02 : f32
      %26 = vector.broadcast %cst_22 : f32 to vector<16x1xf32>
      %27 = arith.divf %25, %26 : vector<16x1xf32>
      %28 = vector.broadcast %27 : vector<16x1xf32> to vector<16x128xf32>
      %29 = arith.subf %23, %28 : vector<16x128xf32>
      %30 = arith.mulf %29, %29 : vector<16x128xf32>
      %cst_23 = arith.constant dense<0.000000e+00> : vector<16xf32>
      %31 = vector.multi_reduction <add>, %30, %cst_23 [1] : vector<16x128xf32> to vector<16xf32>
      %32 = vector.shape_cast %31 : vector<16xf32> to vector<16x1xf32>
      %cst_24 = arith.constant 1.280000e+02 : f32
      %33 = vector.broadcast %cst_24 : f32 to vector<16x1xf32>
      %34 = arith.divf %32, %33 : vector<16x1xf32>
      %35 = vector.broadcast %27 : vector<16x1xf32> to vector<16x128xf32>
      %36 = arith.subf %23, %35 : vector<16x128xf32>
      %cst_25 = arith.constant 9.99999997E-7 : f32
      %37 = vector.broadcast %cst_25 : f32 to vector<16x1xf32>
      %38 = arith.addf %34, %37 : vector<16x1xf32>
      %39 = math.rsqrt %38 : vector<16x1xf32>
      %40 = vector.broadcast %39 : vector<16x1xf32> to vector<16x128xf32>
      %41 = arith.mulf %36, %40 : vector<16x128xf32>
      %42 = vector.broadcast %21 : vector<1x128xf32> to vector<16x128xf32>
      %43 = arith.mulf %41, %42 : vector<16x128xf32>
      %44 = vector.broadcast %22 : vector<1x128xf32> to vector<16x128xf32>
      %45 = arith.addf %43, %44 : vector<16x128xf32>
      %46 = arith.truncf %45 : vector<16x128xf32> to vector<16x128xbf16>
      %c0_26 = arith.constant 0 : index
      %c0_27 = arith.constant 0 : index
      %47 = vector.load %arg10[%c0_26, %c0_27] : memref<16x128xbf16, #tpu.memory_space<vmem>>, vector<16x128xbf16>
      tpu.vector_store %arg10[%c0_26, %c0_27], %46 {strides = array<i32>} : memref<16x128xbf16, #tpu.memory_space<vmem>>, vector<16x128xbf16>,
      %cst_28 = arith.constant 0.000000e+00 : f32
      %48 = vector.broadcast %cst_28 : f32 to vector<16x128xf32>
      %c0_29 = arith.constant 0 : index
      %c0_30 = arith.constant 0 : index
      %49 = vector.load %arg11[%c0_29, %c0_30] : memref<16x128xf32, #tpu.memory_space<vmem>>, vector<16x128xf32>
      tpu.vector_store %arg11[%c0_29, %c0_30], %48 {strides = array<i32>} : memref<16x128xf32, #tpu.memory_space<vmem>>, vector<16x128xf32>,
    } else {
    }
    %c0 = arith.constant 0 : index
    %c0_1 = arith.constant 0 : index
    %3 = vector.load %arg10[%c0, %c0_1] : memref<16x128xbf16, #tpu.memory_space<vmem>>, vector<16x128xbf16>
    %c0_2 = arith.constant 0 : index
    %c0_3 = arith.constant 0 : index
    %4 = vector.load %arg5[%c0_2, %c0_3] : memref<128x256xbf16, #tpu.memory_space<vmem>>, vector<128x256xbf16>
    %cst = arith.constant dense<0.000000e+00> : vector<16x256xf32>
    %5 = tpu.matmul %3, %4, %cst {dimension_numbers = #tpu.dot_dimension_numbers<[1], [0], [0], [1], [0, 0, 1, 1], [], []>} : vector<16x128xbf16>, vector<128x256xbf16>, vector<16x256xf32> -> vector<16x256xf32>
    %c0_4 = arith.constant 0 : index
    %c0_5 = arith.constant 0 : index
    %6 = vector.load %arg6[%c0_4, %c0_5] : memref<1x256xf32, #tpu.memory_space<vmem>>, vector<1x256xf32>
    %7 = vector.broadcast %6 : vector<1x256xf32> to vector<16x256xf32>
    %8 = arith.addf %5, %7 : vector<16x256xf32>
    %cst_6 = arith.constant 0.000000e+00 : f32
    %9 = vector.broadcast %cst_6 : f32 to vector<16x256xf32>
    %10 = arith.maximumf %8, %9 : vector<16x256xf32>
    %11 = arith.truncf %10 : vector<16x256xf32> to vector<16x256xbf16>
    %c0_7 = arith.constant 0 : index
    %c0_8 = arith.constant 0 : index
    %12 = vector.load %arg11[%c0_7, %c0_8] : memref<16x128xf32, #tpu.memory_space<vmem>>, vector<16x128xf32>
    %c0_9 = arith.constant 0 : index
    %c0_10 = arith.constant 0 : index
    %13 = vector.load %arg7[%c0_9, %c0_10] : memref<256x128xbf16, #tpu.memory_space<vmem>>, vector<256x128xbf16>
    %cst_11 = arith.constant dense<0.000000e+00> : vector<16x128xf32>
    %14 = tpu.matmul %11, %13, %cst_11 {dimension_numbers = #tpu.dot_dimension_numbers<[1], [0], [0], [1], [0, 0, 1, 1], [], []>} : vector<16x256xbf16>, vector<256x128xbf16>, vector<16x128xf32> -> vector<16x128xf32>
    %15 = arith.addf %12, %14 : vector<16x128xf32>
    %c0_12 = arith.constant 0 : index
    %c0_13 = arith.constant 0 : index
    %16 = vector.load %arg11[%c0_12, %c0_13] : memref<16x128xf32, #tpu.memory_space<vmem>>, vector<16x128xf32>
    tpu.vector_store %arg11[%c0_12, %c0_13], %15 {strides = array<i32>} : memref<16x128xf32, #tpu.memory_space<vmem>>, vector<16x128xf32>,
    %c1_i32 = arith.constant 1 : i32
    %17 = arith.cmpi eq, %arg1, %c1_i32 : i32
    %18 = arith.extui %17 : i1 to i32
    %c0_i32_14 = arith.constant 0 : i32
    %19 = arith.cmpi ne, %18, %c0_i32_14 : i32
    scf.if %19 {
      %c0_15 = arith.constant 0 : index
      %c0_16 = arith.constant 0 : index
      %20 = vector.load %arg2[%c0_15, %c0_16] : memref<16x128xbf16, #tpu.memory_space<vmem>>, vector<16x128xbf16>
      %21 = arith.extf %20 : vector<16x128xbf16> to vector<16x128xf32>
      %c0_17 = arith.constant 0 : index
      %c0_18 = arith.constant 0 : index
      %22 = vector.load %arg11[%c0_17, %c0_18] : memref<16x128xf32, #tpu.memory_space<vmem>>, vector<16x128xf32>
      %23 = arith.addf %21, %22 : vector<16x128xf32>
      %c0_19 = arith.constant 0 : index
      %c0_20 = arith.constant 0 : index
      %24 = vector.load %arg8[%c0_19, %c0_20] : memref<1x128xf32, #tpu.memory_space<vmem>>, vector<1x128xf32>
      %25 = vector.broadcast %24 : vector<1x128xf32> to vector<16x128xf32>
      %26 = arith.addf %23, %25 : vector<16x128xf32>
      %27 = arith.truncf %26 : vector<16x128xf32> to vector<16x128xbf16>
      %c0_21 = arith.constant 0 : index
      %c0_22 = arith.constant 0 : index
      %28 = vector.load %arg9[%c0_21, %c0_22] : memref<16x128xbf16, #tpu.memory_space<vmem>>, vector<16x128xbf16>
      tpu.vector_store %arg9[%c0_21, %c0_22], %27 {strides = array<i32>} : memref<16x128xbf16, #tpu.memory_space<vmem>>, vector<16x128xbf16>,
    } else {
    }
    return
  }
  func.func @transform_0(%arg0: i32, %arg1: i32) -> (i32, i32) {
    %c0_i32 = arith.constant 0 : i32
    %c0_i32_0 = arith.constant 0 : i32
    return %arg0, %c0_i32 : i32, i32
  }
  func.func @transform_1(%arg0: i32, %arg1: i32) -> (i32, i32) {
    %c0_i32 = arith.constant 0 : i32
    %c0_i32_0 = arith.constant 0 : i32
    %c0_i32_1 = arith.constant 0 : i32
    return %c0_i32, %c0_i32_0 : i32, i32
  }
  func.func @transform_2(%arg0: i32, %arg1: i32) -> (i32, i32) {
    %c0_i32 = arith.constant 0 : i32
    %c0_i32_0 = arith.constant 0 : i32
    %c0_i32_1 = arith.constant 0 : i32
    return %c0_i32, %c0_i32_0 : i32, i32
  }
  func.func @transform_3(%arg0: i32, %arg1: i32) -> (i32, i32) {
    %c0_i32 = arith.constant 0 : i32
    %c0_i32_0 = arith.constant 0 : i32
    return %c0_i32, %arg1 : i32, i32
  }
  func.func @transform_4(%arg0: i32, %arg1: i32) -> (i32, i32) {
    %c0_i32 = arith.constant 0 : i32
    %c0_i32_0 = arith.constant 0 : i32
    return %c0_i32, %arg1 : i32, i32
  }
  func.func @transform_5(%arg0: i32, %arg1: i32) -> (i32, i32) {
    %c0_i32 = arith.constant 0 : i32
    %c0_i32_0 = arith.constant 0 : i32
    return %arg1, %c0_i32 : i32, i32
  }
  func.func @transform_6(%arg0: i32, %arg1: i32) -> (i32, i32) {
    %c0_i32 = arith.constant 0 : i32
    %c0_i32_0 = arith.constant 0 : i32
    %c0_i32_1 = arith.constant 0 : i32
    return %c0_i32, %c0_i32_0 : i32, i32
  }
  func.func @transform_7(%arg0: i32, %arg1: i32) -> (i32, i32) {
    %c0_i32 = arith.constant 0 : i32
    %c0_i32_0 = arith.constant 0 : i32
    return %arg0, %c0_i32 : i32, i32
  }
}

module attributes {stable_mosaic.version = 11 : i64} {
  func.func @fused_self_attn_kernel(%arg0: i32, %arg1: memref<2xi32, #tpu.memory_space<smem>>, %arg2: memref<1x16x128xbf16, #tpu.memory_space<vmem>>, %arg3: memref<1x128xf32, #tpu.memory_space<vmem>>, %arg4: memref<1x128xf32, #tpu.memory_space<vmem>>, %arg5: memref<128x384xbf16, #tpu.memory_space<vmem>>, %arg6: memref<1x384xf32, #tpu.memory_space<vmem>>, %arg7: memref<128x128xbf16, #tpu.memory_space<vmem>>, %arg8: memref<1x128xf32, #tpu.memory_space<vmem>>, %arg9: memref<1x16x128xbf16, #tpu.memory_space<vmem>>) attributes {dimension_semantics = [#tpu.dimension_semantics<parallel>], iteration_bounds = array<i64: 2>, scalar_prefetch = 1 : i64, scratch_operands = 0 : i64, tpu.core_type = #tpu.core_type<tc>, window_params = [{transform_indices = @transform_0, window_bounds = array<i64: 1, 16, 128>}, {pipeline_mode = #tpu.pipeline_mode<synchronous>, transform_indices = @transform_1, window_bounds = array<i64: 1, 128>}, {pipeline_mode = #tpu.pipeline_mode<synchronous>, transform_indices = @transform_2, window_bounds = array<i64: 1, 128>}, {pipeline_mode = #tpu.pipeline_mode<synchronous>, transform_indices = @transform_3, window_bounds = array<i64: 128, 384>}, {pipeline_mode = #tpu.pipeline_mode<synchronous>, transform_indices = @transform_4, window_bounds = array<i64: 1, 384>}, {pipeline_mode = #tpu.pipeline_mode<synchronous>, transform_indices = @transform_5, window_bounds = array<i64: 128, 128>}, {pipeline_mode = #tpu.pipeline_mode<synchronous>, transform_indices = @transform_6, window_bounds = array<i64: 1, 128>}, {transform_indices = @transform_7, window_bounds = array<i64: 1, 16, 128>}]} {
    %c0 = arith.constant 0 : index
    %c0_0 = arith.constant 0 : index
    %c0_1 = arith.constant 0 : index
    %0 = vector.load %arg2[%c0, %c0_0, %c0_1] : memref<1x16x128xbf16, #tpu.memory_space<vmem>>, vector<1x16x128xbf16>
    %1 = vector.shape_cast %0 : vector<1x16x128xbf16> to vector<16x128xbf16>
    %2 = arith.extf %1 : vector<16x128xbf16> to vector<16x128xf32>
    %c0_2 = arith.constant 0 : index
    %c0_3 = arith.constant 0 : index
    %3 = vector.load %arg3[%c0_2, %c0_3] : memref<1x128xf32, #tpu.memory_space<vmem>>, vector<1x128xf32>
    %c0_4 = arith.constant 0 : index
    %c0_5 = arith.constant 0 : index
    %4 = vector.load %arg4[%c0_4, %c0_5] : memref<1x128xf32, #tpu.memory_space<vmem>>, vector<1x128xf32>
    %cst = arith.constant dense<0.000000e+00> : vector<16xf32>
    %5 = vector.multi_reduction <add>, %2, %cst [1] : vector<16x128xf32> to vector<16xf32>
    %6 = vector.shape_cast %5 : vector<16xf32> to vector<16x1xf32>
    %cst_6 = arith.constant 1.280000e+02 : f32
    %7 = vector.broadcast %cst_6 : f32 to vector<16x1xf32>
    %8 = arith.divf %6, %7 : vector<16x1xf32>
    %9 = vector.broadcast %8 : vector<16x1xf32> to vector<16x128xf32>
    %10 = arith.subf %2, %9 : vector<16x128xf32>
    %11 = arith.mulf %10, %10 : vector<16x128xf32>
    %cst_7 = arith.constant dense<0.000000e+00> : vector<16xf32>
    %12 = vector.multi_reduction <add>, %11, %cst_7 [1] : vector<16x128xf32> to vector<16xf32>
    %13 = vector.shape_cast %12 : vector<16xf32> to vector<16x1xf32>
    %cst_8 = arith.constant 1.280000e+02 : f32
    %14 = vector.broadcast %cst_8 : f32 to vector<16x1xf32>
    %15 = arith.divf %13, %14 : vector<16x1xf32>
    %16 = vector.broadcast %8 : vector<16x1xf32> to vector<16x128xf32>
    %17 = arith.subf %2, %16 : vector<16x128xf32>
    %cst_9 = arith.constant 9.99999997E-7 : f32
    %18 = vector.broadcast %cst_9 : f32 to vector<16x1xf32>
    %19 = arith.addf %15, %18 : vector<16x1xf32>
    %20 = math.rsqrt %19 : vector<16x1xf32>
    %21 = vector.broadcast %20 : vector<16x1xf32> to vector<16x128xf32>
    %22 = arith.mulf %17, %21 : vector<16x128xf32>
    %23 = vector.broadcast %3 : vector<1x128xf32> to vector<16x128xf32>
    %24 = arith.mulf %22, %23 : vector<16x128xf32>
    %25 = vector.broadcast %4 : vector<1x128xf32> to vector<16x128xf32>
    %26 = arith.addf %24, %25 : vector<16x128xf32>
    %27 = arith.truncf %26 : vector<16x128xf32> to vector<16x128xbf16>
    %c0_10 = arith.constant 0 : index
    %c0_11 = arith.constant 0 : index
    %28 = vector.load %arg5[%c0_10, %c0_11] : memref<128x384xbf16, #tpu.memory_space<vmem>>, vector<128x384xbf16>
    %cst_12 = arith.constant dense<0.000000e+00> : vector<16x384xf32>
    %29 = tpu.matmul %27, %28, %cst_12 {dimension_numbers = #tpu.dot_dimension_numbers<[1], [0], [0], [1], [0, 0, 1, 1], [], []>} : vector<16x128xbf16>, vector<128x384xbf16>, vector<16x384xf32> -> vector<16x384xf32>
    %c0_13 = arith.constant 0 : index
    %c0_14 = arith.constant 0 : index
    %30 = vector.load %arg6[%c0_13, %c0_14] : memref<1x384xf32, #tpu.memory_space<vmem>>, vector<1x384xf32>
    %31 = vector.broadcast %30 : vector<1x384xf32> to vector<16x384xf32>
    %32 = arith.addf %29, %31 : vector<16x384xf32>
    %33 = arith.truncf %32 : vector<16x384xf32> to vector<16x384xbf16>
    %34 = tpu.iota {dimensions = array<i32: 1>} : vector<16x16xi32>
    %35 = arith.index_cast %arg0 : i32 to index
    %36 = memref.load %arg1[%35] : memref<2xi32, #tpu.memory_space<smem>>
    %37 = vector.broadcast %36 : i32 to vector<16x16xi32>
    %38 = arith.cmpi sge, %34, %37 : vector<16x16xi32>
    %cst_15 = arith.constant -1.000000e+30 : f32
    %cst_16 = arith.constant 0.000000e+00 : f32
    %39 = vector.broadcast %cst_15 : f32 to vector<16x16xf32>
    %40 = vector.broadcast %cst_16 : f32 to vector<16x16xf32>
    %41 = arith.select %38, %39, %40 : vector<16x16xi1>, vector<16x16xf32>
    %42 = vector.extract_strided_slice %33 {offsets = [0, 0], sizes = [16, 128], strides = [1, 1]} : vector<16x384xbf16> to vector<16x128xbf16>
    %43 = vector.extract_strided_slice %33 {offsets = [0, 128], sizes = [16, 128], strides = [1, 1]} : vector<16x384xbf16> to vector<16x128xbf16>
    %44 = vector.extract_strided_slice %33 {offsets = [0, 256], sizes = [16, 128], strides = [1, 1]} : vector<16x384xbf16> to vector<16x128xbf16>
    %c0_17 = arith.constant 0 : index
    %c0_18 = arith.constant 0 : index
    %45 = vector.load %arg7[%c0_17, %c0_18] : memref<128x128xbf16, #tpu.memory_space<vmem>>, vector<128x128xbf16>
    %cst_19 = arith.constant 0.000000e+00 : f32
    %46 = vector.broadcast %cst_19 : f32 to vector<16x128xf32>
    %47 = vector.extract_strided_slice %42 {offsets = [0, 0], sizes = [16, 32], strides = [1, 1]} : vector<16x128xbf16> to vector<16x32xbf16>
    %48 = vector.extract_strided_slice %43 {offsets = [0, 0], sizes = [16, 32], strides = [1, 1]} : vector<16x128xbf16> to vector<16x32xbf16>
    %cst_20 = arith.constant dense<0.000000e+00> : vector<16x16xf32>
    %49 = tpu.matmul %47, %48, %cst_20 {dimension_numbers = #tpu.dot_dimension_numbers<[1], [1], [0], [0], [0, 0, 1, 0], [], []>} : vector<16x32xbf16>, vector<16x32xbf16>, vector<16x16xf32> -> vector<16x16xf32>
    %cst_21 = arith.constant 0.176776692 : f32
    %50 = vector.broadcast %cst_21 : f32 to vector<16x16xf32>
    %51 = arith.mulf %49, %50 : vector<16x16xf32>
    %52 = arith.addf %51, %41 : vector<16x16xf32>
    %cst_22 = arith.constant dense<0xFF800000> : vector<16xf32>
    %53 = vector.multi_reduction <maximumf>, %52, %cst_22 [1] : vector<16x16xf32> to vector<16xf32>
    %54 = vector.shape_cast %53 : vector<16xf32> to vector<16x1xf32>
    %55 = vector.broadcast %54 : vector<16x1xf32> to vector<16x16xf32>
    %56 = arith.subf %52, %55 : vector<16x16xf32>
    %57 = math.exp %56 : vector<16x16xf32>
    %cst_23 = arith.constant dense<0.000000e+00> : vector<16xf32>
    %58 = vector.multi_reduction <add>, %57, %cst_23 [1] : vector<16x16xf32> to vector<16xf32>
    %59 = vector.shape_cast %58 : vector<16xf32> to vector<16x1xf32>
    %60 = vector.broadcast %59 : vector<16x1xf32> to vector<16x16xf32>
    %61 = arith.divf %57, %60 : vector<16x16xf32>
    %62 = arith.truncf %61 : vector<16x16xf32> to vector<16x16xbf16>
    %63 = vector.extract_strided_slice %44 {offsets = [0, 0], sizes = [16, 32], strides = [1, 1]} : vector<16x128xbf16> to vector<16x32xbf16>
    %cst_24 = arith.constant dense<0.000000e+00> : vector<16x32xf32>
    %64 = tpu.matmul %62, %63, %cst_24 {dimension_numbers = #tpu.dot_dimension_numbers<[1], [0], [0], [1], [0, 0, 1, 1], [], []>} : vector<16x16xbf16>, vector<16x32xbf16>, vector<16x32xf32> -> vector<16x32xf32>
    %65 = arith.truncf %64 : vector<16x32xf32> to vector<16x32xbf16>
    %66 = vector.extract_strided_slice %45 {offsets = [0, 0], sizes = [32, 128], strides = [1, 1]} : vector<128x128xbf16> to vector<32x128xbf16>
    %cst_25 = arith.constant dense<0.000000e+00> : vector<16x128xf32>
    %67 = tpu.matmul %65, %66, %cst_25 {dimension_numbers = #tpu.dot_dimension_numbers<[1], [0], [0], [1], [0, 0, 1, 1], [], []>} : vector<16x32xbf16>, vector<32x128xbf16>, vector<16x128xf32> -> vector<16x128xf32>
    %68 = arith.addf %46, %67 : vector<16x128xf32>
    %69 = vector.extract_strided_slice %42 {offsets = [0, 32], sizes = [16, 32], strides = [1, 1]} : vector<16x128xbf16> to vector<16x32xbf16>
    %70 = vector.extract_strided_slice %43 {offsets = [0, 32], sizes = [16, 32], strides = [1, 1]} : vector<16x128xbf16> to vector<16x32xbf16>
    %cst_26 = arith.constant dense<0.000000e+00> : vector<16x16xf32>
    %71 = tpu.matmul %69, %70, %cst_26 {dimension_numbers = #tpu.dot_dimension_numbers<[1], [1], [0], [0], [0, 0, 1, 0], [], []>} : vector<16x32xbf16>, vector<16x32xbf16>, vector<16x16xf32> -> vector<16x16xf32>
    %cst_27 = arith.constant 0.176776692 : f32
    %72 = vector.broadcast %cst_27 : f32 to vector<16x16xf32>
    %73 = arith.mulf %71, %72 : vector<16x16xf32>
    %74 = arith.addf %73, %41 : vector<16x16xf32>
    %cst_28 = arith.constant dense<0xFF800000> : vector<16xf32>
    %75 = vector.multi_reduction <maximumf>, %74, %cst_28 [1] : vector<16x16xf32> to vector<16xf32>
    %76 = vector.shape_cast %75 : vector<16xf32> to vector<16x1xf32>
    %77 = vector.broadcast %76 : vector<16x1xf32> to vector<16x16xf32>
    %78 = arith.subf %74, %77 : vector<16x16xf32>
    %79 = math.exp %78 : vector<16x16xf32>
    %cst_29 = arith.constant dense<0.000000e+00> : vector<16xf32>
    %80 = vector.multi_reduction <add>, %79, %cst_29 [1] : vector<16x16xf32> to vector<16xf32>
    %81 = vector.shape_cast %80 : vector<16xf32> to vector<16x1xf32>
    %82 = vector.broadcast %81 : vector<16x1xf32> to vector<16x16xf32>
    %83 = arith.divf %79, %82 : vector<16x16xf32>
    %84 = arith.truncf %83 : vector<16x16xf32> to vector<16x16xbf16>
    %85 = vector.extract_strided_slice %44 {offsets = [0, 32], sizes = [16, 32], strides = [1, 1]} : vector<16x128xbf16> to vector<16x32xbf16>
    %cst_30 = arith.constant dense<0.000000e+00> : vector<16x32xf32>
    %86 = tpu.matmul %84, %85, %cst_30 {dimension_numbers = #tpu.dot_dimension_numbers<[1], [0], [0], [1], [0, 0, 1, 1], [], []>} : vector<16x16xbf16>, vector<16x32xbf16>, vector<16x32xf32> -> vector<16x32xf32>
    %87 = arith.truncf %86 : vector<16x32xf32> to vector<16x32xbf16>
    %88 = vector.extract_strided_slice %45 {offsets = [32, 0], sizes = [32, 128], strides = [1, 1]} : vector<128x128xbf16> to vector<32x128xbf16>
    %cst_31 = arith.constant dense<0.000000e+00> : vector<16x128xf32>
    %89 = tpu.matmul %87, %88, %cst_31 {dimension_numbers = #tpu.dot_dimension_numbers<[1], [0], [0], [1], [0, 0, 1, 1], [], []>} : vector<16x32xbf16>, vector<32x128xbf16>, vector<16x128xf32> -> vector<16x128xf32>
    %90 = arith.addf %68, %89 : vector<16x128xf32>
    %91 = vector.extract_strided_slice %42 {offsets = [0, 64], sizes = [16, 32], strides = [1, 1]} : vector<16x128xbf16> to vector<16x32xbf16>
    %92 = vector.extract_strided_slice %43 {offsets = [0, 64], sizes = [16, 32], strides = [1, 1]} : vector<16x128xbf16> to vector<16x32xbf16>
    %cst_32 = arith.constant dense<0.000000e+00> : vector<16x16xf32>
    %93 = tpu.matmul %91, %92, %cst_32 {dimension_numbers = #tpu.dot_dimension_numbers<[1], [1], [0], [0], [0, 0, 1, 0], [], []>} : vector<16x32xbf16>, vector<16x32xbf16>, vector<16x16xf32> -> vector<16x16xf32>
    %cst_33 = arith.constant 0.176776692 : f32
    %94 = vector.broadcast %cst_33 : f32 to vector<16x16xf32>
    %95 = arith.mulf %93, %94 : vector<16x16xf32>
    %96 = arith.addf %95, %41 : vector<16x16xf32>
    %cst_34 = arith.constant dense<0xFF800000> : vector<16xf32>
    %97 = vector.multi_reduction <maximumf>, %96, %cst_34 [1] : vector<16x16xf32> to vector<16xf32>
    %98 = vector.shape_cast %97 : vector<16xf32> to vector<16x1xf32>
    %99 = vector.broadcast %98 : vector<16x1xf32> to vector<16x16xf32>
    %100 = arith.subf %96, %99 : vector<16x16xf32>
    %101 = math.exp %100 : vector<16x16xf32>
    %cst_35 = arith.constant dense<0.000000e+00> : vector<16xf32>
    %102 = vector.multi_reduction <add>, %101, %cst_35 [1] : vector<16x16xf32> to vector<16xf32>
    %103 = vector.shape_cast %102 : vector<16xf32> to vector<16x1xf32>
    %104 = vector.broadcast %103 : vector<16x1xf32> to vector<16x16xf32>
    %105 = arith.divf %101, %104 : vector<16x16xf32>
    %106 = arith.truncf %105 : vector<16x16xf32> to vector<16x16xbf16>
    %107 = vector.extract_strided_slice %44 {offsets = [0, 64], sizes = [16, 32], strides = [1, 1]} : vector<16x128xbf16> to vector<16x32xbf16>
    %cst_36 = arith.constant dense<0.000000e+00> : vector<16x32xf32>
    %108 = tpu.matmul %106, %107, %cst_36 {dimension_numbers = #tpu.dot_dimension_numbers<[1], [0], [0], [1], [0, 0, 1, 1], [], []>} : vector<16x16xbf16>, vector<16x32xbf16>, vector<16x32xf32> -> vector<16x32xf32>
    %109 = arith.truncf %108 : vector<16x32xf32> to vector<16x32xbf16>
    %110 = vector.extract_strided_slice %45 {offsets = [64, 0], sizes = [32, 128], strides = [1, 1]} : vector<128x128xbf16> to vector<32x128xbf16>
    %cst_37 = arith.constant dense<0.000000e+00> : vector<16x128xf32>
    %111 = tpu.matmul %109, %110, %cst_37 {dimension_numbers = #tpu.dot_dimension_numbers<[1], [0], [0], [1], [0, 0, 1, 1], [], []>} : vector<16x32xbf16>, vector<32x128xbf16>, vector<16x128xf32> -> vector<16x128xf32>
    %112 = arith.addf %90, %111 : vector<16x128xf32>
    %113 = vector.extract_strided_slice %42 {offsets = [0, 96], sizes = [16, 32], strides = [1, 1]} : vector<16x128xbf16> to vector<16x32xbf16>
    %114 = vector.extract_strided_slice %43 {offsets = [0, 96], sizes = [16, 32], strides = [1, 1]} : vector<16x128xbf16> to vector<16x32xbf16>
    %cst_38 = arith.constant dense<0.000000e+00> : vector<16x16xf32>
    %115 = tpu.matmul %113, %114, %cst_38 {dimension_numbers = #tpu.dot_dimension_numbers<[1], [1], [0], [0], [0, 0, 1, 0], [], []>} : vector<16x32xbf16>, vector<16x32xbf16>, vector<16x16xf32> -> vector<16x16xf32>
    %cst_39 = arith.constant 0.176776692 : f32
    %116 = vector.broadcast %cst_39 : f32 to vector<16x16xf32>
    %117 = arith.mulf %115, %116 : vector<16x16xf32>
    %118 = arith.addf %117, %41 : vector<16x16xf32>
    %cst_40 = arith.constant dense<0xFF800000> : vector<16xf32>
    %119 = vector.multi_reduction <maximumf>, %118, %cst_40 [1] : vector<16x16xf32> to vector<16xf32>
    %120 = vector.shape_cast %119 : vector<16xf32> to vector<16x1xf32>
    %121 = vector.broadcast %120 : vector<16x1xf32> to vector<16x16xf32>
    %122 = arith.subf %118, %121 : vector<16x16xf32>
    %123 = math.exp %122 : vector<16x16xf32>
    %cst_41 = arith.constant dense<0.000000e+00> : vector<16xf32>
    %124 = vector.multi_reduction <add>, %123, %cst_41 [1] : vector<16x16xf32> to vector<16xf32>
    %125 = vector.shape_cast %124 : vector<16xf32> to vector<16x1xf32>
    %126 = vector.broadcast %125 : vector<16x1xf32> to vector<16x16xf32>
    %127 = arith.divf %123, %126 : vector<16x16xf32>
    %128 = arith.truncf %127 : vector<16x16xf32> to vector<16x16xbf16>
    %129 = vector.extract_strided_slice %44 {offsets = [0, 96], sizes = [16, 32], strides = [1, 1]} : vector<16x128xbf16> to vector<16x32xbf16>
    %cst_42 = arith.constant dense<0.000000e+00> : vector<16x32xf32>
    %130 = tpu.matmul %128, %129, %cst_42 {dimension_numbers = #tpu.dot_dimension_numbers<[1], [0], [0], [1], [0, 0, 1, 1], [], []>} : vector<16x16xbf16>, vector<16x32xbf16>, vector<16x32xf32> -> vector<16x32xf32>
    %131 = arith.truncf %130 : vector<16x32xf32> to vector<16x32xbf16>
    %132 = vector.extract_strided_slice %45 {offsets = [96, 0], sizes = [32, 128], strides = [1, 1]} : vector<128x128xbf16> to vector<32x128xbf16>
    %cst_43 = arith.constant dense<0.000000e+00> : vector<16x128xf32>
    %133 = tpu.matmul %131, %132, %cst_43 {dimension_numbers = #tpu.dot_dimension_numbers<[1], [0], [0], [1], [0, 0, 1, 1], [], []>} : vector<16x32xbf16>, vector<32x128xbf16>, vector<16x128xf32> -> vector<16x128xf32>
    %134 = arith.addf %112, %133 : vector<16x128xf32>
    %135 = arith.addf %2, %134 : vector<16x128xf32>
    %c0_44 = arith.constant 0 : index
    %c0_45 = arith.constant 0 : index
    %136 = vector.load %arg8[%c0_44, %c0_45] : memref<1x128xf32, #tpu.memory_space<vmem>>, vector<1x128xf32>
    %137 = vector.broadcast %136 : vector<1x128xf32> to vector<16x128xf32>
    %138 = arith.addf %135, %137 : vector<16x128xf32>
    %139 = arith.truncf %138 : vector<16x128xf32> to vector<16x128xbf16>
    %c0_46 = arith.constant 0 : index
    %c0_47 = arith.constant 0 : index
    %c0_48 = arith.constant 0 : index
    %140 = vector.load %arg9[%c0_46, %c0_47, %c0_48] : memref<1x16x128xbf16, #tpu.memory_space<vmem>>, vector<1x16x128xbf16>
    %141 = vector.shape_cast %140 : vector<1x16x128xbf16> to vector<16x128xbf16>
    %142 = vector.shape_cast %139 : vector<16x128xbf16> to vector<1x16x128xbf16>
    tpu.vector_store %arg9[%c0_46, %c0_47, %c0_48], %142 {strides = array<i32>} : memref<1x16x128xbf16, #tpu.memory_space<vmem>>, vector<1x16x128xbf16>,
    return
  }
  func.func @transform_0(%arg0: i32, %arg1: memref<2xi32, #tpu.memory_space<smem>>) -> (i32, i32, i32) {
    %c0_i32 = arith.constant 0 : i32
    %c0_i32_0 = arith.constant 0 : i32
    %c0_i32_1 = arith.constant 0 : i32
    return %arg0, %c0_i32, %c0_i32_0 : i32, i32, i32
  }
  func.func @transform_1(%arg0: i32, %arg1: memref<2xi32, #tpu.memory_space<smem>>) -> (i32, i32) {
    %c0_i32 = arith.constant 0 : i32
    %c0_i32_0 = arith.constant 0 : i32
    %c0_i32_1 = arith.constant 0 : i32
    return %c0_i32, %c0_i32_0 : i32, i32
  }
  func.func @transform_2(%arg0: i32, %arg1: memref<2xi32, #tpu.memory_space<smem>>) -> (i32, i32) {
    %c0_i32 = arith.constant 0 : i32
    %c0_i32_0 = arith.constant 0 : i32
    %c0_i32_1 = arith.constant 0 : i32
    return %c0_i32, %c0_i32_0 : i32, i32
  }
  func.func @transform_3(%arg0: i32, %arg1: memref<2xi32, #tpu.memory_space<smem>>) -> (i32, i32) {
    %c0_i32 = arith.constant 0 : i32
    %c0_i32_0 = arith.constant 0 : i32
    %c0_i32_1 = arith.constant 0 : i32
    return %c0_i32, %c0_i32_0 : i32, i32
  }
  func.func @transform_4(%arg0: i32, %arg1: memref<2xi32, #tpu.memory_space<smem>>) -> (i32, i32) {
    %c0_i32 = arith.constant 0 : i32
    %c0_i32_0 = arith.constant 0 : i32
    %c0_i32_1 = arith.constant 0 : i32
    return %c0_i32, %c0_i32_0 : i32, i32
  }
  func.func @transform_5(%arg0: i32, %arg1: memref<2xi32, #tpu.memory_space<smem>>) -> (i32, i32) {
    %c0_i32 = arith.constant 0 : i32
    %c0_i32_0 = arith.constant 0 : i32
    %c0_i32_1 = arith.constant 0 : i32
    return %c0_i32, %c0_i32_0 : i32, i32
  }
  func.func @transform_6(%arg0: i32, %arg1: memref<2xi32, #tpu.memory_space<smem>>) -> (i32, i32) {
    %c0_i32 = arith.constant 0 : i32
    %c0_i32_0 = arith.constant 0 : i32
    %c0_i32_1 = arith.constant 0 : i32
    return %c0_i32, %c0_i32_0 : i32, i32
  }
  func.func @transform_7(%arg0: i32, %arg1: memref<2xi32, #tpu.memory_space<smem>>) -> (i32, i32, i32) {
    %c0_i32 = arith.constant 0 : i32
    %c0_i32_0 = arith.constant 0 : i32
    %c0_i32_1 = arith.constant 0 : i32
    return %arg0, %c0_i32, %c0_i32_0 : i32, i32, i32
  }
}

module attributes {stable_mosaic.version = 11 : i64} {
  func.func @fused_self_attn_kernel(%arg0: i32, %arg1: memref<2xi32, #tpu.memory_space<smem>>, %arg2: memref<1x16x128xbf16, #tpu.memory_space<vmem>>, %arg3: memref<1x128xf32, #tpu.memory_space<vmem>>, %arg4: memref<1x128xf32, #tpu.memory_space<vmem>>, %arg5: memref<128x384xbf16, #tpu.memory_space<vmem>>, %arg6: memref<1x384xf32, #tpu.memory_space<vmem>>, %arg7: memref<128x128xbf16, #tpu.memory_space<vmem>>, %arg8: memref<1x128xf32, #tpu.memory_space<vmem>>, %arg9: memref<1x16x128xbf16, #tpu.memory_space<vmem>>) attributes {dimension_semantics = [#tpu.dimension_semantics<parallel>], iteration_bounds = array<i64: 2>, scalar_prefetch = 1 : i64, scratch_operands = 0 : i64, tpu.core_type = #tpu.core_type<tc>, window_params = [{transform_indices = @transform_0, window_bounds = array<i64: 1, 16, 128>}, {pipeline_mode = #tpu.pipeline_mode<synchronous>, transform_indices = @transform_1, window_bounds = array<i64: 1, 128>}, {pipeline_mode = #tpu.pipeline_mode<synchronous>, transform_indices = @transform_2, window_bounds = array<i64: 1, 128>}, {pipeline_mode = #tpu.pipeline_mode<synchronous>, transform_indices = @transform_3, window_bounds = array<i64: 128, 384>}, {pipeline_mode = #tpu.pipeline_mode<synchronous>, transform_indices = @transform_4, window_bounds = array<i64: 1, 384>}, {pipeline_mode = #tpu.pipeline_mode<synchronous>, transform_indices = @transform_5, window_bounds = array<i64: 128, 128>}, {pipeline_mode = #tpu.pipeline_mode<synchronous>, transform_indices = @transform_6, window_bounds = array<i64: 1, 128>}, {transform_indices = @transform_7, window_bounds = array<i64: 1, 16, 128>}]} {
    %c0 = arith.constant 0 : index
    %c0_0 = arith.constant 0 : index
    %c0_1 = arith.constant 0 : index
    %0 = vector.load %arg2[%c0, %c0_0, %c0_1] : memref<1x16x128xbf16, #tpu.memory_space<vmem>>, vector<1x16x128xbf16>
    %1 = vector.shape_cast %0 : vector<1x16x128xbf16> to vector<16x128xbf16>
    %2 = arith.extf %1 : vector<16x128xbf16> to vector<16x128xf32>
    %c0_2 = arith.constant 0 : index
    %c0_3 = arith.constant 0 : index
    %3 = vector.load %arg3[%c0_2, %c0_3] : memref<1x128xf32, #tpu.memory_space<vmem>>, vector<1x128xf32>
    %c0_4 = arith.constant 0 : index
    %c0_5 = arith.constant 0 : index
    %4 = vector.load %arg4[%c0_4, %c0_5] : memref<1x128xf32, #tpu.memory_space<vmem>>, vector<1x128xf32>
    %cst = arith.constant dense<0.000000e+00> : vector<16xf32>
    %5 = vector.multi_reduction <add>, %2, %cst [1] : vector<16x128xf32> to vector<16xf32>
    %6 = vector.shape_cast %5 : vector<16xf32> to vector<16x1xf32>
    %cst_6 = arith.constant 1.280000e+02 : f32
    %7 = vector.broadcast %cst_6 : f32 to vector<16x1xf32>
    %8 = arith.divf %6, %7 : vector<16x1xf32>
    %9 = vector.broadcast %8 : vector<16x1xf32> to vector<16x128xf32>
    %10 = arith.subf %2, %9 : vector<16x128xf32>
    %11 = arith.mulf %10, %10 : vector<16x128xf32>
    %cst_7 = arith.constant dense<0.000000e+00> : vector<16xf32>
    %12 = vector.multi_reduction <add>, %11, %cst_7 [1] : vector<16x128xf32> to vector<16xf32>
    %13 = vector.shape_cast %12 : vector<16xf32> to vector<16x1xf32>
    %cst_8 = arith.constant 1.280000e+02 : f32
    %14 = vector.broadcast %cst_8 : f32 to vector<16x1xf32>
    %15 = arith.divf %13, %14 : vector<16x1xf32>
    %16 = vector.broadcast %8 : vector<16x1xf32> to vector<16x128xf32>
    %17 = arith.subf %2, %16 : vector<16x128xf32>
    %cst_9 = arith.constant 9.99999997E-7 : f32
    %18 = vector.broadcast %cst_9 : f32 to vector<16x1xf32>
    %19 = arith.addf %15, %18 : vector<16x1xf32>
    %20 = math.rsqrt %19 : vector<16x1xf32>
    %21 = vector.broadcast %20 : vector<16x1xf32> to vector<16x128xf32>
    %22 = arith.mulf %17, %21 : vector<16x128xf32>
    %23 = vector.broadcast %3 : vector<1x128xf32> to vector<16x128xf32>
    %24 = arith.mulf %22, %23 : vector<16x128xf32>
    %25 = vector.broadcast %4 : vector<1x128xf32> to vector<16x128xf32>
    %26 = arith.addf %24, %25 : vector<16x128xf32>
    %27 = arith.truncf %26 : vector<16x128xf32> to vector<16x128xbf16>
    %c0_10 = arith.constant 0 : index
    %c0_11 = arith.constant 0 : index
    %28 = vector.load %arg5[%c0_10, %c0_11] : memref<128x384xbf16, #tpu.memory_space<vmem>>, vector<128x384xbf16>
    %cst_12 = arith.constant dense<0.000000e+00> : vector<16x384xf32>
    %29 = tpu.matmul %27, %28, %cst_12 {dimension_numbers = #tpu.dot_dimension_numbers<[1], [0], [0], [1], [0, 0, 1, 1], [], []>} : vector<16x128xbf16>, vector<128x384xbf16>, vector<16x384xf32> -> vector<16x384xf32>
    %c0_13 = arith.constant 0 : index
    %c0_14 = arith.constant 0 : index
    %30 = vector.load %arg6[%c0_13, %c0_14] : memref<1x384xf32, #tpu.memory_space<vmem>>, vector<1x384xf32>
    %31 = vector.broadcast %30 : vector<1x384xf32> to vector<16x384xf32>
    %32 = arith.addf %29, %31 : vector<16x384xf32>
    %33 = arith.truncf %32 : vector<16x384xf32> to vector<16x384xbf16>
    %34 = tpu.iota {dimensions = array<i32: 1>} : vector<16x16xi32>
    %35 = tpu.iota {dimensions = array<i32: 0>} : vector<16x16xi32>
    %36 = arith.cmpi sgt, %34, %35 : vector<16x16xi32>
    %cst_15 = arith.constant -1.000000e+30 : f32
    %cst_16 = arith.constant 0.000000e+00 : f32
    %37 = vector.broadcast %cst_15 : f32 to vector<16x16xf32>
    %38 = vector.broadcast %cst_16 : f32 to vector<16x16xf32>
    %39 = arith.select %36, %37, %38 : vector<16x16xi1>, vector<16x16xf32>
    %40 = vector.extract_strided_slice %33 {offsets = [0, 0], sizes = [16, 128], strides = [1, 1]} : vector<16x384xbf16> to vector<16x128xbf16>
    %41 = vector.extract_strided_slice %33 {offsets = [0, 128], sizes = [16, 128], strides = [1, 1]} : vector<16x384xbf16> to vector<16x128xbf16>
    %42 = vector.extract_strided_slice %33 {offsets = [0, 256], sizes = [16, 128], strides = [1, 1]} : vector<16x384xbf16> to vector<16x128xbf16>
    %c0_17 = arith.constant 0 : index
    %c0_18 = arith.constant 0 : index
    %43 = vector.load %arg7[%c0_17, %c0_18] : memref<128x128xbf16, #tpu.memory_space<vmem>>, vector<128x128xbf16>
    %cst_19 = arith.constant 0.000000e+00 : f32
    %44 = vector.broadcast %cst_19 : f32 to vector<16x128xf32>
    %45 = vector.extract_strided_slice %40 {offsets = [0, 0], sizes = [16, 32], strides = [1, 1]} : vector<16x128xbf16> to vector<16x32xbf16>
    %46 = vector.extract_strided_slice %41 {offsets = [0, 0], sizes = [16, 32], strides = [1, 1]} : vector<16x128xbf16> to vector<16x32xbf16>
    %cst_20 = arith.constant dense<0.000000e+00> : vector<16x16xf32>
    %47 = tpu.matmul %45, %46, %cst_20 {dimension_numbers = #tpu.dot_dimension_numbers<[1], [1], [0], [0], [0, 0, 1, 0], [], []>} : vector<16x32xbf16>, vector<16x32xbf16>, vector<16x16xf32> -> vector<16x16xf32>
    %cst_21 = arith.constant 0.176776692 : f32
    %48 = vector.broadcast %cst_21 : f32 to vector<16x16xf32>
    %49 = arith.mulf %47, %48 : vector<16x16xf32>
    %50 = arith.addf %49, %39 : vector<16x16xf32>
    %cst_22 = arith.constant dense<0xFF800000> : vector<16xf32>
    %51 = vector.multi_reduction <maximumf>, %50, %cst_22 [1] : vector<16x16xf32> to vector<16xf32>
    %52 = vector.shape_cast %51 : vector<16xf32> to vector<16x1xf32>
    %53 = vector.broadcast %52 : vector<16x1xf32> to vector<16x16xf32>
    %54 = arith.subf %50, %53 : vector<16x16xf32>
    %55 = math.exp %54 : vector<16x16xf32>
    %cst_23 = arith.constant dense<0.000000e+00> : vector<16xf32>
    %56 = vector.multi_reduction <add>, %55, %cst_23 [1] : vector<16x16xf32> to vector<16xf32>
    %57 = vector.shape_cast %56 : vector<16xf32> to vector<16x1xf32>
    %58 = vector.broadcast %57 : vector<16x1xf32> to vector<16x16xf32>
    %59 = arith.divf %55, %58 : vector<16x16xf32>
    %60 = arith.truncf %59 : vector<16x16xf32> to vector<16x16xbf16>
    %61 = vector.extract_strided_slice %42 {offsets = [0, 0], sizes = [16, 32], strides = [1, 1]} : vector<16x128xbf16> to vector<16x32xbf16>
    %cst_24 = arith.constant dense<0.000000e+00> : vector<16x32xf32>
    %62 = tpu.matmul %60, %61, %cst_24 {dimension_numbers = #tpu.dot_dimension_numbers<[1], [0], [0], [1], [0, 0, 1, 1], [], []>} : vector<16x16xbf16>, vector<16x32xbf16>, vector<16x32xf32> -> vector<16x32xf32>
    %63 = arith.truncf %62 : vector<16x32xf32> to vector<16x32xbf16>
    %64 = vector.extract_strided_slice %43 {offsets = [0, 0], sizes = [32, 128], strides = [1, 1]} : vector<128x128xbf16> to vector<32x128xbf16>
    %cst_25 = arith.constant dense<0.000000e+00> : vector<16x128xf32>
    %65 = tpu.matmul %63, %64, %cst_25 {dimension_numbers = #tpu.dot_dimension_numbers<[1], [0], [0], [1], [0, 0, 1, 1], [], []>} : vector<16x32xbf16>, vector<32x128xbf16>, vector<16x128xf32> -> vector<16x128xf32>
    %66 = arith.addf %44, %65 : vector<16x128xf32>
    %67 = vector.extract_strided_slice %40 {offsets = [0, 32], sizes = [16, 32], strides = [1, 1]} : vector<16x128xbf16> to vector<16x32xbf16>
    %68 = vector.extract_strided_slice %41 {offsets = [0, 32], sizes = [16, 32], strides = [1, 1]} : vector<16x128xbf16> to vector<16x32xbf16>
    %cst_26 = arith.constant dense<0.000000e+00> : vector<16x16xf32>
    %69 = tpu.matmul %67, %68, %cst_26 {dimension_numbers = #tpu.dot_dimension_numbers<[1], [1], [0], [0], [0, 0, 1, 0], [], []>} : vector<16x32xbf16>, vector<16x32xbf16>, vector<16x16xf32> -> vector<16x16xf32>
    %cst_27 = arith.constant 0.176776692 : f32
    %70 = vector.broadcast %cst_27 : f32 to vector<16x16xf32>
    %71 = arith.mulf %69, %70 : vector<16x16xf32>
    %72 = arith.addf %71, %39 : vector<16x16xf32>
    %cst_28 = arith.constant dense<0xFF800000> : vector<16xf32>
    %73 = vector.multi_reduction <maximumf>, %72, %cst_28 [1] : vector<16x16xf32> to vector<16xf32>
    %74 = vector.shape_cast %73 : vector<16xf32> to vector<16x1xf32>
    %75 = vector.broadcast %74 : vector<16x1xf32> to vector<16x16xf32>
    %76 = arith.subf %72, %75 : vector<16x16xf32>
    %77 = math.exp %76 : vector<16x16xf32>
    %cst_29 = arith.constant dense<0.000000e+00> : vector<16xf32>
    %78 = vector.multi_reduction <add>, %77, %cst_29 [1] : vector<16x16xf32> to vector<16xf32>
    %79 = vector.shape_cast %78 : vector<16xf32> to vector<16x1xf32>
    %80 = vector.broadcast %79 : vector<16x1xf32> to vector<16x16xf32>
    %81 = arith.divf %77, %80 : vector<16x16xf32>
    %82 = arith.truncf %81 : vector<16x16xf32> to vector<16x16xbf16>
    %83 = vector.extract_strided_slice %42 {offsets = [0, 32], sizes = [16, 32], strides = [1, 1]} : vector<16x128xbf16> to vector<16x32xbf16>
    %cst_30 = arith.constant dense<0.000000e+00> : vector<16x32xf32>
    %84 = tpu.matmul %82, %83, %cst_30 {dimension_numbers = #tpu.dot_dimension_numbers<[1], [0], [0], [1], [0, 0, 1, 1], [], []>} : vector<16x16xbf16>, vector<16x32xbf16>, vector<16x32xf32> -> vector<16x32xf32>
    %85 = arith.truncf %84 : vector<16x32xf32> to vector<16x32xbf16>
    %86 = vector.extract_strided_slice %43 {offsets = [32, 0], sizes = [32, 128], strides = [1, 1]} : vector<128x128xbf16> to vector<32x128xbf16>
    %cst_31 = arith.constant dense<0.000000e+00> : vector<16x128xf32>
    %87 = tpu.matmul %85, %86, %cst_31 {dimension_numbers = #tpu.dot_dimension_numbers<[1], [0], [0], [1], [0, 0, 1, 1], [], []>} : vector<16x32xbf16>, vector<32x128xbf16>, vector<16x128xf32> -> vector<16x128xf32>
    %88 = arith.addf %66, %87 : vector<16x128xf32>
    %89 = vector.extract_strided_slice %40 {offsets = [0, 64], sizes = [16, 32], strides = [1, 1]} : vector<16x128xbf16> to vector<16x32xbf16>
    %90 = vector.extract_strided_slice %41 {offsets = [0, 64], sizes = [16, 32], strides = [1, 1]} : vector<16x128xbf16> to vector<16x32xbf16>
    %cst_32 = arith.constant dense<0.000000e+00> : vector<16x16xf32>
    %91 = tpu.matmul %89, %90, %cst_32 {dimension_numbers = #tpu.dot_dimension_numbers<[1], [1], [0], [0], [0, 0, 1, 0], [], []>} : vector<16x32xbf16>, vector<16x32xbf16>, vector<16x16xf32> -> vector<16x16xf32>
    %cst_33 = arith.constant 0.176776692 : f32
    %92 = vector.broadcast %cst_33 : f32 to vector<16x16xf32>
    %93 = arith.mulf %91, %92 : vector<16x16xf32>
    %94 = arith.addf %93, %39 : vector<16x16xf32>
    %cst_34 = arith.constant dense<0xFF800000> : vector<16xf32>
    %95 = vector.multi_reduction <maximumf>, %94, %cst_34 [1] : vector<16x16xf32> to vector<16xf32>
    %96 = vector.shape_cast %95 : vector<16xf32> to vector<16x1xf32>
    %97 = vector.broadcast %96 : vector<16x1xf32> to vector<16x16xf32>
    %98 = arith.subf %94, %97 : vector<16x16xf32>
    %99 = math.exp %98 : vector<16x16xf32>
    %cst_35 = arith.constant dense<0.000000e+00> : vector<16xf32>
    %100 = vector.multi_reduction <add>, %99, %cst_35 [1] : vector<16x16xf32> to vector<16xf32>
    %101 = vector.shape_cast %100 : vector<16xf32> to vector<16x1xf32>
    %102 = vector.broadcast %101 : vector<16x1xf32> to vector<16x16xf32>
    %103 = arith.divf %99, %102 : vector<16x16xf32>
    %104 = arith.truncf %103 : vector<16x16xf32> to vector<16x16xbf16>
    %105 = vector.extract_strided_slice %42 {offsets = [0, 64], sizes = [16, 32], strides = [1, 1]} : vector<16x128xbf16> to vector<16x32xbf16>
    %cst_36 = arith.constant dense<0.000000e+00> : vector<16x32xf32>
    %106 = tpu.matmul %104, %105, %cst_36 {dimension_numbers = #tpu.dot_dimension_numbers<[1], [0], [0], [1], [0, 0, 1, 1], [], []>} : vector<16x16xbf16>, vector<16x32xbf16>, vector<16x32xf32> -> vector<16x32xf32>
    %107 = arith.truncf %106 : vector<16x32xf32> to vector<16x32xbf16>
    %108 = vector.extract_strided_slice %43 {offsets = [64, 0], sizes = [32, 128], strides = [1, 1]} : vector<128x128xbf16> to vector<32x128xbf16>
    %cst_37 = arith.constant dense<0.000000e+00> : vector<16x128xf32>
    %109 = tpu.matmul %107, %108, %cst_37 {dimension_numbers = #tpu.dot_dimension_numbers<[1], [0], [0], [1], [0, 0, 1, 1], [], []>} : vector<16x32xbf16>, vector<32x128xbf16>, vector<16x128xf32> -> vector<16x128xf32>
    %110 = arith.addf %88, %109 : vector<16x128xf32>
    %111 = vector.extract_strided_slice %40 {offsets = [0, 96], sizes = [16, 32], strides = [1, 1]} : vector<16x128xbf16> to vector<16x32xbf16>
    %112 = vector.extract_strided_slice %41 {offsets = [0, 96], sizes = [16, 32], strides = [1, 1]} : vector<16x128xbf16> to vector<16x32xbf16>
    %cst_38 = arith.constant dense<0.000000e+00> : vector<16x16xf32>
    %113 = tpu.matmul %111, %112, %cst_38 {dimension_numbers = #tpu.dot_dimension_numbers<[1], [1], [0], [0], [0, 0, 1, 0], [], []>} : vector<16x32xbf16>, vector<16x32xbf16>, vector<16x16xf32> -> vector<16x16xf32>
    %cst_39 = arith.constant 0.176776692 : f32
    %114 = vector.broadcast %cst_39 : f32 to vector<16x16xf32>
    %115 = arith.mulf %113, %114 : vector<16x16xf32>
    %116 = arith.addf %115, %39 : vector<16x16xf32>
    %cst_40 = arith.constant dense<0xFF800000> : vector<16xf32>
    %117 = vector.multi_reduction <maximumf>, %116, %cst_40 [1] : vector<16x16xf32> to vector<16xf32>
    %118 = vector.shape_cast %117 : vector<16xf32> to vector<16x1xf32>
    %119 = vector.broadcast %118 : vector<16x1xf32> to vector<16x16xf32>
    %120 = arith.subf %116, %119 : vector<16x16xf32>
    %121 = math.exp %120 : vector<16x16xf32>
    %cst_41 = arith.constant dense<0.000000e+00> : vector<16xf32>
    %122 = vector.multi_reduction <add>, %121, %cst_41 [1] : vector<16x16xf32> to vector<16xf32>
    %123 = vector.shape_cast %122 : vector<16xf32> to vector<16x1xf32>
    %124 = vector.broadcast %123 : vector<16x1xf32> to vector<16x16xf32>
    %125 = arith.divf %121, %124 : vector<16x16xf32>
    %126 = arith.truncf %125 : vector<16x16xf32> to vector<16x16xbf16>
    %127 = vector.extract_strided_slice %42 {offsets = [0, 96], sizes = [16, 32], strides = [1, 1]} : vector<16x128xbf16> to vector<16x32xbf16>
    %cst_42 = arith.constant dense<0.000000e+00> : vector<16x32xf32>
    %128 = tpu.matmul %126, %127, %cst_42 {dimension_numbers = #tpu.dot_dimension_numbers<[1], [0], [0], [1], [0, 0, 1, 1], [], []>} : vector<16x16xbf16>, vector<16x32xbf16>, vector<16x32xf32> -> vector<16x32xf32>
    %129 = arith.truncf %128 : vector<16x32xf32> to vector<16x32xbf16>
    %130 = vector.extract_strided_slice %43 {offsets = [96, 0], sizes = [32, 128], strides = [1, 1]} : vector<128x128xbf16> to vector<32x128xbf16>
    %cst_43 = arith.constant dense<0.000000e+00> : vector<16x128xf32>
    %131 = tpu.matmul %129, %130, %cst_43 {dimension_numbers = #tpu.dot_dimension_numbers<[1], [0], [0], [1], [0, 0, 1, 1], [], []>} : vector<16x32xbf16>, vector<32x128xbf16>, vector<16x128xf32> -> vector<16x128xf32>
    %132 = arith.addf %110, %131 : vector<16x128xf32>
    %133 = arith.addf %2, %132 : vector<16x128xf32>
    %c0_44 = arith.constant 0 : index
    %c0_45 = arith.constant 0 : index
    %134 = vector.load %arg8[%c0_44, %c0_45] : memref<1x128xf32, #tpu.memory_space<vmem>>, vector<1x128xf32>
    %135 = vector.broadcast %134 : vector<1x128xf32> to vector<16x128xf32>
    %136 = arith.addf %133, %135 : vector<16x128xf32>
    %137 = arith.truncf %136 : vector<16x128xf32> to vector<16x128xbf16>
    %c0_46 = arith.constant 0 : index
    %c0_47 = arith.constant 0 : index
    %c0_48 = arith.constant 0 : index
    %138 = vector.load %arg9[%c0_46, %c0_47, %c0_48] : memref<1x16x128xbf16, #tpu.memory_space<vmem>>, vector<1x16x128xbf16>
    %139 = vector.shape_cast %138 : vector<1x16x128xbf16> to vector<16x128xbf16>
    %140 = vector.shape_cast %137 : vector<16x128xbf16> to vector<1x16x128xbf16>
    tpu.vector_store %arg9[%c0_46, %c0_47, %c0_48], %140 {strides = array<i32>} : memref<1x16x128xbf16, #tpu.memory_space<vmem>>, vector<1x16x128xbf16>,
    return
  }
  func.func @transform_0(%arg0: i32, %arg1: memref<2xi32, #tpu.memory_space<smem>>) -> (i32, i32, i32) {
    %c0_i32 = arith.constant 0 : i32
    %c0_i32_0 = arith.constant 0 : i32
    %c0_i32_1 = arith.constant 0 : i32
    return %arg0, %c0_i32, %c0_i32_0 : i32, i32, i32
  }
  func.func @transform_1(%arg0: i32, %arg1: memref<2xi32, #tpu.memory_space<smem>>) -> (i32, i32) {
    %c0_i32 = arith.constant 0 : i32
    %c0_i32_0 = arith.constant 0 : i32
    %c0_i32_1 = arith.constant 0 : i32
    return %c0_i32, %c0_i32_0 : i32, i32
  }
  func.func @transform_2(%arg0: i32, %arg1: memref<2xi32, #tpu.memory_space<smem>>) -> (i32, i32) {
    %c0_i32 = arith.constant 0 : i32
    %c0_i32_0 = arith.constant 0 : i32
    %c0_i32_1 = arith.constant 0 : i32
    return %c0_i32, %c0_i32_0 : i32, i32
  }
  func.func @transform_3(%arg0: i32, %arg1: memref<2xi32, #tpu.memory_space<smem>>) -> (i32, i32) {
    %c0_i32 = arith.constant 0 : i32
    %c0_i32_0 = arith.constant 0 : i32
    %c0_i32_1 = arith.constant 0 : i32
    return %c0_i32, %c0_i32_0 : i32, i32
  }
  func.func @transform_4(%arg0: i32, %arg1: memref<2xi32, #tpu.memory_space<smem>>) -> (i32, i32) {
    %c0_i32 = arith.constant 0 : i32
    %c0_i32_0 = arith.constant 0 : i32
    %c0_i32_1 = arith.constant 0 : i32
    return %c0_i32, %c0_i32_0 : i32, i32
  }
  func.func @transform_5(%arg0: i32, %arg1: memref<2xi32, #tpu.memory_space<smem>>) -> (i32, i32) {
    %c0_i32 = arith.constant 0 : i32
    %c0_i32_0 = arith.constant 0 : i32
    %c0_i32_1 = arith.constant 0 : i32
    return %c0_i32, %c0_i32_0 : i32, i32
  }
  func.func @transform_6(%arg0: i32, %arg1: memref<2xi32, #tpu.memory_space<smem>>) -> (i32, i32) {
    %c0_i32 = arith.constant 0 : i32
    %c0_i32_0 = arith.constant 0 : i32
    %c0_i32_1 = arith.constant 0 : i32
    return %c0_i32, %c0_i32_0 : i32, i32
  }
  func.func @transform_7(%arg0: i32, %arg1: memref<2xi32, #tpu.memory_space<smem>>) -> (i32, i32, i32) {
    %c0_i32 = arith.constant 0 : i32
    %c0_i32_0 = arith.constant 0 : i32
    %c0_i32_1 = arith.constant 0 : i32
    return %arg0, %c0_i32, %c0_i32_0 : i32, i32, i32
  }
}

module attributes {stable_mosaic.version = 11 : i64} {
  func.func @fused_cross_attn_kernel(%arg0: i32, %arg1: memref<2xi32, #tpu.memory_space<smem>>, %arg2: memref<1x16x128xbf16, #tpu.memory_space<vmem>>, %arg3: memref<1x16x128xbf16, #tpu.memory_space<vmem>>, %arg4: memref<1x128xf32, #tpu.memory_space<vmem>>, %arg5: memref<1x128xf32, #tpu.memory_space<vmem>>, %arg6: memref<128x128xbf16, #tpu.memory_space<vmem>>, %arg7: memref<1x128xf32, #tpu.memory_space<vmem>>, %arg8: memref<128x256xbf16, #tpu.memory_space<vmem>>, %arg9: memref<1x256xf32, #tpu.memory_space<vmem>>, %arg10: memref<128x128xbf16, #tpu.memory_space<vmem>>, %arg11: memref<1x128xf32, #tpu.memory_space<vmem>>, %arg12: memref<1x16x128xbf16, #tpu.memory_space<vmem>>) attributes {dimension_semantics = [#tpu.dimension_semantics<parallel>], iteration_bounds = array<i64: 2>, scalar_prefetch = 1 : i64, scratch_operands = 0 : i64, tpu.core_type = #tpu.core_type<tc>, window_params = [{transform_indices = @transform_0, window_bounds = array<i64: 1, 16, 128>}, {transform_indices = @transform_1, window_bounds = array<i64: 1, 16, 128>}, {pipeline_mode = #tpu.pipeline_mode<synchronous>, transform_indices = @transform_2, window_bounds = array<i64: 1, 128>}, {pipeline_mode = #tpu.pipeline_mode<synchronous>, transform_indices = @transform_3, window_bounds = array<i64: 1, 128>}, {pipeline_mode = #tpu.pipeline_mode<synchronous>, transform_indices = @transform_4, window_bounds = array<i64: 128, 128>}, {pipeline_mode = #tpu.pipeline_mode<synchronous>, transform_indices = @transform_5, window_bounds = array<i64: 1, 128>}, {pipeline_mode = #tpu.pipeline_mode<synchronous>, transform_indices = @transform_6, window_bounds = array<i64: 128, 256>}, {pipeline_mode = #tpu.pipeline_mode<synchronous>, transform_indices = @transform_7, window_bounds = array<i64: 1, 256>}, {pipeline_mode = #tpu.pipeline_mode<synchronous>, transform_indices = @transform_8, window_bounds = array<i64: 128, 128>}, {pipeline_mode = #tpu.pipeline_mode<synchronous>, transform_indices = @transform_9, window_bounds = array<i64: 1, 128>}, {transform_indices = @transform_10, window_bounds = array<i64: 1, 16, 128>}]} {
    %c0 = arith.constant 0 : index
    %c0_0 = arith.constant 0 : index
    %c0_1 = arith.constant 0 : index
    %0 = vector.load %arg2[%c0, %c0_0, %c0_1] : memref<1x16x128xbf16, #tpu.memory_space<vmem>>, vector<1x16x128xbf16>
    %1 = vector.shape_cast %0 : vector<1x16x128xbf16> to vector<16x128xbf16>
    %2 = arith.extf %1 : vector<16x128xbf16> to vector<16x128xf32>
    %c0_2 = arith.constant 0 : index
    %c0_3 = arith.constant 0 : index
    %c0_4 = arith.constant 0 : index
    %3 = vector.load %arg3[%c0_2, %c0_3, %c0_4] : memref<1x16x128xbf16, #tpu.memory_space<vmem>>, vector<1x16x128xbf16>
    %4 = vector.shape_cast %3 : vector<1x16x128xbf16> to vector<16x128xbf16>
    %c0_5 = arith.constant 0 : index
    %c0_6 = arith.constant 0 : index
    %5 = vector.load %arg4[%c0_5, %c0_6] : memref<1x128xf32, #tpu.memory_space<vmem>>, vector<1x128xf32>
    %c0_7 = arith.constant 0 : index
    %c0_8 = arith.constant 0 : index
    %6 = vector.load %arg5[%c0_7, %c0_8] : memref<1x128xf32, #tpu.memory_space<vmem>>, vector<1x128xf32>
    %cst = arith.constant dense<0.000000e+00> : vector<16xf32>
    %7 = vector.multi_reduction <add>, %2, %cst [1] : vector<16x128xf32> to vector<16xf32>
    %8 = vector.shape_cast %7 : vector<16xf32> to vector<16x1xf32>
    %cst_9 = arith.constant 1.280000e+02 : f32
    %9 = vector.broadcast %cst_9 : f32 to vector<16x1xf32>
    %10 = arith.divf %8, %9 : vector<16x1xf32>
    %11 = vector.broadcast %10 : vector<16x1xf32> to vector<16x128xf32>
    %12 = arith.subf %2, %11 : vector<16x128xf32>
    %13 = arith.mulf %12, %12 : vector<16x128xf32>
    %cst_10 = arith.constant dense<0.000000e+00> : vector<16xf32>
    %14 = vector.multi_reduction <add>, %13, %cst_10 [1] : vector<16x128xf32> to vector<16xf32>
    %15 = vector.shape_cast %14 : vector<16xf32> to vector<16x1xf32>
    %cst_11 = arith.constant 1.280000e+02 : f32
    %16 = vector.broadcast %cst_11 : f32 to vector<16x1xf32>
    %17 = arith.divf %15, %16 : vector<16x1xf32>
    %18 = vector.broadcast %10 : vector<16x1xf32> to vector<16x128xf32>
    %19 = arith.subf %2, %18 : vector<16x128xf32>
    %cst_12 = arith.constant 9.99999997E-7 : f32
    %20 = vector.broadcast %cst_12 : f32 to vector<16x1xf32>
    %21 = arith.addf %17, %20 : vector<16x1xf32>
    %22 = math.rsqrt %21 : vector<16x1xf32>
    %23 = vector.broadcast %22 : vector<16x1xf32> to vector<16x128xf32>
    %24 = arith.mulf %19, %23 : vector<16x128xf32>
    %25 = vector.broadcast %5 : vector<1x128xf32> to vector<16x128xf32>
    %26 = arith.mulf %24, %25 : vector<16x128xf32>
    %27 = vector.broadcast %6 : vector<1x128xf32> to vector<16x128xf32>
    %28 = arith.addf %26, %27 : vector<16x128xf32>
    %29 = arith.truncf %28 : vector<16x128xf32> to vector<16x128xbf16>
    %c0_13 = arith.constant 0 : index
    %c0_14 = arith.constant 0 : index
    %30 = vector.load %arg6[%c0_13, %c0_14] : memref<128x128xbf16, #tpu.memory_space<vmem>>, vector<128x128xbf16>
    %cst_15 = arith.constant dense<0.000000e+00> : vector<16x128xf32>
    %31 = tpu.matmul %29, %30, %cst_15 {dimension_numbers = #tpu.dot_dimension_numbers<[1], [0], [0], [1], [0, 0, 1, 1], [], []>} : vector<16x128xbf16>, vector<128x128xbf16>, vector<16x128xf32> -> vector<16x128xf32>
    %c0_16 = arith.constant 0 : index
    %c0_17 = arith.constant 0 : index
    %32 = vector.load %arg7[%c0_16, %c0_17] : memref<1x128xf32, #tpu.memory_space<vmem>>, vector<1x128xf32>
    %33 = vector.broadcast %32 : vector<1x128xf32> to vector<16x128xf32>
    %34 = arith.addf %31, %33 : vector<16x128xf32>
    %35 = arith.truncf %34 : vector<16x128xf32> to vector<16x128xbf16>
    %c0_18 = arith.constant 0 : index
    %c0_19 = arith.constant 0 : index
    %36 = vector.load %arg8[%c0_18, %c0_19] : memref<128x256xbf16, #tpu.memory_space<vmem>>, vector<128x256xbf16>
    %cst_20 = arith.constant dense<0.000000e+00> : vector<16x256xf32>
    %37 = tpu.matmul %4, %36, %cst_20 {dimension_numbers = #tpu.dot_dimension_numbers<[1], [0], [0], [1], [0, 0, 1, 1], [], []>} : vector<16x128xbf16>, vector<128x256xbf16>, vector<16x256xf32> -> vector<16x256xf32>
    %c0_21 = arith.constant 0 : index
    %c0_22 = arith.constant 0 : index
    %38 = vector.load %arg9[%c0_21, %c0_22] : memref<1x256xf32, #tpu.memory_space<vmem>>, vector<1x256xf32>
    %39 = vector.broadcast %38 : vector<1x256xf32> to vector<16x256xf32>
    %40 = arith.addf %37, %39 : vector<16x256xf32>
    %41 = arith.truncf %40 : vector<16x256xf32> to vector<16x256xbf16>
    %42 = tpu.iota {dimensions = array<i32: 1>} : vector<16x16xi32>
    %43 = arith.index_cast %arg0 : i32 to index
    %44 = memref.load %arg1[%43] : memref<2xi32, #tpu.memory_space<smem>>
    %45 = vector.broadcast %44 : i32 to vector<16x16xi32>
    %46 = arith.cmpi sge, %42, %45 : vector<16x16xi32>
    %cst_23 = arith.constant -1.000000e+30 : f32
    %cst_24 = arith.constant 0.000000e+00 : f32
    %47 = vector.broadcast %cst_23 : f32 to vector<16x16xf32>
    %48 = vector.broadcast %cst_24 : f32 to vector<16x16xf32>
    %49 = arith.select %46, %47, %48 : vector<16x16xi1>, vector<16x16xf32>
    %50 = vector.extract_strided_slice %41 {offsets = [0, 0], sizes = [16, 128], strides = [1, 1]} : vector<16x256xbf16> to vector<16x128xbf16>
    %51 = vector.extract_strided_slice %41 {offsets = [0, 128], sizes = [16, 128], strides = [1, 1]} : vector<16x256xbf16> to vector<16x128xbf16>
    %c0_25 = arith.constant 0 : index
    %c0_26 = arith.constant 0 : index
    %52 = vector.load %arg10[%c0_25, %c0_26] : memref<128x128xbf16, #tpu.memory_space<vmem>>, vector<128x128xbf16>
    %cst_27 = arith.constant 0.000000e+00 : f32
    %53 = vector.broadcast %cst_27 : f32 to vector<16x128xf32>
    %54 = vector.extract_strided_slice %35 {offsets = [0, 0], sizes = [16, 32], strides = [1, 1]} : vector<16x128xbf16> to vector<16x32xbf16>
    %55 = vector.extract_strided_slice %50 {offsets = [0, 0], sizes = [16, 32], strides = [1, 1]} : vector<16x128xbf16> to vector<16x32xbf16>
    %cst_28 = arith.constant dense<0.000000e+00> : vector<16x16xf32>
    %56 = tpu.matmul %54, %55, %cst_28 {dimension_numbers = #tpu.dot_dimension_numbers<[1], [1], [0], [0], [0, 0, 1, 0], [], []>} : vector<16x32xbf16>, vector<16x32xbf16>, vector<16x16xf32> -> vector<16x16xf32>
    %cst_29 = arith.constant 0.176776692 : f32
    %57 = vector.broadcast %cst_29 : f32 to vector<16x16xf32>
    %58 = arith.mulf %56, %57 : vector<16x16xf32>
    %59 = arith.addf %58, %49 : vector<16x16xf32>
    %cst_30 = arith.constant dense<0xFF800000> : vector<16xf32>
    %60 = vector.multi_reduction <maximumf>, %59, %cst_30 [1] : vector<16x16xf32> to vector<16xf32>
    %61 = vector.shape_cast %60 : vector<16xf32> to vector<16x1xf32>
    %62 = vector.broadcast %61 : vector<16x1xf32> to vector<16x16xf32>
    %63 = arith.subf %59, %62 : vector<16x16xf32>
    %64 = math.exp %63 : vector<16x16xf32>
    %cst_31 = arith.constant dense<0.000000e+00> : vector<16xf32>
    %65 = vector.multi_reduction <add>, %64, %cst_31 [1] : vector<16x16xf32> to vector<16xf32>
    %66 = vector.shape_cast %65 : vector<16xf32> to vector<16x1xf32>
    %67 = vector.broadcast %66 : vector<16x1xf32> to vector<16x16xf32>
    %68 = arith.divf %64, %67 : vector<16x16xf32>
    %69 = arith.truncf %68 : vector<16x16xf32> to vector<16x16xbf16>
    %70 = vector.extract_strided_slice %51 {offsets = [0, 0], sizes = [16, 32], strides = [1, 1]} : vector<16x128xbf16> to vector<16x32xbf16>
    %cst_32 = arith.constant dense<0.000000e+00> : vector<16x32xf32>
    %71 = tpu.matmul %69, %70, %cst_32 {dimension_numbers = #tpu.dot_dimension_numbers<[1], [0], [0], [1], [0, 0, 1, 1], [], []>} : vector<16x16xbf16>, vector<16x32xbf16>, vector<16x32xf32> -> vector<16x32xf32>
    %72 = arith.truncf %71 : vector<16x32xf32> to vector<16x32xbf16>
    %73 = vector.extract_strided_slice %52 {offsets = [0, 0], sizes = [32, 128], strides = [1, 1]} : vector<128x128xbf16> to vector<32x128xbf16>
    %cst_33 = arith.constant dense<0.000000e+00> : vector<16x128xf32>
    %74 = tpu.matmul %72, %73, %cst_33 {dimension_numbers = #tpu.dot_dimension_numbers<[1], [0], [0], [1], [0, 0, 1, 1], [], []>} : vector<16x32xbf16>, vector<32x128xbf16>, vector<16x128xf32> -> vector<16x128xf32>
    %75 = arith.addf %53, %74 : vector<16x128xf32>
    %76 = vector.extract_strided_slice %35 {offsets = [0, 32], sizes = [16, 32], strides = [1, 1]} : vector<16x128xbf16> to vector<16x32xbf16>
    %77 = vector.extract_strided_slice %50 {offsets = [0, 32], sizes = [16, 32], strides = [1, 1]} : vector<16x128xbf16> to vector<16x32xbf16>
    %cst_34 = arith.constant dense<0.000000e+00> : vector<16x16xf32>
    %78 = tpu.matmul %76, %77, %cst_34 {dimension_numbers = #tpu.dot_dimension_numbers<[1], [1], [0], [0], [0, 0, 1, 0], [], []>} : vector<16x32xbf16>, vector<16x32xbf16>, vector<16x16xf32> -> vector<16x16xf32>
    %cst_35 = arith.constant 0.176776692 : f32
    %79 = vector.broadcast %cst_35 : f32 to vector<16x16xf32>
    %80 = arith.mulf %78, %79 : vector<16x16xf32>
    %81 = arith.addf %80, %49 : vector<16x16xf32>
    %cst_36 = arith.constant dense<0xFF800000> : vector<16xf32>
    %82 = vector.multi_reduction <maximumf>, %81, %cst_36 [1] : vector<16x16xf32> to vector<16xf32>
    %83 = vector.shape_cast %82 : vector<16xf32> to vector<16x1xf32>
    %84 = vector.broadcast %83 : vector<16x1xf32> to vector<16x16xf32>
    %85 = arith.subf %81, %84 : vector<16x16xf32>
    %86 = math.exp %85 : vector<16x16xf32>
    %cst_37 = arith.constant dense<0.000000e+00> : vector<16xf32>
    %87 = vector.multi_reduction <add>, %86, %cst_37 [1] : vector<16x16xf32> to vector<16xf32>
    %88 = vector.shape_cast %87 : vector<16xf32> to vector<16x1xf32>
    %89 = vector.broadcast %88 : vector<16x1xf32> to vector<16x16xf32>
    %90 = arith.divf %86, %89 : vector<16x16xf32>
    %91 = arith.truncf %90 : vector<16x16xf32> to vector<16x16xbf16>
    %92 = vector.extract_strided_slice %51 {offsets = [0, 32], sizes = [16, 32], strides = [1, 1]} : vector<16x128xbf16> to vector<16x32xbf16>
    %cst_38 = arith.constant dense<0.000000e+00> : vector<16x32xf32>
    %93 = tpu.matmul %91, %92, %cst_38 {dimension_numbers = #tpu.dot_dimension_numbers<[1], [0], [0], [1], [0, 0, 1, 1], [], []>} : vector<16x16xbf16>, vector<16x32xbf16>, vector<16x32xf32> -> vector<16x32xf32>
    %94 = arith.truncf %93 : vector<16x32xf32> to vector<16x32xbf16>
    %95 = vector.extract_strided_slice %52 {offsets = [32, 0], sizes = [32, 128], strides = [1, 1]} : vector<128x128xbf16> to vector<32x128xbf16>
    %cst_39 = arith.constant dense<0.000000e+00> : vector<16x128xf32>
    %96 = tpu.matmul %94, %95, %cst_39 {dimension_numbers = #tpu.dot_dimension_numbers<[1], [0], [0], [1], [0, 0, 1, 1], [], []>} : vector<16x32xbf16>, vector<32x128xbf16>, vector<16x128xf32> -> vector<16x128xf32>
    %97 = arith.addf %75, %96 : vector<16x128xf32>
    %98 = vector.extract_strided_slice %35 {offsets = [0, 64], sizes = [16, 32], strides = [1, 1]} : vector<16x128xbf16> to vector<16x32xbf16>
    %99 = vector.extract_strided_slice %50 {offsets = [0, 64], sizes = [16, 32], strides = [1, 1]} : vector<16x128xbf16> to vector<16x32xbf16>
    %cst_40 = arith.constant dense<0.000000e+00> : vector<16x16xf32>
    %100 = tpu.matmul %98, %99, %cst_40 {dimension_numbers = #tpu.dot_dimension_numbers<[1], [1], [0], [0], [0, 0, 1, 0], [], []>} : vector<16x32xbf16>, vector<16x32xbf16>, vector<16x16xf32> -> vector<16x16xf32>
    %cst_41 = arith.constant 0.176776692 : f32
    %101 = vector.broadcast %cst_41 : f32 to vector<16x16xf32>
    %102 = arith.mulf %100, %101 : vector<16x16xf32>
    %103 = arith.addf %102, %49 : vector<16x16xf32>
    %cst_42 = arith.constant dense<0xFF800000> : vector<16xf32>
    %104 = vector.multi_reduction <maximumf>, %103, %cst_42 [1] : vector<16x16xf32> to vector<16xf32>
    %105 = vector.shape_cast %104 : vector<16xf32> to vector<16x1xf32>
    %106 = vector.broadcast %105 : vector<16x1xf32> to vector<16x16xf32>
    %107 = arith.subf %103, %106 : vector<16x16xf32>
    %108 = math.exp %107 : vector<16x16xf32>
    %cst_43 = arith.constant dense<0.000000e+00> : vector<16xf32>
    %109 = vector.multi_reduction <add>, %108, %cst_43 [1] : vector<16x16xf32> to vector<16xf32>
    %110 = vector.shape_cast %109 : vector<16xf32> to vector<16x1xf32>
    %111 = vector.broadcast %110 : vector<16x1xf32> to vector<16x16xf32>
    %112 = arith.divf %108, %111 : vector<16x16xf32>
    %113 = arith.truncf %112 : vector<16x16xf32> to vector<16x16xbf16>
    %114 = vector.extract_strided_slice %51 {offsets = [0, 64], sizes = [16, 32], strides = [1, 1]} : vector<16x128xbf16> to vector<16x32xbf16>
    %cst_44 = arith.constant dense<0.000000e+00> : vector<16x32xf32>
    %115 = tpu.matmul %113, %114, %cst_44 {dimension_numbers = #tpu.dot_dimension_numbers<[1], [0], [0], [1], [0, 0, 1, 1], [], []>} : vector<16x16xbf16>, vector<16x32xbf16>, vector<16x32xf32> -> vector<16x32xf32>
    %116 = arith.truncf %115 : vector<16x32xf32> to vector<16x32xbf16>
    %117 = vector.extract_strided_slice %52 {offsets = [64, 0], sizes = [32, 128], strides = [1, 1]} : vector<128x128xbf16> to vector<32x128xbf16>
    %cst_45 = arith.constant dense<0.000000e+00> : vector<16x128xf32>
    %118 = tpu.matmul %116, %117, %cst_45 {dimension_numbers = #tpu.dot_dimension_numbers<[1], [0], [0], [1], [0, 0, 1, 1], [], []>} : vector<16x32xbf16>, vector<32x128xbf16>, vector<16x128xf32> -> vector<16x128xf32>
    %119 = arith.addf %97, %118 : vector<16x128xf32>
    %120 = vector.extract_strided_slice %35 {offsets = [0, 96], sizes = [16, 32], strides = [1, 1]} : vector<16x128xbf16> to vector<16x32xbf16>
    %121 = vector.extract_strided_slice %50 {offsets = [0, 96], sizes = [16, 32], strides = [1, 1]} : vector<16x128xbf16> to vector<16x32xbf16>
    %cst_46 = arith.constant dense<0.000000e+00> : vector<16x16xf32>
    %122 = tpu.matmul %120, %121, %cst_46 {dimension_numbers = #tpu.dot_dimension_numbers<[1], [1], [0], [0], [0, 0, 1, 0], [], []>} : vector<16x32xbf16>, vector<16x32xbf16>, vector<16x16xf32> -> vector<16x16xf32>
    %cst_47 = arith.constant 0.176776692 : f32
    %123 = vector.broadcast %cst_47 : f32 to vector<16x16xf32>
    %124 = arith.mulf %122, %123 : vector<16x16xf32>
    %125 = arith.addf %124, %49 : vector<16x16xf32>
    %cst_48 = arith.constant dense<0xFF800000> : vector<16xf32>
    %126 = vector.multi_reduction <maximumf>, %125, %cst_48 [1] : vector<16x16xf32> to vector<16xf32>
    %127 = vector.shape_cast %126 : vector<16xf32> to vector<16x1xf32>
    %128 = vector.broadcast %127 : vector<16x1xf32> to vector<16x16xf32>
    %129 = arith.subf %125, %128 : vector<16x16xf32>
    %130 = math.exp %129 : vector<16x16xf32>
    %cst_49 = arith.constant dense<0.000000e+00> : vector<16xf32>
    %131 = vector.multi_reduction <add>, %130, %cst_49 [1] : vector<16x16xf32> to vector<16xf32>
    %132 = vector.shape_cast %131 : vector<16xf32> to vector<16x1xf32>
    %133 = vector.broadcast %132 : vector<16x1xf32> to vector<16x16xf32>
    %134 = arith.divf %130, %133 : vector<16x16xf32>
    %135 = arith.truncf %134 : vector<16x16xf32> to vector<16x16xbf16>
    %136 = vector.extract_strided_slice %51 {offsets = [0, 96], sizes = [16, 32], strides = [1, 1]} : vector<16x128xbf16> to vector<16x32xbf16>
    %cst_50 = arith.constant dense<0.000000e+00> : vector<16x32xf32>
    %137 = tpu.matmul %135, %136, %cst_50 {dimension_numbers = #tpu.dot_dimension_numbers<[1], [0], [0], [1], [0, 0, 1, 1], [], []>} : vector<16x16xbf16>, vector<16x32xbf16>, vector<16x32xf32> -> vector<16x32xf32>
    %138 = arith.truncf %137 : vector<16x32xf32> to vector<16x32xbf16>
    %139 = vector.extract_strided_slice %52 {offsets = [96, 0], sizes = [32, 128], strides = [1, 1]} : vector<128x128xbf16> to vector<32x128xbf16>
    %cst_51 = arith.constant dense<0.000000e+00> : vector<16x128xf32>
    %140 = tpu.matmul %138, %139, %cst_51 {dimension_numbers = #tpu.dot_dimension_numbers<[1], [0], [0], [1], [0, 0, 1, 1], [], []>} : vector<16x32xbf16>, vector<32x128xbf16>, vector<16x128xf32> -> vector<16x128xf32>
    %141 = arith.addf %119, %140 : vector<16x128xf32>
    %142 = arith.addf %2, %141 : vector<16x128xf32>
    %c0_52 = arith.constant 0 : index
    %c0_53 = arith.constant 0 : index
    %143 = vector.load %arg11[%c0_52, %c0_53] : memref<1x128xf32, #tpu.memory_space<vmem>>, vector<1x128xf32>
    %144 = vector.broadcast %143 : vector<1x128xf32> to vector<16x128xf32>
    %145 = arith.addf %142, %144 : vector<16x128xf32>
    %146 = arith.truncf %145 : vector<16x128xf32> to vector<16x128xbf16>
    %c0_54 = arith.constant 0 : index
    %c0_55 = arith.constant 0 : index
    %c0_56 = arith.constant 0 : index
    %147 = vector.load %arg12[%c0_54, %c0_55, %c0_56] : memref<1x16x128xbf16, #tpu.memory_space<vmem>>, vector<1x16x128xbf16>
    %148 = vector.shape_cast %147 : vector<1x16x128xbf16> to vector<16x128xbf16>
    %149 = vector.shape_cast %146 : vector<16x128xbf16> to vector<1x16x128xbf16>
    tpu.vector_store %arg12[%c0_54, %c0_55, %c0_56], %149 {strides = array<i32>} : memref<1x16x128xbf16, #tpu.memory_space<vmem>>, vector<1x16x128xbf16>,
    return
  }
  func.func @transform_0(%arg0: i32, %arg1: memref<2xi32, #tpu.memory_space<smem>>) -> (i32, i32, i32) {
    %c0_i32 = arith.constant 0 : i32
    %c0_i32_0 = arith.constant 0 : i32
    %c0_i32_1 = arith.constant 0 : i32
    return %arg0, %c0_i32, %c0_i32_0 : i32, i32, i32
  }
  func.func @transform_1(%arg0: i32, %arg1: memref<2xi32, #tpu.memory_space<smem>>) -> (i32, i32, i32) {
    %c0_i32 = arith.constant 0 : i32
    %c0_i32_0 = arith.constant 0 : i32
    %c0_i32_1 = arith.constant 0 : i32
    return %arg0, %c0_i32, %c0_i32_0 : i32, i32, i32
  }
  func.func @transform_2(%arg0: i32, %arg1: memref<2xi32, #tpu.memory_space<smem>>) -> (i32, i32) {
    %c0_i32 = arith.constant 0 : i32
    %c0_i32_0 = arith.constant 0 : i32
    %c0_i32_1 = arith.constant 0 : i32
    return %c0_i32, %c0_i32_0 : i32, i32
  }
  func.func @transform_3(%arg0: i32, %arg1: memref<2xi32, #tpu.memory_space<smem>>) -> (i32, i32) {
    %c0_i32 = arith.constant 0 : i32
    %c0_i32_0 = arith.constant 0 : i32
    %c0_i32_1 = arith.constant 0 : i32
    return %c0_i32, %c0_i32_0 : i32, i32
  }
  func.func @transform_4(%arg0: i32, %arg1: memref<2xi32, #tpu.memory_space<smem>>) -> (i32, i32) {
    %c0_i32 = arith.constant 0 : i32
    %c0_i32_0 = arith.constant 0 : i32
    %c0_i32_1 = arith.constant 0 : i32
    return %c0_i32, %c0_i32_0 : i32, i32
  }
  func.func @transform_5(%arg0: i32, %arg1: memref<2xi32, #tpu.memory_space<smem>>) -> (i32, i32) {
    %c0_i32 = arith.constant 0 : i32
    %c0_i32_0 = arith.constant 0 : i32
    %c0_i32_1 = arith.constant 0 : i32
    return %c0_i32, %c0_i32_0 : i32, i32
  }
  func.func @transform_6(%arg0: i32, %arg1: memref<2xi32, #tpu.memory_space<smem>>) -> (i32, i32) {
    %c0_i32 = arith.constant 0 : i32
    %c0_i32_0 = arith.constant 0 : i32
    %c0_i32_1 = arith.constant 0 : i32
    return %c0_i32, %c0_i32_0 : i32, i32
  }
  func.func @transform_7(%arg0: i32, %arg1: memref<2xi32, #tpu.memory_space<smem>>) -> (i32, i32) {
    %c0_i32 = arith.constant 0 : i32
    %c0_i32_0 = arith.constant 0 : i32
    %c0_i32_1 = arith.constant 0 : i32
    return %c0_i32, %c0_i32_0 : i32, i32
  }
  func.func @transform_8(%arg0: i32, %arg1: memref<2xi32, #tpu.memory_space<smem>>) -> (i32, i32) {
    %c0_i32 = arith.constant 0 : i32
    %c0_i32_0 = arith.constant 0 : i32
    %c0_i32_1 = arith.constant 0 : i32
    return %c0_i32, %c0_i32_0 : i32, i32
  }
  func.func @transform_9(%arg0: i32, %arg1: memref<2xi32, #tpu.memory_space<smem>>) -> (i32, i32) {
    %c0_i32 = arith.constant 0 : i32
    %c0_i32_0 = arith.constant 0 : i32
    %c0_i32_1 = arith.constant 0 : i32
    return %c0_i32, %c0_i32_0 : i32, i32
  }
  func.func @transform_10(%arg0: i32, %arg1: memref<2xi32, #tpu.memory_space<smem>>) -> (i32, i32, i32) {
    %c0_i32 = arith.constant 0 : i32
    %c0_i32_0 = arith.constant 0 : i32
    %c0_i32_1 = arith.constant 0 : i32
    return %arg0, %c0_i32, %c0_i32_0 : i32, i32, i32
  }
}

module attributes {stable_mosaic.version = 11 : i64} {
  func.func @gen_lse_kernel(%arg0: i32, %arg1: i32, %arg2: memref<16x128xbf16, #tpu.memory_space<vmem>>, %arg3: memref<1x128xf32, #tpu.memory_space<vmem>>, %arg4: memref<1x128xf32, #tpu.memory_space<vmem>>, %arg5: memref<128x128xbf16, #tpu.memory_space<vmem>>, %arg6: memref<16x1xf32, #tpu.memory_space<vmem>>, %arg7: memref<16x128xbf16, #tpu.memory_space<vmem>>, %arg8: memref<16x1xf32, #tpu.memory_space<vmem>>, %arg9: memref<16x1xf32, #tpu.memory_space<vmem>>) attributes {dimension_semantics = [#tpu.dimension_semantics<parallel>, #tpu.dimension_semantics<arbitrary>], iteration_bounds = array<i64: 2, 2>, scalar_prefetch = 0 : i64, scratch_operands = 3 : i64, tpu.core_type = #tpu.core_type<tc>, window_params = [{transform_indices = @transform_0, window_bounds = array<i64: 16, 128>}, {pipeline_mode = #tpu.pipeline_mode<synchronous>, transform_indices = @transform_1, window_bounds = array<i64: 1, 128>}, {pipeline_mode = #tpu.pipeline_mode<synchronous>, transform_indices = @transform_2, window_bounds = array<i64: 1, 128>}, {transform_indices = @transform_3, window_bounds = array<i64: 128, 128>}, {transform_indices = @transform_4, window_bounds = array<i64: 16, 1>}]} {
    %c0_i32 = arith.constant 0 : i32
    %0 = arith.cmpi eq, %arg1, %c0_i32 : i32
    %1 = arith.extui %0 : i1 to i32
    %c0_i32_0 = arith.constant 0 : i32
    %2 = arith.cmpi ne, %1, %c0_i32_0 : i32
    scf.if %2 {
      %c0_17 = arith.constant 0 : index
      %c0_18 = arith.constant 0 : index
      %26 = vector.load %arg2[%c0_17, %c0_18] : memref<16x128xbf16, #tpu.memory_space<vmem>>, vector<16x128xbf16>
      %c0_19 = arith.constant 0 : index
      %c0_20 = arith.constant 0 : index
      %27 = vector.load %arg3[%c0_19, %c0_20] : memref<1x128xf32, #tpu.memory_space<vmem>>, vector<1x128xf32>
      %c0_21 = arith.constant 0 : index
      %c0_22 = arith.constant 0 : index
      %28 = vector.load %arg4[%c0_21, %c0_22] : memref<1x128xf32, #tpu.memory_space<vmem>>, vector<1x128xf32>
      %29 = arith.extf %26 : vector<16x128xbf16> to vector<16x128xf32>
      %cst_23 = arith.constant dense<0.000000e+00> : vector<16xf32>
      %30 = vector.multi_reduction <add>, %29, %cst_23 [1] : vector<16x128xf32> to vector<16xf32>
      %31 = vector.shape_cast %30 : vector<16xf32> to vector<16x1xf32>
      %cst_24 = arith.constant 1.280000e+02 : f32
      %32 = vector.broadcast %cst_24 : f32 to vector<16x1xf32>
      %33 = arith.divf %31, %32 : vector<16x1xf32>
      %34 = vector.broadcast %33 : vector<16x1xf32> to vector<16x128xf32>
      %35 = arith.subf %29, %34 : vector<16x128xf32>
      %36 = arith.mulf %35, %35 : vector<16x128xf32>
      %cst_25 = arith.constant dense<0.000000e+00> : vector<16xf32>
      %37 = vector.multi_reduction <add>, %36, %cst_25 [1] : vector<16x128xf32> to vector<16xf32>
      %38 = vector.shape_cast %37 : vector<16xf32> to vector<16x1xf32>
      %cst_26 = arith.constant 1.280000e+02 : f32
      %39 = vector.broadcast %cst_26 : f32 to vector<16x1xf32>
      %40 = arith.divf %38, %39 : vector<16x1xf32>
      %41 = vector.broadcast %33 : vector<16x1xf32> to vector<16x128xf32>
      %42 = arith.subf %29, %41 : vector<16x128xf32>
      %cst_27 = arith.constant 9.99999997E-7 : f32
      %43 = vector.broadcast %cst_27 : f32 to vector<16x1xf32>
      %44 = arith.addf %40, %43 : vector<16x1xf32>
      %45 = math.rsqrt %44 : vector<16x1xf32>
      %46 = vector.broadcast %45 : vector<16x1xf32> to vector<16x128xf32>
      %47 = arith.mulf %42, %46 : vector<16x128xf32>
      %48 = vector.broadcast %27 : vector<1x128xf32> to vector<16x128xf32>
      %49 = arith.mulf %47, %48 : vector<16x128xf32>
      %50 = vector.broadcast %28 : vector<1x128xf32> to vector<16x128xf32>
      %51 = arith.addf %49, %50 : vector<16x128xf32>
      %52 = arith.truncf %51 : vector<16x128xf32> to vector<16x128xbf16>
      %c0_28 = arith.constant 0 : index
      %c0_29 = arith.constant 0 : index
      %53 = vector.load %arg7[%c0_28, %c0_29] : memref<16x128xbf16, #tpu.memory_space<vmem>>, vector<16x128xbf16>
      tpu.vector_store %arg7[%c0_28, %c0_29], %52 {strides = array<i32>} : memref<16x128xbf16, #tpu.memory_space<vmem>>, vector<16x128xbf16>,
      %cst_30 = arith.constant 0xFF800000 : f32
      %54 = vector.broadcast %cst_30 : f32 to vector<16x1xf32>
      %c0_31 = arith.constant 0 : index
      %c0_32 = arith.constant 0 : index
      %55 = vector.load %arg8[%c0_31, %c0_32] : memref<16x1xf32, #tpu.memory_space<vmem>>, vector<16x1xf32>
      tpu.vector_store %arg8[%c0_31, %c0_32], %54 {strides = array<i32>} : memref<16x1xf32, #tpu.memory_space<vmem>>, vector<16x1xf32>,
      %cst_33 = arith.constant 0.000000e+00 : f32
      %56 = vector.broadcast %cst_33 : f32 to vector<16x1xf32>
      %c0_34 = arith.constant 0 : index
      %c0_35 = arith.constant 0 : index
      %57 = vector.load %arg9[%c0_34, %c0_35] : memref<16x1xf32, #tpu.memory_space<vmem>>, vector<16x1xf32>
      tpu.vector_store %arg9[%c0_34, %c0_35], %56 {strides = array<i32>} : memref<16x1xf32, #tpu.memory_space<vmem>>, vector<16x1xf32>,
    } else {
    }
    %c0 = arith.constant 0 : index
    %c0_1 = arith.constant 0 : index
    %3 = vector.load %arg7[%c0, %c0_1] : memref<16x128xbf16, #tpu.memory_space<vmem>>, vector<16x128xbf16>
    %c0_2 = arith.constant 0 : index
    %c0_3 = arith.constant 0 : index
    %4 = vector.load %arg5[%c0_2, %c0_3] : memref<128x128xbf16, #tpu.memory_space<vmem>>, vector<128x128xbf16>
    %cst = arith.constant dense<0.000000e+00> : vector<16x128xf32>
    %5 = tpu.matmul %3, %4, %cst {dimension_numbers = #tpu.dot_dimension_numbers<[1], [1], [0], [0], [0, 0, 1, 0], [], []>} : vector<16x128xbf16>, vector<128x128xbf16>, vector<16x128xf32> -> vector<16x128xf32>
    %c0_4 = arith.constant 0 : index
    %c0_5 = arith.constant 0 : index
    %6 = vector.load %arg8[%c0_4, %c0_5] : memref<16x1xf32, #tpu.memory_space<vmem>>, vector<16x1xf32>
    %cst_6 = arith.constant dense<0xFF800000> : vector<16xf32>
    %7 = vector.multi_reduction <maximumf>, %5, %cst_6 [1] : vector<16x128xf32> to vector<16xf32>
    %8 = vector.shape_cast %7 : vector<16xf32> to vector<16x1xf32>
    %9 = arith.maximumf %6, %8 : vector<16x1xf32>
    %c0_7 = arith.constant 0 : index
    %c0_8 = arith.constant 0 : index
    %10 = vector.load %arg9[%c0_7, %c0_8] : memref<16x1xf32, #tpu.memory_space<vmem>>, vector<16x1xf32>
    %c0_9 = arith.constant 0 : index
    %c0_10 = arith.constant 0 : index
    %11 = vector.load %arg8[%c0_9, %c0_10] : memref<16x1xf32, #tpu.memory_space<vmem>>, vector<16x1xf32>
    %12 = arith.subf %11, %9 : vector<16x1xf32>
    %13 = math.exp %12 : vector<16x1xf32>
    %14 = arith.mulf %10, %13 : vector<16x1xf32>
    %15 = vector.broadcast %9 : vector<16x1xf32> to vector<16x128xf32>
    %16 = arith.subf %5, %15 : vector<16x128xf32>
    %17 = math.exp %16 : vector<16x128xf32>
    %cst_11 = arith.constant dense<0.000000e+00> : vector<16xf32>
    %18 = vector.multi_reduction <add>, %17, %cst_11 [1] : vector<16x128xf32> to vector<16xf32>
    %19 = vector.shape_cast %18 : vector<16xf32> to vector<16x1xf32>
    %20 = arith.addf %14, %19 : vector<16x1xf32>
    %c0_12 = arith.constant 0 : index
    %c0_13 = arith.constant 0 : index
    %21 = vector.load %arg9[%c0_12, %c0_13] : memref<16x1xf32, #tpu.memory_space<vmem>>, vector<16x1xf32>
    tpu.vector_store %arg9[%c0_12, %c0_13], %20 {strides = array<i32>} : memref<16x1xf32, #tpu.memory_space<vmem>>, vector<16x1xf32>,
    %c0_14 = arith.constant 0 : index
    %c0_15 = arith.constant 0 : index
    %22 = vector.load %arg8[%c0_14, %c0_15] : memref<16x1xf32, #tpu.memory_space<vmem>>, vector<16x1xf32>
    tpu.vector_store %arg8[%c0_14, %c0_15], %9 {strides = array<i32>} : memref<16x1xf32, #tpu.memory_space<vmem>>, vector<16x1xf32>,
    %c1_i32 = arith.constant 1 : i32
    %23 = arith.cmpi eq, %arg1, %c1_i32 : i32
    %24 = arith.extui %23 : i1 to i32
    %c0_i32_16 = arith.constant 0 : i32
    %25 = arith.cmpi ne, %24, %c0_i32_16 : i32
    scf.if %25 {
      %c0_17 = arith.constant 0 : index
      %c0_18 = arith.constant 0 : index
      %26 = vector.load %arg8[%c0_17, %c0_18] : memref<16x1xf32, #tpu.memory_space<vmem>>, vector<16x1xf32>
      %c0_19 = arith.constant 0 : index
      %c0_20 = arith.constant 0 : index
      %27 = vector.load %arg9[%c0_19, %c0_20] : memref<16x1xf32, #tpu.memory_space<vmem>>, vector<16x1xf32>
      %28 = math.log %27 : vector<16x1xf32>
      %29 = arith.addf %26, %28 : vector<16x1xf32>
      %c0_21 = arith.constant 0 : index
      %c0_22 = arith.constant 0 : index
      %30 = vector.load %arg6[%c0_21, %c0_22] : memref<16x1xf32, #tpu.memory_space<vmem>>, vector<16x1xf32>
      tpu.vector_store %arg6[%c0_21, %c0_22], %29 {strides = array<i32>} : memref<16x1xf32, #tpu.memory_space<vmem>>, vector<16x1xf32>,
    } else {
    }
    return
  }
  func.func @transform_0(%arg0: i32, %arg1: i32) -> (i32, i32) {
    %c0_i32 = arith.constant 0 : i32
    %c0_i32_0 = arith.constant 0 : i32
    return %arg0, %c0_i32 : i32, i32
  }
  func.func @transform_1(%arg0: i32, %arg1: i32) -> (i32, i32) {
    %c0_i32 = arith.constant 0 : i32
    %c0_i32_0 = arith.constant 0 : i32
    %c0_i32_1 = arith.constant 0 : i32
    return %c0_i32, %c0_i32_0 : i32, i32
  }
  func.func @transform_2(%arg0: i32, %arg1: i32) -> (i32, i32) {
    %c0_i32 = arith.constant 0 : i32
    %c0_i32_0 = arith.constant 0 : i32
    %c0_i32_1 = arith.constant 0 : i32
    return %c0_i32, %c0_i32_0 : i32, i32
  }
  func.func @transform_3(%arg0: i32, %arg1: i32) -> (i32, i32) {
    %c0_i32 = arith.constant 0 : i32
    %c0_i32_0 = arith.constant 0 : i32
    return %arg1, %c0_i32 : i32, i32
  }
  func.func @transform_4(%arg0: i32, %arg1: i32) -> (i32, i32) {
    %c0_i32 = arith.constant 0 : i32
    %c0_i32_0 = arith.constant 0 : i32
    return %arg0, %c0_i32 : i32, i32
  }
}

module attributes {stable_mosaic.version = 11 : i64} {
  func.func @gen_logp_kernel(%arg0: i32, %arg1: i32, %arg2: memref<16x128xbf16, #tpu.memory_space<vmem>>, %arg3: memref<1x128xf32, #tpu.memory_space<vmem>>, %arg4: memref<1x128xf32, #tpu.memory_space<vmem>>, %arg5: memref<128x128xbf16, #tpu.memory_space<vmem>>, %arg6: memref<16x1xf32, #tpu.memory_space<vmem>>, %arg7: memref<16x128xf32, #tpu.memory_space<vmem>>) attributes {dimension_semantics = [#tpu.dimension_semantics<parallel>, #tpu.dimension_semantics<parallel>], iteration_bounds = array<i64: 2, 2>, scalar_prefetch = 0 : i64, scratch_operands = 0 : i64, tpu.core_type = #tpu.core_type<tc>, window_params = [{transform_indices = @transform_0, window_bounds = array<i64: 16, 128>}, {pipeline_mode = #tpu.pipeline_mode<synchronous>, transform_indices = @transform_1, window_bounds = array<i64: 1, 128>}, {pipeline_mode = #tpu.pipeline_mode<synchronous>, transform_indices = @transform_2, window_bounds = array<i64: 1, 128>}, {transform_indices = @transform_3, window_bounds = array<i64: 128, 128>}, {transform_indices = @transform_4, window_bounds = array<i64: 16, 1>}, {transform_indices = @transform_5, window_bounds = array<i64: 16, 128>}]} {
    %c0 = arith.constant 0 : index
    %c0_0 = arith.constant 0 : index
    %0 = vector.load %arg2[%c0, %c0_0] : memref<16x128xbf16, #tpu.memory_space<vmem>>, vector<16x128xbf16>
    %c0_1 = arith.constant 0 : index
    %c0_2 = arith.constant 0 : index
    %1 = vector.load %arg3[%c0_1, %c0_2] : memref<1x128xf32, #tpu.memory_space<vmem>>, vector<1x128xf32>
    %c0_3 = arith.constant 0 : index
    %c0_4 = arith.constant 0 : index
    %2 = vector.load %arg4[%c0_3, %c0_4] : memref<1x128xf32, #tpu.memory_space<vmem>>, vector<1x128xf32>
    %3 = arith.extf %0 : vector<16x128xbf16> to vector<16x128xf32>
    %cst = arith.constant dense<0.000000e+00> : vector<16xf32>
    %4 = vector.multi_reduction <add>, %3, %cst [1] : vector<16x128xf32> to vector<16xf32>
    %5 = vector.shape_cast %4 : vector<16xf32> to vector<16x1xf32>
    %cst_5 = arith.constant 1.280000e+02 : f32
    %6 = vector.broadcast %cst_5 : f32 to vector<16x1xf32>
    %7 = arith.divf %5, %6 : vector<16x1xf32>
    %8 = vector.broadcast %7 : vector<16x1xf32> to vector<16x128xf32>
    %9 = arith.subf %3, %8 : vector<16x128xf32>
    %10 = arith.mulf %9, %9 : vector<16x128xf32>
    %cst_6 = arith.constant dense<0.000000e+00> : vector<16xf32>
    %11 = vector.multi_reduction <add>, %10, %cst_6 [1] : vector<16x128xf32> to vector<16xf32>
    %12 = vector.shape_cast %11 : vector<16xf32> to vector<16x1xf32>
    %cst_7 = arith.constant 1.280000e+02 : f32
    %13 = vector.broadcast %cst_7 : f32 to vector<16x1xf32>
    %14 = arith.divf %12, %13 : vector<16x1xf32>
    %15 = vector.broadcast %7 : vector<16x1xf32> to vector<16x128xf32>
    %16 = arith.subf %3, %15 : vector<16x128xf32>
    %cst_8 = arith.constant 9.99999997E-7 : f32
    %17 = vector.broadcast %cst_8 : f32 to vector<16x1xf32>
    %18 = arith.addf %14, %17 : vector<16x1xf32>
    %19 = math.rsqrt %18 : vector<16x1xf32>
    %20 = vector.broadcast %19 : vector<16x1xf32> to vector<16x128xf32>
    %21 = arith.mulf %16, %20 : vector<16x128xf32>
    %22 = vector.broadcast %1 : vector<1x128xf32> to vector<16x128xf32>
    %23 = arith.mulf %21, %22 : vector<16x128xf32>
    %24 = vector.broadcast %2 : vector<1x128xf32> to vector<16x128xf32>
    %25 = arith.addf %23, %24 : vector<16x128xf32>
    %26 = arith.truncf %25 : vector<16x128xf32> to vector<16x128xbf16>
    %c0_9 = arith.constant 0 : index
    %c0_10 = arith.constant 0 : index
    %27 = vector.load %arg5[%c0_9, %c0_10] : memref<128x128xbf16, #tpu.memory_space<vmem>>, vector<128x128xbf16>
    %cst_11 = arith.constant dense<0.000000e+00> : vector<16x128xf32>
    %28 = tpu.matmul %26, %27, %cst_11 {dimension_numbers = #tpu.dot_dimension_numbers<[1], [1], [0], [0], [0, 0, 1, 0], [], []>} : vector<16x128xbf16>, vector<128x128xbf16>, vector<16x128xf32> -> vector<16x128xf32>
    %c0_12 = arith.constant 0 : index
    %c0_13 = arith.constant 0 : index
    %29 = vector.load %arg6[%c0_12, %c0_13] : memref<16x1xf32, #tpu.memory_space<vmem>>, vector<16x1xf32>
    %30 = vector.broadcast %29 : vector<16x1xf32> to vector<16x128xf32>
    %31 = arith.subf %28, %30 : vector<16x128xf32>
    %c0_14 = arith.constant 0 : index
    %c0_15 = arith.constant 0 : index
    %32 = vector.load %arg7[%c0_14, %c0_15] : memref<16x128xf32, #tpu.memory_space<vmem>>, vector<16x128xf32>
    tpu.vector_store %arg7[%c0_14, %c0_15], %31 {strides = array<i32>} : memref<16x128xf32, #tpu.memory_space<vmem>>, vector<16x128xf32>,
    return
  }
  func.func @transform_0(%arg0: i32, %arg1: i32) -> (i32, i32) {
    %c0_i32 = arith.constant 0 : i32
    %c0_i32_0 = arith.constant 0 : i32
    return %arg0, %c0_i32 : i32, i32
  }
  func.func @transform_1(%arg0: i32, %arg1: i32) -> (i32, i32) {
    %c0_i32 = arith.constant 0 : i32
    %c0_i32_0 = arith.constant 0 : i32
    %c0_i32_1 = arith.constant 0 : i32
    return %c0_i32, %c0_i32_0 : i32, i32
  }
  func.func @transform_2(%arg0: i32, %arg1: i32) -> (i32, i32) {
    %c0_i32 = arith.constant 0 : i32
    %c0_i32_0 = arith.constant 0 : i32
    %c0_i32_1 = arith.constant 0 : i32
    return %c0_i32, %c0_i32_0 : i32, i32
  }
  func.func @transform_3(%arg0: i32, %arg1: i32) -> (i32, i32) {
    %c0_i32 = arith.constant 0 : i32
    %c0_i32_0 = arith.constant 0 : i32
    return %arg1, %c0_i32 : i32, i32
  }
  func.func @transform_4(%arg0: i32, %arg1: i32) -> (i32, i32) {
    %c0_i32 = arith.constant 0 : i32
    %c0_i32_0 = arith.constant 0 : i32
    return %arg0, %c0_i32 : i32, i32
  }
  func.func @transform_5(%arg0: i32, %arg1: i32) -> (i32, i32) {
    %c0_i32 = arith.constant 0 : i32
    return %arg0, %arg1 : i32, i32
  }
}

</mosaic_0001>

<llo_original>
// kernel: transformer_forward.17
$region0: #{transformer_forward.17}
  #allocation0 [shape = 'u32[]', space=smem, size = 0x4, offset = 0x4, fixed_abs, tag = 'smem constant byte address 0x4 - core index']
  #allocation1 [shape = 'u32[144,128]{1,0:T(1,128)}', space=vmem, size = 0x12000, scoped, tag = 'internal scratch']
  %s0 = inlined_call_operand.vmem [shape: bf16[32,128], index: 0, kind: input, shape index: {}]
  %s1 = inlined_call_operand.vmem [shape: f32[1,128], index: 1, kind: input, shape index: {}]
  %s2 = inlined_call_operand.vmem [shape: f32[1,128], index: 2, kind: input, shape index: {}]
  %s3 = inlined_call_operand.vmem [shape: bf16[32,128], index: 3, kind: output, shape index: {}]
  %s4 = sld [smem:[#allocation0]]
  $region45: #{transformer_forward.17} parent=0
    _
  %s6 = ssub.s32 1, %s4
  %s7 = scalar_select 0, %s6, %s4
  loop: start=0, step=1, limit=4
  $region2: #{transformer_forward.17} parent=0 // loop_pre_header
    _
  $region3: #{transformer_forward.17} parent=0 // loop_header
    %s9 = sphi 0, %s13
    %p10 = scmp.ge.s32.totalorder %s9, 4
    %s19 = sphi 0, %s21
    %s22 = sphi 0, %s19
    %s23 = sphi 0, %s22
    %s39 = sphi 0, %s23
    %s43 = sphi 0, %s43
    %s45 = sphi 0, %s43
    %s46 = sphi 0, %s45
    %s60 = sphi 0, %s46
    %s64 = sphi 0, %s64
    %s66 = sphi 0, %s64
    %s67 = sphi 0, %s66
    %s81 = sphi 0, %s67
    %s87 = sphi 0, %s89
    %s90 = sphi 0, %s87
    %s91 = sphi 0, %s90
    %s107 = sphi 0, %s91
  $region4: #{transformer_forward.17} parent=0 // loop_header_branch
    %12 = sbr.rel (%p10) target = $region8
  $region5: #{transformer_forward.17} parent=0 // loop_body
    %s14 = ssub.s32 %s9, 1
    %s15 = ssub.s32 %s9, 2
    %s16 = sadd.s32 %s9, 1
    %s17 = ssub.s32 %s9, %s16
    %p18 = scmp.eq.s32.totalorder %s17, 0
    %s20 = sadd.s32 %s19, 1
    %s21 = scalar_select %p18, %s19, %s20
    %p24 = pneg %p18
    %p25 = scmp.eq.s32.totalorder %s9, 1
    %p26 = por %p24, %p25
    %p27 = scmp.ne.s32.totalorder %s19, %s22
    %p28 = scmp.eq.s32.totalorder %s9, 0
    %p29 = por %p27, %p28
    %p30 = scmp.ne.s32.totalorder %s19, %s22
    %p31 = scmp.eq.s32.totalorder %s14, 1
    %p32 = por %p30, %p31
    %p33 = scmp.ne.s32.totalorder %s22, %s23
    %p34 = scmp.eq.s32.totalorder %s14, 0
    %p35 = por %p33, %p34
    %p36 = scmp.ne.s32.totalorder %s22, %s23
    %p37 = scmp.eq.s32.totalorder %s15, 1
    %p38 = por %p36, %p37
    %p40 = scmp.ne.s32.totalorder %s23, %s39
    %p41 = scmp.eq.s32.totalorder %s15, 0
    %p42 = por %p40, %p41
    %s44 = sadd.s32 %s43, 1
    %p47 = scmp.eq.s32.totalorder %s9, 1
    %p48 = scmp.ne.s32.totalorder %s43, %s45
    %p49 = scmp.eq.s32.totalorder %s9, 0
    %p50 = por %p48, %p49
    %p51 = scmp.ne.s32.totalorder %s43, %s45
    %p52 = scmp.eq.s32.totalorder %s14, 1
    %p53 = por %p51, %p52
    %p54 = scmp.ne.s32.totalorder %s45, %s46
    %p55 = scmp.eq.s32.totalorder %s14, 0
    %p56 = por %p54, %p55
    %p57 = scmp.ne.s32.totalorder %s45, %s46
    %p58 = scmp.eq.s32.totalorder %s15, 1
    %p59 = por %p57, %p58
    %p61 = scmp.ne.s32.totalorder %s46, %s60
    %p62 = scmp.eq.s32.totalorder %s15, 0
    %p63 = por %p61, %p62
    %s65 = sadd.s32 %s64, 1
    %p68 = scmp.eq.s32.totalorder %s9, 1
    %p69 = scmp.ne.s32.totalorder %s64, %s66
    %p70 = scmp.eq.s32.totalorder %s9, 0
    %p71 = por %p69, %p70
    %p72 = scmp.ne.s32.totalorder %s64, %s66
    %p73 = scmp.eq.s32.totalorder %s14, 1
    %p74 = por %p72, %p73
    %p75 = scmp.ne.s32.totalorder %s66, %s67
    %p76 = scmp.eq.s32.totalorder %s14, 0
    %p77 = por %p75, %p76
    %p78 = scmp.ne.s32.totalorder %s66, %s67
    %p79 = scmp.eq.s32.totalorder %s15, 1
    %p80 = por %p78, %p79
    %p82 = scmp.ne.s32.totalorder %s67, %s81
    %p83 = scmp.eq.s32.totalorder %s15, 0
    %p84 = por %p82, %p83
    %s85 = ssub.s32 %s9, %s16
    %p86 = scmp.eq.s32.totalorder %s85, 0
    %s88 = sadd.s32 %s87, 1
    %s89 = scalar_select %p86, %s87, %s88
    %p92 = pneg %p86
    %p93 = scmp.eq.s32.totalorder %s9, 1
    %p94 = por %p92, %p93
    %p95 = scmp.ne.s32.totalorder %s87, %s90
    %p96 = scmp.eq.s32.totalorder %s9, 0
    %p97 = por %p95, %p96
    %p98 = scmp.ne.s32.totalorder %s87, %s90
    %p99 = scmp.eq.s32.totalorder %s14, 1
    %p100 = por %p98, %p99
    %p101 = scmp.ne.s32.totalorder %s90, %s91
    %p102 = scmp.eq.s32.totalorder %s14, 0
    %p103 = por %p101, %p102
    %p104 = scmp.ne.s32.totalorder %s90, %s91
    %p105 = scmp.eq.s32.totalorder %s15, 1
    %p106 = por %p104, %p105
    %p108 = scmp.ne.s32.totalorder %s91, %s107
    %p109 = scmp.eq.s32.totalorder %s15, 0
    %p110 = por %p108, %p109
    %p111 = scmp.le.s32.totalorder 1, %s9
    %p112 = scmp.lt.s32.totalorder %s9, 3
    %p113 = pnand %p111, %p112
    %p114 = pneg %p113
    // Predicated region
    $region9: #{transformer_forward.17} parent=5 // pred_check
      _
    $region10: #{transformer_forward.17} parent=5 // pred_check_branch
      %116 = sbr.rel (%p113) target = $region12
    $region11: #{transformer_forward.17} parent=5 // pred_region
      %s117 = ssub.s32 %s9, 1
      // Predicated region
      $region13: #{transformer_forward.17} parent=11 // pred_check
        %p118 = pneg %p56
      $region14: #{transformer_forward.17} parent=11 // pred_check_branch
        %120 = sbr.rel (%p118) target = $region16
      $region15: #{transformer_forward.17} parent=11 // pred_region
        _
      $region16: #{transformer_forward.17} parent=11 // pred_fallthru
        _
      // Predicated region
      $region17: #{transformer_forward.17} parent=11 // pred_check
        %p121 = pneg %p77
      $region18: #{transformer_forward.17} parent=11 // pred_check_branch
        %123 = sbr.rel (%p121) target = $region20
      $region19: #{transformer_forward.17} parent=11 // pred_region
        _
      $region20: #{transformer_forward.17} parent=11 // pred_fallthru
        _
    $region12: #{transformer_forward.17} parent=5 // pred_fallthru
      _
    %p124 = scmp.lt.s32.totalorder %s9, 2
    // Predicated region
    $region21: #{transformer_forward.17} parent=5 // pred_check
      %p125 = pneg %p124
    $region22: #{transformer_forward.17} parent=5 // pred_check_branch
      %127 = sbr.rel (%p125) target = $region24
    $region23: #{transformer_forward.17} parent=5 // pred_region
      // Predicated region
      $region25: #{transformer_forward.17} parent=23 // pred_check
        %p128 = pneg %p29
      $region26: #{transformer_forward.17} parent=23 // pred_check_branch
        %130 = sbr.rel (%p128) target = $region28
      $region27: #{transformer_forward.17} parent=23 // pred_region
        %s131 = smul.u32 2, %s9
        %p132 = scmp.lt.s32.totalorder %s131, 3
        %s133 = scalar_select %p132, %s131, 3
        %s134 = smul.addr %s133, 4
        %s135 = scalar_lea.vmem %s0, %s134
        %s136 = smul.u32 2, %s9
      $region28: #{transformer_forward.17} parent=23 // pred_fallthru
        _
    $region24: #{transformer_forward.17} parent=5 // pred_fallthru
      _
    %p137 = scmp.le.s32.totalorder 1, %s9
    %p138 = scmp.lt.s32.totalorder %s9, 3
    %p139 = pnand %p137, %p138
    %p140 = pneg %p139
    // Predicated region
    $region29: #{transformer_forward.17} parent=5 // pred_check
      _
    $region30: #{transformer_forward.17} parent=5 // pred_check_branch
      %142 = sbr.rel (%p139) target = $region32
    $region31: #{transformer_forward.17} parent=5 // pred_region
      %s143 = ssub.s32 %s9, 1
      %s144 = smul.u32 2, %s14
      %p145 = scmp.lt.s32.totalorder %s144, 3
      %s146 = scalar_select %p145, %s144, 3
      %s147 = smul.addr %s146, 4
      %s148 = scalar_lea.vmem %s0, %s147
      %p149 = pneg %p35
      %p150 = pneg %p32
      %p151 = pneg %p56
      %p152 = pneg %p53
      %p153 = pneg %p77
      %p154 = pneg %p74
      %p155 = pneg %p103
      %p156 = pneg %p100
      %s157 = smul.u32 2, %s14
      %p158 = scmp.lt.s32.totalorder %s157, 3
      %s159 = scalar_select %p158, %s157, 3
      %s160 = smul.addr %s159, 4
      %s161 = scalar_lea.vmem %s3, %s160
      %s162 = smul.u32 2, %s14
      %p163 = scmp.lt.s32.totalorder %s162, 3
      %s164 = scalar_select %p163, %s162, 3
      %s165 = smul.addr %s164, 4
      %s166 = scalar_lea.vmem %s0, %s165
      %s167 = smul.u32 2, %s14
      %s168 = smul.u32 2, %s14
      %p169 = scmp.lt.s32.totalorder %s168, 3
      %s170 = scalar_select %p169, %s168, 3
      %s171 = smul.addr %s170, 4
      %s172 = scalar_lea.vmem %s3, %s171
      %s173 = smul.u32 2, %s14
      %v174 = vld [vmem:[%s166] sm:$0xf]
      %v175 = vld [vmem:[%s166 + $0x4] sm:$0xf]
      %v176 = vld [vmem:[%s1] sm:$0x1]
      %v177 = vld [vmem:[%s2] sm:$0x1]
      %v178 = vunpack.c.l.bf16 %v174
      %v179 = vunpack.c.l.bf16 %v175
      %180 = vadd.xlane.f32.xlu0 %v178
      %v181 = vpop.xlane.xlu0 %180
      %182 = vadd.xlane.f32.xlu0 %v179
      %v183 = vpop.xlane.xlu0 %182
      %v184 = vrcp.pop 128.0
      %v185 = vmul.f32 %v181, %v184
      %v186 = vmul.f32 %v183, %v184
      %v187 = vsub.f32 %v178, %v185
      %v188 = vsub.f32 %v179, %v186
      %v189 = vmul.f32 %v187, %v187
      %v190 = vmul.f32 %v188, %v188
      %191 = vadd.xlane.f32.xlu0 %v189
      %v192 = vpop.xlane.xlu0 %191
      %193 = vadd.xlane.f32.xlu0 %v190
      %v194 = vpop.xlane.xlu0 %193
      %v195 = vmul.f32 %v192, %v184
      %v196 = vmul.f32 %v194, %v184
      %v197 = vadd.f32 %v195, 1e-06
      %v198 = vadd.f32 %v196, 1e-06
      %v199 = vrsqrt.pop %v197
      %v200 = vrsqrt.pop %v198
      %v201 = vmul.f32 %v187, %v199
      %v202 = vmul.f32 %v188, %v200
      %v204 = vlaneseq
      %v205 = vshrl.u32 %v204, 7
      %v206 = vsub.s32 0, %v205
      %v207 = vrot.slane %v176, %v206
      %v209 = vmul.f32 %v201, %v207
      %v210 = vmul.f32 %v202, %v207
      %v212 = vlaneseq
      %v213 = vshrl.u32 %v212, 7
      %v214 = vsub.s32 0, %v213
      %v215 = vrot.slane %v177, %v214
      %v217 = vadd.f32 %v209, %v215
      %v218 = vadd.f32 %v210, %v215
      %v219 = vpack.c.bf16 %v218, %v217
      %v221 = vunpack.c.l.b16 %v219
      %v222 = vunpack.c.h.b16 %v219
      %v223 = vpack.c.b16 %v221, %v221
      %v224 = vpack.c.b16 %v222, %v222
      %227 = vst [vmem:[%s172] sm:$0xf] %v223
      %228 = vst [vmem:[%s172 + $0x4] sm:$0xf] %v224
      %s229 = smul.u32 2, %s14
      %p230 = scmp.lt.s32.totalorder %s229, 3
      %s231 = scalar_select %p230, %s229, 3
      %s232 = smul.addr %s231, 4
      %s233 = scalar_lea.vmem %s3, %s232
      // Predicated region
      $region33: #{transformer_forward.17} parent=31 // pred_check
        %p234 = pneg %p100
      $region34: #{transformer_forward.17} parent=31 // pred_check_branch
        %236 = sbr.rel (%p234) target = $region36
      $region35: #{transformer_forward.17} parent=31 // pred_region
        %s237 = smul.u32 2, %s14
      $region36: #{transformer_forward.17} parent=31 // pred_fallthru
        _
    $region32: #{transformer_forward.17} parent=5 // pred_fallthru
      _
    %p238 = scmp.le.s32.totalorder 2, %s9
    // Predicated region
    $region37: #{transformer_forward.17} parent=5 // pred_check
      %p239 = pneg %p238
    $region38: #{transformer_forward.17} parent=5 // pred_check_branch
      %241 = sbr.rel (%p239) target = $region40
    $region39: #{transformer_forward.17} parent=5 // pred_region
      %s242 = ssub.s32 %s9, 2
      // Predicated region
      $region41: #{transformer_forward.17} parent=39 // pred_check
        %p243 = pneg %p106
      $region42: #{transformer_forward.17} parent=39 // pred_check_branch
        %245 = sbr.rel (%p243) target = $region44
      $region43: #{transformer_forward.17} parent=39 // pred_region
        %s246 = smul.u32 2, %s15
        %p247 = scmp.lt.s32.totalorder %s246, 3
        %s248 = scalar_select %p247, %s246, 3
        %s249 = smul.addr %s248, 4
        %s250 = scalar_lea.vmem %s3, %s249
      $region44: #{transformer_forward.17} parent=39 // pred_fallthru
        _
    $region40: #{transformer_forward.17} parent=5 // pred_fallthru
      _
  $region6: #{transformer_forward.17} parent=0 // loop_footer
    %s13 = sadd.s32 1, %s9
  $region7: #{transformer_forward.17} parent=0 // loop_footer_branch
    %8 = sbr.rel target = $region3
  $region8: #{transformer_forward.17} parent=0 // loop_exit
    _

// kernel: transformer_forward.14
$region0: #{transformer_forward.14}
  #allocation0 [shape = 'u32[]', space=smem, size = 0x4, offset = 0x4, fixed_abs, tag = 'smem constant byte address 0x4 - core index']
  #allocation1 [shape = 'u32[144,128]{1,0:T(1,128)}', space=vmem, size = 0x12000, scoped, tag = 'internal scratch']
  #allocation2 [shape = 'bf16[16,128]{1,0:T(16,128)(2,1)}', space=vmem, size = 0x1000, scoped, tag = 'scratch operand']
  #allocation3 [shape = 'f32[16,128]{1,0:T(8,128)}', space=vmem, size = 0x2000, scoped, tag = 'scratch operand']
  %s0 = inlined_call_operand.vmem [shape: bf16[32,128], index: 0, kind: input, shape index: {}]
  %s1 = inlined_call_operand.vmem [shape: f32[1,128], index: 1, kind: input, shape index: {}]
  %s2 = inlined_call_operand.vmem [shape: f32[1,128], index: 2, kind: input, shape index: {}]
  %s3 = inlined_call_operand.vmem [shape: bf16[128,512], index: 3, kind: input, shape index: {}]
  %s4 = inlined_call_operand.vmem [shape: f32[1,512], index: 4, kind: input, shape index: {}]
  %s5 = inlined_call_operand.vmem [shape: bf16[512,128], index: 5, kind: input, shape index: {}]
  %s6 = inlined_call_operand.vmem [shape: f32[1,128], index: 6, kind: input, shape index: {}]
  %s7 = inlined_call_operand.vmem [shape: bf16[32,128], index: 7, kind: output, shape index: {}]
  %s8 = sld [smem:[#allocation0]]
  $region107: #{transformer_forward.14} parent=0
    _
  %s10 = ssub.s32 1, %s8
  %s11 = scalar_select 0, %s10, %s8
  $region1: #{transformer_forward.14} parent=0
    #allocation4 [shape = 'u8[131072]{0}', space=vmem, size = 0x20000, scoped, tag = 'input window, operand 3']
    loop: start=0, step=1, limit=6
    $region2: #{transformer_forward.14} parent=1 // loop_pre_header
      _
    $region3: #{transformer_forward.14} parent=1 // loop_header
      %s13 = sphi 0, %s17
      %p14 = scmp.ge.s32.totalorder %s13, 6
      %s20 = sphi 0, %s32
      %s21 = sphi 0, %s28
      %s22 = sphi 0, %s20
      %s23 = sphi 0, %s21
      %s24 = sphi 0, %s22
      %s25 = sphi 0, %s23
      %s35 = sphi 0, %s37
      %s38 = sphi 0, %s35
      %s39 = sphi 0, %s38
      %s55 = sphi 0, %s39
      %s59 = sphi 0, %s59
      %s61 = sphi 0, %s59
      %s62 = sphi 0, %s61
      %s76 = sphi 0, %s62
      %s80 = sphi 0, %s80
      %s82 = sphi 0, %s80
      %s83 = sphi 0, %s82
      %s97 = sphi 0, %s83
      %s103 = sphi 0, %s105
      %s106 = sphi 0, %s103
      %s107 = sphi 0, %s106
      %s123 = sphi 0, %s107
      %s129 = sphi 0, %s131
      %s132 = sphi 0, %s129
      %s133 = sphi 0, %s132
      %s149 = sphi 0, %s133
      %s155 = sphi 0, %s157
      %s158 = sphi 0, %s155
      %s159 = sphi 0, %s158
      %s175 = sphi 0, %s159
      %s179 = sphi 0, %s179
      %s181 = sphi 0, %s179
      %s182 = sphi 0, %s181
      %s196 = sphi 0, %s182
      %s202 = sphi 0, %s204
      %s205 = sphi 0, %s202
      %s206 = sphi 0, %s205
      %s222 = sphi 0, %s206
    $region4: #{transformer_forward.14} parent=1 // loop_header_branch
      %16 = sbr.rel (%p14) target = $region8
    $region5: #{transformer_forward.14} parent=1 // loop_body
      %s18 = ssub.s32 %s13, 1
      %s19 = ssub.s32 %s13, 2
      %s26 = sadd.s32 1, %s21
      %p27 = scmp.ge.s32.totalorder %s26, 2
      %s28 = scalar_select %p27, 0, %s26
      %s29 = sadd.s32 1, %s20
      %s30 = scalar_select %p27, %s29, %s20
      %p31 = scmp.ge.s32.totalorder %s30, 2
      %s32 = scalar_select %p31, 0, %s30
      %s33 = ssub.s32 %s20, %s32
      %p34 = scmp.eq.s32.totalorder %s33, 0
      %s36 = sadd.s32 %s35, 1
      %s37 = scalar_select %p34, %s35, %s36
      %p40 = pneg %p34
      %p41 = scmp.eq.s32.totalorder %s13, 3
      %p42 = por %p40, %p41
      %p43 = scmp.ne.s32.totalorder %s35, %s38
      %p44 = scmp.eq.s32.totalorder %s13, 0
      %p45 = por %p43, %p44
      %p46 = scmp.ne.s32.totalorder %s35, %s38
      %p47 = scmp.eq.s32.totalorder %s18, 3
      %p48 = por %p46, %p47
      %p49 = scmp.ne.s32.totalorder %s38, %s39
      %p50 = scmp.eq.s32.totalorder %s18, 0
      %p51 = por %p49, %p50
      %p52 = scmp.ne.s32.totalorder %s38, %s39
      %p53 = scmp.eq.s32.totalorder %s19, 3
      %p54 = por %p52, %p53
      %p56 = scmp.ne.s32.totalorder %s39, %s55
      %p57 = scmp.eq.s32.totalorder %s19, 0
      %p58 = por %p56, %p57
      %s60 = sadd.s32 %s59, 1
      %p63 = scmp.eq.s32.totalorder %s13, 3
      %p64 = scmp.ne.s32.totalorder %s59, %s61
      %p65 = scmp.eq.s32.totalorder %s13, 0
      %p66 = por %p64, %p65
      %p67 = scmp.ne.s32.totalorder %s59, %s61
      %p68 = scmp.eq.s32.totalorder %s18, 3
      %p69 = por %p67, %p68
      %p70 = scmp.ne.s32.totalorder %s61, %s62
      %p71 = scmp.eq.s32.totalorder %s18, 0
      %p72 = por %p70, %p71
      %p73 = scmp.ne.s32.totalorder %s61, %s62
      %p74 = scmp.eq.s32.totalorder %s19, 3
      %p75 = por %p73, %p74
      %p77 = scmp.ne.s32.totalorder %s62, %s76
      %p78 = scmp.eq.s32.totalorder %s19, 0
      %p79 = por %p77, %p78
      %s81 = sadd.s32 %s80, 1
      %p84 = scmp.eq.s32.totalorder %s13, 3
      %p85 = scmp.ne.s32.totalorder %s80, %s82
      %p86 = scmp.eq.s32.totalorder %s13, 0
      %p87 = por %p85, %p86
      %p88 = scmp.ne.s32.totalorder %s80, %s82
      %p89 = scmp.eq.s32.totalorder %s18, 3
      %p90 = por %p88, %p89
      %p91 = scmp.ne.s32.totalorder %s82, %s83
      %p92 = scmp.eq.s32.totalorder %s18, 0
      %p93 = por %p91, %p92
      %p94 = scmp.ne.s32.totalorder %s82, %s83
      %p95 = scmp.eq.s32.totalorder %s19, 3
      %p96 = por %p94, %p95
      %p98 = scmp.ne.s32.totalorder %s83, %s97
      %p99 = scmp.eq.s32.totalorder %s19, 0
      %p100 = por %p98, %p99
      %s101 = ssub.s32 %s21, %s28
      %p102 = scmp.eq.s32.totalorder %s101, 0
      %s104 = sadd.s32 %s103, 1
      %s105 = scalar_select %p102, %s103, %s104
      %p108 = pneg %p102
      %p109 = scmp.eq.s32.totalorder %s13, 3
      %p110 = por %p108, %p109
      %p111 = scmp.ne.s32.totalorder %s103, %s106
      %p112 = scmp.eq.s32.totalorder %s13, 0
      %p113 = por %p111, %p112
      %p114 = scmp.ne.s32.totalorder %s103, %s106
      %p115 = scmp.eq.s32.totalorder %s18, 3
      %p116 = por %p114, %p115
      %p117 = scmp.ne.s32.totalorder %s106, %s107
      %p118 = scmp.eq.s32.totalorder %s18, 0
      %p119 = por %p117, %p118
      %p120 = scmp.ne.s32.totalorder %s106, %s107
      %p121 = scmp.eq.s32.totalorder %s19, 3
      %p122 = por %p120, %p121
      %p124 = scmp.ne.s32.totalorder %s107, %s123
      %p125 = scmp.eq.s32.totalorder %s19, 0
      %p126 = por %p124, %p125
      %s127 = ssub.s32 %s21, %s28
      %p128 = scmp.eq.s32.totalorder %s127, 0
      %s130 = sadd.s32 %s129, 1
      %s131 = scalar_select %p128, %s129, %s130
      %p134 = pneg %p128
      %p135 = scmp.eq.s32.totalorder %s13, 3
      %p136 = por %p134, %p135
      %p137 = scmp.ne.s32.totalorder %s129, %s132
      %p138 = scmp.eq.s32.totalorder %s13, 0
      %p139 = por %p137, %p138
      %p140 = scmp.ne.s32.totalorder %s129, %s132
      %p141 = scmp.eq.s32.totalorder %s18, 3
      %p142 = por %p140, %p141
      %p143 = scmp.ne.s32.totalorder %s132, %s133
      %p144 = scmp.eq.s32.totalorder %s18, 0
      %p145 = por %p143, %p144
      %p146 = scmp.ne.s32.totalorder %s132, %s133
      %p147 = scmp.eq.s32.totalorder %s19, 3
      %p148 = por %p146, %p147
      %p150 = scmp.ne.s32.totalorder %s133, %s149
      %p151 = scmp.eq.s32.totalorder %s19, 0
      %p152 = por %p150, %p151
      %s153 = ssub.s32 %s21, %s28
      %p154 = scmp.eq.s32.totalorder %s153, 0
      %s156 = sadd.s32 %s155, 1
      %s157 = scalar_select %p154, %s155, %s156
      %p160 = pneg %p154
      %p161 = scmp.eq.s32.totalorder %s13, 3
      %p162 = por %p160, %p161
      %p163 = scmp.ne.s32.totalorder %s155, %s158
      %p164 = scmp.eq.s32.totalorder %s13, 0
      %p165 = por %p163, %p164
      %p166 = scmp.ne.s32.totalorder %s155, %s158
      %p167 = scmp.eq.s32.totalorder %s18, 3
      %p168 = por %p166, %p167
      %p169 = scmp.ne.s32.totalorder %s158, %s159
      %p170 = scmp.eq.s32.totalorder %s18, 0
      %p171 = por %p169, %p170
      %p172 = scmp.ne.s32.totalorder %s158, %s159
      %p173 = scmp.eq.s32.totalorder %s19, 3
      %p174 = por %p172, %p173
      %p176 = scmp.ne.s32.totalorder %s159, %s175
      %p177 = scmp.eq.s32.totalorder %s19, 0
      %p178 = por %p176, %p177
      %s180 = sadd.s32 %s179, 1
      %p183 = scmp.eq.s32.totalorder %s13, 3
      %p184 = scmp.ne.s32.totalorder %s179, %s181
      %p185 = scmp.eq.s32.totalorder %s13, 0
      %p186 = por %p184, %p185
      %p187 = scmp.ne.s32.totalorder %s179, %s181
      %p188 = scmp.eq.s32.totalorder %s18, 3
      %p189 = por %p187, %p188
      %p190 = scmp.ne.s32.totalorder %s181, %s182
      %p191 = scmp.eq.s32.totalorder %s18, 0
      %p192 = por %p190, %p191
      %p193 = scmp.ne.s32.totalorder %s181, %s182
      %p194 = scmp.eq.s32.totalorder %s19, 3
      %p195 = por %p193, %p194
      %p197 = scmp.ne.s32.totalorder %s182, %s196
      %p198 = scmp.eq.s32.totalorder %s19, 0
      %p199 = por %p197, %p198
      %s200 = ssub.s32 %s20, %s32
      %p201 = scmp.eq.s32.totalorder %s200, 0
      %s203 = sadd.s32 %s202, 1
      %s204 = scalar_select %p201, %s202, %s203
      %p207 = pneg %p201
      %p208 = scmp.eq.s32.totalorder %s13, 3
      %p209 = por %p207, %p208
      %p210 = scmp.ne.s32.totalorder %s202, %s205
      %p211 = scmp.eq.s32.totalorder %s13, 0
      %p212 = por %p210, %p211
      %p213 = scmp.ne.s32.totalorder %s202, %s205
      %p214 = scmp.eq.s32.totalorder %s18, 3
      %p215 = por %p213, %p214
      %p216 = scmp.ne.s32.totalorder %s205, %s206
      %p217 = scmp.eq.s32.totalorder %s18, 0
      %p218 = por %p216, %p217
      %p219 = scmp.ne.s32.totalorder %s205, %s206
      %p220 = scmp.eq.s32.totalorder %s19, 3
      %p221 = por %p219, %p220
      %p223 = scmp.ne.s32.totalorder %s206, %s222
      %p224 = scmp.eq.s32.totalorder %s19, 0
      %p225 = por %p223, %p224
      %p226 = scmp.le.s32.totalorder 1, %s13
      %p227 = scmp.lt.s32.totalorder %s13, 5
      %p228 = pnand %p226, %p227
      %p229 = pneg %p228
      // Predicated region
      $region9: #{transformer_forward.14} parent=5 // pred_check
        _
      $region10: #{transformer_forward.14} parent=5 // pred_check_branch
        %231 = sbr.rel (%p228) target = $region12
      $region11: #{transformer_forward.14} parent=5 // pred_region
        %s232 = ssub.s32 %s13, 1
        // Predicated region
        $region13: #{transformer_forward.14} parent=11 // pred_check
          %p233 = pneg %p72
        $region14: #{transformer_forward.14} parent=11 // pred_check_branch
          %235 = sbr.rel (%p233) target = $region16
        $region15: #{transformer_forward.14} parent=11 // pred_region
          _
        $region16: #{transformer_forward.14} parent=11 // pred_fallthru
          _
        // Predicated region
        $region17: #{transformer_forward.14} parent=11 // pred_check
          %p236 = pneg %p93
        $region18: #{transformer_forward.14} parent=11 // pred_check_branch
          %238 = sbr.rel (%p236) target = $region20
        $region19: #{transformer_forward.14} parent=11 // pred_region
          _
        $region20: #{transformer_forward.14} parent=11 // pred_fallthru
          _
        // Predicated region
        $region21: #{transformer_forward.14} parent=11 // pred_check
          %p239 = pneg %p192
        $region22: #{transformer_forward.14} parent=11 // pred_check_branch
          %241 = sbr.rel (%p239) target = $region24
        $region23: #{transformer_forward.14} parent=11 // pred_region
          _
        $region24: #{transformer_forward.14} parent=11 // pred_fallthru
          _
      $region12: #{transformer_forward.14} parent=5 // pred_fallthru
        _
      %p242 = scmp.lt.s32.totalorder %s13, 4
      // Predicated region
      $region25: #{transformer_forward.14} parent=5 // pred_check
        %p243 = pneg %p242
      $region26: #{transformer_forward.14} parent=5 // pred_check_branch
        %245 = sbr.rel (%p243) target = $region28
      $region27: #{transformer_forward.14} parent=5 // pred_region
        // Predicated region
        $region29: #{transformer_forward.14} parent=27 // pred_check
          %p246 = pneg %p45
        $region30: #{transformer_forward.14} parent=27 // pred_check_branch
          %248 = sbr.rel (%p246) target = $region32
        $region31: #{transformer_forward.14} parent=27 // pred_region
          %s249 = smul.u32 2, %s20
          %p250 = scmp.lt.s32.totalorder %s249, 3
          %s251 = scalar_select %p250, %s249, 3
          %s252 = smul.addr %s251, 4
          %s253 = scalar_lea.vmem %s0, %s252
          %s254 = smul.u32 2, %s20
        $region32: #{transformer_forward.14} parent=27 // pred_fallthru
          _
        // Predicated region
        $region33: #{transformer_forward.14} parent=27 // pred_check
          %p255 = pneg %p113
        $region34: #{transformer_forward.14} parent=27 // pred_check_branch
          %257 = sbr.rel (%p255) target = $region36
        $region35: #{transformer_forward.14} parent=27 // pred_region
          %s258 = sand.u32 %s103, 1
          %s259 = sand.u32 %s103, 1
          %s260 = smul.addr %s259, 128
          %s261 = scalar_lea.vmem [#allocation4], %s260
          %s262 = smul.u32 2, %s21
          %s263 = smul.addr %s262, 4
          %s264 = scalar_lea.vmem %s3, %s263
          // Predicated region
          $region37: #{transformer_forward.14} parent=35 // pred_check
            _
          $region38: #{transformer_forward.14} parent=35 // pred_check_branch
            %266 = sbr.rel (0) target = $region40
          $region39: #{transformer_forward.14} parent=35 // pred_region
            // Predicated region
            $region41: #{transformer_forward.14} parent=39 // pred_check
              _
            $region42: #{transformer_forward.14} parent=39 // pred_check_branch
              %268 = sbr.rel (0) target = $region44
            $region43: #{transformer_forward.14} parent=39 // pred_region
              // Predicated region
              $region56: #{transformer_forward.14} parent=43 // pred_check
                _
              $region57: #{transformer_forward.14} parent=43 // pred_check_branch
                %313 = sbr.rel (0) target = $region59
              $region58: #{transformer_forward.14} parent=43 // pred_region
                loop: start=0, step=1, limit=1
                $region60: #{transformer_forward.14} parent=58 // loop_pre_header
                  _
                $region61: #{transformer_forward.14} parent=58 // loop_header
                  %s315 = sphi 0, %s319
                  %p316 = scmp.ge.s32.totalorder %s315, 1
                  %s320 = sphi %s264, %s264
                  %s321 = sphi %s261, %s261
                $region62: #{transformer_forward.14} parent=58 // loop_header_branch
                  %318 = sbr.rel (%p316) target = $region66
                $region63: #{transformer_forward.14} parent=58 // loop_body
                  %v322 = vld [vmem:[%s320] sm:$0xff]
                  %323 = vst [vmem:[%s321] sm:$0xff] %v322
                  %v324 = vld [vmem:[%s320 + $0x10] sm:$0xff]
                  %325 = vst [vmem:[%s321 + $0x8] sm:$0xff] %v324
                  %v326 = vld [vmem:[%s320 + $0x20] sm:$0xff]
                  %327 = vst [vmem:[%s321 + $0x10] sm:$0xff] %v326
                  %v328 = vld [vmem:[%s320 + $0x30] sm:$0xff]
                  %329 = vst [vmem:[%s321 + $0x18] sm:$0xff] %v328
                  %v330 = vld [vmem:[%s320 + $0x40] sm:$0xff]
                  %331 = vst [vmem:[%s321 + $0x20] sm:$0xff] %v330
                  %v332 = vld [vmem:[%s320 + $0x50] sm:$0xff]
                  %333 = vst [vmem:[%s321 + $0x28] sm:$0xff] %v332
                  %v334 = vld [vmem:[%s320 + $0x60] sm:$0xff]
                  %335 = vst [vmem:[%s321 + $0x30] sm:$0xff] %v334
                  %v336 = vld [vmem:[%s320 + $0x70] sm:$0xff]
                  %337 = vst [vmem:[%s321 + $0x38] sm:$0xff] %v336
                  %v338 = vld [vmem:[%s320 + $0x80] sm:$0xff]
                  %339 = vst [vmem:[%s321 + $0x40] sm:$0xff] %v338
                  %v340 = vld [vmem:[%s320 + $0x90] sm:$0xff]
                  %341 = vst [vmem:[%s321 + $0x48] sm:$0xff] %v340
                  %v342 = vld [vmem:[%s320 + $0xa0] sm:$0xff]
                  %343 = vst [vmem:[%s321 + $0x50] sm:$0xff] %v342
                  %v344 = vld [vmem:[%s320 + $0xb0] sm:$0xff]
                  %345 = vst [vmem:[%s321 + $0x58] sm:$0xff] %v344
                  %v346 = vld [vmem:[%s320 + $0xc0] sm:$0xff]
                  %347 = vst [vmem:[%s321 + $0x60] sm:$0xff] %v346
                  %v348 = vld [vmem:[%s320 + $0xd0] sm:$0xff]
                  %349 = vst [vmem:[%s321 + $0x68] sm:$0xff] %v348
                  %v350 = vld [vmem:[%s320 + $0xe0] sm:$0xff]
                  %351 = vst [vmem:[%s321 + $0x70] sm:$0xff] %v350
                  %v352 = vld [vmem:[%s320 + $0xf0] sm:$0xff]
                  %353 = vst [vmem:[%s321 + $0x78] sm:$0xff] %v352
                $region64: #{transformer_forward.14} parent=58 // loop_footer
                  %s319 = sadd.s32 1, %s315
                $region65: #{transformer_forward.14} parent=58 // loop_footer_branch
                  %314 = sbr.rel target = $region61
                $region66: #{transformer_forward.14} parent=58 // loop_exit
                  _
              $region59: #{transformer_forward.14} parent=43 // pred_fallthru
                _
              // Predicated region
              $region67: #{transformer_forward.14} parent=43 // pred_check
                _
              $region68: #{transformer_forward.14} parent=43 // pred_check_branch
                %355 = sbr.rel target = $region70
              $region69: #{transformer_forward.14} parent=43 // pred_region
                _
              $region70: #{transformer_forward.14} parent=43 // pred_fallthru
                _
            $region44: #{transformer_forward.14} parent=39 // pred_fallthru
              _
            // Predicated region
            $region45: #{transformer_forward.14} parent=39 // pred_check
              _
            $region46: #{transformer_forward.14} parent=39 // pred_check_branch
              %270 = sbr.rel target = $region48
            $region47: #{transformer_forward.14} parent=39 // pred_region
              loop: start=0, step=1, limit=1
              $region49: #{transformer_forward.14} parent=47 // loop_pre_header
                _
              $region50: #{transformer_forward.14} parent=47 // loop_header
                %s273 = sphi 0, %s277
                %p274 = scmp.ge.s32.totalorder %s273, 1
                %s278 = sphi %s264, %s264
                %s279 = sphi %s261, %s261
              $region51: #{transformer_forward.14} parent=47 // loop_header_branch
                %276 = sbr.rel (%p274) target = $region55
              $region52: #{transformer_forward.14} parent=47 // loop_body
                %v280 = vld [vmem:[%s278] sm:$0xff]
                %281 = vst [vmem:[%s279] sm:$0xff] %v280
                %v282 = vld [vmem:[%s278 + $0x10] sm:$0xff]
                %283 = vst [vmem:[%s279 + $0x8] sm:$0xff] %v282
                %v284 = vld [vmem:[%s278 + $0x20] sm:$0xff]
                %285 = vst [vmem:[%s279 + $0x10] sm:$0xff] %v284
                %v286 = vld [vmem:[%s278 + $0x30] sm:$0xff]
                %287 = vst [vmem:[%s279 + $0x18] sm:$0xff] %v286
                %v288 = vld [vmem:[%s278 + $0x40] sm:$0xff]
                %289 = vst [vmem:[%s279 + $0x20] sm:$0xff] %v288
                %v290 = vld [vmem:[%s278 + $0x50] sm:$0xff]
                %291 = vst [vmem:[%s279 + $0x28] sm:$0xff] %v290
                %v292 = vld [vmem:[%s278 + $0x60] sm:$0xff]
                %293 = vst [vmem:[%s279 + $0x30] sm:$0xff] %v292
                %v294 = vld [vmem:[%s278 + $0x70] sm:$0xff]
                %295 = vst [vmem:[%s279 + $0x38] sm:$0xff] %v294
                %v296 = vld [vmem:[%s278 + $0x80] sm:$0xff]
                %297 = vst [vmem:[%s279 + $0x40] sm:$0xff] %v296
                %v298 = vld [vmem:[%s278 + $0x90] sm:$0xff]
                %299 = vst [vmem:[%s279 + $0x48] sm:$0xff] %v298
                %v300 = vld [vmem:[%s278 + $0xa0] sm:$0xff]
                %301 = vst [vmem:[%s279 + $0x50] sm:$0xff] %v300
                %v302 = vld [vmem:[%s278 + $0xb0] sm:$0xff]
                %303 = vst [vmem:[%s279 + $0x58] sm:$0xff] %v302
                %v304 = vld [vmem:[%s278 + $0xc0] sm:$0xff]
                %305 = vst [vmem:[%s279 + $0x60] sm:$0xff] %v304
                %v306 = vld [vmem:[%s278 + $0xd0] sm:$0xff]
                %307 = vst [vmem:[%s279 + $0x68] sm:$0xff] %v306
                %v308 = vld [vmem:[%s278 + $0xe0] sm:$0xff]
                %309 = vst [vmem:[%s279 + $0x70] sm:$0xff] %v308
                %v310 = vld [vmem:[%s278 + $0xf0] sm:$0xff]
                %311 = vst [vmem:[%s279 + $0x78] sm:$0xff] %v310
              $region53: #{transformer_forward.14} parent=47 // loop_footer
                %s277 = sadd.s32 1, %s273
              $region54: #{transformer_forward.14} parent=47 // loop_footer_branch
                %272 = sbr.rel target = $region50
              $region55: #{transformer_forward.14} parent=47 // loop_exit
                _
            $region48: #{transformer_forward.14} parent=39 // pred_fallthru
              _
          $region40: #{transformer_forward.14} parent=35 // pred_fallthru
            _
          %356 = vnop
        $region36: #{transformer_forward.14} parent=27 // pred_fallthru
          _
        // Predicated region
        $region71: #{transformer_forward.14} parent=27 // pred_check
          %p357 = pneg %p139
        $region72: #{transformer_forward.14} parent=27 // pred_check_branch
          %359 = sbr.rel (%p357) target = $region74
        $region73: #{transformer_forward.14} parent=27 // pred_region
          %s360 = smul.u32 2, %s21
          %p361 = scmp.lt.s32.totalorder %s360, 3
          %s362 = scalar_select %p361, %s360, 3
          %s363 = scalar_lea.vmem %s4, %s362
          %s364 = smul.u32 2, %s21
        $region74: #{transformer_forward.14} parent=27 // pred_fallthru
          _
        // Predicated region
        $region75: #{transformer_forward.14} parent=27 // pred_check
          %p365 = pneg %p165
        $region76: #{transformer_forward.14} parent=27 // pred_check_branch
          %367 = sbr.rel (%p365) target = $region78
        $region77: #{transformer_forward.14} parent=27 // pred_region
          %s368 = smul.u32 32, %s21
          %p369 = scmp.lt.s32.totalorder %s368, 63
          %s370 = scalar_select %p369, %s368, 63
          %s371 = smul.addr %s370, 4
          %s372 = scalar_lea.vmem %s5, %s371
          %s373 = smul.u32 32, %s21
        $region78: #{transformer_forward.14} parent=27 // pred_fallthru
          _
      $region28: #{transformer_forward.14} parent=5 // pred_fallthru
        _
      %p374 = scmp.le.s32.totalorder 1, %s13
      %p375 = scmp.lt.s32.totalorder %s13, 5
      %p376 = pnand %p374, %p375
      %p377 = pneg %p376
      // Predicated region
      $region79: #{transformer_forward.14} parent=5 // pred_check
        _
      $region80: #{transformer_forward.14} parent=5 // pred_check_branch
        %379 = sbr.rel (%p376) target = $region82
      $region81: #{transformer_forward.14} parent=5 // pred_region
        %s380 = ssub.s32 %s13, 1
        %s381 = sand.u32 %s106, 1
        %s382 = sand.u32 %s106, 1
        %s383 = smul.addr %s382, 128
        %s384 = scalar_lea.vmem [#allocation4], %s383
        // Predicated region
        $region83: #{transformer_forward.14} parent=81 // pred_check
          %p385 = pneg %p119
        $region84: #{transformer_forward.14} parent=81 // pred_check_branch
          %387 = sbr.rel (%p385) target = $region86
        $region85: #{transformer_forward.14} parent=81 // pred_region
          _
        $region86: #{transformer_forward.14} parent=81 // pred_fallthru
          _
        %s388 = smul.u32 2, %s22
        %p389 = scmp.lt.s32.totalorder %s388, 3
        %s390 = scalar_select %p389, %s388, 3
        %s391 = smul.addr %s390, 4
        %s392 = scalar_lea.vmem %s0, %s391
        %p393 = pneg %p51
        %p394 = pneg %p48
        %p395 = pneg %p72
        %p396 = pneg %p69
        %p397 = pneg %p93
        %p398 = pneg %p90
        %s399 = sand.u32 %s106, 1
        %s400 = sand.u32 %s106, 1
        %s401 = smul.addr %s400, 128
        %s402 = scalar_lea.vmem [#allocation4], %s401
        %p403 = pneg %p119
        %p404 = pneg %p116
        %s405 = smul.u32 2, %s23
        %p406 = scmp.lt.s32.totalorder %s405, 3
        %s407 = scalar_select %p406, %s405, 3
        %s408 = scalar_lea.vmem %s4, %s407
        %p409 = pneg %p145
        %p410 = pneg %p142
        %s411 = smul.u32 32, %s23
        %p412 = scmp.lt.s32.totalorder %s411, 63
        %s413 = scalar_select %p412, %s411, 63
        %s414 = smul.addr %s413, 4
        %s415 = scalar_lea.vmem %s5, %s414
        %p416 = pneg %p171
        %p417 = pneg %p168
        %p418 = pneg %p192
        %p419 = pneg %p189
        %p420 = pneg %p218
        %p421 = pneg %p215
        %s422 = smul.u32 2, %s22
        %p423 = scmp.lt.s32.totalorder %s422, 3
        %s424 = scalar_select %p423, %s422, 3
        %s425 = smul.addr %s424, 4
        %s426 = scalar_lea.vmem %s7, %s425
        %s427 = smul.u32 2, %s22
        %p428 = scmp.lt.s32.totalorder %s427, 3
        %s429 = scalar_select %p428, %s427, 3
        %s430 = smul.addr %s429, 4
        %s431 = scalar_lea.vmem %s0, %s430
        %s432 = smul.u32 2, %s22
        %s433 = smul.u32 2, %s23
        %s434 = smul.u32 2, %s23
        %p435 = scmp.lt.s32.totalorder %s434, 3
        %s436 = scalar_select %p435, %s434, 3
        %s437 = scalar_lea.vmem %s4, %s436
        %s438 = smul.u32 2, %s23
        %s439 = smul.u32 32, %s23
        %p440 = scmp.lt.s32.totalorder %s439, 63
        %s441 = scalar_select %p440, %s439, 63
        %s442 = smul.addr %s441, 4
        %s443 = scalar_lea.vmem %s5, %s442
        %s444 = smul.u32 32, %s23
        %s445 = smul.u32 2, %s22
        %p446 = scmp.lt.s32.totalorder %s445, 3
        %s447 = scalar_select %p446, %s445, 3
        %s448 = smul.addr %s447, 4
        %s449 = scalar_lea.vmem %s7, %s448
        %s450 = smul.u32 2, %s22
        %p452 = scmp.eq.s32.totalorder %s23, 0
        // Predicated region
        $region87: #{transformer_forward.14} parent=81 // pred_check
          %p453 = pneg %p452
        $region88: #{transformer_forward.14} parent=81 // pred_check_branch
          %455 = sbr.rel (%p453) target = $region90
        $region89: #{transformer_forward.14} parent=81 // pred_region
          %v456 = vld [vmem:[%s431] sm:$0xf]
          %v457 = vld [vmem:[%s431 + $0x4] sm:$0xf]
          %v458 = vld [vmem:[%s1] sm:$0x1]
          %v459 = vld [vmem:[%s2] sm:$0x1]
          %v460 = vunpack.c.l.bf16 %v456
          %v461 = vunpack.c.l.bf16 %v457
          %462 = vadd.xlane.f32.xlu0 %v460
          %v463 = vpop.xlane.xlu0 %462
          %464 = vadd.xlane.f32.xlu0 %v461
          %v465 = vpop.xlane.xlu0 %464
          %v466 = vrcp.pop 128.0
          %v467 = vmul.f32 %v463, %v466
          %v468 = vmul.f32 %v465, %v466
          %v469 = vsub.f32 %v460, %v467
          %v470 = vsub.f32 %v461, %v468
          %v471 = vmul.f32 %v469, %v469
          %v472 = vmul.f32 %v470, %v470
          %473 = vadd.xlane.f32.xlu0 %v471
          %v474 = vpop.xlane.xlu0 %473
          %475 = vadd.xlane.f32.xlu0 %v472
          %v476 = vpop.xlane.xlu0 %475
          %v477 = vmul.f32 %v474, %v466
          %v478 = vmul.f32 %v476, %v466
          %v479 = vadd.f32 %v477, 1e-06
          %v480 = vadd.f32 %v478, 1e-06
          %v481 = vrsqrt.pop %v479
          %v482 = vrsqrt.pop %v480
          %v483 = vmul.f32 %v469, %v481
          %v484 = vmul.f32 %v470, %v482
          %v486 = vlaneseq
          %v487 = vshrl.u32 %v486, 7
          %v488 = vsub.s32 0, %v487
          %v489 = vrot.slane %v458, %v488
          %v491 = vmul.f32 %v483, %v489
          %v492 = vmul.f32 %v484, %v489
          %v494 = vlaneseq
          %v495 = vshrl.u32 %v494, 7
          %v496 = vsub.s32 0, %v495
          %v497 = vrot.slane %v459, %v496
          %v499 = vadd.f32 %v491, %v497
          %v500 = vadd.f32 %v492, %v497
          %v501 = vpack.c.bf16 %v500, %v499
          %502 = vst [vmem:[#allocation2] sm:$0xff] %v501
          %503 = vst [vmem:[#allocation3] sm:$0xff] 0.0
          %504 = vst [vmem:[#allocation3 + $0x8] sm:$0xff] 0.0
        $region90: #{transformer_forward.14} parent=81 // pred_fallthru
          _
        %v505 = vld [vmem:[#allocation2] sm:$0xff]
        %v506 = vld [vmem:[%s384] sm:$0xff]
        %v507 = vld [vmem:[%s384 + $0x8] sm:$0xff]
        %v508 = vld [vmem:[%s384 + $0x10] sm:$0xff]
        %v509 = vld [vmem:[%s384 + $0x18] sm:$0xff]
        %v510 = vld [vmem:[%s384 + $0x20] sm:$0xff]
        %v511 = vld [vmem:[%s384 + $0x28] sm:$0xff]
        %v512 = vld [vmem:[%s384 + $0x30] sm:$0xff]
        %v513 = vld [vmem:[%s384 + $0x38] sm:$0xff]
        %v514 = vld [vmem:[%s384 + $0x40] sm:$0xff]
        %v515 = vld [vmem:[%s384 + $0x48] sm:$0xff]
        %v516 = vld [vmem:[%s384 + $0x50] sm:$0xff]
        %v517 = vld [vmem:[%s384 + $0x58] sm:$0xff]
        %v518 = vld [vmem:[%s384 + $0x60] sm:$0xff]
        %v519 = vld [vmem:[%s384 + $0x68] sm:$0xff]
        %v520 = vld [vmem:[%s384 + $0x70] sm:$0xff]
        %v521 = vld [vmem:[%s384 + $0x78] sm:$0xff]
        %v522 = vld [vmem:[%s437] sm:$0x3]
        %v524 = vlaneseq
        %v525 = vshrl.u32 %v524, 7
        %v526 = vsub.s32 0, %v525
        %v527 = vrot.slane %v522, %v526
        %v528 = vlaneseq
        %v529 = vshrl.u32 %v528, 7
        %v530 = vsub.s32 1, %v529
        %v531 = vrot.slane %v522, %v530
        %v550 = vunpack.c.l.b16 %v506
        %v551 = vunpack.c.h.b16 %v506
        %v552 = vunpack.c.l.b16 %v507
        %v553 = vunpack.c.h.b16 %v507
        %v554 = vunpack.c.l.b16 %v508
        %v555 = vunpack.c.h.b16 %v508
        %v556 = vunpack.c.l.b16 %v509
        %v557 = vunpack.c.h.b16 %v509
        %v558 = vunpack.c.l.b16 %v510
        %v559 = vunpack.c.h.b16 %v510
        %v560 = vunpack.c.l.b16 %v511
        %v561 = vunpack.c.h.b16 %v511
        %v562 = vunpack.c.l.b16 %v512
        %v563 = vunpack.c.h.b16 %v512
        %v564 = vunpack.c.l.b16 %v513
        %v565 = vunpack.c.h.b16 %v513
        %v566 = vunpack.c.l.b16 %v514
        %v567 = vunpack.c.h.b16 %v514
        %v568 = vunpack.c.l.b16 %v515
        %v569 = vunpack.c.h.b16 %v515
        %v570 = vunpack.c.l.b16 %v516
        %v571 = vunpack.c.h.b16 %v516
        %v572 = vunpack.c.l.b16 %v517
        %v573 = vunpack.c.h.b16 %v517
        %v574 = vunpack.c.l.b16 %v518
        %v575 = vunpack.c.h.b16 %v518
        %v576 = vunpack.c.l.b16 %v519
        %v577 = vunpack.c.h.b16 %v519
        %v578 = vunpack.c.l.b16 %v520
        %v579 = vunpack.c.h.b16 %v520
        %v580 = vunpack.c.l.b16 %v521
        %v581 = vunpack.c.h.b16 %v521
        %v582 = vpack.c.b16 %v552, %v550
        %v583 = vpack.c.b16 %v553, %v551
        %v584 = vpack.c.b16 %v556, %v554
        %v585 = vpack.c.b16 %v557, %v555
        %v586 = vpack.c.b16 %v560, %v558
        %v587 = vpack.c.b16 %v561, %v559
        %v588 = vpack.c.b16 %v564, %v562
        %v589 = vpack.c.b16 %v565, %v563
        %v590 = vpack.c.b16 %v568, %v566
        %v591 = vpack.c.b16 %v569, %v567
        %v592 = vpack.c.b16 %v572, %v570
        %v593 = vpack.c.b16 %v573, %v571
        %v594 = vpack.c.b16 %v576, %v574
        %v595 = vpack.c.b16 %v577, %v575
        %v596 = vpack.c.b16 %v580, %v578
        %v597 = vpack.c.b16 %v581, %v579
        %614 = vmatprep.subr.bf16.mxu0 %v583
        %615 = vmatpush1.bf16.msra.mxu0 %v582
        %616 = vmatprep.subr.bf16.mxu0 %v585
        %617 = vmatpush1.bf16.msra.mxu0 %v584
        %618 = vmatprep.subr.bf16.mxu0 %v587
        %619 = vmatpush1.bf16.msra.mxu0 %v586
        %620 = vmatprep.subr.bf16.mxu0 %v589
        %621 = vmatpush1.bf16.msra.mxu0 %v588
        %622 = vmatprep.subr.bf16.mxu0 %v591
        %623 = vmatpush1.bf16.msra.mxu0 %v590
        %624 = vmatprep.subr.bf16.mxu0 %v593
        %625 = vmatpush1.bf16.msra.mxu0 %v592
        %626 = vmatprep.subr.bf16.mxu0 %v595
        %627 = vmatpush1.bf16.msra.mxu0 %v594
        %628 = vmatprep.subr.bf16.mxu0 %v597
        %629 = vmatpush1.bf16.msra.mxu0 %v596
        %630 = vmatprep.subr.bf16.mxu0 0
        %631 = vmatpush1.bf16.msra.mxu0 0
        %632 = vmatprep.subr.bf16.mxu0 0
        %633 = vmatpush1.bf16.msra.mxu0 0
        %634 = vmatprep.subr.bf16.mxu0 0
        %635 = vmatpush1.bf16.msra.mxu0 0
        %636 = vmatprep.subr.bf16.mxu0 0
        %637 = vmatpush1.bf16.msra.mxu0 0
        %638 = vmatprep.subr.bf16.mxu0 0
        %639 = vmatpush1.bf16.msra.mxu0 0
        %640 = vmatprep.subr.bf16.mxu0 0
        %641 = vmatpush1.bf16.msra.mxu0 0
        %642 = vmatprep.subr.bf16.mxu0 0
        %643 = vmatpush1.bf16.msra.mxu0 0
        %644 = vmatprep.subr.bf16.mxu0 0
        %645 = vmatpush1.bf16.msra.mxu0 0
        %646 = vmatprep.mubr.bf16.mxu0 0
        %647 = vmatmul.mubr.bf16.gmra.mrb[0].mxu0 %v505
        %v648 = vpop.f32.mrb[0].mxu0
        %v649 = vadd.f32 %v527, %v648
        %v650 = vpop.f32.mrb[0].mxu0
        %v651 = vadd.f32 %v531, %v650
        %v652 = vpop.f32.mrb[0].mxu0
        %v653 = vadd.f32 %v527, %v652
        %v654 = vpop.f32.mrb[0].mxu0
        %v655 = vadd.f32 %v531, %v654
        %656 = vdwg.mxu0
        %v657 = vmax.f32 %v649, 0.0
        %v658 = vmax.f32 %v651, 0.0
        %v659 = vmax.f32 %v653, 0.0
        %v660 = vmax.f32 %v655, 0.0
        %v661 = vpack.c.bf16 %v659, %v657
        %v662 = vpack.c.bf16 %v660, %v658
        %v663 = vld [vmem:[#allocation3] sm:$0xff]
        %v664 = vld [vmem:[#allocation3 + $0x8] sm:$0xff]
        %v665 = vld [vmem:[%s443] sm:$0xf]
        %v666 = vld [vmem:[%s443 + $0x4] sm:$0xf]
        %v667 = vld [vmem:[%s443 + $0x8] sm:$0xf]
        %v668 = vld [vmem:[%s443 + $0xc] sm:$0xf]
        %v669 = vld [vmem:[%s443 + $0x10] sm:$0xf]
        %v670 = vld [vmem:[%s443 + $0x14] sm:$0xf]
        %v671 = vld [vmem:[%s443 + $0x18] sm:$0xf]
        %v672 = vld [vmem:[%s443 + $0x1c] sm:$0xf]
        %v673 = vld [vmem:[%s443 + $0x20] sm:$0xf]
        %v674 = vld [vmem:[%s443 + $0x24] sm:$0xf]
        %v675 = vld [vmem:[%s443 + $0x28] sm:$0xf]
        %v676 = vld [vmem:[%s443 + $0x2c] sm:$0xf]
        %v677 = vld [vmem:[%s443 + $0x30] sm:$0xf]
        %v678 = vld [vmem:[%s443 + $0x34] sm:$0xf]
        %v679 = vld [vmem:[%s443 + $0x38] sm:$0xf]
        %v680 = vld [vmem:[%s443 + $0x3c] sm:$0xf]
        %v681 = vld [vmem:[%s443 + $0x40] sm:$0xf]
        %v682 = vld [vmem:[%s443 + $0x44] sm:$0xf]
        %v683 = vld [vmem:[%s443 + $0x48] sm:$0xf]
        %v684 = vld [vmem:[%s443 + $0x4c] sm:$0xf]
        %v685 = vld [vmem:[%s443 + $0x50] sm:$0xf]
        %v686 = vld [vmem:[%s443 + $0x54] sm:$0xf]
        %v687 = vld [vmem:[%s443 + $0x58] sm:$0xf]
        %v688 = vld [vmem:[%s443 + $0x5c] sm:$0xf]
        %v689 = vld [vmem:[%s443 + $0x60] sm:$0xf]
        %v690 = vld [vmem:[%s443 + $0x64] sm:$0xf]
        %v691 = vld [vmem:[%s443 + $0x68] sm:$0xf]
        %v692 = vld [vmem:[%s443 + $0x6c] sm:$0xf]
        %v693 = vld [vmem:[%s443 + $0x70] sm:$0xf]
        %v694 = vld [vmem:[%s443 + $0x74] sm:$0xf]
        %v695 = vld [vmem:[%s443 + $0x78] sm:$0xf]
        %v696 = vld [vmem:[%s443 + $0x7c] sm:$0xf]
        %v729 = vunpack.c.l.b16 %v665
        %v730 = vunpack.c.l.b16 %v666
        %v731 = vunpack.c.l.b16 %v667
        %v732 = vunpack.c.l.b16 %v668
        %v733 = vunpack.c.l.b16 %v669
        %v734 = vunpack.c.l.b16 %v670
        %v735 = vunpack.c.l.b16 %v671
        %v736 = vunpack.c.l.b16 %v672
        %v737 = vunpack.c.l.b16 %v673
        %v738 = vunpack.c.l.b16 %v674
        %v739 = vunpack.c.l.b16 %v675
        %v740 = vunpack.c.l.b16 %v676
        %v741 = vunpack.c.l.b16 %v677
        %v742 = vunpack.c.l.b16 %v678
        %v743 = vunpack.c.l.b16 %v679
        %v744 = vunpack.c.l.b16 %v680
        %v745 = vunpack.c.l.b16 %v681
        %v746 = vunpack.c.l.b16 %v682
        %v747 = vunpack.c.l.b16 %v683
        %v748 = vunpack.c.l.b16 %v684
        %v749 = vunpack.c.l.b16 %v685
        %v750 = vunpack.c.l.b16 %v686
        %v751 = vunpack.c.l.b16 %v687
        %v752 = vunpack.c.l.b16 %v688
        %v753 = vunpack.c.l.b16 %v689
        %v754 = vunpack.c.l.b16 %v690
        %v755 = vunpack.c.l.b16 %v691
        %v756 = vunpack.c.l.b16 %v692
        %v757 = vunpack.c.l.b16 %v693
        %v758 = vunpack.c.l.b16 %v694
        %v759 = vunpack.c.l.b16 %v695
        %v760 = vunpack.c.l.b16 %v696
        %v761 = vpack.c.b16 %v730, %v729
        %v762 = vpack.c.b16 %v732, %v731
        %v763 = vpack.c.b16 %v734, %v733
        %v764 = vpack.c.b16 %v736, %v735
        %v765 = vpack.c.b16 %v738, %v737
        %v766 = vpack.c.b16 %v740, %v739
        %v767 = vpack.c.b16 %v742, %v741
        %v768 = vpack.c.b16 %v744, %v743
        %v769 = vpack.c.b16 %v746, %v745
        %v770 = vpack.c.b16 %v748, %v747
        %v771 = vpack.c.b16 %v750, %v749
        %v772 = vpack.c.b16 %v752, %v751
        %v773 = vpack.c.b16 %v754, %v753
        %v774 = vpack.c.b16 %v756, %v755
        %v775 = vpack.c.b16 %v758, %v757
        %v776 = vpack.c.b16 %v760, %v759
        %793 = vmatprep.subr.bf16.mxu0 0
        %794 = vmatpush1.bf16.msra.mxu0 %v761
        %795 = vmatprep.subr.bf16.mxu0 0
        %796 = vmatpush1.bf16.msra.mxu0 %v762
        %797 = vmatprep.subr.bf16.mxu0 0
        %798 = vmatpush1.bf16.msra.mxu0 %v763
        %799 = vmatprep.subr.bf16.mxu0 0
        %800 = vmatpush1.bf16.msra.mxu0 %v764
        %801 = vmatprep.subr.bf16.mxu0 0
        %802 = vmatpush1.bf16.msra.mxu0 %v765
        %803 = vmatprep.subr.bf16.mxu0 0
        %804 = vmatpush1.bf16.msra.mxu0 %v766
        %805 = vmatprep.subr.bf16.mxu0 0
        %806 = vmatpush1.bf16.msra.mxu0 %v767
        %807 = vmatprep.subr.bf16.mxu0 0
        %808 = vmatpush1.bf16.msra.mxu0 %v768
        %809 = vmatprep.subr.bf16.mxu0 0
        %810 = vmatpush1.bf16.msra.mxu0 %v769
        %811 = vmatprep.subr.bf16.mxu0 0
        %812 = vmatpush1.bf16.msra.mxu0 %v770
        %813 = vmatprep.subr.bf16.mxu0 0
        %814 = vmatpush1.bf16.msra.mxu0 %v771
        %815 = vmatprep.subr.bf16.mxu0 0
        %816 = vmatpush1.bf16.msra.mxu0 %v772
        %817 = vmatprep.subr.bf16.mxu0 0
        %818 = vmatpush1.bf16.msra.mxu0 %v773
        %819 = vmatprep.subr.bf16.mxu0 0
        %820 = vmatpush1.bf16.msra.mxu0 %v774
        %821 = vmatprep.subr.bf16.mxu0 0
        %822 = vmatpush1.bf16.msra.mxu0 %v775
        %823 = vmatprep.subr.bf16.mxu0 0
        %824 = vmatpush1.bf16.msra.mxu0 %v776
        %825 = vmatprep.mubr.bf16.mxu0 %v662
        %826 = vmatmul.mubr.bf16.gmra.mrb[0].mxu0 %v661
        %v827 = vpop.f32.mrb[0].mxu0
        %v828 = vadd.f32 0.0, %v827
        %v829 = vpop.f32.mrb[0].mxu0
        %v830 = vpop.f32.mrb[0].mxu0
        %v831 = vadd.f32 0.0, %v830
        %v832 = vpop.f32.mrb[0].mxu0
        %833 = vdwg.mxu0
        %v834 = vadd.f32 %v663, %v828
        %v835 = vadd.f32 %v664, %v831
        %836 = vst [vmem:[#allocation3] sm:$0xff] %v834
        %837 = vst [vmem:[#allocation3 + $0x8] sm:$0xff] %v835
        %p838 = scmp.eq.s32.totalorder %s23, 1
        // Predicated region
        $region91: #{transformer_forward.14} parent=81 // pred_check
          %p839 = pneg %p838
        $region92: #{transformer_forward.14} parent=81 // pred_check_branch
          %841 = sbr.rel (%p839) target = $region94
        $region93: #{transformer_forward.14} parent=81 // pred_region
          %v842 = vld [vmem:[%s431] sm:$0xf]
          %v843 = vld [vmem:[%s431 + $0x4] sm:$0xf]
          %v844 = vunpack.c.l.bf16 %v842
          %v845 = vunpack.c.l.bf16 %v843
          %v846 = vld [vmem:[#allocation3] sm:$0xff]
          %v847 = vld [vmem:[#allocation3 + $0x8] sm:$0xff]
          %v848 = vadd.f32 %v844, %v846
          %v849 = vadd.f32 %v845, %v847
          %v850 = vld [vmem:[%s6] sm:$0x1]
          %v852 = vlaneseq
          %v853 = vshrl.u32 %v852, 7
          %v854 = vsub.s32 0, %v853
          %v855 = vrot.slane %v850, %v854
          %v857 = vadd.f32 %v848, %v855
          %v858 = vadd.f32 %v849, %v855
          %v859 = vpack.c.bf16 %v858, %v857
          %v861 = vunpack.c.l.b16 %v859
          %v862 = vunpack.c.h.b16 %v859
          %v863 = vpack.c.b16 %v861, %v861
          %v864 = vpack.c.b16 %v862, %v862
          %867 = vst [vmem:[%s449] sm:$0xf] %v863
          %868 = vst [vmem:[%s449 + $0x4] sm:$0xf] %v864
        $region94: #{transformer_forward.14} parent=81 // pred_fallthru
          _
        %s869 = smul.u32 2, %s22
        %p870 = scmp.lt.s32.totalorder %s869, 3
        %s871 = scalar_select %p870, %s869, 3
        %s872 = smul.addr %s871, 4
        %s873 = scalar_lea.vmem %s7, %s872
        // Predicated region
        $region95: #{transformer_forward.14} parent=81 // pred_check
          %p874 = pneg %p215
        $region96: #{transformer_forward.14} parent=81 // pred_check_branch
          %876 = sbr.rel (%p874) target = $region98
        $region97: #{transformer_forward.14} parent=81 // pred_region
          %s877 = smul.u32 2, %s22
        $region98: #{transformer_forward.14} parent=81 // pred_fallthru
          _
      $region82: #{transformer_forward.14} parent=5 // pred_fallthru
        _
      %p878 = scmp.le.s32.totalorder 2, %s13
      // Predicated region
      $region99: #{transformer_forward.14} parent=5 // pred_check
        %p879 = pneg %p878
      $region100: #{transformer_forward.14} parent=5 // pred_check_branch
        %881 = sbr.rel (%p879) target = $region102
      $region101: #{transformer_forward.14} parent=5 // pred_region
        %s882 = ssub.s32 %s13, 2
        // Predicated region
        $region103: #{transformer_forward.14} parent=101 // pred_check
          %p883 = pneg %p221
        $region104: #{transformer_forward.14} parent=101 // pred_check_branch
          %885 = sbr.rel (%p883) target = $region106
        $region105: #{transformer_forward.14} parent=101 // pred_region
          %s886 = smul.u32 2, %s24
          %p887 = scmp.lt.s32.totalorder %s886, 3
          %s888 = scalar_select %p887, %s886, 3
          %s889 = smul.addr %s888, 4
          %s890 = scalar_lea.vmem %s7, %s889
        $region106: #{transformer_forward.14} parent=101 // pred_fallthru
          _
      $region102: #{transformer_forward.14} parent=5 // pred_fallthru
        _
    $region6: #{transformer_forward.14} parent=1 // loop_footer
      %s17 = sadd.s32 1, %s13
    $region7: #{transformer_forward.14} parent=1 // loop_footer_branch
      %12 = sbr.rel target = $region3
    $region8: #{transformer_forward.14} parent=1 // loop_exit
      _

// kernel: transformer_forward.13
$region0: #{transformer_forward.13}
  #allocation0 [shape = 'u32[]', space=smem, size = 0x4, offset = 0x4, fixed_abs, tag = 'smem constant byte address 0x4 - core index']
  #allocation1 [shape = 'u32[144,128]{1,0:T(1,128)}', space=vmem, size = 0x12000, scoped, tag = 'internal scratch']
  #allocation2 [shape = 's32[1]{0}', space=sflag, size = 0x4, scoped, tag = 'scoped memory for transformer_forward.13']
  #allocation3 [shape = 'u8[512]{0}', space=smem, size = 0x200, scoped, tag = 'prefetched SMEM operand 0']
  %s0 = inlined_call_operand.vmem [shape: s32[2], index: 0, kind: input, shape index: {}]
  %s1 = inlined_call_operand.vmem [shape: bf16[2,16,128], index: 1, kind: input, shape index: {}]
  %s2 = inlined_call_operand.vmem [shape: f32[1,128], index: 2, kind: input, shape index: {}]
  %s3 = inlined_call_operand.vmem [shape: f32[1,128], index: 3, kind: input, shape index: {}]
  %s4 = inlined_call_operand.vmem [shape: bf16[128,384], index: 4, kind: input, shape index: {}]
  %s5 = inlined_call_operand.vmem [shape: f32[1,384], index: 5, kind: input, shape index: {}]
  %s6 = inlined_call_operand.vmem [shape: bf16[128,128], index: 6, kind: input, shape index: {}]
  %s7 = inlined_call_operand.vmem [shape: f32[1,128], index: 7, kind: input, shape index: {}]
  %s8 = inlined_call_operand.vmem [shape: bf16[2,16,128], index: 8, kind: output, shape index: {}]
  %s9 = sld [smem:[#allocation0]]
  $region61: #{transformer_forward.13} parent=0
    _
  %s11 = ssub.s32 1, %s9
  %s12 = scalar_select 0, %s11, %s9
  %s13 = sshll.u32 %s0, 4
  %s14 = int_to_ptr.vmem [resolvable:$true] %s13
  %16 = dma.vmem_to_smem %s14, 16, [#allocation3], [#allocation2]
  %17 = dma.done [#allocation2], 16
  %18 = sfence
  loop: start=0, step=1, limit=4
  $region2: #{transformer_forward.13} parent=0 // loop_pre_header
    _
  $region3: #{transformer_forward.13} parent=0 // loop_header
    %s20 = sphi 0, %s24
    %p21 = scmp.ge.s32.totalorder %s20, 4
    %s30 = sphi 0, %s32
    %s33 = sphi 0, %s30
    %s34 = sphi 0, %s33
    %s50 = sphi 0, %s34
    %s54 = sphi 0, %s54
    %s56 = sphi 0, %s54
    %s57 = sphi 0, %s56
    %s71 = sphi 0, %s57
    %s75 = sphi 0, %s75
    %s77 = sphi 0, %s75
    %s78 = sphi 0, %s77
    %s92 = sphi 0, %s78
    %s96 = sphi 0, %s96
    %s98 = sphi 0, %s96
    %s99 = sphi 0, %s98
    %s113 = sphi 0, %s99
    %s117 = sphi 0, %s117
    %s119 = sphi 0, %s117
    %s120 = sphi 0, %s119
    %s134 = sphi 0, %s120
    %s138 = sphi 0, %s138
    %s140 = sphi 0, %s138
    %s141 = sphi 0, %s140
    %s155 = sphi 0, %s141
    %s159 = sphi 0, %s159
    %s161 = sphi 0, %s159
    %s162 = sphi 0, %s161
    %s176 = sphi 0, %s162
    %s182 = sphi 0, %s184
    %s185 = sphi 0, %s182
    %s186 = sphi 0, %s185
    %s202 = sphi 0, %s186
  $region4: #{transformer_forward.13} parent=0 // loop_header_branch
    %23 = sbr.rel (%p21) target = $region8
  $region5: #{transformer_forward.13} parent=0 // loop_body
    %s25 = ssub.s32 %s20, 1
    %s26 = ssub.s32 %s20, 2
    %s27 = sadd.s32 %s20, 1
    %s28 = ssub.s32 %s20, %s27
    %p29 = scmp.eq.s32.totalorder %s28, 0
    %s31 = sadd.s32 %s30, 1
    %s32 = scalar_select %p29, %s30, %s31
    %p35 = pneg %p29
    %p36 = scmp.eq.s32.totalorder %s20, 1
    %p37 = por %p35, %p36
    %p38 = scmp.ne.s32.totalorder %s30, %s33
    %p39 = scmp.eq.s32.totalorder %s20, 0
    %p40 = por %p38, %p39
    %p41 = scmp.ne.s32.totalorder %s30, %s33
    %p42 = scmp.eq.s32.totalorder %s25, 1
    %p43 = por %p41, %p42
    %p44 = scmp.ne.s32.totalorder %s33, %s34
    %p45 = scmp.eq.s32.totalorder %s25, 0
    %p46 = por %p44, %p45
    %p47 = scmp.ne.s32.totalorder %s33, %s34
    %p48 = scmp.eq.s32.totalorder %s26, 1
    %p49 = por %p47, %p48
    %p51 = scmp.ne.s32.totalorder %s34, %s50
    %p52 = scmp.eq.s32.totalorder %s26, 0
    %p53 = por %p51, %p52
    %s55 = sadd.s32 %s54, 1
    %p58 = scmp.eq.s32.totalorder %s20, 1
    %p59 = scmp.ne.s32.totalorder %s54, %s56
    %p60 = scmp.eq.s32.totalorder %s20, 0
    %p61 = por %p59, %p60
    %p62 = scmp.ne.s32.totalorder %s54, %s56
    %p63 = scmp.eq.s32.totalorder %s25, 1
    %p64 = por %p62, %p63
    %p65 = scmp.ne.s32.totalorder %s56, %s57
    %p66 = scmp.eq.s32.totalorder %s25, 0
    %p67 = por %p65, %p66
    %p68 = scmp.ne.s32.totalorder %s56, %s57
    %p69 = scmp.eq.s32.totalorder %s26, 1
    %p70 = por %p68, %p69
    %p72 = scmp.ne.s32.totalorder %s57, %s71
    %p73 = scmp.eq.s32.totalorder %s26, 0
    %p74 = por %p72, %p73
    %s76 = sadd.s32 %s75, 1
    %p79 = scmp.eq.s32.totalorder %s20, 1
    %p80 = scmp.ne.s32.totalorder %s75, %s77
    %p81 = scmp.eq.s32.totalorder %s20, 0
    %p82 = por %p80, %p81
    %p83 = scmp.ne.s32.totalorder %s75, %s77
    %p84 = scmp.eq.s32.totalorder %s25, 1
    %p85 = por %p83, %p84
    %p86 = scmp.ne.s32.totalorder %s77, %s78
    %p87 = scmp.eq.s32.totalorder %s25, 0
    %p88 = por %p86, %p87
    %p89 = scmp.ne.s32.totalorder %s77, %s78
    %p90 = scmp.eq.s32.totalorder %s26, 1
    %p91 = por %p89, %p90
    %p93 = scmp.ne.s32.totalorder %s78, %s92
    %p94 = scmp.eq.s32.totalorder %s26, 0
    %p95 = por %p93, %p94
    %s97 = sadd.s32 %s96, 1
    %p100 = scmp.eq.s32.totalorder %s20, 1
    %p101 = scmp.ne.s32.totalorder %s96, %s98
    %p102 = scmp.eq.s32.totalorder %s20, 0
    %p103 = por %p101, %p102
    %p104 = scmp.ne.s32.totalorder %s96, %s98
    %p105 = scmp.eq.s32.totalorder %s25, 1
    %p106 = por %p104, %p105
    %p107 = scmp.ne.s32.totalorder %s98, %s99
    %p108 = scmp.eq.s32.totalorder %s25, 0
    %p109 = por %p107, %p108
    %p110 = scmp.ne.s32.totalorder %s98, %s99
    %p111 = scmp.eq.s32.totalorder %s26, 1
    %p112 = por %p110, %p111
    %p114 = scmp.ne.s32.totalorder %s99, %s113
    %p115 = scmp.eq.s32.totalorder %s26, 0
    %p116 = por %p114, %p115
    %s118 = sadd.s32 %s117, 1
    %p121 = scmp.eq.s32.totalorder %s20, 1
    %p122 = scmp.ne.s32.totalorder %s117, %s119
    %p123 = scmp.eq.s32.totalorder %s20, 0
    %p124 = por %p122, %p123
    %p125 = scmp.ne.s32.totalorder %s117, %s119
    %p126 = scmp.eq.s32.totalorder %s25, 1
    %p127 = por %p125, %p126
    %p128 = scmp.ne.s32.totalorder %s119, %s120
    %p129 = scmp.eq.s32.totalorder %s25, 0
    %p130 = por %p128, %p129
    %p131 = scmp.ne.s32.totalorder %s119, %s120
    %p132 = scmp.eq.s32.totalorder %s26, 1
    %p133 = por %p131, %p132
    %p135 = scmp.ne.s32.totalorder %s120, %s134
    %p136 = scmp.eq.s32.totalorder %s26, 0
    %p137 = por %p135, %p136
    %s139 = sadd.s32 %s138, 1
    %p142 = scmp.eq.s32.totalorder %s20, 1
    %p143 = scmp.ne.s32.totalorder %s138, %s140
    %p144 = scmp.eq.s32.totalorder %s20, 0
    %p145 = por %p143, %p144
    %p146 = scmp.ne.s32.totalorder %s138, %s140
    %p147 = scmp.eq.s32.totalorder %s25, 1
    %p148 = por %p146, %p147
    %p149 = scmp.ne.s32.totalorder %s140, %s141
    %p150 = scmp.eq.s32.totalorder %s25, 0
    %p151 = por %p149, %p150
    %p152 = scmp.ne.s32.totalorder %s140, %s141
    %p153 = scmp.eq.s32.totalorder %s26, 1
    %p154 = por %p152, %p153
    %p156 = scmp.ne.s32.totalorder %s141, %s155
    %p157 = scmp.eq.s32.totalorder %s26, 0
    %p158 = por %p156, %p157
    %s160 = sadd.s32 %s159, 1
    %p163 = scmp.eq.s32.totalorder %s20, 1
    %p164 = scmp.ne.s32.totalorder %s159, %s161
    %p165 = scmp.eq.s32.totalorder %s20, 0
    %p166 = por %p164, %p165
    %p167 = scmp.ne.s32.totalorder %s159, %s161
    %p168 = scmp.eq.s32.totalorder %s25, 1
    %p169 = por %p167, %p168
    %p170 = scmp.ne.s32.totalorder %s161, %s162
    %p171 = scmp.eq.s32.totalorder %s25, 0
    %p172 = por %p170, %p171
    %p173 = scmp.ne.s32.totalorder %s161, %s162
    %p174 = scmp.eq.s32.totalorder %s26, 1
    %p175 = por %p173, %p174
    %p177 = scmp.ne.s32.totalorder %s162, %s176
    %p178 = scmp.eq.s32.totalorder %s26, 0
    %p179 = por %p177, %p178
    %s180 = ssub.s32 %s20, %s27
    %p181 = scmp.eq.s32.totalorder %s180, 0
    %s183 = sadd.s32 %s182, 1
    %s184 = scalar_select %p181, %s182, %s183
    %p187 = pneg %p181
    %p188 = scmp.eq.s32.totalorder %s20, 1
    %p189 = por %p187, %p188
    %p190 = scmp.ne.s32.totalorder %s182, %s185
    %p191 = scmp.eq.s32.totalorder %s20, 0
    %p192 = por %p190, %p191
    %p193 = scmp.ne.s32.totalorder %s182, %s185
    %p194 = scmp.eq.s32.totalorder %s25, 1
    %p195 = por %p193, %p194
    %p196 = scmp.ne.s32.totalorder %s185, %s186
    %p197 = scmp.eq.s32.totalorder %s25, 0
    %p198 = por %p196, %p197
    %p199 = scmp.ne.s32.totalorder %s185, %s186
    %p200 = scmp.eq.s32.totalorder %s26, 1
    %p201 = por %p199, %p200
    %p203 = scmp.ne.s32.totalorder %s186, %s202
    %p204 = scmp.eq.s32.totalorder %s26, 0
    %p205 = por %p203, %p204
    %p206 = scmp.le.s32.totalorder 1, %s20
    %p207 = scmp.lt.s32.totalorder %s20, 3
    %p208 = pnand %p206, %p207
    %p209 = pneg %p208
    // Predicated region
    $region9: #{transformer_forward.13} parent=5 // pred_check
      _
    $region10: #{transformer_forward.13} parent=5 // pred_check_branch
      %211 = sbr.rel (%p208) target = $region12
    $region11: #{transformer_forward.13} parent=5 // pred_region
      %s212 = ssub.s32 %s20, 1
      // Predicated region
      $region13: #{transformer_forward.13} parent=11 // pred_check
        %p213 = pneg %p67
      $region14: #{transformer_forward.13} parent=11 // pred_check_branch
        %215 = sbr.rel (%p213) target = $region16
      $region15: #{transformer_forward.13} parent=11 // pred_region
        _
      $region16: #{transformer_forward.13} parent=11 // pred_fallthru
        _
      // Predicated region
      $region17: #{transformer_forward.13} parent=11 // pred_check
        %p216 = pneg %p88
      $region18: #{transformer_forward.13} parent=11 // pred_check_branch
        %218 = sbr.rel (%p216) target = $region20
      $region19: #{transformer_forward.13} parent=11 // pred_region
        _
      $region20: #{transformer_forward.13} parent=11 // pred_fallthru
        _
      // Predicated region
      $region21: #{transformer_forward.13} parent=11 // pred_check
        %p219 = pneg %p109
      $region22: #{transformer_forward.13} parent=11 // pred_check_branch
        %221 = sbr.rel (%p219) target = $region24
      $region23: #{transformer_forward.13} parent=11 // pred_region
        _
      $region24: #{transformer_forward.13} parent=11 // pred_fallthru
        _
      // Predicated region
      $region25: #{transformer_forward.13} parent=11 // pred_check
        %p222 = pneg %p130
      $region26: #{transformer_forward.13} parent=11 // pred_check_branch
        %224 = sbr.rel (%p222) target = $region28
      $region27: #{transformer_forward.13} parent=11 // pred_region
        _
      $region28: #{transformer_forward.13} parent=11 // pred_fallthru
        _
      // Predicated region
      $region29: #{transformer_forward.13} parent=11 // pred_check
        %p225 = pneg %p151
      $region30: #{transformer_forward.13} parent=11 // pred_check_branch
        %227 = sbr.rel (%p225) target = $region32
      $region31: #{transformer_forward.13} parent=11 // pred_region
        _
      $region32: #{transformer_forward.13} parent=11 // pred_fallthru
        _
      // Predicated region
      $region33: #{transformer_forward.13} parent=11 // pred_check
        %p228 = pneg %p172
      $region34: #{transformer_forward.13} parent=11 // pred_check_branch
        %230 = sbr.rel (%p228) target = $region36
      $region35: #{transformer_forward.13} parent=11 // pred_region
        _
      $region36: #{transformer_forward.13} parent=11 // pred_fallthru
        _
    $region12: #{transformer_forward.13} parent=5 // pred_fallthru
      _
    %p231 = scmp.lt.s32.totalorder %s20, 2
    // Predicated region
    $region37: #{transformer_forward.13} parent=5 // pred_check
      %p232 = pneg %p231
    $region38: #{transformer_forward.13} parent=5 // pred_check_branch
      %234 = sbr.rel (%p232) target = $region40
    $region39: #{transformer_forward.13} parent=5 // pred_region
      // Predicated region
      $region41: #{transformer_forward.13} parent=39 // pred_check
        %p235 = pneg %p40
      $region42: #{transformer_forward.13} parent=39 // pred_check_branch
        %237 = sbr.rel (%p235) target = $region44
      $region43: #{transformer_forward.13} parent=39 // pred_region
        %p238 = scmp.lt.s32.totalorder %s20, 1
        %s239 = scalar_select %p238, %s20, 1
        %s240 = smul.addr %s239, 2
        %s241 = smul.addr %s240, 4
        %s242 = scalar_lea.vmem %s1, %s241
      $region44: #{transformer_forward.13} parent=39 // pred_fallthru
        _
    $region40: #{transformer_forward.13} parent=5 // pred_fallthru
      _
    %p243 = scmp.le.s32.totalorder 1, %s20
    %p244 = scmp.lt.s32.totalorder %s20, 3
    %p245 = pnand %p243, %p244
    %p246 = pneg %p245
    // Predicated region
    $region45: #{transformer_forward.13} parent=5 // pred_check
      _
    $region46: #{transformer_forward.13} parent=5 // pred_check_branch
      %248 = sbr.rel (%p245) target = $region48
    $region47: #{transformer_forward.13} parent=5 // pred_region
      %s249 = ssub.s32 %s20, 1
      %p250 = scmp.lt.s32.totalorder %s25, 1
      %s251 = scalar_select %p250, %s25, 1
      %s252 = smul.addr %s251, 2
      %s253 = smul.addr %s252, 4
      %s254 = scalar_lea.vmem %s1, %s253
      %p255 = pneg %p46
      %p256 = pneg %p43
      %p257 = pneg %p67
      %p258 = pneg %p64
      %p259 = pneg %p88
      %p260 = pneg %p85
      %p261 = pneg %p109
      %p262 = pneg %p106
      %p263 = pneg %p130
      %p264 = pneg %p127
      %p265 = pneg %p151
      %p266 = pneg %p148
      %p267 = pneg %p172
      %p268 = pneg %p169
      %p269 = pneg %p198
      %p270 = pneg %p195
      %p271 = scmp.lt.s32.totalorder %s25, 1
      %s272 = scalar_select %p271, %s25, 1
      %s273 = smul.addr %s272, 2
      %s274 = smul.addr %s273, 4
      %s275 = scalar_lea.vmem %s8, %s274
      %p276 = scmp.lt.s32.totalorder %s25, 1
      %s277 = scalar_select %p276, %s25, 1
      %s278 = smul.addr %s277, 2
      %s279 = smul.addr %s278, 4
      %s280 = scalar_lea.vmem %s1, %s279
      %p281 = scmp.lt.s32.totalorder %s25, 1
      %s282 = scalar_select %p281, %s25, 1
      %s283 = smul.addr %s282, 2
      %s284 = smul.addr %s283, 4
      %s285 = scalar_lea.vmem %s8, %s284
      %v287 = vld [vmem:[%s280] sm:$0xf]
      %v288 = vld [vmem:[%s280 + $0x4] sm:$0xf]
      %v289 = vunpack.c.l.bf16 %v287
      %v290 = vunpack.c.l.bf16 %v288
      %v291 = vld [vmem:[%s2] sm:$0x1]
      %v292 = vld [vmem:[%s3] sm:$0x1]
      %293 = vadd.xlane.f32.xlu0 %v289
      %v294 = vpop.xlane.xlu0 %293
      %295 = vadd.xlane.f32.xlu0 %v290
      %v296 = vpop.xlane.xlu0 %295
      %v297 = vrcp.pop 128.0
      %v298 = vmul.f32 %v294, %v297
      %v299 = vmul.f32 %v296, %v297
      %v300 = vsub.f32 %v289, %v298
      %v301 = vsub.f32 %v290, %v299
      %v302 = vmul.f32 %v300, %v300
      %v303 = vmul.f32 %v301, %v301
      %304 = vadd.xlane.f32.xlu0 %v302
      %v305 = vpop.xlane.xlu0 %304
      %306 = vadd.xlane.f32.xlu0 %v303
      %v307 = vpop.xlane.xlu0 %306
      %v308 = vmul.f32 %v305, %v297
      %v309 = vmul.f32 %v307, %v297
      %v310 = vadd.f32 %v308, 1e-06
      %v311 = vadd.f32 %v309, 1e-06
      %v312 = vrsqrt.pop %v310
      %v313 = vrsqrt.pop %v311
      %v314 = vmul.f32 %v300, %v312
      %v315 = vmul.f32 %v301, %v313
      %v317 = vlaneseq
      %v318 = vshrl.u32 %v317, 7
      %v319 = vsub.s32 0, %v318
      %v320 = vrot.slane %v291, %v319
      %v322 = vmul.f32 %v314, %v320
      %v323 = vmul.f32 %v315, %v320
      %v325 = vlaneseq
      %v326 = vshrl.u32 %v325, 7
      %v327 = vsub.s32 0, %v326
      %v328 = vrot.slane %v292, %v327
      %v330 = vadd.f32 %v322, %v328
      %v331 = vadd.f32 %v323, %v328
      %v332 = vpack.c.bf16 %v331, %v330
      %v333 = vld [vmem:[%s4] sm:$0xff]
      %v334 = vld [vmem:[%s4 + $0x8] sm:$0xf]
      %v335 = vld [vmem:[%s4 + $0xc] sm:$0xff]
      %v336 = vld [vmem:[%s4 + $0x14] sm:$0xf]
      %v337 = vld [vmem:[%s4 + $0x18] sm:$0xff]
      %v338 = vld [vmem:[%s4 + $0x20] sm:$0xf]
      %v339 = vld [vmem:[%s4 + $0x24] sm:$0xff]
      %v340 = vld [vmem:[%s4 + $0x2c] sm:$0xf]
      %v341 = vld [vmem:[%s4 + $0x30] sm:$0xff]
      %v342 = vld [vmem:[%s4 + $0x38] sm:$0xf]
      %v343 = vld [vmem:[%s4 + $0x3c] sm:$0xff]
      %v344 = vld [vmem:[%s4 + $0x44] sm:$0xf]
      %v345 = vld [vmem:[%s4 + $0x48] sm:$0xff]
      %v346 = vld [vmem:[%s4 + $0x50] sm:$0xf]
      %v347 = vld [vmem:[%s4 + $0x54] sm:$0xff]
      %v348 = vld [vmem:[%s4 + $0x5c] sm:$0xf]
      %v349 = vld [vmem:[%s4 + $0x60] sm:$0xff]
      %v350 = vld [vmem:[%s4 + $0x68] sm:$0xf]
      %v351 = vld [vmem:[%s4 + $0x6c] sm:$0xff]
      %v352 = vld [vmem:[%s4 + $0x74] sm:$0xf]
      %v353 = vld [vmem:[%s4 + $0x78] sm:$0xff]
      %v354 = vld [vmem:[%s4 + $0x80] sm:$0xf]
      %v355 = vld [vmem:[%s4 + $0x84] sm:$0xff]
      %v356 = vld [vmem:[%s4 + $0x8c] sm:$0xf]
      %v357 = vld [vmem:[%s4 + $0x90] sm:$0xff]
      %v358 = vld [vmem:[%s4 + $0x98] sm:$0xf]
      %v359 = vld [vmem:[%s4 + $0x9c] sm:$0xff]
      %v360 = vld [vmem:[%s4 + $0xa4] sm:$0xf]
      %v361 = vld [vmem:[%s4 + $0xa8] sm:$0xff]
      %v362 = vld [vmem:[%s4 + $0xb0] sm:$0xf]
      %v363 = vld [vmem:[%s4 + $0xb4] sm:$0xff]
      %v364 = vld [vmem:[%s4 + $0xbc] sm:$0xf]
      %v365 = vld [vmem:[%s5] sm:$0x7]
      %v367 = vlaneseq
      %v368 = vshrl.u32 %v367, 7
      %v369 = vsub.s32 0, %v368
      %v370 = vrot.slane %v365, %v369
      %v371 = vlaneseq
      %v372 = vshrl.u32 %v371, 7
      %v373 = vsub.s32 1, %v372
      %v374 = vrot.slane %v365, %v373
      %v375 = vlaneseq
      %v376 = vshrl.u32 %v375, 7
      %v377 = vsub.s32 2, %v376
      %v378 = vrot.slane %v365, %v377
      %v414 = vunpack.c.l.b16 %v333
      %v415 = vunpack.c.h.b16 %v333
      %v416 = vunpack.c.l.b16 %v334
      %v417 = vunpack.c.l.b16 %v335
      %v418 = vunpack.c.h.b16 %v335
      %v419 = vunpack.c.l.b16 %v336
      %v420 = vunpack.c.l.b16 %v337
      %v421 = vunpack.c.h.b16 %v337
      %v422 = vunpack.c.l.b16 %v338
      %v423 = vunpack.c.l.b16 %v339
      %v424 = vunpack.c.h.b16 %v339
      %v425 = vunpack.c.l.b16 %v340
      %v426 = vunpack.c.l.b16 %v341
      %v427 = vunpack.c.h.b16 %v341
      %v428 = vunpack.c.l.b16 %v342
      %v429 = vunpack.c.l.b16 %v343
      %v430 = vunpack.c.h.b16 %v343
      %v431 = vunpack.c.l.b16 %v344
      %v432 = vunpack.c.l.b16 %v345
      %v433 = vunpack.c.h.b16 %v345
      %v434 = vunpack.c.l.b16 %v346
      %v435 = vunpack.c.l.b16 %v347
      %v436 = vunpack.c.h.b16 %v347
      %v437 = vunpack.c.l.b16 %v348
      %v438 = vunpack.c.l.b16 %v349
      %v439 = vunpack.c.h.b16 %v349
      %v440 = vunpack.c.l.b16 %v350
      %v441 = vunpack.c.l.b16 %v351
      %v442 = vunpack.c.h.b16 %v351
      %v443 = vunpack.c.l.b16 %v352
      %v444 = vunpack.c.l.b16 %v353
      %v445 = vunpack.c.h.b16 %v353
      %v446 = vunpack.c.l.b16 %v354
      %v447 = vunpack.c.l.b16 %v355
      %v448 = vunpack.c.h.b16 %v355
      %v449 = vunpack.c.l.b16 %v356
      %v450 = vunpack.c.l.b16 %v357
      %v451 = vunpack.c.h.b16 %v357
      %v452 = vunpack.c.l.b16 %v358
      %v453 = vunpack.c.l.b16 %v359
      %v454 = vunpack.c.h.b16 %v359
      %v455 = vunpack.c.l.b16 %v360
      %v456 = vunpack.c.l.b16 %v361
      %v457 = vunpack.c.h.b16 %v361
      %v458 = vunpack.c.l.b16 %v362
      %v459 = vunpack.c.l.b16 %v363
      %v460 = vunpack.c.h.b16 %v363
      %v461 = vunpack.c.l.b16 %v364
      %v462 = vpack.c.b16 %v417, %v414
      %v463 = vpack.c.b16 %v418, %v415
      %v464 = vpack.c.b16 %v419, %v416
      %v465 = vpack.c.b16 %v423, %v420
      %v466 = vpack.c.b16 %v424, %v421
      %v467 = vpack.c.b16 %v425, %v422
      %v468 = vpack.c.b16 %v429, %v426
      %v469 = vpack.c.b16 %v430, %v427
      %v470 = vpack.c.b16 %v431, %v428
      %v471 = vpack.c.b16 %v435, %v432
      %v472 = vpack.c.b16 %v436, %v433
      %v473 = vpack.c.b16 %v437, %v434
      %v474 = vpack.c.b16 %v441, %v438
      %v475 = vpack.c.b16 %v442, %v439
      %v476 = vpack.c.b16 %v443, %v440
      %v477 = vpack.c.b16 %v447, %v444
      %v478 = vpack.c.b16 %v448, %v445
      %v479 = vpack.c.b16 %v449, %v446
      %v480 = vpack.c.b16 %v453, %v450
      %v481 = vpack.c.b16 %v454, %v451
      %v482 = vpack.c.b16 %v455, %v452
      %v483 = vpack.c.b16 %v459, %v456
      %v484 = vpack.c.b16 %v460, %v457
      %v485 = vpack.c.b16 %v461, %v458
      %510 = vmatprep.subr.bf16.mxu0 %v463
      %511 = vmatpush1.bf16.msra.mxu0 %v462
      %512 = vmatprep.subr.bf16.mxu0 %v466
      %513 = vmatpush1.bf16.msra.mxu0 %v465
      %514 = vmatprep.subr.bf16.mxu0 %v469
      %515 = vmatpush1.bf16.msra.mxu0 %v468
      %516 = vmatprep.subr.bf16.mxu0 %v472
      %517 = vmatpush1.bf16.msra.mxu0 %v471
      %518 = vmatprep.subr.bf16.mxu0 %v475
      %519 = vmatpush1.bf16.msra.mxu0 %v474
      %520 = vmatprep.subr.bf16.mxu0 %v478
      %521 = vmatpush1.bf16.msra.mxu0 %v477
      %522 = vmatprep.subr.bf16.mxu0 %v481
      %523 = vmatpush1.bf16.msra.mxu0 %v480
      %524 = vmatprep.subr.bf16.mxu0 %v484
      %525 = vmatpush1.bf16.msra.mxu0 %v483
      %526 = vmatprep.subr.bf16.mxu0 0
      %527 = vmatpush1.bf16.msra.mxu0 0
      %528 = vmatprep.subr.bf16.mxu0 0
      %529 = vmatpush1.bf16.msra.mxu0 0
      %530 = vmatprep.subr.bf16.mxu0 0
      %531 = vmatpush1.bf16.msra.mxu0 0
      %532 = vmatprep.subr.bf16.mxu0 0
      %533 = vmatpush1.bf16.msra.mxu0 0
      %534 = vmatprep.subr.bf16.mxu0 0
      %535 = vmatpush1.bf16.msra.mxu0 0
      %536 = vmatprep.subr.bf16.mxu0 0
      %537 = vmatpush1.bf16.msra.mxu0 0
      %538 = vmatprep.subr.bf16.mxu0 0
      %539 = vmatpush1.bf16.msra.mxu0 0
      %540 = vmatprep.subr.bf16.mxu0 0
      %541 = vmatpush1.bf16.msra.mxu0 0
      %542 = vmatprep.mubr.bf16.mxu0 0
      %543 = vmatmul.mubr.bf16.gmra.mrb[0].mxu0 %v332
      %v544 = vpop.f32.mrb[0].mxu0
      %v545 = vadd.f32 %v370, %v544
      %v546 = vpop.f32.mrb[0].mxu0
      %v547 = vadd.f32 %v374, %v546
      %v548 = vpop.f32.mrb[0].mxu0
      %v549 = vadd.f32 %v370, %v548
      %v550 = vpop.f32.mrb[0].mxu0
      %v551 = vadd.f32 %v374, %v550
      %552 = vdwg.mxu0
      %553 = vmatprep.subr.bf16.mxu0 0
      %554 = vmatpush1.bf16.msra.mxu0 %v464
      %555 = vmatprep.subr.bf16.mxu0 0
      %556 = vmatpush1.bf16.msra.mxu0 %v467
      %557 = vmatprep.subr.bf16.mxu0 0
      %558 = vmatpush1.bf16.msra.mxu0 %v470
      %559 = vmatprep.subr.bf16.mxu0 0
      %560 = vmatpush1.bf16.msra.mxu0 %v473
      %561 = vmatprep.subr.bf16.mxu0 0
      %562 = vmatpush1.bf16.msra.mxu0 %v476
      %563 = vmatprep.subr.bf16.mxu0 0
      %564 = vmatpush1.bf16.msra.mxu0 %v479
      %565 = vmatprep.subr.bf16.mxu0 0
      %566 = vmatpush1.bf16.msra.mxu0 %v482
      %567 = vmatprep.subr.bf16.mxu0 0
      %568 = vmatpush1.bf16.msra.mxu0 %v485
      %569 = vmatprep.subr.bf16.mxu0 0
      %570 = vmatpush1.bf16.msra.mxu0 0
      %571 = vmatprep.subr.bf16.mxu0 0
      %572 = vmatpush1.bf16.msra.mxu0 0
      %573 = vmatprep.subr.bf16.mxu0 0
      %574 = vmatpush1.bf16.msra.mxu0 0
      %575 = vmatprep.subr.bf16.mxu0 0
      %576 = vmatpush1.bf16.msra.mxu0 0
      %577 = vmatprep.subr.bf16.mxu0 0
      %578 = vmatpush1.bf16.msra.mxu0 0
      %579 = vmatprep.subr.bf16.mxu0 0
      %580 = vmatpush1.bf16.msra.mxu0 0
      %581 = vmatprep.subr.bf16.mxu0 0
      %582 = vmatpush1.bf16.msra.mxu0 0
      %583 = vmatprep.subr.bf16.mxu0 0
      %584 = vmatpush1.bf16.msra.mxu0 0
      %585 = vmatprep.mubr.bf16.mxu0 0
      %586 = vmatmul.mubr.bf16.gmra.mrb[0].mxu0 %v332
      %v587 = vpop.f32.mrb[0].mxu0
      %v588 = vadd.f32 %v378, %v587
      %v589 = vpop.f32.mrb[0].mxu0
      %v590 = vpop.f32.mrb[0].mxu0
      %v591 = vadd.f32 %v378, %v590
      %v592 = vpop.f32.mrb[0].mxu0
      %593 = vdwg.mxu0
      %v594 = vpack.c.bf16 %v549, %v545
      %v595 = vpack.c.bf16 %v551, %v547
      %v596 = vpack.c.bf16 %v591, %v588
      %v597 = vlaneseq
      %v598 = vand.u32 %v597, 127
      %s599 = sld [smem:[#allocation3 + %s25]]
      %v600 = vstv %s599
      %vm601 = vcmp.ge.s32.totalorder %v598, %v600
      %v602 = vsel %vm601, -1e+30, 0.0
      %v603 = vld [vmem:[%s6] sm:$0xf]
      %v604 = vld [vmem:[%s6 + $0x4] sm:$0xf]
      %v605 = vld [vmem:[%s6 + $0x8] sm:$0xf]
      %v606 = vld [vmem:[%s6 + $0xc] sm:$0xf]
      %v607 = vld [vmem:[%s6 + $0x10] sm:$0xf]
      %v608 = vld [vmem:[%s6 + $0x14] sm:$0xf]
      %v609 = vld [vmem:[%s6 + $0x18] sm:$0xf]
      %v610 = vld [vmem:[%s6 + $0x1c] sm:$0xf]
      %v611 = vld [vmem:[%s6 + $0x20] sm:$0xf]
      %v612 = vld [vmem:[%s6 + $0x24] sm:$0xf]
      %v613 = vld [vmem:[%s6 + $0x28] sm:$0xf]
      %v614 = vld [vmem:[%s6 + $0x2c] sm:$0xf]
      %v615 = vld [vmem:[%s6 + $0x30] sm:$0xf]
      %v616 = vld [vmem:[%s6 + $0x34] sm:$0xf]
      %v617 = vld [vmem:[%s6 + $0x38] sm:$0xf]
      %v618 = vld [vmem:[%s6 + $0x3c] sm:$0xf]
      %vm619 = vcmask 261120
      %v621 = vsel %vm619, %v594, 0
      %v624 = vsel %vm619, %v595, 0
      %626 = vmatprep.subr.bf16.mxu0 0
      %627 = vmatpush1.bf16.xpose.msra.mxu0 %v624
      %628 = vmatprep.subr.bf16.mxu0 0
      %629 = vmatpush1.bf16.xpose.msra.mxu0 0
      %630 = vmatprep.subr.bf16.mxu0 0
      %631 = vmatpush1.bf16.xpose.msra.mxu0 0
      %632 = vmatprep.subr.bf16.mxu0 0
      %633 = vmatpush1.bf16.xpose.msra.mxu0 0
      %634 = vmatprep.subr.bf16.mxu0 0
      %635 = vmatpush1.bf16.xpose.msra.mxu0 0
      %636 = vmatprep.subr.bf16.mxu0 0
      %637 = vmatpush1.bf16.xpose.msra.mxu0 0
      %638 = vmatprep.subr.bf16.mxu0 0
      %639 = vmatpush1.bf16.xpose.msra.mxu0 0
      %640 = vmatprep.subr.bf16.mxu0 0
      %641 = vmatpush1.bf16.xpose.msra.mxu0 0
      %642 = vmatprep.subr.bf16.mxu0 0
      %643 = vmatpush1.bf16.xpose.msra.mxu0 0
      %644 = vmatprep.subr.bf16.mxu0 0
      %645 = vmatpush1.bf16.xpose.msra.mxu0 0
      %646 = vmatprep.subr.bf16.mxu0 0
      %647 = vmatpush1.bf16.xpose.msra.mxu0 0
      %648 = vmatprep.subr.bf16.mxu0 0
      %649 = vmatpush1.bf16.xpose.msra.mxu0 0
      %650 = vmatprep.subr.bf16.mxu0 0
      %651 = vmatpush1.bf16.xpose.msra.mxu0 0
      %652 = vmatprep.subr.bf16.mxu0 0
      %653 = vmatpush1.bf16.xpose.msra.mxu0 0
      %654 = vmatprep.subr.bf16.mxu0 0
      %655 = vmatpush1.bf16.xpose.msra.mxu0 0
      %656 = vmatprep.subr.bf16.mxu0 0
      %657 = vmatpush1.bf16.xpose.msra.mxu0 0
      %658 = vmatprep.mubr.bf16.mxu0 0
      %659 = vmatmul.mubr.bf16.gmra.mrb[0].mxu0 %v621
      %v660 = vpop.f32.mrb[0].mxu0
      %v661 = vadd.f32 0.0, %v660
      %v662 = vpop.f32.mrb[0].mxu0
      %v663 = vpop.f32.mrb[0].mxu0
      %v664 = vadd.f32 0.0, %v663
      %v665 = vpop.f32.mrb[0].mxu0
      %666 = vdwg.mxu0
      %v667 = vmul.f32 %v661, 0.17677669
      %v668 = vmul.f32 %v664, 0.17677669
      %v669 = vadd.f32 %v667, %v602
      %v670 = vadd.f32 %v668, %v602
      %vm671 = vcmask 130048
      %v672 = vsel %vm671, %v669, -inf
      %673 = vmax.xlane.f32.xlu0 %v672
      %v674 = vpop.xlane.xlu0 %673
      %v675 = vsel %vm671, %v670, -inf
      %676 = vmax.xlane.f32.xlu0 %v675
      %v677 = vpop.xlane.xlu0 %676
      %v678 = vsub.f32 %v669, %v674
      %v679 = vsub.f32 %v670, %v677
      %v680 = vmul.f32 %v678, 1.442695
      %v681 = vpow.pop %v680
      %v682 = vmul.f32 %v679, 1.442695
      %v683 = vpow.pop %v682
      %v684 = vsel %vm671, %v681, 0.0
      %685 = vadd.xlane.f32.xlu0 %v684
      %v686 = vpop.xlane.xlu0 %685
      %v687 = vsel %vm671, %v683, 0.0
      %688 = vadd.xlane.f32.xlu0 %v687
      %v689 = vpop.xlane.xlu0 %688
      %v690 = vrcp.pop %v686
      %v691 = vmul.f32 %v681, %v690
      %v692 = vrcp.pop %v689
      %v693 = vmul.f32 %v683, %v692
      %v694 = vpack.c.bf16 %v693, %v691
      %v696 = vsel %vm671, %v694, 0
      %698 = vmatprep.subr.bf16.mxu0 0
      %699 = vmatpush1.bf16.msra.mxu0 %v596
      %700 = vmatprep.subr.bf16.mxu0 0
      %701 = vmatpush1.bf16.msra.mxu0 0
      %702 = vmatprep.subr.bf16.mxu0 0
      %703 = vmatpush1.bf16.msra.mxu0 0
      %704 = vmatprep.subr.bf16.mxu0 0
      %705 = vmatpush1.bf16.msra.mxu0 0
      %706 = vmatprep.subr.bf16.mxu0 0
      %707 = vmatpush1.bf16.msra.mxu0 0
      %708 = vmatprep.subr.bf16.mxu0 0
      %709 = vmatpush1.bf16.msra.mxu0 0
      %710 = vmatprep.subr.bf16.mxu0 0
      %711 = vmatpush1.bf16.msra.mxu0 0
      %712 = vmatprep.subr.bf16.mxu0 0
      %713 = vmatpush1.bf16.msra.mxu0 0
      %714 = vmatprep.subr.bf16.mxu0 0
      %715 = vmatpush1.bf16.msra.mxu0 0
      %716 = vmatprep.subr.bf16.mxu0 0
      %717 = vmatpush1.bf16.msra.mxu0 0
      %718 = vmatprep.subr.bf16.mxu0 0
      %719 = vmatpush1.bf16.msra.mxu0 0
      %720 = vmatprep.subr.bf16.mxu0 0
      %721 = vmatpush1.bf16.msra.mxu0 0
      %722 = vmatprep.subr.bf16.mxu0 0
      %723 = vmatpush1.bf16.msra.mxu0 0
      %724 = vmatprep.subr.bf16.mxu0 0
      %725 = vmatpush1.bf16.msra.mxu0 0
      %726 = vmatprep.subr.bf16.mxu0 0
      %727 = vmatpush1.bf16.msra.mxu0 0
      %728 = vmatprep.subr.bf16.mxu0 0
      %729 = vmatpush1.bf16.msra.mxu0 0
      %730 = vmatprep.mubr.bf16.mxu0 0
      %731 = vmatmul.mubr.bf16.gmra.mrb[0].mxu0 %v696
      %v732 = vpop.f32.mrb[0].mxu0
      %v733 = vadd.f32 0.0, %v732
      %v734 = vpop.f32.mrb[0].mxu0
      %v735 = vpop.f32.mrb[0].mxu0
      %v736 = vadd.f32 0.0, %v735
      %v737 = vpop.f32.mrb[0].mxu0
      %738 = vdwg.mxu0
      %v739 = vpack.c.bf16 %v736, %v733
      %741 = vrot.lane.b32.xlu0 %v594, 96
      %v742 = vpop.permute.xlu0 %741
      %744 = vrot.lane.b32.xlu0 %v595, 96
      %v745 = vpop.permute.xlu0 %744
      %v747 = vsel %vm619, %v742, 0
      %v750 = vsel %vm619, %v745, 0
      %752 = vmatprep.subr.bf16.mxu0 0
      %753 = vmatpush1.bf16.xpose.msra.mxu0 %v750
      %754 = vmatprep.subr.bf16.mxu0 0
      %755 = vmatpush1.bf16.xpose.msra.mxu0 0
      %756 = vmatprep.subr.bf16.mxu0 0
      %757 = vmatpush1.bf16.xpose.msra.mxu0 0
      %758 = vmatprep.subr.bf16.mxu0 0
      %759 = vmatpush1.bf16.xpose.msra.mxu0 0
      %760 = vmatprep.subr.bf16.mxu0 0
      %761 = vmatpush1.bf16.xpose.msra.mxu0 0
      %762 = vmatprep.subr.bf16.mxu0 0
      %763 = vmatpush1.bf16.xpose.msra.mxu0 0
      %764 = vmatprep.subr.bf16.mxu0 0
      %765 = vmatpush1.bf16.xpose.msra.mxu0 0
      %766 = vmatprep.subr.bf16.mxu0 0
      %767 = vmatpush1.bf16.xpose.msra.mxu0 0
      %768 = vmatprep.subr.bf16.mxu0 0
      %769 = vmatpush1.bf16.xpose.msra.mxu0 0
      %770 = vmatprep.subr.bf16.mxu0 0
      %771 = vmatpush1.bf16.xpose.msra.mxu0 0
      %772 = vmatprep.subr.bf16.mxu0 0
      %773 = vmatpush1.bf16.xpose.msra.mxu0 0
      %774 = vmatprep.subr.bf16.mxu0 0
      %775 = vmatpush1.bf16.xpose.msra.mxu0 0
      %776 = vmatprep.subr.bf16.mxu0 0
      %777 = vmatpush1.bf16.xpose.msra.mxu0 0
      %778 = vmatprep.subr.bf16.mxu0 0
      %779 = vmatpush1.bf16.xpose.msra.mxu0 0
      %780 = vmatprep.subr.bf16.mxu0 0
      %781 = vmatpush1.bf16.xpose.msra.mxu0 0
      %782 = vmatprep.subr.bf16.mxu0 0
      %783 = vmatpush1.bf16.xpose.msra.mxu0 0
      %784 = vmatprep.mubr.bf16.mxu0 0
      %785 = vmatmul.mubr.bf16.gmra.mrb[0].mxu0 %v747
      %v786 = vpop.f32.mrb[0].mxu0
      %v787 = vadd.f32 0.0, %v786
      %v788 = vpop.f32.mrb[0].mxu0
      %v789 = vpop.f32.mrb[0].mxu0
      %v790 = vadd.f32 0.0, %v789
      %v791 = vpop.f32.mrb[0].mxu0
      %792 = vdwg.mxu0
      %v793 = vmul.f32 %v787, 0.17677669
      %v794 = vmul.f32 %v790, 0.17677669
      %v795 = vadd.f32 %v793, %v602
      %v796 = vadd.f32 %v794, %v602
      %v797 = vsel %vm671, %v795, -inf
      %798 = vmax.xlane.f32.xlu0 %v797
      %v799 = vpop.xlane.xlu0 %798
      %v800 = vsel %vm671, %v796, -inf
      %801 = vmax.xlane.f32.xlu0 %v800
      %v802 = vpop.xlane.xlu0 %801
      %v803 = vsub.f32 %v795, %v799
      %v804 = vsub.f32 %v796, %v802
      %v805 = vmul.f32 %v803, 1.442695
      %v806 = vpow.pop %v805
      %v807 = vmul.f32 %v804, 1.442695
      %v808 = vpow.pop %v807
      %v809 = vsel %vm671, %v806, 0.0
      %810 = vadd.xlane.f32.xlu0 %v809
      %v811 = vpop.xlane.xlu0 %810
      %v812 = vsel %vm671, %v808, 0.0
      %813 = vadd.xlane.f32.xlu0 %v812
      %v814 = vpop.xlane.xlu0 %813
      %v815 = vrcp.pop %v811
      %v816 = vmul.f32 %v806, %v815
      %v817 = vrcp.pop %v814
      %v818 = vmul.f32 %v808, %v817
      %v819 = vpack.c.bf16 %v818, %v816
      %821 = vrot.lane.b32.xlu0 %v596, 96
      %v822 = vpop.permute.xlu0 %821
      %v825 = vsel %vm671, %v819, 0
      %827 = vmatprep.subr.bf16.mxu0 0
      %828 = vmatpush1.bf16.msra.mxu0 %v822
      %829 = vmatprep.subr.bf16.mxu0 0
      %830 = vmatpush1.bf16.msra.mxu0 0
      %831 = vmatprep.subr.bf16.mxu0 0
      %832 = vmatpush1.bf16.msra.mxu0 0
      %833 = vmatprep.subr.bf16.mxu0 0
      %834 = vmatpush1.bf16.msra.mxu0 0
      %835 = vmatprep.subr.bf16.mxu0 0
      %836 = vmatpush1.bf16.msra.mxu0 0
      %837 = vmatprep.subr.bf16.mxu0 0
      %838 = vmatpush1.bf16.msra.mxu0 0
      %839 = vmatprep.subr.bf16.mxu0 0
      %840 = vmatpush1.bf16.msra.mxu0 0
      %841 = vmatprep.subr.bf16.mxu0 0
      %842 = vmatpush1.bf16.msra.mxu0 0
      %843 = vmatprep.subr.bf16.mxu0 0
      %844 = vmatpush1.bf16.msra.mxu0 0
      %845 = vmatprep.subr.bf16.mxu0 0
      %846 = vmatpush1.bf16.msra.mxu0 0
      %847 = vmatprep.subr.bf16.mxu0 0
      %848 = vmatpush1.bf16.msra.mxu0 0
      %849 = vmatprep.subr.bf16.mxu0 0
      %850 = vmatpush1.bf16.msra.mxu0 0
      %851 = vmatprep.subr.bf16.mxu0 0
      %852 = vmatpush1.bf16.msra.mxu0 0
      %853 = vmatprep.subr.bf16.mxu0 0
      %854 = vmatpush1.bf16.msra.mxu0 0
      %855 = vmatprep.subr.bf16.mxu0 0
      %856 = vmatpush1.bf16.msra.mxu0 0
      %857 = vmatprep.subr.bf16.mxu0 0
      %858 = vmatpush1.bf16.msra.mxu0 0
      %859 = vmatprep.mubr.bf16.mxu0 0
      %860 = vmatmul.mubr.bf16.gmra.mrb[0].mxu0 %v825
      %v861 = vpop.f32.mrb[0].mxu0
      %v862 = vadd.f32 0.0, %v861
      %v863 = vpop.f32.mrb[0].mxu0
      %v864 = vpop.f32.mrb[0].mxu0
      %v865 = vadd.f32 0.0, %v864
      %v866 = vpop.f32.mrb[0].mxu0
      %867 = vdwg.mxu0
      %v868 = vpack.c.bf16 %v865, %v862
      %v873 = vunpack.c.l.b16 %v607
      %v874 = vunpack.c.l.b16 %v608
      %v875 = vunpack.c.l.b16 %v609
      %v876 = vunpack.c.l.b16 %v610
      %v877 = vpack.c.b16 %v874, %v873
      %v878 = vpack.c.b16 %v876, %v875
      %v882 = vsel %vm619, %v868, 0
      %884 = vmatprep.subr.bf16.mxu0 0
      %885 = vmatpush1.bf16.msra.mxu0 %v877
      %886 = vmatprep.subr.bf16.mxu0 0
      %887 = vmatpush1.bf16.msra.mxu0 %v878
      %888 = vmatprep.subr.bf16.mxu0 0
      %889 = vmatpush1.bf16.msra.mxu0 0
      %890 = vmatprep.subr.bf16.mxu0 0
      %891 = vmatpush1.bf16.msra.mxu0 0
      %892 = vmatprep.subr.bf16.mxu0 0
      %893 = vmatpush1.bf16.msra.mxu0 0
      %894 = vmatprep.subr.bf16.mxu0 0
      %895 = vmatpush1.bf16.msra.mxu0 0
      %896 = vmatprep.subr.bf16.mxu0 0
      %897 = vmatpush1.bf16.msra.mxu0 0
      %898 = vmatprep.subr.bf16.mxu0 0
      %899 = vmatpush1.bf16.msra.mxu0 0
      %900 = vmatprep.subr.bf16.mxu0 0
      %901 = vmatpush1.bf16.msra.mxu0 0
      %902 = vmatprep.subr.bf16.mxu0 0
      %903 = vmatpush1.bf16.msra.mxu0 0
      %904 = vmatprep.subr.bf16.mxu0 0
      %905 = vmatpush1.bf16.msra.mxu0 0
      %906 = vmatprep.subr.bf16.mxu0 0
      %907 = vmatpush1.bf16.msra.mxu0 0
      %908 = vmatprep.subr.bf16.mxu0 0
      %909 = vmatpush1.bf16.msra.mxu0 0
      %910 = vmatprep.subr.bf16.mxu0 0
      %911 = vmatpush1.bf16.msra.mxu0 0
      %912 = vmatprep.subr.bf16.mxu0 0
      %913 = vmatpush1.bf16.msra.mxu0 0
      %914 = vmatprep.subr.bf16.mxu0 0
      %915 = vmatpush1.bf16.msra.mxu0 0
      %916 = vmatprep.mubr.bf16.mxu0 0
      %917 = vmatmul.mubr.bf16.gmra.mrb[0].mxu0 %v882
      %v918 = vpop.f32.mrb[0].mxu0
      %v919 = vadd.f32 0.0, %v918
      %v920 = vpop.f32.mrb[0].mxu0
      %v921 = vpop.f32.mrb[0].mxu0
      %v922 = vadd.f32 0.0, %v921
      %v923 = vpop.f32.mrb[0].mxu0
      %924 = vdwg.mxu0
      %v929 = vunpack.c.l.b16 %v603
      %v930 = vunpack.c.l.b16 %v604
      %v931 = vunpack.c.l.b16 %v605
      %v932 = vunpack.c.l.b16 %v606
      %v933 = vpack.c.b16 %v930, %v929
      %v934 = vpack.c.b16 %v932, %v931
      %v938 = vsel %vm619, %v739, 0
      %940 = vmatprep.subr.bf16.mxu0 0
      %941 = vmatpush1.bf16.msra.mxu0 %v933
      %942 = vmatprep.subr.bf16.mxu0 0
      %943 = vmatpush1.bf16.msra.mxu0 %v934
      %944 = vmatprep.subr.bf16.mxu0 0
      %945 = vmatpush1.bf16.msra.mxu0 0
      %946 = vmatprep.subr.bf16.mxu0 0
      %947 = vmatpush1.bf16.msra.mxu0 0
      %948 = vmatprep.subr.bf16.mxu0 0
      %949 = vmatpush1.bf16.msra.mxu0 0
      %950 = vmatprep.subr.bf16.mxu0 0
      %951 = vmatpush1.bf16.msra.mxu0 0
      %952 = vmatprep.subr.bf16.mxu0 0
      %953 = vmatpush1.bf16.msra.mxu0 0
      %954 = vmatprep.subr.bf16.mxu0 0
      %955 = vmatpush1.bf16.msra.mxu0 0
      %956 = vmatprep.subr.bf16.mxu0 0
      %957 = vmatpush1.bf16.msra.mxu0 0
      %958 = vmatprep.subr.bf16.mxu0 0
      %959 = vmatpush1.bf16.msra.mxu0 0
      %960 = vmatprep.subr.bf16.mxu0 0
      %961 = vmatpush1.bf16.msra.mxu0 0
      %962 = vmatprep.subr.bf16.mxu0 0
      %963 = vmatpush1.bf16.msra.mxu0 0
      %964 = vmatprep.subr.bf16.mxu0 0
      %965 = vmatpush1.bf16.msra.mxu0 0
      %966 = vmatprep.subr.bf16.mxu0 0
      %967 = vmatpush1.bf16.msra.mxu0 0
      %968 = vmatprep.subr.bf16.mxu0 0
      %969 = vmatpush1.bf16.msra.mxu0 0
      %970 = vmatprep.subr.bf16.mxu0 0
      %971 = vmatpush1.bf16.msra.mxu0 0
      %972 = vmatprep.mubr.bf16.mxu0 0
      %973 = vmatmul.mubr.bf16.gmra.mrb[0].mxu0 %v938
      %v974 = vpop.f32.mrb[0].mxu0
      %v975 = vadd.f32 %v919, %v974
      %v976 = vpop.f32.mrb[0].mxu0
      %v977 = vpop.f32.mrb[0].mxu0
      %v978 = vadd.f32 %v922, %v977
      %v979 = vpop.f32.mrb[0].mxu0
      %980 = vdwg.mxu0
      %981 = vrot.lane.b32.xlu0 %v594, 64
      %v982 = vpop.permute.xlu0 %981
      %983 = vrot.lane.b32.xlu0 %v595, 64
      %v984 = vpop.permute.xlu0 %983
      %v986 = vsel %vm619, %v982, 0
      %v989 = vsel %vm619, %v984, 0
      %991 = vmatprep.subr.bf16.mxu0 0
      %992 = vmatpush1.bf16.xpose.msra.mxu0 %v989
      %993 = vmatprep.subr.bf16.mxu0 0
      %994 = vmatpush1.bf16.xpose.msra.mxu0 0
      %995 = vmatprep.subr.bf16.mxu0 0
      %996 = vmatpush1.bf16.xpose.msra.mxu0 0
      %997 = vmatprep.subr.bf16.mxu0 0
      %998 = vmatpush1.bf16.xpose.msra.mxu0 0
      %999 = vmatprep.subr.bf16.mxu0 0
      %1000 = vmatpush1.bf16.xpose.msra.mxu0 0
      %1001 = vmatprep.subr.bf16.mxu0 0
      %1002 = vmatpush1.bf16.xpose.msra.mxu0 0
      %1003 = vmatprep.subr.bf16.mxu0 0
      %1004 = vmatpush1.bf16.xpose.msra.mxu0 0
      %1005 = vmatprep.subr.bf16.mxu0 0
      %1006 = vmatpush1.bf16.xpose.msra.mxu0 0
      %1007 = vmatprep.subr.bf16.mxu0 0
      %1008 = vmatpush1.bf16.xpose.msra.mxu0 0
      %1009 = vmatprep.subr.bf16.mxu0 0
      %1010 = vmatpush1.bf16.xpose.msra.mxu0 0
      %1011 = vmatprep.subr.bf16.mxu0 0
      %1012 = vmatpush1.bf16.xpose.msra.mxu0 0
      %1013 = vmatprep.subr.bf16.mxu0 0
      %1014 = vmatpush1.bf16.xpose.msra.mxu0 0
      %1015 = vmatprep.subr.bf16.mxu0 0
      %1016 = vmatpush1.bf16.xpose.msra.mxu0 0
      %1017 = vmatprep.subr.bf16.mxu0 0
      %1018 = vmatpush1.bf16.xpose.msra.mxu0 0
      %1019 = vmatprep.subr.bf16.mxu0 0
      %1020 = vmatpush1.bf16.xpose.msra.mxu0 0
      %1021 = vmatprep.subr.bf16.mxu0 0
      %1022 = vmatpush1.bf16.xpose.msra.mxu0 0
      %1023 = vmatprep.mubr.bf16.mxu0 0
      %1024 = vmatmul.mubr.bf16.gmra.mrb[0].mxu0 %v986
      %v1025 = vpop.f32.mrb[0].mxu0
      %v1026 = vadd.f32 0.0, %v1025
      %v1027 = vpop.f32.mrb[0].mxu0
      %v1028 = vpop.f32.mrb[0].mxu0
      %v1029 = vadd.f32 0.0, %v1028
      %v1030 = vpop.f32.mrb[0].mxu0
      %1031 = vdwg.mxu0
      %v1032 = vmul.f32 %v1026, 0.17677669
      %v1033 = vmul.f32 %v1029, 0.17677669
      %v1034 = vadd.f32 %v1032, %v602
      %v1035 = vadd.f32 %v1033, %v602
      %v1036 = vsel %vm671, %v1034, -inf
      %1037 = vmax.xlane.f32.xlu0 %v1036
      %v1038 = vpop.xlane.xlu0 %1037
      %v1039 = vsel %vm671, %v1035, -inf
      %1040 = vmax.xlane.f32.xlu0 %v1039
      %v1041 = vpop.xlane.xlu0 %1040
      %v1042 = vsub.f32 %v1034, %v1038
      %v1043 = vsub.f32 %v1035, %v1041
      %v1044 = vmul.f32 %v1042, 1.442695
      %v1045 = vpow.pop %v1044
      %v1046 = vmul.f32 %v1043, 1.442695
      %v1047 = vpow.pop %v1046
      %v1048 = vsel %vm671, %v1045, 0.0
      %1049 = vadd.xlane.f32.xlu0 %v1048
      %v1050 = vpop.xlane.xlu0 %1049
      %v1051 = vsel %vm671, %v1047, 0.0
      %1052 = vadd.xlane.f32.xlu0 %v1051
      %v1053 = vpop.xlane.xlu0 %1052
      %v1054 = vrcp.pop %v1050
      %v1055 = vmul.f32 %v1045, %v1054
      %v1056 = vrcp.pop %v1053
      %v1057 = vmul.f32 %v1047, %v1056
      %v1058 = vpack.c.bf16 %v1057, %v1055
      %1059 = vrot.lane.b32.xlu0 %v596, 64
      %v1060 = vpop.permute.xlu0 %1059
      %v1063 = vsel %vm671, %v1058, 0
      %1065 = vmatprep.subr.bf16.mxu0 0
      %1066 = vmatpush1.bf16.msra.mxu0 %v1060
      %1067 = vmatprep.subr.bf16.mxu0 0
      %1068 = vmatpush1.bf16.msra.mxu0 0
      %1069 = vmatprep.subr.bf16.mxu0 0
      %1070 = vmatpush1.bf16.msra.mxu0 0
      %1071 = vmatprep.subr.bf16.mxu0 0
      %1072 = vmatpush1.bf16.msra.mxu0 0
      %1073 = vmatprep.subr.bf16.mxu0 0
      %1074 = vmatpush1.bf16.msra.mxu0 0
      %1075 = vmatprep.subr.bf16.mxu0 0
      %1076 = vmatpush1.bf16.msra.mxu0 0
      %1077 = vmatprep.subr.bf16.mxu0 0
      %1078 = vmatpush1.bf16.msra.mxu0 0
      %1079 = vmatprep.subr.bf16.mxu0 0
      %1080 = vmatpush1.bf16.msra.mxu0 0
      %1081 = vmatprep.subr.bf16.mxu0 0
      %1082 = vmatpush1.bf16.msra.mxu0 0
      %1083 = vmatprep.subr.bf16.mxu0 0
      %1084 = vmatpush1.bf16.msra.mxu0 0
      %1085 = vmatprep.subr.bf16.mxu0 0
      %1086 = vmatpush1.bf16.msra.mxu0 0
      %1087 = vmatprep.subr.bf16.mxu0 0
      %1088 = vmatpush1.bf16.msra.mxu0 0
      %1089 = vmatprep.subr.bf16.mxu0 0
      %1090 = vmatpush1.bf16.msra.mxu0 0
      %1091 = vmatprep.subr.bf16.mxu0 0
      %1092 = vmatpush1.bf16.msra.mxu0 0
      %1093 = vmatprep.subr.bf16.mxu0 0
      %1094 = vmatpush1.bf16.msra.mxu0 0
      %1095 = vmatprep.subr.bf16.mxu0 0
      %1096 = vmatpush1.bf16.msra.mxu0 0
      %1097 = vmatprep.mubr.bf16.mxu0 0
      %1098 = vmatmul.mubr.bf16.gmra.mrb[0].mxu0 %v1063
      %v1099 = vpop.f32.mrb[0].mxu0
      %v1100 = vadd.f32 0.0, %v1099
      %v1101 = vpop.f32.mrb[0].mxu0
      %v1102 = vpop.f32.mrb[0].mxu0
      %v1103 = vadd.f32 0.0, %v1102
      %v1104 = vpop.f32.mrb[0].mxu0
      %1105 = vdwg.mxu0
      %v1106 = vpack.c.bf16 %v1103, %v1100
      %v1111 = vunpack.c.l.b16 %v611
      %v1112 = vunpack.c.l.b16 %v612
      %v1113 = vunpack.c.l.b16 %v613
      %v1114 = vunpack.c.l.b16 %v614
      %v1115 = vpack.c.b16 %v1112, %v1111
      %v1116 = vpack.c.b16 %v1114, %v1113
      %v1120 = vsel %vm619, %v1106, 0
      %1122 = vmatprep.subr.bf16.mxu0 0
      %1123 = vmatpush1.bf16.msra.mxu0 %v1115
      %1124 = vmatprep.subr.bf16.mxu0 0
      %1125 = vmatpush1.bf16.msra.mxu0 %v1116
      %1126 = vmatprep.subr.bf16.mxu0 0
      %1127 = vmatpush1.bf16.msra.mxu0 0
      %1128 = vmatprep.subr.bf16.mxu0 0
      %1129 = vmatpush1.bf16.msra.mxu0 0
      %1130 = vmatprep.subr.bf16.mxu0 0
      %1131 = vmatpush1.bf16.msra.mxu0 0
      %1132 = vmatprep.subr.bf16.mxu0 0
      %1133 = vmatpush1.bf16.msra.mxu0 0
      %1134 = vmatprep.subr.bf16.mxu0 0
      %1135 = vmatpush1.bf16.msra.mxu0 0
      %1136 = vmatprep.subr.bf16.mxu0 0
      %1137 = vmatpush1.bf16.msra.mxu0 0
      %1138 = vmatprep.subr.bf16.mxu0 0
      %1139 = vmatpush1.bf16.msra.mxu0 0
      %1140 = vmatprep.subr.bf16.mxu0 0
      %1141 = vmatpush1.bf16.msra.mxu0 0
      %1142 = vmatprep.subr.bf16.mxu0 0
      %1143 = vmatpush1.bf16.msra.mxu0 0
      %1144 = vmatprep.subr.bf16.mxu0 0
      %1145 = vmatpush1.bf16.msra.mxu0 0
      %1146 = vmatprep.subr.bf16.mxu0 0
      %1147 = vmatpush1.bf16.msra.mxu0 0
      %1148 = vmatprep.subr.bf16.mxu0 0
      %1149 = vmatpush1.bf16.msra.mxu0 0
      %1150 = vmatprep.subr.bf16.mxu0 0
      %1151 = vmatpush1.bf16.msra.mxu0 0
      %1152 = vmatprep.subr.bf16.mxu0 0
      %1153 = vmatpush1.bf16.msra.mxu0 0
      %1154 = vmatprep.mubr.bf16.mxu0 0
      %1155 = vmatmul.mubr.bf16.gmra.mrb[0].mxu0 %v1120
      %v1156 = vpop.f32.mrb[0].mxu0
      %v1157 = vadd.f32 0.0, %v1156
      %v1158 = vpop.f32.mrb[0].mxu0
      %v1159 = vpop.f32.mrb[0].mxu0
      %v1160 = vadd.f32 0.0, %v1159
      %v1161 = vpop.f32.mrb[0].mxu0
      %1162 = vdwg.mxu0
      %v1163 = vadd.f32 %v975, %v1157
      %v1164 = vadd.f32 %v978, %v1160
      %1165 = vrot.lane.b32.xlu0 %v594, 32
      %v1166 = vpop.permute.xlu0 %1165
      %1167 = vrot.lane.b32.xlu0 %v595, 32
      %v1168 = vpop.permute.xlu0 %1167
      %v1170 = vsel %vm619, %v1166, 0
      %v1173 = vsel %vm619, %v1168, 0
      %1175 = vmatprep.subr.bf16.mxu0 0
      %1176 = vmatpush1.bf16.xpose.msra.mxu0 %v1173
      %1177 = vmatprep.subr.bf16.mxu0 0
      %1178 = vmatpush1.bf16.xpose.msra.mxu0 0
      %1179 = vmatprep.subr.bf16.mxu0 0
      %1180 = vmatpush1.bf16.xpose.msra.mxu0 0
      %1181 = vmatprep.subr.bf16.mxu0 0
      %1182 = vmatpush1.bf16.xpose.msra.mxu0 0
      %1183 = vmatprep.subr.bf16.mxu0 0
      %1184 = vmatpush1.bf16.xpose.msra.mxu0 0
      %1185 = vmatprep.subr.bf16.mxu0 0
      %1186 = vmatpush1.bf16.xpose.msra.mxu0 0
      %1187 = vmatprep.subr.bf16.mxu0 0
      %1188 = vmatpush1.bf16.xpose.msra.mxu0 0
      %1189 = vmatprep.subr.bf16.mxu0 0
      %1190 = vmatpush1.bf16.xpose.msra.mxu0 0
      %1191 = vmatprep.subr.bf16.mxu0 0
      %1192 = vmatpush1.bf16.xpose.msra.mxu0 0
      %1193 = vmatprep.subr.bf16.mxu0 0
      %1194 = vmatpush1.bf16.xpose.msra.mxu0 0
      %1195 = vmatprep.subr.bf16.mxu0 0
      %1196 = vmatpush1.bf16.xpose.msra.mxu0 0
      %1197 = vmatprep.subr.bf16.mxu0 0
      %1198 = vmatpush1.bf16.xpose.msra.mxu0 0
      %1199 = vmatprep.subr.bf16.mxu0 0
      %1200 = vmatpush1.bf16.xpose.msra.mxu0 0
      %1201 = vmatprep.subr.bf16.mxu0 0
      %1202 = vmatpush1.bf16.xpose.msra.mxu0 0
      %1203 = vmatprep.subr.bf16.mxu0 0
      %1204 = vmatpush1.bf16.xpose.msra.mxu0 0
      %1205 = vmatprep.subr.bf16.mxu0 0
      %1206 = vmatpush1.bf16.xpose.msra.mxu0 0
      %1207 = vmatprep.mubr.bf16.mxu0 0
      %1208 = vmatmul.mubr.bf16.gmra.mrb[0].mxu0 %v1170
      %v1209 = vpop.f32.mrb[0].mxu0
      %v1210 = vadd.f32 0.0, %v1209
      %v1211 = vpop.f32.mrb[0].mxu0
      %v1212 = vpop.f32.mrb[0].mxu0
      %v1213 = vadd.f32 0.0, %v1212
      %v1214 = vpop.f32.mrb[0].mxu0
      %1215 = vdwg.mxu0
      %v1216 = vmul.f32 %v1210, 0.17677669
      %v1217 = vmul.f32 %v1213, 0.17677669
      %v1218 = vadd.f32 %v1216, %v602
      %v1219 = vadd.f32 %v1217, %v602
      %v1220 = vsel %vm671, %v1218, -inf
      %1221 = vmax.xlane.f32.xlu0 %v1220
      %v1222 = vpop.xlane.xlu0 %1221
      %v1223 = vsel %vm671, %v1219, -inf
      %1224 = vmax.xlane.f32.xlu0 %v1223
      %v1225 = vpop.xlane.xlu0 %1224
      %v1226 = vsub.f32 %v1218, %v1222
      %v1227 = vsub.f32 %v1219, %v1225
      %v1228 = vmul.f32 %v1226, 1.442695
      %v1229 = vpow.pop %v1228
      %v1230 = vmul.f32 %v1227, 1.442695
      %v1231 = vpow.pop %v1230
      %v1232 = vsel %vm671, %v1229, 0.0
      %1233 = vadd.xlane.f32.xlu0 %v1232
      %v1234 = vpop.xlane.xlu0 %1233
      %v1235 = vsel %vm671, %v1231, 0.0
      %1236 = vadd.xlane.f32.xlu0 %v1235
      %v1237 = vpop.xlane.xlu0 %1236
      %v1238 = vrcp.pop %v1234
      %v1239 = vmul.f32 %v1229, %v1238
      %v1240 = vrcp.pop %v1237
      %v1241 = vmul.f32 %v1231, %v1240
      %v1242 = vpack.c.bf16 %v1241, %v1239
      %1243 = vrot.lane.b32.xlu0 %v596, 32
      %v1244 = vpop.permute.xlu0 %1243
      %v1247 = vsel %vm671, %v1242, 0
      %1249 = vmatprep.subr.bf16.mxu0 0
      %1250 = vmatpush1.bf16.msra.mxu0 %v1244
      %1251 = vmatprep.subr.bf16.mxu0 0
      %1252 = vmatpush1.bf16.msra.mxu0 0
      %1253 = vmatprep.subr.bf16.mxu0 0
      %1254 = vmatpush1.bf16.msra.mxu0 0
      %1255 = vmatprep.subr.bf16.mxu0 0
      %1256 = vmatpush1.bf16.msra.mxu0 0
      %1257 = vmatprep.subr.bf16.mxu0 0
      %1258 = vmatpush1.bf16.msra.mxu0 0
      %1259 = vmatprep.subr.bf16.mxu0 0
      %1260 = vmatpush1.bf16.msra.mxu0 0
      %1261 = vmatprep.subr.bf16.mxu0 0
      %1262 = vmatpush1.bf16.msra.mxu0 0
      %1263 = vmatprep.subr.bf16.mxu0 0
      %1264 = vmatpush1.bf16.msra.mxu0 0
      %1265 = vmatprep.subr.bf16.mxu0 0
      %1266 = vmatpush1.bf16.msra.mxu0 0
      %1267 = vmatprep.subr.bf16.mxu0 0
      %1268 = vmatpush1.bf16.msra.mxu0 0
      %1269 = vmatprep.subr.bf16.mxu0 0
      %1270 = vmatpush1.bf16.msra.mxu0 0
      %1271 = vmatprep.subr.bf16.mxu0 0
      %1272 = vmatpush1.bf16.msra.mxu0 0
      %1273 = vmatprep.subr.bf16.mxu0 0
      %1274 = vmatpush1.bf16.msra.mxu0 0
      %1275 = vmatprep.subr.bf16.mxu0 0
      %1276 = vmatpush1.bf16.msra.mxu0 0
      %1277 = vmatprep.subr.bf16.mxu0 0
      %1278 = vmatpush1.bf16.msra.mxu0 0
      %1279 = vmatprep.subr.bf16.mxu0 0
      %1280 = vmatpush1.bf16.msra.mxu0 0
      %1281 = vmatprep.mubr.bf16.mxu0 0
      %1282 = vmatmul.mubr.bf16.gmra.mrb[0].mxu0 %v1247
      %v1283 = vpop.f32.mrb[0].mxu0
      %v1284 = vadd.f32 0.0, %v1283
      %v1285 = vpop.f32.mrb[0].mxu0
      %v1286 = vpop.f32.mrb[0].mxu0
      %v1287 = vadd.f32 0.0, %v1286
      %v1288 = vpop.f32.mrb[0].mxu0
      %1289 = vdwg.mxu0
      %v1290 = vpack.c.bf16 %v1287, %v1284
      %v1295 = vunpack.c.l.b16 %v615
      %v1296 = vunpack.c.l.b16 %v616
      %v1297 = vunpack.c.l.b16 %v617
      %v1298 = vunpack.c.l.b16 %v618
      %v1299 = vpack.c.b16 %v1296, %v1295
      %v1300 = vpack.c.b16 %v1298, %v1297
      %v1304 = vsel %vm619, %v1290, 0
      %1306 = vmatprep.subr.bf16.mxu0 0
      %1307 = vmatpush1.bf16.msra.mxu0 %v1299
      %1308 = vmatprep.subr.bf16.mxu0 0
      %1309 = vmatpush1.bf16.msra.mxu0 %v1300
      %1310 = vmatprep.subr.bf16.mxu0 0
      %1311 = vmatpush1.bf16.msra.mxu0 0
      %1312 = vmatprep.subr.bf16.mxu0 0
      %1313 = vmatpush1.bf16.msra.mxu0 0
      %1314 = vmatprep.subr.bf16.mxu0 0
      %1315 = vmatpush1.bf16.msra.mxu0 0
      %1316 = vmatprep.subr.bf16.mxu0 0
      %1317 = vmatpush1.bf16.msra.mxu0 0
      %1318 = vmatprep.subr.bf16.mxu0 0
      %1319 = vmatpush1.bf16.msra.mxu0 0
      %1320 = vmatprep.subr.bf16.mxu0 0
      %1321 = vmatpush1.bf16.msra.mxu0 0
      %1322 = vmatprep.subr.bf16.mxu0 0
      %1323 = vmatpush1.bf16.msra.mxu0 0
      %1324 = vmatprep.subr.bf16.mxu0 0
      %1325 = vmatpush1.bf16.msra.mxu0 0
      %1326 = vmatprep.subr.bf16.mxu0 0
      %1327 = vmatpush1.bf16.msra.mxu0 0
      %1328 = vmatprep.subr.bf16.mxu0 0
      %1329 = vmatpush1.bf16.msra.mxu0 0
      %1330 = vmatprep.subr.bf16.mxu0 0
      %1331 = vmatpush1.bf16.msra.mxu0 0
      %1332 = vmatprep.subr.bf16.mxu0 0
      %1333 = vmatpush1.bf16.msra.mxu0 0
      %1334 = vmatprep.subr.bf16.mxu0 0
      %1335 = vmatpush1.bf16.msra.mxu0 0
      %1336 = vmatprep.subr.bf16.mxu0 0
      %1337 = vmatpush1.bf16.msra.mxu0 0
      %1338 = vmatprep.mubr.bf16.mxu0 0
      %1339 = vmatmul.mubr.bf16.gmra.mrb[0].mxu0 %v1304
      %v1340 = vpop.f32.mrb[0].mxu0
      %v1341 = vadd.f32 0.0, %v1340
      %v1342 = vpop.f32.mrb[0].mxu0
      %v1343 = vpop.f32.mrb[0].mxu0
      %v1344 = vadd.f32 0.0, %v1343
      %v1345 = vpop.f32.mrb[0].mxu0
      %1346 = vdwg.mxu0
      %v1347 = vadd.f32 %v1163, %v1341
      %v1348 = vadd.f32 %v1164, %v1344
      %v1349 = vadd.f32 %v289, %v1347
      %v1350 = vadd.f32 %v290, %v1348
      %v1351 = vld [vmem:[%s7] sm:$0x1]
      %v1353 = vlaneseq
      %v1354 = vshrl.u32 %v1353, 7
      %v1355 = vsub.s32 0, %v1354
      %v1356 = vrot.slane %v1351, %v1355
      %v1358 = vadd.f32 %v1349, %v1356
      %v1359 = vadd.f32 %v1350, %v1356
      %v1360 = vpack.c.bf16 %v1359, %v1358
      %v1362 = vunpack.c.l.b16 %v1360
      %v1363 = vunpack.c.h.b16 %v1360
      %v1364 = vpack.c.b16 %v1362, %v1362
      %v1365 = vpack.c.b16 %v1363, %v1363
      %1368 = vst [vmem:[%s285] sm:$0xf] %v1364
      %1369 = vst [vmem:[%s285 + $0x4] sm:$0xf] %v1365
      %p1370 = scmp.lt.s32.totalorder %s25, 1
      %s1371 = scalar_select %p1370, %s25, 1
      %s1372 = smul.addr %s1371, 2
      %s1373 = smul.addr %s1372, 4
      %s1374 = scalar_lea.vmem %s8, %s1373
      // Predicated region
      $region49: #{transformer_forward.13} parent=47 // pred_check
        %p1375 = pneg %p195
      $region50: #{transformer_forward.13} parent=47 // pred_check_branch
        %1377 = sbr.rel (%p1375) target = $region52
      $region51: #{transformer_forward.13} parent=47 // pred_region
        _
      $region52: #{transformer_forward.13} parent=47 // pred_fallthru
        _
    $region48: #{transformer_forward.13} parent=5 // pred_fallthru
      _
    %p1378 = scmp.le.s32.totalorder 2, %s20
    // Predicated region
    $region53: #{transformer_forward.13} parent=5 // pred_check
      %p1379 = pneg %p1378
    $region54: #{transformer_forward.13} parent=5 // pred_check_branch
      %1381 = sbr.rel (%p1379) target = $region56
    $region55: #{transformer_forward.13} parent=5 // pred_region
      %s1382 = ssub.s32 %s20, 2
      // Predicated region
      $region57: #{transformer_forward.13} parent=55 // pred_check
        %p1383 = pneg %p201
      $region58: #{transformer_forward.13} parent=55 // pred_check_branch
        %1385 = sbr.rel (%p1383) target = $region60
      $region59: #{transformer_forward.13} parent=55 // pred_region
        %p1386 = scmp.lt.s32.totalorder %s26, 1
        %s1387 = scalar_select %p1386, %s26, 1
        %s1388 = smul.addr %s1387, 2
        %s1389 = smul.addr %s1388, 4
        %s1390 = scalar_lea.vmem %s8, %s1389
      $region60: #{transformer_forward.13} parent=55 // pred_fallthru
        _
    $region56: #{transformer_forward.13} parent=5 // pred_fallthru
      _
  $region6: #{transformer_forward.13} parent=0 // loop_footer
    %s24 = sadd.s32 1, %s20
  $region7: #{transformer_forward.13} parent=0 // loop_footer_branch
    %19 = sbr.rel target = $region3
  $region8: #{transformer_forward.13} parent=0 // loop_exit
    _

// kernel: transformer_forward.18
$region0: #{transformer_forward.18}
  #allocation0 [shape = 'u32[]', space=smem, size = 0x4, offset = 0x4, fixed_abs, tag = 'smem constant byte address 0x4 - core index']
  #allocation1 [shape = 'u32[144,128]{1,0:T(1,128)}', space=vmem, size = 0x12000, scoped, tag = 'internal scratch']
  #allocation2 [shape = 's32[1]{0}', space=sflag, size = 0x4, scoped, tag = 'scoped memory for transformer_forward.18']
  #allocation3 [shape = 'u8[512]{0}', space=smem, size = 0x200, scoped, tag = 'prefetched SMEM operand 0']
  %s0 = inlined_call_operand.vmem [shape: s32[2], index: 0, kind: input, shape index: {}]
  %s1 = inlined_call_operand.vmem [shape: bf16[2,16,128], index: 1, kind: input, shape index: {}]
  %s2 = inlined_call_operand.vmem [shape: f32[1,128], index: 2, kind: input, shape index: {}]
  %s3 = inlined_call_operand.vmem [shape: f32[1,128], index: 3, kind: input, shape index: {}]
  %s4 = inlined_call_operand.vmem [shape: bf16[128,384], index: 4, kind: input, shape index: {}]
  %s5 = inlined_call_operand.vmem [shape: f32[1,384], index: 5, kind: input, shape index: {}]
  %s6 = inlined_call_operand.vmem [shape: bf16[128,128], index: 6, kind: input, shape index: {}]
  %s7 = inlined_call_operand.vmem [shape: f32[1,128], index: 7, kind: input, shape index: {}]
  %s8 = inlined_call_operand.vmem [shape: bf16[2,16,128], index: 8, kind: output, shape index: {}]
  %s9 = sld [smem:[#allocation0]]
  $region61: #{transformer_forward.18} parent=0
    _
  %s11 = ssub.s32 1, %s9
  %s12 = scalar_select 0, %s11, %s9
  %s13 = sshll.u32 %s0, 4
  %s14 = int_to_ptr.vmem [resolvable:$true] %s13
  %16 = dma.vmem_to_smem %s14, 16, [#allocation3], [#allocation2]
  %17 = dma.done [#allocation2], 16
  %18 = sfence
  loop: start=0, step=1, limit=4
  $region2: #{transformer_forward.18} parent=0 // loop_pre_header
    _
  $region3: #{transformer_forward.18} parent=0 // loop_header
    %s20 = sphi 0, %s24
    %p21 = scmp.ge.s32.totalorder %s20, 4
    %s30 = sphi 0, %s32
    %s33 = sphi 0, %s30
    %s34 = sphi 0, %s33
    %s50 = sphi 0, %s34
    %s54 = sphi 0, %s54
    %s56 = sphi 0, %s54
    %s57 = sphi 0, %s56
    %s71 = sphi 0, %s57
    %s75 = sphi 0, %s75
    %s77 = sphi 0, %s75
    %s78 = sphi 0, %s77
    %s92 = sphi 0, %s78
    %s96 = sphi 0, %s96
    %s98 = sphi 0, %s96
    %s99 = sphi 0, %s98
    %s113 = sphi 0, %s99
    %s117 = sphi 0, %s117
    %s119 = sphi 0, %s117
    %s120 = sphi 0, %s119
    %s134 = sphi 0, %s120
    %s138 = sphi 0, %s138
    %s140 = sphi 0, %s138
    %s141 = sphi 0, %s140
    %s155 = sphi 0, %s141
    %s159 = sphi 0, %s159
    %s161 = sphi 0, %s159
    %s162 = sphi 0, %s161
    %s176 = sphi 0, %s162
    %s182 = sphi 0, %s184
    %s185 = sphi 0, %s182
    %s186 = sphi 0, %s185
    %s202 = sphi 0, %s186
  $region4: #{transformer_forward.18} parent=0 // loop_header_branch
    %23 = sbr.rel (%p21) target = $region8
  $region5: #{transformer_forward.18} parent=0 // loop_body
    %s25 = ssub.s32 %s20, 1
    %s26 = ssub.s32 %s20, 2
    %s27 = sadd.s32 %s20, 1
    %s28 = ssub.s32 %s20, %s27
    %p29 = scmp.eq.s32.totalorder %s28, 0
    %s31 = sadd.s32 %s30, 1
    %s32 = scalar_select %p29, %s30, %s31
    %p35 = pneg %p29
    %p36 = scmp.eq.s32.totalorder %s20, 1
    %p37 = por %p35, %p36
    %p38 = scmp.ne.s32.totalorder %s30, %s33
    %p39 = scmp.eq.s32.totalorder %s20, 0
    %p40 = por %p38, %p39
    %p41 = scmp.ne.s32.totalorder %s30, %s33
    %p42 = scmp.eq.s32.totalorder %s25, 1
    %p43 = por %p41, %p42
    %p44 = scmp.ne.s32.totalorder %s33, %s34
    %p45 = scmp.eq.s32.totalorder %s25, 0
    %p46 = por %p44, %p45
    %p47 = scmp.ne.s32.totalorder %s33, %s34
    %p48 = scmp.eq.s32.totalorder %s26, 1
    %p49 = por %p47, %p48
    %p51 = scmp.ne.s32.totalorder %s34, %s50
    %p52 = scmp.eq.s32.totalorder %s26, 0
    %p53 = por %p51, %p52
    %s55 = sadd.s32 %s54, 1
    %p58 = scmp.eq.s32.totalorder %s20, 1
    %p59 = scmp.ne.s32.totalorder %s54, %s56
    %p60 = scmp.eq.s32.totalorder %s20, 0
    %p61 = por %p59, %p60
    %p62 = scmp.ne.s32.totalorder %s54, %s56
    %p63 = scmp.eq.s32.totalorder %s25, 1
    %p64 = por %p62, %p63
    %p65 = scmp.ne.s32.totalorder %s56, %s57
    %p66 = scmp.eq.s32.totalorder %s25, 0
    %p67 = por %p65, %p66
    %p68 = scmp.ne.s32.totalorder %s56, %s57
    %p69 = scmp.eq.s32.totalorder %s26, 1
    %p70 = por %p68, %p69
    %p72 = scmp.ne.s32.totalorder %s57, %s71
    %p73 = scmp.eq.s32.totalorder %s26, 0
    %p74 = por %p72, %p73
    %s76 = sadd.s32 %s75, 1
    %p79 = scmp.eq.s32.totalorder %s20, 1
    %p80 = scmp.ne.s32.totalorder %s75, %s77
    %p81 = scmp.eq.s32.totalorder %s20, 0
    %p82 = por %p80, %p81
    %p83 = scmp.ne.s32.totalorder %s75, %s77
    %p84 = scmp.eq.s32.totalorder %s25, 1
    %p85 = por %p83, %p84
    %p86 = scmp.ne.s32.totalorder %s77, %s78
    %p87 = scmp.eq.s32.totalorder %s25, 0
    %p88 = por %p86, %p87
    %p89 = scmp.ne.s32.totalorder %s77, %s78
    %p90 = scmp.eq.s32.totalorder %s26, 1
    %p91 = por %p89, %p90
    %p93 = scmp.ne.s32.totalorder %s78, %s92
    %p94 = scmp.eq.s32.totalorder %s26, 0
    %p95 = por %p93, %p94
    %s97 = sadd.s32 %s96, 1
    %p100 = scmp.eq.s32.totalorder %s20, 1
    %p101 = scmp.ne.s32.totalorder %s96, %s98
    %p102 = scmp.eq.s32.totalorder %s20, 0
    %p103 = por %p101, %p102
    %p104 = scmp.ne.s32.totalorder %s96, %s98
    %p105 = scmp.eq.s32.totalorder %s25, 1
    %p106 = por %p104, %p105
    %p107 = scmp.ne.s32.totalorder %s98, %s99
    %p108 = scmp.eq.s32.totalorder %s25, 0
    %p109 = por %p107, %p108
    %p110 = scmp.ne.s32.totalorder %s98, %s99
    %p111 = scmp.eq.s32.totalorder %s26, 1
    %p112 = por %p110, %p111
    %p114 = scmp.ne.s32.totalorder %s99, %s113
    %p115 = scmp.eq.s32.totalorder %s26, 0
    %p116 = por %p114, %p115
    %s118 = sadd.s32 %s117, 1
    %p121 = scmp.eq.s32.totalorder %s20, 1
    %p122 = scmp.ne.s32.totalorder %s117, %s119
    %p123 = scmp.eq.s32.totalorder %s20, 0
    %p124 = por %p122, %p123
    %p125 = scmp.ne.s32.totalorder %s117, %s119
    %p126 = scmp.eq.s32.totalorder %s25, 1
    %p127 = por %p125, %p126
    %p128 = scmp.ne.s32.totalorder %s119, %s120
    %p129 = scmp.eq.s32.totalorder %s25, 0
    %p130 = por %p128, %p129
    %p131 = scmp.ne.s32.totalorder %s119, %s120
    %p132 = scmp.eq.s32.totalorder %s26, 1
    %p133 = por %p131, %p132
    %p135 = scmp.ne.s32.totalorder %s120, %s134
    %p136 = scmp.eq.s32.totalorder %s26, 0
    %p137 = por %p135, %p136
    %s139 = sadd.s32 %s138, 1
    %p142 = scmp.eq.s32.totalorder %s20, 1
    %p143 = scmp.ne.s32.totalorder %s138, %s140
    %p144 = scmp.eq.s32.totalorder %s20, 0
    %p145 = por %p143, %p144
    %p146 = scmp.ne.s32.totalorder %s138, %s140
    %p147 = scmp.eq.s32.totalorder %s25, 1
    %p148 = por %p146, %p147
    %p149 = scmp.ne.s32.totalorder %s140, %s141
    %p150 = scmp.eq.s32.totalorder %s25, 0
    %p151 = por %p149, %p150
    %p152 = scmp.ne.s32.totalorder %s140, %s141
    %p153 = scmp.eq.s32.totalorder %s26, 1
    %p154 = por %p152, %p153
    %p156 = scmp.ne.s32.totalorder %s141, %s155
    %p157 = scmp.eq.s32.totalorder %s26, 0
    %p158 = por %p156, %p157
    %s160 = sadd.s32 %s159, 1
    %p163 = scmp.eq.s32.totalorder %s20, 1
    %p164 = scmp.ne.s32.totalorder %s159, %s161
    %p165 = scmp.eq.s32.totalorder %s20, 0
    %p166 = por %p164, %p165
    %p167 = scmp.ne.s32.totalorder %s159, %s161
    %p168 = scmp.eq.s32.totalorder %s25, 1
    %p169 = por %p167, %p168
    %p170 = scmp.ne.s32.totalorder %s161, %s162
    %p171 = scmp.eq.s32.totalorder %s25, 0
    %p172 = por %p170, %p171
    %p173 = scmp.ne.s32.totalorder %s161, %s162
    %p174 = scmp.eq.s32.totalorder %s26, 1
    %p175 = por %p173, %p174
    %p177 = scmp.ne.s32.totalorder %s162, %s176
    %p178 = scmp.eq.s32.totalorder %s26, 0
    %p179 = por %p177, %p178
    %s180 = ssub.s32 %s20, %s27
    %p181 = scmp.eq.s32.totalorder %s180, 0
    %s183 = sadd.s32 %s182, 1
    %s184 = scalar_select %p181, %s182, %s183
    %p187 = pneg %p181
    %p188 = scmp.eq.s32.totalorder %s20, 1
    %p189 = por %p187, %p188
    %p190 = scmp.ne.s32.totalorder %s182, %s185
    %p191 = scmp.eq.s32.totalorder %s20, 0
    %p192 = por %p190, %p191
    %p193 = scmp.ne.s32.totalorder %s182, %s185
    %p194 = scmp.eq.s32.totalorder %s25, 1
    %p195 = por %p193, %p194
    %p196 = scmp.ne.s32.totalorder %s185, %s186
    %p197 = scmp.eq.s32.totalorder %s25, 0
    %p198 = por %p196, %p197
    %p199 = scmp.ne.s32.totalorder %s185, %s186
    %p200 = scmp.eq.s32.totalorder %s26, 1
    %p201 = por %p199, %p200
    %p203 = scmp.ne.s32.totalorder %s186, %s202
    %p204 = scmp.eq.s32.totalorder %s26, 0
    %p205 = por %p203, %p204
    %p206 = scmp.le.s32.totalorder 1, %s20
    %p207 = scmp.lt.s32.totalorder %s20, 3
    %p208 = pnand %p206, %p207
    %p209 = pneg %p208
    // Predicated region
    $region9: #{transformer_forward.18} parent=5 // pred_check
      _
    $region10: #{transformer_forward.18} parent=5 // pred_check_branch
      %211 = sbr.rel (%p208) target = $region12
    $region11: #{transformer_forward.18} parent=5 // pred_region
      %s212 = ssub.s32 %s20, 1
      // Predicated region
      $region13: #{transformer_forward.18} parent=11 // pred_check
        %p213 = pneg %p67
      $region14: #{transformer_forward.18} parent=11 // pred_check_branch
        %215 = sbr.rel (%p213) target = $region16
      $region15: #{transformer_forward.18} parent=11 // pred_region
        _
      $region16: #{transformer_forward.18} parent=11 // pred_fallthru
        _
      // Predicated region
      $region17: #{transformer_forward.18} parent=11 // pred_check
        %p216 = pneg %p88
      $region18: #{transformer_forward.18} parent=11 // pred_check_branch
        %218 = sbr.rel (%p216) target = $region20
      $region19: #{transformer_forward.18} parent=11 // pred_region
        _
      $region20: #{transformer_forward.18} parent=11 // pred_fallthru
        _
      // Predicated region
      $region21: #{transformer_forward.18} parent=11 // pred_check
        %p219 = pneg %p109
      $region22: #{transformer_forward.18} parent=11 // pred_check_branch
        %221 = sbr.rel (%p219) target = $region24
      $region23: #{transformer_forward.18} parent=11 // pred_region
        _
      $region24: #{transformer_forward.18} parent=11 // pred_fallthru
        _
      // Predicated region
      $region25: #{transformer_forward.18} parent=11 // pred_check
        %p222 = pneg %p130
      $region26: #{transformer_forward.18} parent=11 // pred_check_branch
        %224 = sbr.rel (%p222) target = $region28
      $region27: #{transformer_forward.18} parent=11 // pred_region
        _
      $region28: #{transformer_forward.18} parent=11 // pred_fallthru
        _
      // Predicated region
      $region29: #{transformer_forward.18} parent=11 // pred_check
        %p225 = pneg %p151
      $region30: #{transformer_forward.18} parent=11 // pred_check_branch
        %227 = sbr.rel (%p225) target = $region32
      $region31: #{transformer_forward.18} parent=11 // pred_region
        _
      $region32: #{transformer_forward.18} parent=11 // pred_fallthru
        _
      // Predicated region
      $region33: #{transformer_forward.18} parent=11 // pred_check
        %p228 = pneg %p172
      $region34: #{transformer_forward.18} parent=11 // pred_check_branch
        %230 = sbr.rel (%p228) target = $region36
      $region35: #{transformer_forward.18} parent=11 // pred_region
        _
      $region36: #{transformer_forward.18} parent=11 // pred_fallthru
        _
    $region12: #{transformer_forward.18} parent=5 // pred_fallthru
      _
    %p231 = scmp.lt.s32.totalorder %s20, 2
    // Predicated region
    $region37: #{transformer_forward.18} parent=5 // pred_check
      %p232 = pneg %p231
    $region38: #{transformer_forward.18} parent=5 // pred_check_branch
      %234 = sbr.rel (%p232) target = $region40
    $region39: #{transformer_forward.18} parent=5 // pred_region
      // Predicated region
      $region41: #{transformer_forward.18} parent=39 // pred_check
        %p235 = pneg %p40
      $region42: #{transformer_forward.18} parent=39 // pred_check_branch
        %237 = sbr.rel (%p235) target = $region44
      $region43: #{transformer_forward.18} parent=39 // pred_region
        %p238 = scmp.lt.s32.totalorder %s20, 1
        %s239 = scalar_select %p238, %s20, 1
        %s240 = smul.addr %s239, 2
        %s241 = smul.addr %s240, 4
        %s242 = scalar_lea.vmem %s1, %s241
      $region44: #{transformer_forward.18} parent=39 // pred_fallthru
        _
    $region40: #{transformer_forward.18} parent=5 // pred_fallthru
      _
    %p243 = scmp.le.s32.totalorder 1, %s20
    %p244 = scmp.lt.s32.totalorder %s20, 3
    %p245 = pnand %p243, %p244
    %p246 = pneg %p245
    // Predicated region
    $region45: #{transformer_forward.18} parent=5 // pred_check
      _
    $region46: #{transformer_forward.18} parent=5 // pred_check_branch
      %248 = sbr.rel (%p245) target = $region48
    $region47: #{transformer_forward.18} parent=5 // pred_region
      %s249 = ssub.s32 %s20, 1
      %p250 = scmp.lt.s32.totalorder %s25, 1
      %s251 = scalar_select %p250, %s25, 1
      %s252 = smul.addr %s251, 2
      %s253 = smul.addr %s252, 4
      %s254 = scalar_lea.vmem %s1, %s253
      %p255 = pneg %p46
      %p256 = pneg %p43
      %p257 = pneg %p67
      %p258 = pneg %p64
      %p259 = pneg %p88
      %p260 = pneg %p85
      %p261 = pneg %p109
      %p262 = pneg %p106
      %p263 = pneg %p130
      %p264 = pneg %p127
      %p265 = pneg %p151
      %p266 = pneg %p148
      %p267 = pneg %p172
      %p268 = pneg %p169
      %p269 = pneg %p198
      %p270 = pneg %p195
      %p271 = scmp.lt.s32.totalorder %s25, 1
      %s272 = scalar_select %p271, %s25, 1
      %s273 = smul.addr %s272, 2
      %s274 = smul.addr %s273, 4
      %s275 = scalar_lea.vmem %s8, %s274
      %p276 = scmp.lt.s32.totalorder %s25, 1
      %s277 = scalar_select %p276, %s25, 1
      %s278 = smul.addr %s277, 2
      %s279 = smul.addr %s278, 4
      %s280 = scalar_lea.vmem %s1, %s279
      %p281 = scmp.lt.s32.totalorder %s25, 1
      %s282 = scalar_select %p281, %s25, 1
      %s283 = smul.addr %s282, 2
      %s284 = smul.addr %s283, 4
      %s285 = scalar_lea.vmem %s8, %s284
      %v287 = vld [vmem:[%s280] sm:$0xf]
      %v288 = vld [vmem:[%s280 + $0x4] sm:$0xf]
      %v289 = vunpack.c.l.bf16 %v287
      %v290 = vunpack.c.l.bf16 %v288
      %v291 = vld [vmem:[%s2] sm:$0x1]
      %v292 = vld [vmem:[%s3] sm:$0x1]
      %293 = vadd.xlane.f32.xlu0 %v289
      %v294 = vpop.xlane.xlu0 %293
      %295 = vadd.xlane.f32.xlu0 %v290
      %v296 = vpop.xlane.xlu0 %295
      %v297 = vrcp.pop 128.0
      %v298 = vmul.f32 %v294, %v297
      %v299 = vmul.f32 %v296, %v297
      %v300 = vsub.f32 %v289, %v298
      %v301 = vsub.f32 %v290, %v299
      %v302 = vmul.f32 %v300, %v300
      %v303 = vmul.f32 %v301, %v301
      %304 = vadd.xlane.f32.xlu0 %v302
      %v305 = vpop.xlane.xlu0 %304
      %306 = vadd.xlane.f32.xlu0 %v303
      %v307 = vpop.xlane.xlu0 %306
      %v308 = vmul.f32 %v305, %v297
      %v309 = vmul.f32 %v307, %v297
      %v310 = vadd.f32 %v308, 1e-06
      %v311 = vadd.f32 %v309, 1e-06
      %v312 = vrsqrt.pop %v310
      %v313 = vrsqrt.pop %v311
      %v314 = vmul.f32 %v300, %v312
      %v315 = vmul.f32 %v301, %v313
      %v317 = vlaneseq
      %v318 = vshrl.u32 %v317, 7
      %v319 = vsub.s32 0, %v318
      %v320 = vrot.slane %v291, %v319
      %v322 = vmul.f32 %v314, %v320
      %v323 = vmul.f32 %v315, %v320
      %v325 = vlaneseq
      %v326 = vshrl.u32 %v325, 7
      %v327 = vsub.s32 0, %v326
      %v328 = vrot.slane %v292, %v327
      %v330 = vadd.f32 %v322, %v328
      %v331 = vadd.f32 %v323, %v328
      %v332 = vpack.c.bf16 %v331, %v330
      %v333 = vld [vmem:[%s4] sm:$0xff]
      %v334 = vld [vmem:[%s4 + $0x8] sm:$0xf]
      %v335 = vld [vmem:[%s4 + $0xc] sm:$0xff]
      %v336 = vld [vmem:[%s4 + $0x14] sm:$0xf]
      %v337 = vld [vmem:[%s4 + $0x18] sm:$0xff]
      %v338 = vld [vmem:[%s4 + $0x20] sm:$0xf]
      %v339 = vld [vmem:[%s4 + $0x24] sm:$0xff]
      %v340 = vld [vmem:[%s4 + $0x2c] sm:$0xf]
      %v341 = vld [vmem:[%s4 + $0x30] sm:$0xff]
      %v342 = vld [vmem:[%s4 + $0x38] sm:$0xf]
      %v343 = vld [vmem:[%s4 + $0x3c] sm:$0xff]
      %v344 = vld [vmem:[%s4 + $0x44] sm:$0xf]
      %v345 = vld [vmem:[%s4 + $0x48] sm:$0xff]
      %v346 = vld [vmem:[%s4 + $0x50] sm:$0xf]
      %v347 = vld [vmem:[%s4 + $0x54] sm:$0xff]
      %v348 = vld [vmem:[%s4 + $0x5c] sm:$0xf]
      %v349 = vld [vmem:[%s4 + $0x60] sm:$0xff]
      %v350 = vld [vmem:[%s4 + $0x68] sm:$0xf]
      %v351 = vld [vmem:[%s4 + $0x6c] sm:$0xff]
      %v352 = vld [vmem:[%s4 + $0x74] sm:$0xf]
      %v353 = vld [vmem:[%s4 + $0x78] sm:$0xff]
      %v354 = vld [vmem:[%s4 + $0x80] sm:$0xf]
      %v355 = vld [vmem:[%s4 + $0x84] sm:$0xff]
      %v356 = vld [vmem:[%s4 + $0x8c] sm:$0xf]
      %v357 = vld [vmem:[%s4 + $0x90] sm:$0xff]
      %v358 = vld [vmem:[%s4 + $0x98] sm:$0xf]
      %v359 = vld [vmem:[%s4 + $0x9c] sm:$0xff]
      %v360 = vld [vmem:[%s4 + $0xa4] sm:$0xf]
      %v361 = vld [vmem:[%s4 + $0xa8] sm:$0xff]
      %v362 = vld [vmem:[%s4 + $0xb0] sm:$0xf]
      %v363 = vld [vmem:[%s4 + $0xb4] sm:$0xff]
      %v364 = vld [vmem:[%s4 + $0xbc] sm:$0xf]
      %v365 = vld [vmem:[%s5] sm:$0x7]
      %v367 = vlaneseq
      %v368 = vshrl.u32 %v367, 7
      %v369 = vsub.s32 0, %v368
      %v370 = vrot.slane %v365, %v369
      %v371 = vlaneseq
      %v372 = vshrl.u32 %v371, 7
      %v373 = vsub.s32 1, %v372
      %v374 = vrot.slane %v365, %v373
      %v375 = vlaneseq
      %v376 = vshrl.u32 %v375, 7
      %v377 = vsub.s32 2, %v376
      %v378 = vrot.slane %v365, %v377
      %v414 = vunpack.c.l.b16 %v333
      %v415 = vunpack.c.h.b16 %v333
      %v416 = vunpack.c.l.b16 %v334
      %v417 = vunpack.c.l.b16 %v335
      %v418 = vunpack.c.h.b16 %v335
      %v419 = vunpack.c.l.b16 %v336
      %v420 = vunpack.c.l.b16 %v337
      %v421 = vunpack.c.h.b16 %v337
      %v422 = vunpack.c.l.b16 %v338
      %v423 = vunpack.c.l.b16 %v339
      %v424 = vunpack.c.h.b16 %v339
      %v425 = vunpack.c.l.b16 %v340
      %v426 = vunpack.c.l.b16 %v341
      %v427 = vunpack.c.h.b16 %v341
      %v428 = vunpack.c.l.b16 %v342
      %v429 = vunpack.c.l.b16 %v343
      %v430 = vunpack.c.h.b16 %v343
      %v431 = vunpack.c.l.b16 %v344
      %v432 = vunpack.c.l.b16 %v345
      %v433 = vunpack.c.h.b16 %v345
      %v434 = vunpack.c.l.b16 %v346
      %v435 = vunpack.c.l.b16 %v347
      %v436 = vunpack.c.h.b16 %v347
      %v437 = vunpack.c.l.b16 %v348
      %v438 = vunpack.c.l.b16 %v349
      %v439 = vunpack.c.h.b16 %v349
      %v440 = vunpack.c.l.b16 %v350
      %v441 = vunpack.c.l.b16 %v351
      %v442 = vunpack.c.h.b16 %v351
      %v443 = vunpack.c.l.b16 %v352
      %v444 = vunpack.c.l.b16 %v353
      %v445 = vunpack.c.h.b16 %v353
      %v446 = vunpack.c.l.b16 %v354
      %v447 = vunpack.c.l.b16 %v355
      %v448 = vunpack.c.h.b16 %v355
      %v449 = vunpack.c.l.b16 %v356
      %v450 = vunpack.c.l.b16 %v357
      %v451 = vunpack.c.h.b16 %v357
      %v452 = vunpack.c.l.b16 %v358
      %v453 = vunpack.c.l.b16 %v359
      %v454 = vunpack.c.h.b16 %v359
      %v455 = vunpack.c.l.b16 %v360
      %v456 = vunpack.c.l.b16 %v361
      %v457 = vunpack.c.h.b16 %v361
      %v458 = vunpack.c.l.b16 %v362
      %v459 = vunpack.c.l.b16 %v363
      %v460 = vunpack.c.h.b16 %v363
      %v461 = vunpack.c.l.b16 %v364
      %v462 = vpack.c.b16 %v417, %v414
      %v463 = vpack.c.b16 %v418, %v415
      %v464 = vpack.c.b16 %v419, %v416
      %v465 = vpack.c.b16 %v423, %v420
      %v466 = vpack.c.b16 %v424, %v421
      %v467 = vpack.c.b16 %v425, %v422
      %v468 = vpack.c.b16 %v429, %v426
      %v469 = vpack.c.b16 %v430, %v427
      %v470 = vpack.c.b16 %v431, %v428
      %v471 = vpack.c.b16 %v435, %v432
      %v472 = vpack.c.b16 %v436, %v433
      %v473 = vpack.c.b16 %v437, %v434
      %v474 = vpack.c.b16 %v441, %v438
      %v475 = vpack.c.b16 %v442, %v439
      %v476 = vpack.c.b16 %v443, %v440
      %v477 = vpack.c.b16 %v447, %v444
      %v478 = vpack.c.b16 %v448, %v445
      %v479 = vpack.c.b16 %v449, %v446
      %v480 = vpack.c.b16 %v453, %v450
      %v481 = vpack.c.b16 %v454, %v451
      %v482 = vpack.c.b16 %v455, %v452
      %v483 = vpack.c.b16 %v459, %v456
      %v484 = vpack.c.b16 %v460, %v457
      %v485 = vpack.c.b16 %v461, %v458
      %510 = vmatprep.subr.bf16.mxu0 %v463
      %511 = vmatpush1.bf16.msra.mxu0 %v462
      %512 = vmatprep.subr.bf16.mxu0 %v466
      %513 = vmatpush1.bf16.msra.mxu0 %v465
      %514 = vmatprep.subr.bf16.mxu0 %v469
      %515 = vmatpush1.bf16.msra.mxu0 %v468
      %516 = vmatprep.subr.bf16.mxu0 %v472
      %517 = vmatpush1.bf16.msra.mxu0 %v471
      %518 = vmatprep.subr.bf16.mxu0 %v475
      %519 = vmatpush1.bf16.msra.mxu0 %v474
      %520 = vmatprep.subr.bf16.mxu0 %v478
      %521 = vmatpush1.bf16.msra.mxu0 %v477
      %522 = vmatprep.subr.bf16.mxu0 %v481
      %523 = vmatpush1.bf16.msra.mxu0 %v480
      %524 = vmatprep.subr.bf16.mxu0 %v484
      %525 = vmatpush1.bf16.msra.mxu0 %v483
      %526 = vmatprep.subr.bf16.mxu0 0
      %527 = vmatpush1.bf16.msra.mxu0 0
      %528 = vmatprep.subr.bf16.mxu0 0
      %529 = vmatpush1.bf16.msra.mxu0 0
      %530 = vmatprep.subr.bf16.mxu0 0
      %531 = vmatpush1.bf16.msra.mxu0 0
      %532 = vmatprep.subr.bf16.mxu0 0
      %533 = vmatpush1.bf16.msra.mxu0 0
      %534 = vmatprep.subr.bf16.mxu0 0
      %535 = vmatpush1.bf16.msra.mxu0 0
      %536 = vmatprep.subr.bf16.mxu0 0
      %537 = vmatpush1.bf16.msra.mxu0 0
      %538 = vmatprep.subr.bf16.mxu0 0
      %539 = vmatpush1.bf16.msra.mxu0 0
      %540 = vmatprep.subr.bf16.mxu0 0
      %541 = vmatpush1.bf16.msra.mxu0 0
      %542 = vmatprep.mubr.bf16.mxu0 0
      %543 = vmatmul.mubr.bf16.gmra.mrb[0].mxu0 %v332
      %v544 = vpop.f32.mrb[0].mxu0
      %v545 = vadd.f32 %v370, %v544
      %v546 = vpop.f32.mrb[0].mxu0
      %v547 = vadd.f32 %v374, %v546
      %v548 = vpop.f32.mrb[0].mxu0
      %v549 = vadd.f32 %v370, %v548
      %v550 = vpop.f32.mrb[0].mxu0
      %v551 = vadd.f32 %v374, %v550
      %552 = vdwg.mxu0
      %553 = vmatprep.subr.bf16.mxu0 0
      %554 = vmatpush1.bf16.msra.mxu0 %v464
      %555 = vmatprep.subr.bf16.mxu0 0
      %556 = vmatpush1.bf16.msra.mxu0 %v467
      %557 = vmatprep.subr.bf16.mxu0 0
      %558 = vmatpush1.bf16.msra.mxu0 %v470
      %559 = vmatprep.subr.bf16.mxu0 0
      %560 = vmatpush1.bf16.msra.mxu0 %v473
      %561 = vmatprep.subr.bf16.mxu0 0
      %562 = vmatpush1.bf16.msra.mxu0 %v476
      %563 = vmatprep.subr.bf16.mxu0 0
      %564 = vmatpush1.bf16.msra.mxu0 %v479
      %565 = vmatprep.subr.bf16.mxu0 0
      %566 = vmatpush1.bf16.msra.mxu0 %v482
      %567 = vmatprep.subr.bf16.mxu0 0
      %568 = vmatpush1.bf16.msra.mxu0 %v485
      %569 = vmatprep.subr.bf16.mxu0 0
      %570 = vmatpush1.bf16.msra.mxu0 0
      %571 = vmatprep.subr.bf16.mxu0 0
      %572 = vmatpush1.bf16.msra.mxu0 0
      %573 = vmatprep.subr.bf16.mxu0 0
      %574 = vmatpush1.bf16.msra.mxu0 0
      %575 = vmatprep.subr.bf16.mxu0 0
      %576 = vmatpush1.bf16.msra.mxu0 0
      %577 = vmatprep.subr.bf16.mxu0 0
      %578 = vmatpush1.bf16.msra.mxu0 0
      %579 = vmatprep.subr.bf16.mxu0 0
      %580 = vmatpush1.bf16.msra.mxu0 0
      %581 = vmatprep.subr.bf16.mxu0 0
      %582 = vmatpush1.bf16.msra.mxu0 0
      %583 = vmatprep.subr.bf16.mxu0 0
      %584 = vmatpush1.bf16.msra.mxu0 0
      %585 = vmatprep.mubr.bf16.mxu0 0
      %586 = vmatmul.mubr.bf16.gmra.mrb[0].mxu0 %v332
      %v587 = vpop.f32.mrb[0].mxu0
      %v588 = vadd.f32 %v378, %v587
      %v589 = vpop.f32.mrb[0].mxu0
      %v590 = vpop.f32.mrb[0].mxu0
      %v591 = vadd.f32 %v378, %v590
      %v592 = vpop.f32.mrb[0].mxu0
      %593 = vdwg.mxu0
      %v594 = vpack.c.bf16 %v549, %v545
      %v595 = vpack.c.bf16 %v551, %v547
      %v596 = vpack.c.bf16 %v591, %v588
      %v597 = vlaneseq
      %v598 = vand.u32 %v597, 127
      %v599 = vlaneseq
      %v600 = vshrl.u32 %v599, 7
      %v601 = vadd.s32 %v600, 8
      %vm602 = vcmp.gt.s32.totalorder %v598, %v600
      %vm603 = vcmp.gt.s32.totalorder %v598, %v601
      %v604 = vsel %vm602, -1e+30, 0.0
      %v605 = vsel %vm603, -1e+30, 0.0
      %v606 = vld [vmem:[%s6] sm:$0xf]
      %v607 = vld [vmem:[%s6 + $0x4] sm:$0xf]
      %v608 = vld [vmem:[%s6 + $0x8] sm:$0xf]
      %v609 = vld [vmem:[%s6 + $0xc] sm:$0xf]
      %v610 = vld [vmem:[%s6 + $0x10] sm:$0xf]
      %v611 = vld [vmem:[%s6 + $0x14] sm:$0xf]
      %v612 = vld [vmem:[%s6 + $0x18] sm:$0xf]
      %v613 = vld [vmem:[%s6 + $0x1c] sm:$0xf]
      %v614 = vld [vmem:[%s6 + $0x20] sm:$0xf]
      %v615 = vld [vmem:[%s6 + $0x24] sm:$0xf]
      %v616 = vld [vmem:[%s6 + $0x28] sm:$0xf]
      %v617 = vld [vmem:[%s6 + $0x2c] sm:$0xf]
      %v618 = vld [vmem:[%s6 + $0x30] sm:$0xf]
      %v619 = vld [vmem:[%s6 + $0x34] sm:$0xf]
      %v620 = vld [vmem:[%s6 + $0x38] sm:$0xf]
      %v621 = vld [vmem:[%s6 + $0x3c] sm:$0xf]
      %vm622 = vcmask 261120
      %v624 = vsel %vm622, %v594, 0
      %v627 = vsel %vm622, %v595, 0
      %629 = vmatprep.subr.bf16.mxu0 0
      %630 = vmatpush1.bf16.xpose.msra.mxu0 %v627
      %631 = vmatprep.subr.bf16.mxu0 0
      %632 = vmatpush1.bf16.xpose.msra.mxu0 0
      %633 = vmatprep.subr.bf16.mxu0 0
      %634 = vmatpush1.bf16.xpose.msra.mxu0 0
      %635 = vmatprep.subr.bf16.mxu0 0
      %636 = vmatpush1.bf16.xpose.msra.mxu0 0
      %637 = vmatprep.subr.bf16.mxu0 0
      %638 = vmatpush1.bf16.xpose.msra.mxu0 0
      %639 = vmatprep.subr.bf16.mxu0 0
      %640 = vmatpush1.bf16.xpose.msra.mxu0 0
      %641 = vmatprep.subr.bf16.mxu0 0
      %642 = vmatpush1.bf16.xpose.msra.mxu0 0
      %643 = vmatprep.subr.bf16.mxu0 0
      %644 = vmatpush1.bf16.xpose.msra.mxu0 0
      %645 = vmatprep.subr.bf16.mxu0 0
      %646 = vmatpush1.bf16.xpose.msra.mxu0 0
      %647 = vmatprep.subr.bf16.mxu0 0
      %648 = vmatpush1.bf16.xpose.msra.mxu0 0
      %649 = vmatprep.subr.bf16.mxu0 0
      %650 = vmatpush1.bf16.xpose.msra.mxu0 0
      %651 = vmatprep.subr.bf16.mxu0 0
      %652 = vmatpush1.bf16.xpose.msra.mxu0 0
      %653 = vmatprep.subr.bf16.mxu0 0
      %654 = vmatpush1.bf16.xpose.msra.mxu0 0
      %655 = vmatprep.subr.bf16.mxu0 0
      %656 = vmatpush1.bf16.xpose.msra.mxu0 0
      %657 = vmatprep.subr.bf16.mxu0 0
      %658 = vmatpush1.bf16.xpose.msra.mxu0 0
      %659 = vmatprep.subr.bf16.mxu0 0
      %660 = vmatpush1.bf16.xpose.msra.mxu0 0
      %661 = vmatprep.mubr.bf16.mxu0 0
      %662 = vmatmul.mubr.bf16.gmra.mrb[0].mxu0 %v624
      %v663 = vpop.f32.mrb[0].mxu0
      %v664 = vadd.f32 0.0, %v663
      %v665 = vpop.f32.mrb[0].mxu0
      %v666 = vpop.f32.mrb[0].mxu0
      %v667 = vadd.f32 0.0, %v666
      %v668 = vpop.f32.mrb[0].mxu0
      %669 = vdwg.mxu0
      %v670 = vmul.f32 %v664, 0.17677669
      %v671 = vmul.f32 %v667, 0.17677669
      %v672 = vadd.f32 %v670, %v604
      %v673 = vadd.f32 %v671, %v605
      %vm674 = vcmask 130048
      %v675 = vsel %vm674, %v672, -inf
      %676 = vmax.xlane.f32.xlu0 %v675
      %v677 = vpop.xlane.xlu0 %676
      %v678 = vsel %vm674, %v673, -inf
      %679 = vmax.xlane.f32.xlu0 %v678
      %v680 = vpop.xlane.xlu0 %679
      %v681 = vsub.f32 %v672, %v677
      %v682 = vsub.f32 %v673, %v680
      %v683 = vmul.f32 %v681, 1.442695
      %v684 = vpow.pop %v683
      %v685 = vmul.f32 %v682, 1.442695
      %v686 = vpow.pop %v685
      %v687 = vsel %vm674, %v684, 0.0
      %688 = vadd.xlane.f32.xlu0 %v687
      %v689 = vpop.xlane.xlu0 %688
      %v690 = vsel %vm674, %v686, 0.0
      %691 = vadd.xlane.f32.xlu0 %v690
      %v692 = vpop.xlane.xlu0 %691
      %v693 = vrcp.pop %v689
      %v694 = vmul.f32 %v684, %v693
      %v695 = vrcp.pop %v692
      %v696 = vmul.f32 %v686, %v695
      %v697 = vpack.c.bf16 %v696, %v694
      %v699 = vsel %vm674, %v697, 0
      %701 = vmatprep.subr.bf16.mxu0 0
      %702 = vmatpush1.bf16.msra.mxu0 %v596
      %703 = vmatprep.subr.bf16.mxu0 0
      %704 = vmatpush1.bf16.msra.mxu0 0
      %705 = vmatprep.subr.bf16.mxu0 0
      %706 = vmatpush1.bf16.msra.mxu0 0
      %707 = vmatprep.subr.bf16.mxu0 0
      %708 = vmatpush1.bf16.msra.mxu0 0
      %709 = vmatprep.subr.bf16.mxu0 0
      %710 = vmatpush1.bf16.msra.mxu0 0
      %711 = vmatprep.subr.bf16.mxu0 0
      %712 = vmatpush1.bf16.msra.mxu0 0
      %713 = vmatprep.subr.bf16.mxu0 0
      %714 = vmatpush1.bf16.msra.mxu0 0
      %715 = vmatprep.subr.bf16.mxu0 0
      %716 = vmatpush1.bf16.msra.mxu0 0
      %717 = vmatprep.subr.bf16.mxu0 0
      %718 = vmatpush1.bf16.msra.mxu0 0
      %719 = vmatprep.subr.bf16.mxu0 0
      %720 = vmatpush1.bf16.msra.mxu0 0
      %721 = vmatprep.subr.bf16.mxu0 0
      %722 = vmatpush1.bf16.msra.mxu0 0
      %723 = vmatprep.subr.bf16.mxu0 0
      %724 = vmatpush1.bf16.msra.mxu0 0
      %725 = vmatprep.subr.bf16.mxu0 0
      %726 = vmatpush1.bf16.msra.mxu0 0
      %727 = vmatprep.subr.bf16.mxu0 0
      %728 = vmatpush1.bf16.msra.mxu0 0
      %729 = vmatprep.subr.bf16.mxu0 0
      %730 = vmatpush1.bf16.msra.mxu0 0
      %731 = vmatprep.subr.bf16.mxu0 0
      %732 = vmatpush1.bf16.msra.mxu0 0
      %733 = vmatprep.mubr.bf16.mxu0 0
      %734 = vmatmul.mubr.bf16.gmra.mrb[0].mxu0 %v699
      %v735 = vpop.f32.mrb[0].mxu0
      %v736 = vadd.f32 0.0, %v735
      %v737 = vpop.f32.mrb[0].mxu0
      %v738 = vpop.f32.mrb[0].mxu0
      %v739 = vadd.f32 0.0, %v738
      %v740 = vpop.f32.mrb[0].mxu0
      %741 = vdwg.mxu0
      %v742 = vpack.c.bf16 %v739, %v736
      %744 = vrot.lane.b32.xlu0 %v594, 96
      %v745 = vpop.permute.xlu0 %744
      %747 = vrot.lane.b32.xlu0 %v595, 96
      %v748 = vpop.permute.xlu0 %747
      %v750 = vsel %vm622, %v745, 0
      %v753 = vsel %vm622, %v748, 0
      %755 = vmatprep.subr.bf16.mxu0 0
      %756 = vmatpush1.bf16.xpose.msra.mxu0 %v753
      %757 = vmatprep.subr.bf16.mxu0 0
      %758 = vmatpush1.bf16.xpose.msra.mxu0 0
      %759 = vmatprep.subr.bf16.mxu0 0
      %760 = vmatpush1.bf16.xpose.msra.mxu0 0
      %761 = vmatprep.subr.bf16.mxu0 0
      %762 = vmatpush1.bf16.xpose.msra.mxu0 0
      %763 = vmatprep.subr.bf16.mxu0 0
      %764 = vmatpush1.bf16.xpose.msra.mxu0 0
      %765 = vmatprep.subr.bf16.mxu0 0
      %766 = vmatpush1.bf16.xpose.msra.mxu0 0
      %767 = vmatprep.subr.bf16.mxu0 0
      %768 = vmatpush1.bf16.xpose.msra.mxu0 0
      %769 = vmatprep.subr.bf16.mxu0 0
      %770 = vmatpush1.bf16.xpose.msra.mxu0 0
      %771 = vmatprep.subr.bf16.mxu0 0
      %772 = vmatpush1.bf16.xpose.msra.mxu0 0
      %773 = vmatprep.subr.bf16.mxu0 0
      %774 = vmatpush1.bf16.xpose.msra.mxu0 0
      %775 = vmatprep.subr.bf16.mxu0 0
      %776 = vmatpush1.bf16.xpose.msra.mxu0 0
      %777 = vmatprep.subr.bf16.mxu0 0
      %778 = vmatpush1.bf16.xpose.msra.mxu0 0
      %779 = vmatprep.subr.bf16.mxu0 0
      %780 = vmatpush1.bf16.xpose.msra.mxu0 0
      %781 = vmatprep.subr.bf16.mxu0 0
      %782 = vmatpush1.bf16.xpose.msra.mxu0 0
      %783 = vmatprep.subr.bf16.mxu0 0
      %784 = vmatpush1.bf16.xpose.msra.mxu0 0
      %785 = vmatprep.subr.bf16.mxu0 0
      %786 = vmatpush1.bf16.xpose.msra.mxu0 0
      %787 = vmatprep.mubr.bf16.mxu0 0
      %788 = vmatmul.mubr.bf16.gmra.mrb[0].mxu0 %v750
      %v789 = vpop.f32.mrb[0].mxu0
      %v790 = vadd.f32 0.0, %v789
      %v791 = vpop.f32.mrb[0].mxu0
      %v792 = vpop.f32.mrb[0].mxu0
      %v793 = vadd.f32 0.0, %v792
      %v794 = vpop.f32.mrb[0].mxu0
      %795 = vdwg.mxu0
      %v796 = vmul.f32 %v790, 0.17677669
      %v797 = vmul.f32 %v793, 0.17677669
      %v798 = vadd.f32 %v796, %v604
      %v799 = vadd.f32 %v797, %v605
      %v800 = vsel %vm674, %v798, -inf
      %801 = vmax.xlane.f32.xlu0 %v800
      %v802 = vpop.xlane.xlu0 %801
      %v803 = vsel %vm674, %v799, -inf
      %804 = vmax.xlane.f32.xlu0 %v803
      %v805 = vpop.xlane.xlu0 %804
      %v806 = vsub.f32 %v798, %v802
      %v807 = vsub.f32 %v799, %v805
      %v808 = vmul.f32 %v806, 1.442695
      %v809 = vpow.pop %v808
      %v810 = vmul.f32 %v807, 1.442695
      %v811 = vpow.pop %v810
      %v812 = vsel %vm674, %v809, 0.0
      %813 = vadd.xlane.f32.xlu0 %v812
      %v814 = vpop.xlane.xlu0 %813
      %v815 = vsel %vm674, %v811, 0.0
      %816 = vadd.xlane.f32.xlu0 %v815
      %v817 = vpop.xlane.xlu0 %816
      %v818 = vrcp.pop %v814
      %v819 = vmul.f32 %v809, %v818
      %v820 = vrcp.pop %v817
      %v821 = vmul.f32 %v811, %v820
      %v822 = vpack.c.bf16 %v821, %v819
      %824 = vrot.lane.b32.xlu0 %v596, 96
      %v825 = vpop.permute.xlu0 %824
      %v828 = vsel %vm674, %v822, 0
      %830 = vmatprep.subr.bf16.mxu0 0
      %831 = vmatpush1.bf16.msra.mxu0 %v825
      %832 = vmatprep.subr.bf16.mxu0 0
      %833 = vmatpush1.bf16.msra.mxu0 0
      %834 = vmatprep.subr.bf16.mxu0 0
      %835 = vmatpush1.bf16.msra.mxu0 0
      %836 = vmatprep.subr.bf16.mxu0 0
      %837 = vmatpush1.bf16.msra.mxu0 0
      %838 = vmatprep.subr.bf16.mxu0 0
      %839 = vmatpush1.bf16.msra.mxu0 0
      %840 = vmatprep.subr.bf16.mxu0 0
      %841 = vmatpush1.bf16.msra.mxu0 0
      %842 = vmatprep.subr.bf16.mxu0 0
      %843 = vmatpush1.bf16.msra.mxu0 0
      %844 = vmatprep.subr.bf16.mxu0 0
      %845 = vmatpush1.bf16.msra.mxu0 0
      %846 = vmatprep.subr.bf16.mxu0 0
      %847 = vmatpush1.bf16.msra.mxu0 0
      %848 = vmatprep.subr.bf16.mxu0 0
      %849 = vmatpush1.bf16.msra.mxu0 0
      %850 = vmatprep.subr.bf16.mxu0 0
      %851 = vmatpush1.bf16.msra.mxu0 0
      %852 = vmatprep.subr.bf16.mxu0 0
      %853 = vmatpush1.bf16.msra.mxu0 0
      %854 = vmatprep.subr.bf16.mxu0 0
      %855 = vmatpush1.bf16.msra.mxu0 0
      %856 = vmatprep.subr.bf16.mxu0 0
      %857 = vmatpush1.bf16.msra.mxu0 0
      %858 = vmatprep.subr.bf16.mxu0 0
      %859 = vmatpush1.bf16.msra.mxu0 0
      %860 = vmatprep.subr.bf16.mxu0 0
      %861 = vmatpush1.bf16.msra.mxu0 0
      %862 = vmatprep.mubr.bf16.mxu0 0
      %863 = vmatmul.mubr.bf16.gmra.mrb[0].mxu0 %v828
      %v864 = vpop.f32.mrb[0].mxu0
      %v865 = vadd.f32 0.0, %v864
      %v866 = vpop.f32.mrb[0].mxu0
      %v867 = vpop.f32.mrb[0].mxu0
      %v868 = vadd.f32 0.0, %v867
      %v869 = vpop.f32.mrb[0].mxu0
      %870 = vdwg.mxu0
      %v871 = vpack.c.bf16 %v868, %v865
      %v876 = vunpack.c.l.b16 %v610
      %v877 = vunpack.c.l.b16 %v611
      %v878 = vunpack.c.l.b16 %v612
      %v879 = vunpack.c.l.b16 %v613
      %v880 = vpack.c.b16 %v877, %v876
      %v881 = vpack.c.b16 %v879, %v878
      %v885 = vsel %vm622, %v871, 0
      %887 = vmatprep.subr.bf16.mxu0 0
      %888 = vmatpush1.bf16.msra.mxu0 %v880
      %889 = vmatprep.subr.bf16.mxu0 0
      %890 = vmatpush1.bf16.msra.mxu0 %v881
      %891 = vmatprep.subr.bf16.mxu0 0
      %892 = vmatpush1.bf16.msra.mxu0 0
      %893 = vmatprep.subr.bf16.mxu0 0
      %894 = vmatpush1.bf16.msra.mxu0 0
      %895 = vmatprep.subr.bf16.mxu0 0
      %896 = vmatpush1.bf16.msra.mxu0 0
      %897 = vmatprep.subr.bf16.mxu0 0
      %898 = vmatpush1.bf16.msra.mxu0 0
      %899 = vmatprep.subr.bf16.mxu0 0
      %900 = vmatpush1.bf16.msra.mxu0 0
      %901 = vmatprep.subr.bf16.mxu0 0
      %902 = vmatpush1.bf16.msra.mxu0 0
      %903 = vmatprep.subr.bf16.mxu0 0
      %904 = vmatpush1.bf16.msra.mxu0 0
      %905 = vmatprep.subr.bf16.mxu0 0
      %906 = vmatpush1.bf16.msra.mxu0 0
      %907 = vmatprep.subr.bf16.mxu0 0
      %908 = vmatpush1.bf16.msra.mxu0 0
      %909 = vmatprep.subr.bf16.mxu0 0
      %910 = vmatpush1.bf16.msra.mxu0 0
      %911 = vmatprep.subr.bf16.mxu0 0
      %912 = vmatpush1.bf16.msra.mxu0 0
      %913 = vmatprep.subr.bf16.mxu0 0
      %914 = vmatpush1.bf16.msra.mxu0 0
      %915 = vmatprep.subr.bf16.mxu0 0
      %916 = vmatpush1.bf16.msra.mxu0 0
      %917 = vmatprep.subr.bf16.mxu0 0
      %918 = vmatpush1.bf16.msra.mxu0 0
      %919 = vmatprep.mubr.bf16.mxu0 0
      %920 = vmatmul.mubr.bf16.gmra.mrb[0].mxu0 %v885
      %v921 = vpop.f32.mrb[0].mxu0
      %v922 = vadd.f32 0.0, %v921
      %v923 = vpop.f32.mrb[0].mxu0
      %v924 = vpop.f32.mrb[0].mxu0
      %v925 = vadd.f32 0.0, %v924
      %v926 = vpop.f32.mrb[0].mxu0
      %927 = vdwg.mxu0
      %v932 = vunpack.c.l.b16 %v606
      %v933 = vunpack.c.l.b16 %v607
      %v934 = vunpack.c.l.b16 %v608
      %v935 = vunpack.c.l.b16 %v609
      %v936 = vpack.c.b16 %v933, %v932
      %v937 = vpack.c.b16 %v935, %v934
      %v941 = vsel %vm622, %v742, 0
      %943 = vmatprep.subr.bf16.mxu0 0
      %944 = vmatpush1.bf16.msra.mxu0 %v936
      %945 = vmatprep.subr.bf16.mxu0 0
      %946 = vmatpush1.bf16.msra.mxu0 %v937
      %947 = vmatprep.subr.bf16.mxu0 0
      %948 = vmatpush1.bf16.msra.mxu0 0
      %949 = vmatprep.subr.bf16.mxu0 0
      %950 = vmatpush1.bf16.msra.mxu0 0
      %951 = vmatprep.subr.bf16.mxu0 0
      %952 = vmatpush1.bf16.msra.mxu0 0
      %953 = vmatprep.subr.bf16.mxu0 0
      %954 = vmatpush1.bf16.msra.mxu0 0
      %955 = vmatprep.subr.bf16.mxu0 0
      %956 = vmatpush1.bf16.msra.mxu0 0
      %957 = vmatprep.subr.bf16.mxu0 0
      %958 = vmatpush1.bf16.msra.mxu0 0
      %959 = vmatprep.subr.bf16.mxu0 0
      %960 = vmatpush1.bf16.msra.mxu0 0
      %961 = vmatprep.subr.bf16.mxu0 0
      %962 = vmatpush1.bf16.msra.mxu0 0
      %963 = vmatprep.subr.bf16.mxu0 0
      %964 = vmatpush1.bf16.msra.mxu0 0
      %965 = vmatprep.subr.bf16.mxu0 0
      %966 = vmatpush1.bf16.msra.mxu0 0
      %967 = vmatprep.subr.bf16.mxu0 0
      %968 = vmatpush1.bf16.msra.mxu0 0
      %969 = vmatprep.subr.bf16.mxu0 0
      %970 = vmatpush1.bf16.msra.mxu0 0
      %971 = vmatprep.subr.bf16.mxu0 0
      %972 = vmatpush1.bf16.msra.mxu0 0
      %973 = vmatprep.subr.bf16.mxu0 0
      %974 = vmatpush1.bf16.msra.mxu0 0
      %975 = vmatprep.mubr.bf16.mxu0 0
      %976 = vmatmul.mubr.bf16.gmra.mrb[0].mxu0 %v941
      %v977 = vpop.f32.mrb[0].mxu0
      %v978 = vadd.f32 %v922, %v977
      %v979 = vpop.f32.mrb[0].mxu0
      %v980 = vpop.f32.mrb[0].mxu0
      %v981 = vadd.f32 %v925, %v980
      %v982 = vpop.f32.mrb[0].mxu0
      %983 = vdwg.mxu0
      %984 = vrot.lane.b32.xlu0 %v594, 64
      %v985 = vpop.permute.xlu0 %984
      %986 = vrot.lane.b32.xlu0 %v595, 64
      %v987 = vpop.permute.xlu0 %986
      %v989 = vsel %vm622, %v985, 0
      %v992 = vsel %vm622, %v987, 0
      %994 = vmatprep.subr.bf16.mxu0 0
      %995 = vmatpush1.bf16.xpose.msra.mxu0 %v992
      %996 = vmatprep.subr.bf16.mxu0 0
      %997 = vmatpush1.bf16.xpose.msra.mxu0 0
      %998 = vmatprep.subr.bf16.mxu0 0
      %999 = vmatpush1.bf16.xpose.msra.mxu0 0
      %1000 = vmatprep.subr.bf16.mxu0 0
      %1001 = vmatpush1.bf16.xpose.msra.mxu0 0
      %1002 = vmatprep.subr.bf16.mxu0 0
      %1003 = vmatpush1.bf16.xpose.msra.mxu0 0
      %1004 = vmatprep.subr.bf16.mxu0 0
      %1005 = vmatpush1.bf16.xpose.msra.mxu0 0
      %1006 = vmatprep.subr.bf16.mxu0 0
      %1007 = vmatpush1.bf16.xpose.msra.mxu0 0
      %1008 = vmatprep.subr.bf16.mxu0 0
      %1009 = vmatpush1.bf16.xpose.msra.mxu0 0
      %1010 = vmatprep.subr.bf16.mxu0 0
      %1011 = vmatpush1.bf16.xpose.msra.mxu0 0
      %1012 = vmatprep.subr.bf16.mxu0 0
      %1013 = vmatpush1.bf16.xpose.msra.mxu0 0
      %1014 = vmatprep.subr.bf16.mxu0 0
      %1015 = vmatpush1.bf16.xpose.msra.mxu0 0
      %1016 = vmatprep.subr.bf16.mxu0 0
      %1017 = vmatpush1.bf16.xpose.msra.mxu0 0
      %1018 = vmatprep.subr.bf16.mxu0 0
      %1019 = vmatpush1.bf16.xpose.msra.mxu0 0
      %1020 = vmatprep.subr.bf16.mxu0 0
      %1021 = vmatpush1.bf16.xpose.msra.mxu0 0
      %1022 = vmatprep.subr.bf16.mxu0 0
      %1023 = vmatpush1.bf16.xpose.msra.mxu0 0
      %1024 = vmatprep.subr.bf16.mxu0 0
      %1025 = vmatpush1.bf16.xpose.msra.mxu0 0
      %1026 = vmatprep.mubr.bf16.mxu0 0
      %1027 = vmatmul.mubr.bf16.gmra.mrb[0].mxu0 %v989
      %v1028 = vpop.f32.mrb[0].mxu0
      %v1029 = vadd.f32 0.0, %v1028
      %v1030 = vpop.f32.mrb[0].mxu0
      %v1031 = vpop.f32.mrb[0].mxu0
      %v1032 = vadd.f32 0.0, %v1031
      %v1033 = vpop.f32.mrb[0].mxu0
      %1034 = vdwg.mxu0
      %v1035 = vmul.f32 %v1029, 0.17677669
      %v1036 = vmul.f32 %v1032, 0.17677669
      %v1037 = vadd.f32 %v1035, %v604
      %v1038 = vadd.f32 %v1036, %v605
      %v1039 = vsel %vm674, %v1037, -inf
      %1040 = vmax.xlane.f32.xlu0 %v1039
      %v1041 = vpop.xlane.xlu0 %1040
      %v1042 = vsel %vm674, %v1038, -inf
      %1043 = vmax.xlane.f32.xlu0 %v1042
      %v1044 = vpop.xlane.xlu0 %1043
      %v1045 = vsub.f32 %v1037, %v1041
      %v1046 = vsub.f32 %v1038, %v1044
      %v1047 = vmul.f32 %v1045, 1.442695
      %v1048 = vpow.pop %v1047
      %v1049 = vmul.f32 %v1046, 1.442695
      %v1050 = vpow.pop %v1049
      %v1051 = vsel %vm674, %v1048, 0.0
      %1052 = vadd.xlane.f32.xlu0 %v1051
      %v1053 = vpop.xlane.xlu0 %1052
      %v1054 = vsel %vm674, %v1050, 0.0
      %1055 = vadd.xlane.f32.xlu0 %v1054
      %v1056 = vpop.xlane.xlu0 %1055
      %v1057 = vrcp.pop %v1053
      %v1058 = vmul.f32 %v1048, %v1057
      %v1059 = vrcp.pop %v1056
      %v1060 = vmul.f32 %v1050, %v1059
      %v1061 = vpack.c.bf16 %v1060, %v1058
      %1062 = vrot.lane.b32.xlu0 %v596, 64
      %v1063 = vpop.permute.xlu0 %1062
      %v1066 = vsel %vm674, %v1061, 0
      %1068 = vmatprep.subr.bf16.mxu0 0
      %1069 = vmatpush1.bf16.msra.mxu0 %v1063
      %1070 = vmatprep.subr.bf16.mxu0 0
      %1071 = vmatpush1.bf16.msra.mxu0 0
      %1072 = vmatprep.subr.bf16.mxu0 0
      %1073 = vmatpush1.bf16.msra.mxu0 0
      %1074 = vmatprep.subr.bf16.mxu0 0
      %1075 = vmatpush1.bf16.msra.mxu0 0
      %1076 = vmatprep.subr.bf16.mxu0 0
      %1077 = vmatpush1.bf16.msra.mxu0 0
      %1078 = vmatprep.subr.bf16.mxu0 0
      %1079 = vmatpush1.bf16.msra.mxu0 0
      %1080 = vmatprep.subr.bf16.mxu0 0
      %1081 = vmatpush1.bf16.msra.mxu0 0
      %1082 = vmatprep.subr.bf16.mxu0 0
      %1083 = vmatpush1.bf16.msra.mxu0 0
      %1084 = vmatprep.subr.bf16.mxu0 0
      %1085 = vmatpush1.bf16.msra.mxu0 0
      %1086 = vmatprep.subr.bf16.mxu0 0
      %1087 = vmatpush1.bf16.msra.mxu0 0
      %1088 = vmatprep.subr.bf16.mxu0 0
      %1089 = vmatpush1.bf16.msra.mxu0 0
      %1090 = vmatprep.subr.bf16.mxu0 0
      %1091 = vmatpush1.bf16.msra.mxu0 0
      %1092 = vmatprep.subr.bf16.mxu0 0
      %1093 = vmatpush1.bf16.msra.mxu0 0
      %1094 = vmatprep.subr.bf16.mxu0 0
      %1095 = vmatpush1.bf16.msra.mxu0 0
      %1096 = vmatprep.subr.bf16.mxu0 0
      %1097 = vmatpush1.bf16.msra.mxu0 0
      %1098 = vmatprep.subr.bf16.mxu0 0
      %1099 = vmatpush1.bf16.msra.mxu0 0
      %1100 = vmatprep.mubr.bf16.mxu0 0
      %1101 = vmatmul.mubr.bf16.gmra.mrb[0].mxu0 %v1066
      %v1102 = vpop.f32.mrb[0].mxu0
      %v1103 = vadd.f32 0.0, %v1102
      %v1104 = vpop.f32.mrb[0].mxu0
      %v1105 = vpop.f32.mrb[0].mxu0
      %v1106 = vadd.f32 0.0, %v1105
      %v1107 = vpop.f32.mrb[0].mxu0
      %1108 = vdwg.mxu0
      %v1109 = vpack.c.bf16 %v1106, %v1103
      %v1114 = vunpack.c.l.b16 %v614
      %v1115 = vunpack.c.l.b16 %v615
      %v1116 = vunpack.c.l.b16 %v616
      %v1117 = vunpack.c.l.b16 %v617
      %v1118 = vpack.c.b16 %v1115, %v1114
      %v1119 = vpack.c.b16 %v1117, %v1116
      %v1123 = vsel %vm622, %v1109, 0
      %1125 = vmatprep.subr.bf16.mxu0 0
      %1126 = vmatpush1.bf16.msra.mxu0 %v1118
      %1127 = vmatprep.subr.bf16.mxu0 0
      %1128 = vmatpush1.bf16.msra.mxu0 %v1119
      %1129 = vmatprep.subr.bf16.mxu0 0
      %1130 = vmatpush1.bf16.msra.mxu0 0
      %1131 = vmatprep.subr.bf16.mxu0 0
      %1132 = vmatpush1.bf16.msra.mxu0 0
      %1133 = vmatprep.subr.bf16.mxu0 0
      %1134 = vmatpush1.bf16.msra.mxu0 0
      %1135 = vmatprep.subr.bf16.mxu0 0
      %1136 = vmatpush1.bf16.msra.mxu0 0
      %1137 = vmatprep.subr.bf16.mxu0 0
      %1138 = vmatpush1.bf16.msra.mxu0 0
      %1139 = vmatprep.subr.bf16.mxu0 0
      %1140 = vmatpush1.bf16.msra.mxu0 0
      %1141 = vmatprep.subr.bf16.mxu0 0
      %1142 = vmatpush1.bf16.msra.mxu0 0
      %1143 = vmatprep.subr.bf16.mxu0 0
      %1144 = vmatpush1.bf16.msra.mxu0 0
      %1145 = vmatprep.subr.bf16.mxu0 0
      %1146 = vmatpush1.bf16.msra.mxu0 0
      %1147 = vmatprep.subr.bf16.mxu0 0
      %1148 = vmatpush1.bf16.msra.mxu0 0
      %1149 = vmatprep.subr.bf16.mxu0 0
      %1150 = vmatpush1.bf16.msra.mxu0 0
      %1151 = vmatprep.subr.bf16.mxu0 0
      %1152 = vmatpush1.bf16.msra.mxu0 0
      %1153 = vmatprep.subr.bf16.mxu0 0
      %1154 = vmatpush1.bf16.msra.mxu0 0
      %1155 = vmatprep.subr.bf16.mxu0 0
      %1156 = vmatpush1.bf16.msra.mxu0 0
      %1157 = vmatprep.mubr.bf16.mxu0 0
      %1158 = vmatmul.mubr.bf16.gmra.mrb[0].mxu0 %v1123
      %v1159 = vpop.f32.mrb[0].mxu0
      %v1160 = vadd.f32 0.0, %v1159
      %v1161 = vpop.f32.mrb[0].mxu0
      %v1162 = vpop.f32.mrb[0].mxu0
      %v1163 = vadd.f32 0.0, %v1162
      %v1164 = vpop.f32.mrb[0].mxu0
      %1165 = vdwg.mxu0
      %v1166 = vadd.f32 %v978, %v1160
      %v1167 = vadd.f32 %v981, %v1163
      %1168 = vrot.lane.b32.xlu0 %v594, 32
      %v1169 = vpop.permute.xlu0 %1168
      %1170 = vrot.lane.b32.xlu0 %v595, 32
      %v1171 = vpop.permute.xlu0 %1170
      %v1173 = vsel %vm622, %v1169, 0
      %v1176 = vsel %vm622, %v1171, 0
      %1178 = vmatprep.subr.bf16.mxu0 0
      %1179 = vmatpush1.bf16.xpose.msra.mxu0 %v1176
      %1180 = vmatprep.subr.bf16.mxu0 0
      %1181 = vmatpush1.bf16.xpose.msra.mxu0 0
      %1182 = vmatprep.subr.bf16.mxu0 0
      %1183 = vmatpush1.bf16.xpose.msra.mxu0 0
      %1184 = vmatprep.subr.bf16.mxu0 0
      %1185 = vmatpush1.bf16.xpose.msra.mxu0 0
      %1186 = vmatprep.subr.bf16.mxu0 0
      %1187 = vmatpush1.bf16.xpose.msra.mxu0 0
      %1188 = vmatprep.subr.bf16.mxu0 0
      %1189 = vmatpush1.bf16.xpose.msra.mxu0 0
      %1190 = vmatprep.subr.bf16.mxu0 0
      %1191 = vmatpush1.bf16.xpose.msra.mxu0 0
      %1192 = vmatprep.subr.bf16.mxu0 0
      %1193 = vmatpush1.bf16.xpose.msra.mxu0 0
      %1194 = vmatprep.subr.bf16.mxu0 0
      %1195 = vmatpush1.bf16.xpose.msra.mxu0 0
      %1196 = vmatprep.subr.bf16.mxu0 0
      %1197 = vmatpush1.bf16.xpose.msra.mxu0 0
      %1198 = vmatprep.subr.bf16.mxu0 0
      %1199 = vmatpush1.bf16.xpose.msra.mxu0 0
      %1200 = vmatprep.subr.bf16.mxu0 0
      %1201 = vmatpush1.bf16.xpose.msra.mxu0 0
      %1202 = vmatprep.subr.bf16.mxu0 0
      %1203 = vmatpush1.bf16.xpose.msra.mxu0 0
      %1204 = vmatprep.subr.bf16.mxu0 0
      %1205 = vmatpush1.bf16.xpose.msra.mxu0 0
      %1206 = vmatprep.subr.bf16.mxu0 0
      %1207 = vmatpush1.bf16.xpose.msra.mxu0 0
      %1208 = vmatprep.subr.bf16.mxu0 0
      %1209 = vmatpush1.bf16.xpose.msra.mxu0 0
      %1210 = vmatprep.mubr.bf16.mxu0 0
      %1211 = vmatmul.mubr.bf16.gmra.mrb[0].mxu0 %v1173
      %v1212 = vpop.f32.mrb[0].mxu0
      %v1213 = vadd.f32 0.0, %v1212
      %v1214 = vpop.f32.mrb[0].mxu0
      %v1215 = vpop.f32.mrb[0].mxu0
      %v1216 = vadd.f32 0.0, %v1215
      %v1217 = vpop.f32.mrb[0].mxu0
      %1218 = vdwg.mxu0
      %v1219 = vmul.f32 %v1213, 0.17677669
      %v1220 = vmul.f32 %v1216, 0.17677669
      %v1221 = vadd.f32 %v1219, %v604
      %v1222 = vadd.f32 %v1220, %v605
      %v1223 = vsel %vm674, %v1221, -inf
      %1224 = vmax.xlane.f32.xlu0 %v1223
      %v1225 = vpop.xlane.xlu0 %1224
      %v1226 = vsel %vm674, %v1222, -inf
      %1227 = vmax.xlane.f32.xlu0 %v1226
      %v1228 = vpop.xlane.xlu0 %1227
      %v1229 = vsub.f32 %v1221, %v1225
      %v1230 = vsub.f32 %v1222, %v1228
      %v1231 = vmul.f32 %v1229, 1.442695
      %v1232 = vpow.pop %v1231
      %v1233 = vmul.f32 %v1230, 1.442695
      %v1234 = vpow.pop %v1233
      %v1235 = vsel %vm674, %v1232, 0.0
      %1236 = vadd.xlane.f32.xlu0 %v1235
      %v1237 = vpop.xlane.xlu0 %1236
      %v1238 = vsel %vm674, %v1234, 0.0
      %1239 = vadd.xlane.f32.xlu0 %v1238
      %v1240 = vpop.xlane.xlu0 %1239
      %v1241 = vrcp.pop %v1237
      %v1242 = vmul.f32 %v1232, %v1241
      %v1243 = vrcp.pop %v1240
      %v1244 = vmul.f32 %v1234, %v1243
      %v1245 = vpack.c.bf16 %v1244, %v1242
      %1246 = vrot.lane.b32.xlu0 %v596, 32
      %v1247 = vpop.permute.xlu0 %1246
      %v1250 = vsel %vm674, %v1245, 0
      %1252 = vmatprep.subr.bf16.mxu0 0
      %1253 = vmatpush1.bf16.msra.mxu0 %v1247
      %1254 = vmatprep.subr.bf16.mxu0 0
      %1255 = vmatpush1.bf16.msra.mxu0 0
      %1256 = vmatprep.subr.bf16.mxu0 0
      %1257 = vmatpush1.bf16.msra.mxu0 0
      %1258 = vmatprep.subr.bf16.mxu0 0
      %1259 = vmatpush1.bf16.msra.mxu0 0
      %1260 = vmatprep.subr.bf16.mxu0 0
      %1261 = vmatpush1.bf16.msra.mxu0 0
      %1262 = vmatprep.subr.bf16.mxu0 0
      %1263 = vmatpush1.bf16.msra.mxu0 0
      %1264 = vmatprep.subr.bf16.mxu0 0
      %1265 = vmatpush1.bf16.msra.mxu0 0
      %1266 = vmatprep.subr.bf16.mxu0 0
      %1267 = vmatpush1.bf16.msra.mxu0 0
      %1268 = vmatprep.subr.bf16.mxu0 0
      %1269 = vmatpush1.bf16.msra.mxu0 0
      %1270 = vmatprep.subr.bf16.mxu0 0
      %1271 = vmatpush1.bf16.msra.mxu0 0
      %1272 = vmatprep.subr.bf16.mxu0 0
      %1273 = vmatpush1.bf16.msra.mxu0 0
      %1274 = vmatprep.subr.bf16.mxu0 0
      %1275 = vmatpush1.bf16.msra.mxu0 0
      %1276 = vmatprep.subr.bf16.mxu0 0
      %1277 = vmatpush1.bf16.msra.mxu0 0
      %1278 = vmatprep.subr.bf16.mxu0 0
      %1279 = vmatpush1.bf16.msra.mxu0 0
      %1280 = vmatprep.subr.bf16.mxu0 0
      %1281 = vmatpush1.bf16.msra.mxu0 0
      %1282 = vmatprep.subr.bf16.mxu0 0
      %1283 = vmatpush1.bf16.msra.mxu0 0
      %1284 = vmatprep.mubr.bf16.mxu0 0
      %1285 = vmatmul.mubr.bf16.gmra.mrb[0].mxu0 %v1250
      %v1286 = vpop.f32.mrb[0].mxu0
      %v1287 = vadd.f32 0.0, %v1286
      %v1288 = vpop.f32.mrb[0].mxu0
      %v1289 = vpop.f32.mrb[0].mxu0
      %v1290 = vadd.f32 0.0, %v1289
      %v1291 = vpop.f32.mrb[0].mxu0
      %1292 = vdwg.mxu0
      %v1293 = vpack.c.bf16 %v1290, %v1287
      %v1298 = vunpack.c.l.b16 %v618
      %v1299 = vunpack.c.l.b16 %v619
      %v1300 = vunpack.c.l.b16 %v620
      %v1301 = vunpack.c.l.b16 %v621
      %v1302 = vpack.c.b16 %v1299, %v1298
      %v1303 = vpack.c.b16 %v1301, %v1300
      %v1307 = vsel %vm622, %v1293, 0
      %1309 = vmatprep.subr.bf16.mxu0 0
      %1310 = vmatpush1.bf16.msra.mxu0 %v1302
      %1311 = vmatprep.subr.bf16.mxu0 0
      %1312 = vmatpush1.bf16.msra.mxu0 %v1303
      %1313 = vmatprep.subr.bf16.mxu0 0
      %1314 = vmatpush1.bf16.msra.mxu0 0
      %1315 = vmatprep.subr.bf16.mxu0 0
      %1316 = vmatpush1.bf16.msra.mxu0 0
      %1317 = vmatprep.subr.bf16.mxu0 0
      %1318 = vmatpush1.bf16.msra.mxu0 0
      %1319 = vmatprep.subr.bf16.mxu0 0
      %1320 = vmatpush1.bf16.msra.mxu0 0
      %1321 = vmatprep.subr.bf16.mxu0 0
      %1322 = vmatpush1.bf16.msra.mxu0 0
      %1323 = vmatprep.subr.bf16.mxu0 0
      %1324 = vmatpush1.bf16.msra.mxu0 0
      %1325 = vmatprep.subr.bf16.mxu0 0
      %1326 = vmatpush1.bf16.msra.mxu0 0
      %1327 = vmatprep.subr.bf16.mxu0 0
      %1328 = vmatpush1.bf16.msra.mxu0 0
      %1329 = vmatprep.subr.bf16.mxu0 0
      %1330 = vmatpush1.bf16.msra.mxu0 0
      %1331 = vmatprep.subr.bf16.mxu0 0
      %1332 = vmatpush1.bf16.msra.mxu0 0
      %1333 = vmatprep.subr.bf16.mxu0 0
      %1334 = vmatpush1.bf16.msra.mxu0 0
      %1335 = vmatprep.subr.bf16.mxu0 0
      %1336 = vmatpush1.bf16.msra.mxu0 0
      %1337 = vmatprep.subr.bf16.mxu0 0
      %1338 = vmatpush1.bf16.msra.mxu0 0
      %1339 = vmatprep.subr.bf16.mxu0 0
      %1340 = vmatpush1.bf16.msra.mxu0 0
      %1341 = vmatprep.mubr.bf16.mxu0 0
      %1342 = vmatmul.mubr.bf16.gmra.mrb[0].mxu0 %v1307
      %v1343 = vpop.f32.mrb[0].mxu0
      %v1344 = vadd.f32 0.0, %v1343
      %v1345 = vpop.f32.mrb[0].mxu0
      %v1346 = vpop.f32.mrb[0].mxu0
      %v1347 = vadd.f32 0.0, %v1346
      %v1348 = vpop.f32.mrb[0].mxu0
      %1349 = vdwg.mxu0
      %v1350 = vadd.f32 %v1166, %v1344
      %v1351 = vadd.f32 %v1167, %v1347
      %v1352 = vadd.f32 %v289, %v1350
      %v1353 = vadd.f32 %v290, %v1351
      %v1354 = vld [vmem:[%s7] sm:$0x1]
      %v1356 = vlaneseq
      %v1357 = vshrl.u32 %v1356, 7
      %v1358 = vsub.s32 0, %v1357
      %v1359 = vrot.slane %v1354, %v1358
      %v1361 = vadd.f32 %v1352, %v1359
      %v1362 = vadd.f32 %v1353, %v1359
      %v1363 = vpack.c.bf16 %v1362, %v1361
      %v1365 = vunpack.c.l.b16 %v1363
      %v1366 = vunpack.c.h.b16 %v1363
      %v1367 = vpack.c.b16 %v1365, %v1365
      %v1368 = vpack.c.b16 %v1366, %v1366
      %1371 = vst [vmem:[%s285] sm:$0xf] %v1367
      %1372 = vst [vmem:[%s285 + $0x4] sm:$0xf] %v1368
      %p1373 = scmp.lt.s32.totalorder %s25, 1
      %s1374 = scalar_select %p1373, %s25, 1
      %s1375 = smul.addr %s1374, 2
      %s1376 = smul.addr %s1375, 4
      %s1377 = scalar_lea.vmem %s8, %s1376
      // Predicated region
      $region49: #{transformer_forward.18} parent=47 // pred_check
        %p1378 = pneg %p195
      $region50: #{transformer_forward.18} parent=47 // pred_check_branch
        %1380 = sbr.rel (%p1378) target = $region52
      $region51: #{transformer_forward.18} parent=47 // pred_region
        _
      $region52: #{transformer_forward.18} parent=47 // pred_fallthru
        _
    $region48: #{transformer_forward.18} parent=5 // pred_fallthru
      _
    %p1381 = scmp.le.s32.totalorder 2, %s20
    // Predicated region
    $region53: #{transformer_forward.18} parent=5 // pred_check
      %p1382 = pneg %p1381
    $region54: #{transformer_forward.18} parent=5 // pred_check_branch
      %1384 = sbr.rel (%p1382) target = $region56
    $region55: #{transformer_forward.18} parent=5 // pred_region
      %s1385 = ssub.s32 %s20, 2
      // Predicated region
      $region57: #{transformer_forward.18} parent=55 // pred_check
        %p1386 = pneg %p201
      $region58: #{transformer_forward.18} parent=55 // pred_check_branch
        %1388 = sbr.rel (%p1386) target = $region60
      $region59: #{transformer_forward.18} parent=55 // pred_region
        %p1389 = scmp.lt.s32.totalorder %s26, 1
        %s1390 = scalar_select %p1389, %s26, 1
        %s1391 = smul.addr %s1390, 2
        %s1392 = smul.addr %s1391, 4
        %s1393 = scalar_lea.vmem %s8, %s1392
      $region60: #{transformer_forward.18} parent=55 // pred_fallthru
        _
    $region56: #{transformer_forward.18} parent=5 // pred_fallthru
      _
  $region6: #{transformer_forward.18} parent=0 // loop_footer
    %s24 = sadd.s32 1, %s20
  $region7: #{transformer_forward.18} parent=0 // loop_footer_branch
    %19 = sbr.rel target = $region3
  $region8: #{transformer_forward.18} parent=0 // loop_exit
    _

// kernel: transformer_forward.19
$region0: #{transformer_forward.19}
  #allocation0 [shape = 'u32[]', space=smem, size = 0x4, offset = 0x4, fixed_abs, tag = 'smem constant byte address 0x4 - core index']
  #allocation1 [shape = 'u32[144,128]{1,0:T(1,128)}', space=vmem, size = 0x12000, scoped, tag = 'internal scratch']
  #allocation2 [shape = 's32[1]{0}', space=sflag, size = 0x4, scoped, tag = 'scoped memory for transformer_forward.19']
  #allocation3 [shape = 'u8[512]{0}', space=smem, size = 0x200, scoped, tag = 'prefetched SMEM operand 0']
  %s0 = inlined_call_operand.vmem [shape: s32[2], index: 0, kind: input, shape index: {}]
  %s1 = inlined_call_operand.vmem [shape: bf16[2,16,128], index: 1, kind: input, shape index: {}]
  %s2 = inlined_call_operand.vmem [shape: bf16[2,16,128], index: 2, kind: input, shape index: {}]
  %s3 = inlined_call_operand.vmem [shape: f32[1,128], index: 3, kind: input, shape index: {}]
  %s4 = inlined_call_operand.vmem [shape: f32[1,128], index: 4, kind: input, shape index: {}]
  %s5 = inlined_call_operand.vmem [shape: bf16[128,128], index: 5, kind: input, shape index: {}]
  %s6 = inlined_call_operand.vmem [shape: f32[1,128], index: 6, kind: input, shape index: {}]
  %s7 = inlined_call_operand.vmem [shape: bf16[128,256], index: 7, kind: input, shape index: {}]
  %s8 = inlined_call_operand.vmem [shape: f32[1,256], index: 8, kind: input, shape index: {}]
  %s9 = inlined_call_operand.vmem [shape: bf16[128,128], index: 9, kind: input, shape index: {}]
  %s10 = inlined_call_operand.vmem [shape: f32[1,128], index: 10, kind: input, shape index: {}]
  %s11 = inlined_call_operand.vmem [shape: bf16[2,16,128], index: 11, kind: output, shape index: {}]
  %s12 = sld [smem:[#allocation0]]
  $region73: #{transformer_forward.19} parent=0
    _
  %s14 = ssub.s32 1, %s12
  %s15 = scalar_select 0, %s14, %s12
  %s16 = sshll.u32 %s0, 4
  %s17 = int_to_ptr.vmem [resolvable:$true] %s16
  %19 = dma.vmem_to_smem %s17, 16, [#allocation3], [#allocation2]
  %20 = dma.done [#allocation2], 16
  %21 = sfence
  loop: start=0, step=1, limit=4
  $region2: #{transformer_forward.19} parent=0 // loop_pre_header
    _
  $region3: #{transformer_forward.19} parent=0 // loop_header
    %s23 = sphi 0, %s27
    %p24 = scmp.ge.s32.totalorder %s23, 4
    %s33 = sphi 0, %s35
    %s36 = sphi 0, %s33
    %s37 = sphi 0, %s36
    %s53 = sphi 0, %s37
    %s59 = sphi 0, %s61
    %s62 = sphi 0, %s59
    %s63 = sphi 0, %s62
    %s79 = sphi 0, %s63
    %s83 = sphi 0, %s83
    %s85 = sphi 0, %s83
    %s86 = sphi 0, %s85
    %s100 = sphi 0, %s86
    %s104 = sphi 0, %s104
    %s106 = sphi 0, %s104
    %s107 = sphi 0, %s106
    %s121 = sphi 0, %s107
    %s125 = sphi 0, %s125
    %s127 = sphi 0, %s125
    %s128 = sphi 0, %s127
    %s142 = sphi 0, %s128
    %s146 = sphi 0, %s146
    %s148 = sphi 0, %s146
    %s149 = sphi 0, %s148
    %s163 = sphi 0, %s149
    %s167 = sphi 0, %s167
    %s169 = sphi 0, %s167
    %s170 = sphi 0, %s169
    %s184 = sphi 0, %s170
    %s188 = sphi 0, %s188
    %s190 = sphi 0, %s188
    %s191 = sphi 0, %s190
    %s205 = sphi 0, %s191
    %s209 = sphi 0, %s209
    %s211 = sphi 0, %s209
    %s212 = sphi 0, %s211
    %s226 = sphi 0, %s212
    %s230 = sphi 0, %s230
    %s232 = sphi 0, %s230
    %s233 = sphi 0, %s232
    %s247 = sphi 0, %s233
    %s253 = sphi 0, %s255
    %s256 = sphi 0, %s253
    %s257 = sphi 0, %s256
    %s273 = sphi 0, %s257
  $region4: #{transformer_forward.19} parent=0 // loop_header_branch
    %26 = sbr.rel (%p24) target = $region8
  $region5: #{transformer_forward.19} parent=0 // loop_body
    %s28 = ssub.s32 %s23, 1
    %s29 = ssub.s32 %s23, 2
    %s30 = sadd.s32 %s23, 1
    %s31 = ssub.s32 %s23, %s30
    %p32 = scmp.eq.s32.totalorder %s31, 0
    %s34 = sadd.s32 %s33, 1
    %s35 = scalar_select %p32, %s33, %s34
    %p38 = pneg %p32
    %p39 = scmp.eq.s32.totalorder %s23, 1
    %p40 = por %p38, %p39
    %p41 = scmp.ne.s32.totalorder %s33, %s36
    %p42 = scmp.eq.s32.totalorder %s23, 0
    %p43 = por %p41, %p42
    %p44 = scmp.ne.s32.totalorder %s33, %s36
    %p45 = scmp.eq.s32.totalorder %s28, 1
    %p46 = por %p44, %p45
    %p47 = scmp.ne.s32.totalorder %s36, %s37
    %p48 = scmp.eq.s32.totalorder %s28, 0
    %p49 = por %p47, %p48
    %p50 = scmp.ne.s32.totalorder %s36, %s37
    %p51 = scmp.eq.s32.totalorder %s29, 1
    %p52 = por %p50, %p51
    %p54 = scmp.ne.s32.totalorder %s37, %s53
    %p55 = scmp.eq.s32.totalorder %s29, 0
    %p56 = por %p54, %p55
    %s57 = ssub.s32 %s23, %s30
    %p58 = scmp.eq.s32.totalorder %s57, 0
    %s60 = sadd.s32 %s59, 1
    %s61 = scalar_select %p58, %s59, %s60
    %p64 = pneg %p58
    %p65 = scmp.eq.s32.totalorder %s23, 1
    %p66 = por %p64, %p65
    %p67 = scmp.ne.s32.totalorder %s59, %s62
    %p68 = scmp.eq.s32.totalorder %s23, 0
    %p69 = por %p67, %p68
    %p70 = scmp.ne.s32.totalorder %s59, %s62
    %p71 = scmp.eq.s32.totalorder %s28, 1
    %p72 = por %p70, %p71
    %p73 = scmp.ne.s32.totalorder %s62, %s63
    %p74 = scmp.eq.s32.totalorder %s28, 0
    %p75 = por %p73, %p74
    %p76 = scmp.ne.s32.totalorder %s62, %s63
    %p77 = scmp.eq.s32.totalorder %s29, 1
    %p78 = por %p76, %p77
    %p80 = scmp.ne.s32.totalorder %s63, %s79
    %p81 = scmp.eq.s32.totalorder %s29, 0
    %p82 = por %p80, %p81
    %s84 = sadd.s32 %s83, 1
    %p87 = scmp.eq.s32.totalorder %s23, 1
    %p88 = scmp.ne.s32.totalorder %s83, %s85
    %p89 = scmp.eq.s32.totalorder %s23, 0
    %p90 = por %p88, %p89
    %p91 = scmp.ne.s32.totalorder %s83, %s85
    %p92 = scmp.eq.s32.totalorder %s28, 1
    %p93 = por %p91, %p92
    %p94 = scmp.ne.s32.totalorder %s85, %s86
    %p95 = scmp.eq.s32.totalorder %s28, 0
    %p96 = por %p94, %p95
    %p97 = scmp.ne.s32.totalorder %s85, %s86
    %p98 = scmp.eq.s32.totalorder %s29, 1
    %p99 = por %p97, %p98
    %p101 = scmp.ne.s32.totalorder %s86, %s100
    %p102 = scmp.eq.s32.totalorder %s29, 0
    %p103 = por %p101, %p102
    %s105 = sadd.s32 %s104, 1
    %p108 = scmp.eq.s32.totalorder %s23, 1
    %p109 = scmp.ne.s32.totalorder %s104, %s106
    %p110 = scmp.eq.s32.totalorder %s23, 0
    %p111 = por %p109, %p110
    %p112 = scmp.ne.s32.totalorder %s104, %s106
    %p113 = scmp.eq.s32.totalorder %s28, 1
    %p114 = por %p112, %p113
    %p115 = scmp.ne.s32.totalorder %s106, %s107
    %p116 = scmp.eq.s32.totalorder %s28, 0
    %p117 = por %p115, %p116
    %p118 = scmp.ne.s32.totalorder %s106, %s107
    %p119 = scmp.eq.s32.totalorder %s29, 1
    %p120 = por %p118, %p119
    %p122 = scmp.ne.s32.totalorder %s107, %s121
    %p123 = scmp.eq.s32.totalorder %s29, 0
    %p124 = por %p122, %p123
    %s126 = sadd.s32 %s125, 1
    %p129 = scmp.eq.s32.totalorder %s23, 1
    %p130 = scmp.ne.s32.totalorder %s125, %s127
    %p131 = scmp.eq.s32.totalorder %s23, 0
    %p132 = por %p130, %p131
    %p133 = scmp.ne.s32.totalorder %s125, %s127
    %p134 = scmp.eq.s32.totalorder %s28, 1
    %p135 = por %p133, %p134
    %p136 = scmp.ne.s32.totalorder %s127, %s128
    %p137 = scmp.eq.s32.totalorder %s28, 0
    %p138 = por %p136, %p137
    %p139 = scmp.ne.s32.totalorder %s127, %s128
    %p140 = scmp.eq.s32.totalorder %s29, 1
    %p141 = por %p139, %p140
    %p143 = scmp.ne.s32.totalorder %s128, %s142
    %p144 = scmp.eq.s32.totalorder %s29, 0
    %p145 = por %p143, %p144
    %s147 = sadd.s32 %s146, 1
    %p150 = scmp.eq.s32.totalorder %s23, 1
    %p151 = scmp.ne.s32.totalorder %s146, %s148
    %p152 = scmp.eq.s32.totalorder %s23, 0
    %p153 = por %p151, %p152
    %p154 = scmp.ne.s32.totalorder %s146, %s148
    %p155 = scmp.eq.s32.totalorder %s28, 1
    %p156 = por %p154, %p155
    %p157 = scmp.ne.s32.totalorder %s148, %s149
    %p158 = scmp.eq.s32.totalorder %s28, 0
    %p159 = por %p157, %p158
    %p160 = scmp.ne.s32.totalorder %s148, %s149
    %p161 = scmp.eq.s32.totalorder %s29, 1
    %p162 = por %p160, %p161
    %p164 = scmp.ne.s32.totalorder %s149, %s163
    %p165 = scmp.eq.s32.totalorder %s29, 0
    %p166 = por %p164, %p165
    %s168 = sadd.s32 %s167, 1
    %p171 = scmp.eq.s32.totalorder %s23, 1
    %p172 = scmp.ne.s32.totalorder %s167, %s169
    %p173 = scmp.eq.s32.totalorder %s23, 0
    %p174 = por %p172, %p173
    %p175 = scmp.ne.s32.totalorder %s167, %s169
    %p176 = scmp.eq.s32.totalorder %s28, 1
    %p177 = por %p175, %p176
    %p178 = scmp.ne.s32.totalorder %s169, %s170
    %p179 = scmp.eq.s32.totalorder %s28, 0
    %p180 = por %p178, %p179
    %p181 = scmp.ne.s32.totalorder %s169, %s170
    %p182 = scmp.eq.s32.totalorder %s29, 1
    %p183 = por %p181, %p182
    %p185 = scmp.ne.s32.totalorder %s170, %s184
    %p186 = scmp.eq.s32.totalorder %s29, 0
    %p187 = por %p185, %p186
    %s189 = sadd.s32 %s188, 1
    %p192 = scmp.eq.s32.totalorder %s23, 1
    %p193 = scmp.ne.s32.totalorder %s188, %s190
    %p194 = scmp.eq.s32.totalorder %s23, 0
    %p195 = por %p193, %p194
    %p196 = scmp.ne.s32.totalorder %s188, %s190
    %p197 = scmp.eq.s32.totalorder %s28, 1
    %p198 = por %p196, %p197
    %p199 = scmp.ne.s32.totalorder %s190, %s191
    %p200 = scmp.eq.s32.totalorder %s28, 0
    %p201 = por %p199, %p200
    %p202 = scmp.ne.s32.totalorder %s190, %s191
    %p203 = scmp.eq.s32.totalorder %s29, 1
    %p204 = por %p202, %p203
    %p206 = scmp.ne.s32.totalorder %s191, %s205
    %p207 = scmp.eq.s32.totalorder %s29, 0
    %p208 = por %p206, %p207
    %s210 = sadd.s32 %s209, 1
    %p213 = scmp.eq.s32.totalorder %s23, 1
    %p214 = scmp.ne.s32.totalorder %s209, %s211
    %p215 = scmp.eq.s32.totalorder %s23, 0
    %p216 = por %p214, %p215
    %p217 = scmp.ne.s32.totalorder %s209, %s211
    %p218 = scmp.eq.s32.totalorder %s28, 1
    %p219 = por %p217, %p218
    %p220 = scmp.ne.s32.totalorder %s211, %s212
    %p221 = scmp.eq.s32.totalorder %s28, 0
    %p222 = por %p220, %p221
    %p223 = scmp.ne.s32.totalorder %s211, %s212
    %p224 = scmp.eq.s32.totalorder %s29, 1
    %p225 = por %p223, %p224
    %p227 = scmp.ne.s32.totalorder %s212, %s226
    %p228 = scmp.eq.s32.totalorder %s29, 0
    %p229 = por %p227, %p228
    %s231 = sadd.s32 %s230, 1
    %p234 = scmp.eq.s32.totalorder %s23, 1
    %p235 = scmp.ne.s32.totalorder %s230, %s232
    %p236 = scmp.eq.s32.totalorder %s23, 0
    %p237 = por %p235, %p236
    %p238 = scmp.ne.s32.totalorder %s230, %s232
    %p239 = scmp.eq.s32.totalorder %s28, 1
    %p240 = por %p238, %p239
    %p241 = scmp.ne.s32.totalorder %s232, %s233
    %p242 = scmp.eq.s32.totalorder %s28, 0
    %p243 = por %p241, %p242
    %p244 = scmp.ne.s32.totalorder %s232, %s233
    %p245 = scmp.eq.s32.totalorder %s29, 1
    %p246 = por %p244, %p245
    %p248 = scmp.ne.s32.totalorder %s233, %s247
    %p249 = scmp.eq.s32.totalorder %s29, 0
    %p250 = por %p248, %p249
    %s251 = ssub.s32 %s23, %s30
    %p252 = scmp.eq.s32.totalorder %s251, 0
    %s254 = sadd.s32 %s253, 1
    %s255 = scalar_select %p252, %s253, %s254
    %p258 = pneg %p252
    %p259 = scmp.eq.s32.totalorder %s23, 1
    %p260 = por %p258, %p259
    %p261 = scmp.ne.s32.totalorder %s253, %s256
    %p262 = scmp.eq.s32.totalorder %s23, 0
    %p263 = por %p261, %p262
    %p264 = scmp.ne.s32.totalorder %s253, %s256
    %p265 = scmp.eq.s32.totalorder %s28, 1
    %p266 = por %p264, %p265
    %p267 = scmp.ne.s32.totalorder %s256, %s257
    %p268 = scmp.eq.s32.totalorder %s28, 0
    %p269 = por %p267, %p268
    %p270 = scmp.ne.s32.totalorder %s256, %s257
    %p271 = scmp.eq.s32.totalorder %s29, 1
    %p272 = por %p270, %p271
    %p274 = scmp.ne.s32.totalorder %s257, %s273
    %p275 = scmp.eq.s32.totalorder %s29, 0
    %p276 = por %p274, %p275
    %p277 = scmp.le.s32.totalorder 1, %s23
    %p278 = scmp.lt.s32.totalorder %s23, 3
    %p279 = pnand %p277, %p278
    %p280 = pneg %p279
    // Predicated region
    $region9: #{transformer_forward.19} parent=5 // pred_check
      _
    $region10: #{transformer_forward.19} parent=5 // pred_check_branch
      %282 = sbr.rel (%p279) target = $region12
    $region11: #{transformer_forward.19} parent=5 // pred_region
      %s283 = ssub.s32 %s23, 1
      // Predicated region
      $region13: #{transformer_forward.19} parent=11 // pred_check
        %p284 = pneg %p96
      $region14: #{transformer_forward.19} parent=11 // pred_check_branch
        %286 = sbr.rel (%p284) target = $region16
      $region15: #{transformer_forward.19} parent=11 // pred_region
        _
      $region16: #{transformer_forward.19} parent=11 // pred_fallthru
        _
      // Predicated region
      $region17: #{transformer_forward.19} parent=11 // pred_check
        %p287 = pneg %p117
      $region18: #{transformer_forward.19} parent=11 // pred_check_branch
        %289 = sbr.rel (%p287) target = $region20
      $region19: #{transformer_forward.19} parent=11 // pred_region
        _
      $region20: #{transformer_forward.19} parent=11 // pred_fallthru
        _
      // Predicated region
      $region21: #{transformer_forward.19} parent=11 // pred_check
        %p290 = pneg %p138
      $region22: #{transformer_forward.19} parent=11 // pred_check_branch
        %292 = sbr.rel (%p290) target = $region24
      $region23: #{transformer_forward.19} parent=11 // pred_region
        _
      $region24: #{transformer_forward.19} parent=11 // pred_fallthru
        _
      // Predicated region
      $region25: #{transformer_forward.19} parent=11 // pred_check
        %p293 = pneg %p159
      $region26: #{transformer_forward.19} parent=11 // pred_check_branch
        %295 = sbr.rel (%p293) target = $region28
      $region27: #{transformer_forward.19} parent=11 // pred_region
        _
      $region28: #{transformer_forward.19} parent=11 // pred_fallthru
        _
      // Predicated region
      $region29: #{transformer_forward.19} parent=11 // pred_check
        %p296 = pneg %p180
      $region30: #{transformer_forward.19} parent=11 // pred_check_branch
        %298 = sbr.rel (%p296) target = $region32
      $region31: #{transformer_forward.19} parent=11 // pred_region
        _
      $region32: #{transformer_forward.19} parent=11 // pred_fallthru
        _
      // Predicated region
      $region33: #{transformer_forward.19} parent=11 // pred_check
        %p299 = pneg %p201
      $region34: #{transformer_forward.19} parent=11 // pred_check_branch
        %301 = sbr.rel (%p299) target = $region36
      $region35: #{transformer_forward.19} parent=11 // pred_region
        _
      $region36: #{transformer_forward.19} parent=11 // pred_fallthru
        _
      // Predicated region
      $region37: #{transformer_forward.19} parent=11 // pred_check
        %p302 = pneg %p222
      $region38: #{transformer_forward.19} parent=11 // pred_check_branch
        %304 = sbr.rel (%p302) target = $region40
      $region39: #{transformer_forward.19} parent=11 // pred_region
        _
      $region40: #{transformer_forward.19} parent=11 // pred_fallthru
        _
      // Predicated region
      $region41: #{transformer_forward.19} parent=11 // pred_check
        %p305 = pneg %p243
      $region42: #{transformer_forward.19} parent=11 // pred_check_branch
        %307 = sbr.rel (%p305) target = $region44
      $region43: #{transformer_forward.19} parent=11 // pred_region
        _
      $region44: #{transformer_forward.19} parent=11 // pred_fallthru
        _
    $region12: #{transformer_forward.19} parent=5 // pred_fallthru
      _
    %p308 = scmp.lt.s32.totalorder %s23, 2
    // Predicated region
    $region45: #{transformer_forward.19} parent=5 // pred_check
      %p309 = pneg %p308
    $region46: #{transformer_forward.19} parent=5 // pred_check_branch
      %311 = sbr.rel (%p309) target = $region48
    $region47: #{transformer_forward.19} parent=5 // pred_region
      // Predicated region
      $region49: #{transformer_forward.19} parent=47 // pred_check
        %p312 = pneg %p43
      $region50: #{transformer_forward.19} parent=47 // pred_check_branch
        %314 = sbr.rel (%p312) target = $region52
      $region51: #{transformer_forward.19} parent=47 // pred_region
        %p315 = scmp.lt.s32.totalorder %s23, 1
        %s316 = scalar_select %p315, %s23, 1
        %s317 = smul.addr %s316, 2
        %s318 = smul.addr %s317, 4
        %s319 = scalar_lea.vmem %s1, %s318
      $region52: #{transformer_forward.19} parent=47 // pred_fallthru
        _
      // Predicated region
      $region53: #{transformer_forward.19} parent=47 // pred_check
        %p320 = pneg %p69
      $region54: #{transformer_forward.19} parent=47 // pred_check_branch
        %322 = sbr.rel (%p320) target = $region56
      $region55: #{transformer_forward.19} parent=47 // pred_region
        %p323 = scmp.lt.s32.totalorder %s23, 1
        %s324 = scalar_select %p323, %s23, 1
        %s325 = smul.addr %s324, 2
        %s326 = smul.addr %s325, 4
        %s327 = scalar_lea.vmem %s2, %s326
      $region56: #{transformer_forward.19} parent=47 // pred_fallthru
        _
    $region48: #{transformer_forward.19} parent=5 // pred_fallthru
      _
    %p328 = scmp.le.s32.totalorder 1, %s23
    %p329 = scmp.lt.s32.totalorder %s23, 3
    %p330 = pnand %p328, %p329
    %p331 = pneg %p330
    // Predicated region
    $region57: #{transformer_forward.19} parent=5 // pred_check
      _
    $region58: #{transformer_forward.19} parent=5 // pred_check_branch
      %333 = sbr.rel (%p330) target = $region60
    $region59: #{transformer_forward.19} parent=5 // pred_region
      %s334 = ssub.s32 %s23, 1
      %p335 = scmp.lt.s32.totalorder %s28, 1
      %s336 = scalar_select %p335, %s28, 1
      %s337 = smul.addr %s336, 2
      %s338 = smul.addr %s337, 4
      %s339 = scalar_lea.vmem %s1, %s338
      %p340 = pneg %p49
      %p341 = pneg %p46
      %p342 = scmp.lt.s32.totalorder %s28, 1
      %s343 = scalar_select %p342, %s28, 1
      %s344 = smul.addr %s343, 2
      %s345 = smul.addr %s344, 4
      %s346 = scalar_lea.vmem %s2, %s345
      %p347 = pneg %p75
      %p348 = pneg %p72
      %p349 = pneg %p96
      %p350 = pneg %p93
      %p351 = pneg %p117
      %p352 = pneg %p114
      %p353 = pneg %p138
      %p354 = pneg %p135
      %p355 = pneg %p159
      %p356 = pneg %p156
      %p357 = pneg %p180
      %p358 = pneg %p177
      %p359 = pneg %p201
      %p360 = pneg %p198
      %p361 = pneg %p222
      %p362 = pneg %p219
      %p363 = pneg %p243
      %p364 = pneg %p240
      %p365 = pneg %p269
      %p366 = pneg %p266
      %p367 = scmp.lt.s32.totalorder %s28, 1
      %s368 = scalar_select %p367, %s28, 1
      %s369 = smul.addr %s368, 2
      %s370 = smul.addr %s369, 4
      %s371 = scalar_lea.vmem %s11, %s370
      %p372 = scmp.lt.s32.totalorder %s28, 1
      %s373 = scalar_select %p372, %s28, 1
      %s374 = smul.addr %s373, 2
      %s375 = smul.addr %s374, 4
      %s376 = scalar_lea.vmem %s1, %s375
      %p377 = scmp.lt.s32.totalorder %s28, 1
      %s378 = scalar_select %p377, %s28, 1
      %s379 = smul.addr %s378, 2
      %s380 = smul.addr %s379, 4
      %s381 = scalar_lea.vmem %s2, %s380
      %p382 = scmp.lt.s32.totalorder %s28, 1
      %s383 = scalar_select %p382, %s28, 1
      %s384 = smul.addr %s383, 2
      %s385 = smul.addr %s384, 4
      %s386 = scalar_lea.vmem %s11, %s385
      %v388 = vld [vmem:[%s376] sm:$0xf]
      %v389 = vld [vmem:[%s376 + $0x4] sm:$0xf]
      %v390 = vunpack.c.l.bf16 %v388
      %v391 = vunpack.c.l.bf16 %v389
      %v392 = vld [vmem:[%s381] sm:$0xf]
      %v393 = vld [vmem:[%s381 + $0x4] sm:$0xf]
      %v394 = vld [vmem:[%s3] sm:$0x1]
      %v395 = vld [vmem:[%s4] sm:$0x1]
      %396 = vadd.xlane.f32.xlu0 %v390
      %v397 = vpop.xlane.xlu0 %396
      %398 = vadd.xlane.f32.xlu0 %v391
      %v399 = vpop.xlane.xlu0 %398
      %v400 = vrcp.pop 128.0
      %v401 = vmul.f32 %v397, %v400
      %v402 = vmul.f32 %v399, %v400
      %v403 = vsub.f32 %v390, %v401
      %v404 = vsub.f32 %v391, %v402
      %v405 = vmul.f32 %v403, %v403
      %v406 = vmul.f32 %v404, %v404
      %407 = vadd.xlane.f32.xlu0 %v405
      %v408 = vpop.xlane.xlu0 %407
      %409 = vadd.xlane.f32.xlu0 %v406
      %v410 = vpop.xlane.xlu0 %409
      %v411 = vmul.f32 %v408, %v400
      %v412 = vmul.f32 %v410, %v400
      %v413 = vadd.f32 %v411, 1e-06
      %v414 = vadd.f32 %v412, 1e-06
      %v415 = vrsqrt.pop %v413
      %v416 = vrsqrt.pop %v414
      %v417 = vmul.f32 %v403, %v415
      %v418 = vmul.f32 %v404, %v416
      %v420 = vlaneseq
      %v421 = vshrl.u32 %v420, 7
      %v422 = vsub.s32 0, %v421
      %v423 = vrot.slane %v394, %v422
      %v425 = vmul.f32 %v417, %v423
      %v426 = vmul.f32 %v418, %v423
      %v428 = vlaneseq
      %v429 = vshrl.u32 %v428, 7
      %v430 = vsub.s32 0, %v429
      %v431 = vrot.slane %v395, %v430
      %v433 = vadd.f32 %v425, %v431
      %v434 = vadd.f32 %v426, %v431
      %v435 = vpack.c.bf16 %v434, %v433
      %v436 = vld [vmem:[%s5] sm:$0xf]
      %v437 = vld [vmem:[%s5 + $0x4] sm:$0xf]
      %v438 = vld [vmem:[%s5 + $0x8] sm:$0xf]
      %v439 = vld [vmem:[%s5 + $0xc] sm:$0xf]
      %v440 = vld [vmem:[%s5 + $0x10] sm:$0xf]
      %v441 = vld [vmem:[%s5 + $0x14] sm:$0xf]
      %v442 = vld [vmem:[%s5 + $0x18] sm:$0xf]
      %v443 = vld [vmem:[%s5 + $0x1c] sm:$0xf]
      %v444 = vld [vmem:[%s5 + $0x20] sm:$0xf]
      %v445 = vld [vmem:[%s5 + $0x24] sm:$0xf]
      %v446 = vld [vmem:[%s5 + $0x28] sm:$0xf]
      %v447 = vld [vmem:[%s5 + $0x2c] sm:$0xf]
      %v448 = vld [vmem:[%s5 + $0x30] sm:$0xf]
      %v449 = vld [vmem:[%s5 + $0x34] sm:$0xf]
      %v450 = vld [vmem:[%s5 + $0x38] sm:$0xf]
      %v451 = vld [vmem:[%s5 + $0x3c] sm:$0xf]
      %v452 = vld [vmem:[%s6] sm:$0x1]
      %v454 = vlaneseq
      %v455 = vshrl.u32 %v454, 7
      %v456 = vsub.s32 0, %v455
      %v457 = vrot.slane %v452, %v456
      %v475 = vunpack.c.l.b16 %v436
      %v476 = vunpack.c.l.b16 %v437
      %v477 = vunpack.c.l.b16 %v438
      %v478 = vunpack.c.l.b16 %v439
      %v479 = vunpack.c.l.b16 %v440
      %v480 = vunpack.c.l.b16 %v441
      %v481 = vunpack.c.l.b16 %v442
      %v482 = vunpack.c.l.b16 %v443
      %v483 = vunpack.c.l.b16 %v444
      %v484 = vunpack.c.l.b16 %v445
      %v485 = vunpack.c.l.b16 %v446
      %v486 = vunpack.c.l.b16 %v447
      %v487 = vunpack.c.l.b16 %v448
      %v488 = vunpack.c.l.b16 %v449
      %v489 = vunpack.c.l.b16 %v450
      %v490 = vunpack.c.l.b16 %v451
      %v491 = vpack.c.b16 %v476, %v475
      %v492 = vpack.c.b16 %v478, %v477
      %v493 = vpack.c.b16 %v480, %v479
      %v494 = vpack.c.b16 %v482, %v481
      %v495 = vpack.c.b16 %v484, %v483
      %v496 = vpack.c.b16 %v486, %v485
      %v497 = vpack.c.b16 %v488, %v487
      %v498 = vpack.c.b16 %v490, %v489
      %507 = vmatprep.subr.bf16.mxu0 0
      %508 = vmatpush1.bf16.msra.mxu0 %v491
      %509 = vmatprep.subr.bf16.mxu0 0
      %510 = vmatpush1.bf16.msra.mxu0 %v492
      %511 = vmatprep.subr.bf16.mxu0 0
      %512 = vmatpush1.bf16.msra.mxu0 %v493
      %513 = vmatprep.subr.bf16.mxu0 0
      %514 = vmatpush1.bf16.msra.mxu0 %v494
      %515 = vmatprep.subr.bf16.mxu0 0
      %516 = vmatpush1.bf16.msra.mxu0 %v495
      %517 = vmatprep.subr.bf16.mxu0 0
      %518 = vmatpush1.bf16.msra.mxu0 %v496
      %519 = vmatprep.subr.bf16.mxu0 0
      %520 = vmatpush1.bf16.msra.mxu0 %v497
      %521 = vmatprep.subr.bf16.mxu0 0
      %522 = vmatpush1.bf16.msra.mxu0 %v498
      %523 = vmatprep.subr.bf16.mxu0 0
      %524 = vmatpush1.bf16.msra.mxu0 0
      %525 = vmatprep.subr.bf16.mxu0 0
      %526 = vmatpush1.bf16.msra.mxu0 0
      %527 = vmatprep.subr.bf16.mxu0 0
      %528 = vmatpush1.bf16.msra.mxu0 0
      %529 = vmatprep.subr.bf16.mxu0 0
      %530 = vmatpush1.bf16.msra.mxu0 0
      %531 = vmatprep.subr.bf16.mxu0 0
      %532 = vmatpush1.bf16.msra.mxu0 0
      %533 = vmatprep.subr.bf16.mxu0 0
      %534 = vmatpush1.bf16.msra.mxu0 0
      %535 = vmatprep.subr.bf16.mxu0 0
      %536 = vmatpush1.bf16.msra.mxu0 0
      %537 = vmatprep.subr.bf16.mxu0 0
      %538 = vmatpush1.bf16.msra.mxu0 0
      %539 = vmatprep.mubr.bf16.mxu0 0
      %540 = vmatmul.mubr.bf16.gmra.mrb[0].mxu0 %v435
      %v541 = vpop.f32.mrb[0].mxu0
      %v542 = vadd.f32 %v457, %v541
      %v543 = vpop.f32.mrb[0].mxu0
      %v544 = vpop.f32.mrb[0].mxu0
      %v545 = vadd.f32 %v457, %v544
      %v546 = vpop.f32.mrb[0].mxu0
      %547 = vdwg.mxu0
      %v548 = vpack.c.bf16 %v545, %v542
      %v549 = vld [vmem:[%s7] sm:$0xff]
      %v550 = vld [vmem:[%s7 + $0x8] sm:$0xff]
      %v551 = vld [vmem:[%s7 + $0x10] sm:$0xff]
      %v552 = vld [vmem:[%s7 + $0x18] sm:$0xff]
      %v553 = vld [vmem:[%s7 + $0x20] sm:$0xff]
      %v554 = vld [vmem:[%s7 + $0x28] sm:$0xff]
      %v555 = vld [vmem:[%s7 + $0x30] sm:$0xff]
      %v556 = vld [vmem:[%s7 + $0x38] sm:$0xff]
      %v557 = vld [vmem:[%s7 + $0x40] sm:$0xff]
      %v558 = vld [vmem:[%s7 + $0x48] sm:$0xff]
      %v559 = vld [vmem:[%s7 + $0x50] sm:$0xff]
      %v560 = vld [vmem:[%s7 + $0x58] sm:$0xff]
      %v561 = vld [vmem:[%s7 + $0x60] sm:$0xff]
      %v562 = vld [vmem:[%s7 + $0x68] sm:$0xff]
      %v563 = vld [vmem:[%s7 + $0x70] sm:$0xff]
      %v564 = vld [vmem:[%s7 + $0x78] sm:$0xff]
      %v565 = vld [vmem:[%s8] sm:$0x3]
      %v567 = vlaneseq
      %v568 = vshrl.u32 %v567, 7
      %v569 = vsub.s32 0, %v568
      %v570 = vrot.slane %v565, %v569
      %v571 = vlaneseq
      %v572 = vshrl.u32 %v571, 7
      %v573 = vsub.s32 1, %v572
      %v574 = vrot.slane %v565, %v573
      %v579 = vunpack.c.l.b16 %v392
      %v580 = vunpack.c.l.b16 %v393
      %v581 = vpack.c.b16 %v580, %v579
      %v599 = vunpack.c.l.b16 %v549
      %v600 = vunpack.c.h.b16 %v549
      %v601 = vunpack.c.l.b16 %v550
      %v602 = vunpack.c.h.b16 %v550
      %v603 = vunpack.c.l.b16 %v551
      %v604 = vunpack.c.h.b16 %v551
      %v605 = vunpack.c.l.b16 %v552
      %v606 = vunpack.c.h.b16 %v552
      %v607 = vunpack.c.l.b16 %v553
      %v608 = vunpack.c.h.b16 %v553
      %v609 = vunpack.c.l.b16 %v554
      %v610 = vunpack.c.h.b16 %v554
      %v611 = vunpack.c.l.b16 %v555
      %v612 = vunpack.c.h.b16 %v555
      %v613 = vunpack.c.l.b16 %v556
      %v614 = vunpack.c.h.b16 %v556
      %v615 = vunpack.c.l.b16 %v557
      %v616 = vunpack.c.h.b16 %v557
      %v617 = vunpack.c.l.b16 %v558
      %v618 = vunpack.c.h.b16 %v558
      %v619 = vunpack.c.l.b16 %v559
      %v620 = vunpack.c.h.b16 %v559
      %v621 = vunpack.c.l.b16 %v560
      %v622 = vunpack.c.h.b16 %v560
      %v623 = vunpack.c.l.b16 %v561
      %v624 = vunpack.c.h.b16 %v561
      %v625 = vunpack.c.l.b16 %v562
      %v626 = vunpack.c.h.b16 %v562
      %v627 = vunpack.c.l.b16 %v563
      %v628 = vunpack.c.h.b16 %v563
      %v629 = vunpack.c.l.b16 %v564
      %v630 = vunpack.c.h.b16 %v564
      %v631 = vpack.c.b16 %v601, %v599
      %v632 = vpack.c.b16 %v602, %v600
      %v633 = vpack.c.b16 %v605, %v603
      %v634 = vpack.c.b16 %v606, %v604
      %v635 = vpack.c.b16 %v609, %v607
      %v636 = vpack.c.b16 %v610, %v608
      %v637 = vpack.c.b16 %v613, %v611
      %v638 = vpack.c.b16 %v614, %v612
      %v639 = vpack.c.b16 %v617, %v615
      %v640 = vpack.c.b16 %v618, %v616
      %v641 = vpack.c.b16 %v621, %v619
      %v642 = vpack.c.b16 %v622, %v620
      %v643 = vpack.c.b16 %v625, %v623
      %v644 = vpack.c.b16 %v626, %v624
      %v645 = vpack.c.b16 %v629, %v627
      %v646 = vpack.c.b16 %v630, %v628
      %663 = vmatprep.subr.bf16.mxu0 %v632
      %664 = vmatpush1.bf16.msra.mxu0 %v631
      %665 = vmatprep.subr.bf16.mxu0 %v634
      %666 = vmatpush1.bf16.msra.mxu0 %v633
      %667 = vmatprep.subr.bf16.mxu0 %v636
      %668 = vmatpush1.bf16.msra.mxu0 %v635
      %669 = vmatprep.subr.bf16.mxu0 %v638
      %670 = vmatpush1.bf16.msra.mxu0 %v637
      %671 = vmatprep.subr.bf16.mxu0 %v640
      %672 = vmatpush1.bf16.msra.mxu0 %v639
      %673 = vmatprep.subr.bf16.mxu0 %v642
      %674 = vmatpush1.bf16.msra.mxu0 %v641
      %675 = vmatprep.subr.bf16.mxu0 %v644
      %676 = vmatpush1.bf16.msra.mxu0 %v643
      %677 = vmatprep.subr.bf16.mxu0 %v646
      %678 = vmatpush1.bf16.msra.mxu0 %v645
      %679 = vmatprep.subr.bf16.mxu0 0
      %680 = vmatpush1.bf16.msra.mxu0 0
      %681 = vmatprep.subr.bf16.mxu0 0
      %682 = vmatpush1.bf16.msra.mxu0 0
      %683 = vmatprep.subr.bf16.mxu0 0
      %684 = vmatpush1.bf16.msra.mxu0 0
      %685 = vmatprep.subr.bf16.mxu0 0
      %686 = vmatpush1.bf16.msra.mxu0 0
      %687 = vmatprep.subr.bf16.mxu0 0
      %688 = vmatpush1.bf16.msra.mxu0 0
      %689 = vmatprep.subr.bf16.mxu0 0
      %690 = vmatpush1.bf16.msra.mxu0 0
      %691 = vmatprep.subr.bf16.mxu0 0
      %692 = vmatpush1.bf16.msra.mxu0 0
      %693 = vmatprep.subr.bf16.mxu0 0
      %694 = vmatpush1.bf16.msra.mxu0 0
      %695 = vmatprep.mubr.bf16.mxu0 0
      %696 = vmatmul.mubr.bf16.gmra.mrb[0].mxu0 %v581
      %v697 = vpop.f32.mrb[0].mxu0
      %v698 = vadd.f32 %v570, %v697
      %v699 = vpop.f32.mrb[0].mxu0
      %v700 = vadd.f32 %v574, %v699
      %v701 = vpop.f32.mrb[0].mxu0
      %v702 = vadd.f32 %v570, %v701
      %v703 = vpop.f32.mrb[0].mxu0
      %v704 = vadd.f32 %v574, %v703
      %705 = vdwg.mxu0
      %v706 = vpack.c.bf16 %v702, %v698
      %v707 = vpack.c.bf16 %v704, %v700
      %v708 = vlaneseq
      %v709 = vand.u32 %v708, 127
      %s710 = sld [smem:[#allocation3 + %s28]]
      %v711 = vstv %s710
      %vm712 = vcmp.ge.s32.totalorder %v709, %v711
      %v713 = vsel %vm712, -1e+30, 0.0
      %v714 = vld [vmem:[%s9] sm:$0xf]
      %v715 = vld [vmem:[%s9 + $0x4] sm:$0xf]
      %v716 = vld [vmem:[%s9 + $0x8] sm:$0xf]
      %v717 = vld [vmem:[%s9 + $0xc] sm:$0xf]
      %v718 = vld [vmem:[%s9 + $0x10] sm:$0xf]
      %v719 = vld [vmem:[%s9 + $0x14] sm:$0xf]
      %v720 = vld [vmem:[%s9 + $0x18] sm:$0xf]
      %v721 = vld [vmem:[%s9 + $0x1c] sm:$0xf]
      %v722 = vld [vmem:[%s9 + $0x20] sm:$0xf]
      %v723 = vld [vmem:[%s9 + $0x24] sm:$0xf]
      %v724 = vld [vmem:[%s9 + $0x28] sm:$0xf]
      %v725 = vld [vmem:[%s9 + $0x2c] sm:$0xf]
      %v726 = vld [vmem:[%s9 + $0x30] sm:$0xf]
      %v727 = vld [vmem:[%s9 + $0x34] sm:$0xf]
      %v728 = vld [vmem:[%s9 + $0x38] sm:$0xf]
      %v729 = vld [vmem:[%s9 + $0x3c] sm:$0xf]
      %vm730 = vcmask 261120
      %v732 = vsel %vm730, %v548, 0
      %v735 = vsel %vm730, %v706, 0
      %737 = vmatprep.subr.bf16.mxu0 0
      %738 = vmatpush1.bf16.xpose.msra.mxu0 %v735
      %739 = vmatprep.subr.bf16.mxu0 0
      %740 = vmatpush1.bf16.xpose.msra.mxu0 0
      %741 = vmatprep.subr.bf16.mxu0 0
      %742 = vmatpush1.bf16.xpose.msra.mxu0 0
      %743 = vmatprep.subr.bf16.mxu0 0
      %744 = vmatpush1.bf16.xpose.msra.mxu0 0
      %745 = vmatprep.subr.bf16.mxu0 0
      %746 = vmatpush1.bf16.xpose.msra.mxu0 0
      %747 = vmatprep.subr.bf16.mxu0 0
      %748 = vmatpush1.bf16.xpose.msra.mxu0 0
      %749 = vmatprep.subr.bf16.mxu0 0
      %750 = vmatpush1.bf16.xpose.msra.mxu0 0
      %751 = vmatprep.subr.bf16.mxu0 0
      %752 = vmatpush1.bf16.xpose.msra.mxu0 0
      %753 = vmatprep.subr.bf16.mxu0 0
      %754 = vmatpush1.bf16.xpose.msra.mxu0 0
      %755 = vmatprep.subr.bf16.mxu0 0
      %756 = vmatpush1.bf16.xpose.msra.mxu0 0
      %757 = vmatprep.subr.bf16.mxu0 0
      %758 = vmatpush1.bf16.xpose.msra.mxu0 0
      %759 = vmatprep.subr.bf16.mxu0 0
      %760 = vmatpush1.bf16.xpose.msra.mxu0 0
      %761 = vmatprep.subr.bf16.mxu0 0
      %762 = vmatpush1.bf16.xpose.msra.mxu0 0
      %763 = vmatprep.subr.bf16.mxu0 0
      %764 = vmatpush1.bf16.xpose.msra.mxu0 0
      %765 = vmatprep.subr.bf16.mxu0 0
      %766 = vmatpush1.bf16.xpose.msra.mxu0 0
      %767 = vmatprep.subr.bf16.mxu0 0
      %768 = vmatpush1.bf16.xpose.msra.mxu0 0
      %769 = vmatprep.mubr.bf16.mxu0 0
      %770 = vmatmul.mubr.bf16.gmra.mrb[0].mxu0 %v732
      %v771 = vpop.f32.mrb[0].mxu0
      %v772 = vadd.f32 0.0, %v771
      %v773 = vpop.f32.mrb[0].mxu0
      %v774 = vpop.f32.mrb[0].mxu0
      %v775 = vadd.f32 0.0, %v774
      %v776 = vpop.f32.mrb[0].mxu0
      %777 = vdwg.mxu0
      %v778 = vmul.f32 %v772, 0.17677669
      %v779 = vmul.f32 %v775, 0.17677669
      %v780 = vadd.f32 %v778, %v713
      %v781 = vadd.f32 %v779, %v713
      %vm782 = vcmask 130048
      %v783 = vsel %vm782, %v780, -inf
      %784 = vmax.xlane.f32.xlu0 %v783
      %v785 = vpop.xlane.xlu0 %784
      %v786 = vsel %vm782, %v781, -inf
      %787 = vmax.xlane.f32.xlu0 %v786
      %v788 = vpop.xlane.xlu0 %787
      %v789 = vsub.f32 %v780, %v785
      %v790 = vsub.f32 %v781, %v788
      %v791 = vmul.f32 %v789, 1.442695
      %v792 = vpow.pop %v791
      %v793 = vmul.f32 %v790, 1.442695
      %v794 = vpow.pop %v793
      %v795 = vsel %vm782, %v792, 0.0
      %796 = vadd.xlane.f32.xlu0 %v795
      %v797 = vpop.xlane.xlu0 %796
      %v798 = vsel %vm782, %v794, 0.0
      %799 = vadd.xlane.f32.xlu0 %v798
      %v800 = vpop.xlane.xlu0 %799
      %v801 = vrcp.pop %v797
      %v802 = vmul.f32 %v792, %v801
      %v803 = vrcp.pop %v800
      %v804 = vmul.f32 %v794, %v803
      %v805 = vpack.c.bf16 %v804, %v802
      %v807 = vsel %vm782, %v805, 0
      %809 = vmatprep.subr.bf16.mxu0 0
      %810 = vmatpush1.bf16.msra.mxu0 %v707
      %811 = vmatprep.subr.bf16.mxu0 0
      %812 = vmatpush1.bf16.msra.mxu0 0
      %813 = vmatprep.subr.bf16.mxu0 0
      %814 = vmatpush1.bf16.msra.mxu0 0
      %815 = vmatprep.subr.bf16.mxu0 0
      %816 = vmatpush1.bf16.msra.mxu0 0
      %817 = vmatprep.subr.bf16.mxu0 0
      %818 = vmatpush1.bf16.msra.mxu0 0
      %819 = vmatprep.subr.bf16.mxu0 0
      %820 = vmatpush1.bf16.msra.mxu0 0
      %821 = vmatprep.subr.bf16.mxu0 0
      %822 = vmatpush1.bf16.msra.mxu0 0
      %823 = vmatprep.subr.bf16.mxu0 0
      %824 = vmatpush1.bf16.msra.mxu0 0
      %825 = vmatprep.subr.bf16.mxu0 0
      %826 = vmatpush1.bf16.msra.mxu0 0
      %827 = vmatprep.subr.bf16.mxu0 0
      %828 = vmatpush1.bf16.msra.mxu0 0
      %829 = vmatprep.subr.bf16.mxu0 0
      %830 = vmatpush1.bf16.msra.mxu0 0
      %831 = vmatprep.subr.bf16.mxu0 0
      %832 = vmatpush1.bf16.msra.mxu0 0
      %833 = vmatprep.subr.bf16.mxu0 0
      %834 = vmatpush1.bf16.msra.mxu0 0
      %835 = vmatprep.subr.bf16.mxu0 0
      %836 = vmatpush1.bf16.msra.mxu0 0
      %837 = vmatprep.subr.bf16.mxu0 0
      %838 = vmatpush1.bf16.msra.mxu0 0
      %839 = vmatprep.subr.bf16.mxu0 0
      %840 = vmatpush1.bf16.msra.mxu0 0
      %841 = vmatprep.mubr.bf16.mxu0 0
      %842 = vmatmul.mubr.bf16.gmra.mrb[0].mxu0 %v807
      %v843 = vpop.f32.mrb[0].mxu0
      %v844 = vadd.f32 0.0, %v843
      %v845 = vpop.f32.mrb[0].mxu0
      %v846 = vpop.f32.mrb[0].mxu0
      %v847 = vadd.f32 0.0, %v846
      %v848 = vpop.f32.mrb[0].mxu0
      %849 = vdwg.mxu0
      %v850 = vpack.c.bf16 %v847, %v844
      %852 = vrot.lane.b32.xlu0 %v548, 96
      %v853 = vpop.permute.xlu0 %852
      %855 = vrot.lane.b32.xlu0 %v706, 96
      %v856 = vpop.permute.xlu0 %855
      %v858 = vsel %vm730, %v853, 0
      %v861 = vsel %vm730, %v856, 0
      %863 = vmatprep.subr.bf16.mxu0 0
      %864 = vmatpush1.bf16.xpose.msra.mxu0 %v861
      %865 = vmatprep.subr.bf16.mxu0 0
      %866 = vmatpush1.bf16.xpose.msra.mxu0 0
      %867 = vmatprep.subr.bf16.mxu0 0
      %868 = vmatpush1.bf16.xpose.msra.mxu0 0
      %869 = vmatprep.subr.bf16.mxu0 0
      %870 = vmatpush1.bf16.xpose.msra.mxu0 0
      %871 = vmatprep.subr.bf16.mxu0 0
      %872 = vmatpush1.bf16.xpose.msra.mxu0 0
      %873 = vmatprep.subr.bf16.mxu0 0
      %874 = vmatpush1.bf16.xpose.msra.mxu0 0
      %875 = vmatprep.subr.bf16.mxu0 0
      %876 = vmatpush1.bf16.xpose.msra.mxu0 0
      %877 = vmatprep.subr.bf16.mxu0 0
      %878 = vmatpush1.bf16.xpose.msra.mxu0 0
      %879 = vmatprep.subr.bf16.mxu0 0
      %880 = vmatpush1.bf16.xpose.msra.mxu0 0
      %881 = vmatprep.subr.bf16.mxu0 0
      %882 = vmatpush1.bf16.xpose.msra.mxu0 0
      %883 = vmatprep.subr.bf16.mxu0 0
      %884 = vmatpush1.bf16.xpose.msra.mxu0 0
      %885 = vmatprep.subr.bf16.mxu0 0
      %886 = vmatpush1.bf16.xpose.msra.mxu0 0
      %887 = vmatprep.subr.bf16.mxu0 0
      %888 = vmatpush1.bf16.xpose.msra.mxu0 0
      %889 = vmatprep.subr.bf16.mxu0 0
      %890 = vmatpush1.bf16.xpose.msra.mxu0 0
      %891 = vmatprep.subr.bf16.mxu0 0
      %892 = vmatpush1.bf16.xpose.msra.mxu0 0
      %893 = vmatprep.subr.bf16.mxu0 0
      %894 = vmatpush1.bf16.xpose.msra.mxu0 0
      %895 = vmatprep.mubr.bf16.mxu0 0
      %896 = vmatmul.mubr.bf16.gmra.mrb[0].mxu0 %v858
      %v897 = vpop.f32.mrb[0].mxu0
      %v898 = vadd.f32 0.0, %v897
      %v899 = vpop.f32.mrb[0].mxu0
      %v900 = vpop.f32.mrb[0].mxu0
      %v901 = vadd.f32 0.0, %v900
      %v902 = vpop.f32.mrb[0].mxu0
      %903 = vdwg.mxu0
      %v904 = vmul.f32 %v898, 0.17677669
      %v905 = vmul.f32 %v901, 0.17677669
      %v906 = vadd.f32 %v904, %v713
      %v907 = vadd.f32 %v905, %v713
      %v908 = vsel %vm782, %v906, -inf
      %909 = vmax.xlane.f32.xlu0 %v908
      %v910 = vpop.xlane.xlu0 %909
      %v911 = vsel %vm782, %v907, -inf
      %912 = vmax.xlane.f32.xlu0 %v911
      %v913 = vpop.xlane.xlu0 %912
      %v914 = vsub.f32 %v906, %v910
      %v915 = vsub.f32 %v907, %v913
      %v916 = vmul.f32 %v914, 1.442695
      %v917 = vpow.pop %v916
      %v918 = vmul.f32 %v915, 1.442695
      %v919 = vpow.pop %v918
      %v920 = vsel %vm782, %v917, 0.0
      %921 = vadd.xlane.f32.xlu0 %v920
      %v922 = vpop.xlane.xlu0 %921
      %v923 = vsel %vm782, %v919, 0.0
      %924 = vadd.xlane.f32.xlu0 %v923
      %v925 = vpop.xlane.xlu0 %924
      %v926 = vrcp.pop %v922
      %v927 = vmul.f32 %v917, %v926
      %v928 = vrcp.pop %v925
      %v929 = vmul.f32 %v919, %v928
      %v930 = vpack.c.bf16 %v929, %v927
      %932 = vrot.lane.b32.xlu0 %v707, 96
      %v933 = vpop.permute.xlu0 %932
      %v936 = vsel %vm782, %v930, 0
      %938 = vmatprep.subr.bf16.mxu0 0
      %939 = vmatpush1.bf16.msra.mxu0 %v933
      %940 = vmatprep.subr.bf16.mxu0 0
      %941 = vmatpush1.bf16.msra.mxu0 0
      %942 = vmatprep.subr.bf16.mxu0 0
      %943 = vmatpush1.bf16.msra.mxu0 0
      %944 = vmatprep.subr.bf16.mxu0 0
      %945 = vmatpush1.bf16.msra.mxu0 0
      %946 = vmatprep.subr.bf16.mxu0 0
      %947 = vmatpush1.bf16.msra.mxu0 0
      %948 = vmatprep.subr.bf16.mxu0 0
      %949 = vmatpush1.bf16.msra.mxu0 0
      %950 = vmatprep.subr.bf16.mxu0 0
      %951 = vmatpush1.bf16.msra.mxu0 0
      %952 = vmatprep.subr.bf16.mxu0 0
      %953 = vmatpush1.bf16.msra.mxu0 0
      %954 = vmatprep.subr.bf16.mxu0 0
      %955 = vmatpush1.bf16.msra.mxu0 0
      %956 = vmatprep.subr.bf16.mxu0 0
      %957 = vmatpush1.bf16.msra.mxu0 0
      %958 = vmatprep.subr.bf16.mxu0 0
      %959 = vmatpush1.bf16.msra.mxu0 0
      %960 = vmatprep.subr.bf16.mxu0 0
      %961 = vmatpush1.bf16.msra.mxu0 0
      %962 = vmatprep.subr.bf16.mxu0 0
      %963 = vmatpush1.bf16.msra.mxu0 0
      %964 = vmatprep.subr.bf16.mxu0 0
      %965 = vmatpush1.bf16.msra.mxu0 0
      %966 = vmatprep.subr.bf16.mxu0 0
      %967 = vmatpush1.bf16.msra.mxu0 0
      %968 = vmatprep.subr.bf16.mxu0 0
      %969 = vmatpush1.bf16.msra.mxu0 0
      %970 = vmatprep.mubr.bf16.mxu0 0
      %971 = vmatmul.mubr.bf16.gmra.mrb[0].mxu0 %v936
      %v972 = vpop.f32.mrb[0].mxu0
      %v973 = vadd.f32 0.0, %v972
      %v974 = vpop.f32.mrb[0].mxu0
      %v975 = vpop.f32.mrb[0].mxu0
      %v976 = vadd.f32 0.0, %v975
      %v977 = vpop.f32.mrb[0].mxu0
      %978 = vdwg.mxu0
      %v979 = vpack.c.bf16 %v976, %v973
      %v984 = vunpack.c.l.b16 %v718
      %v985 = vunpack.c.l.b16 %v719
      %v986 = vunpack.c.l.b16 %v720
      %v987 = vunpack.c.l.b16 %v721
      %v988 = vpack.c.b16 %v985, %v984
      %v989 = vpack.c.b16 %v987, %v986
      %v993 = vsel %vm730, %v979, 0
      %995 = vmatprep.subr.bf16.mxu0 0
      %996 = vmatpush1.bf16.msra.mxu0 %v988
      %997 = vmatprep.subr.bf16.mxu0 0
      %998 = vmatpush1.bf16.msra.mxu0 %v989
      %999 = vmatprep.subr.bf16.mxu0 0
      %1000 = vmatpush1.bf16.msra.mxu0 0
      %1001 = vmatprep.subr.bf16.mxu0 0
      %1002 = vmatpush1.bf16.msra.mxu0 0
      %1003 = vmatprep.subr.bf16.mxu0 0
      %1004 = vmatpush1.bf16.msra.mxu0 0
      %1005 = vmatprep.subr.bf16.mxu0 0
      %1006 = vmatpush1.bf16.msra.mxu0 0
      %1007 = vmatprep.subr.bf16.mxu0 0
      %1008 = vmatpush1.bf16.msra.mxu0 0
      %1009 = vmatprep.subr.bf16.mxu0 0
      %1010 = vmatpush1.bf16.msra.mxu0 0
      %1011 = vmatprep.subr.bf16.mxu0 0
      %1012 = vmatpush1.bf16.msra.mxu0 0
      %1013 = vmatprep.subr.bf16.mxu0 0
      %1014 = vmatpush1.bf16.msra.mxu0 0
      %1015 = vmatprep.subr.bf16.mxu0 0
      %1016 = vmatpush1.bf16.msra.mxu0 0
      %1017 = vmatprep.subr.bf16.mxu0 0
      %1018 = vmatpush1.bf16.msra.mxu0 0
      %1019 = vmatprep.subr.bf16.mxu0 0
      %1020 = vmatpush1.bf16.msra.mxu0 0
      %1021 = vmatprep.subr.bf16.mxu0 0
      %1022 = vmatpush1.bf16.msra.mxu0 0
      %1023 = vmatprep.subr.bf16.mxu0 0
      %1024 = vmatpush1.bf16.msra.mxu0 0
      %1025 = vmatprep.subr.bf16.mxu0 0
      %1026 = vmatpush1.bf16.msra.mxu0 0
      %1027 = vmatprep.mubr.bf16.mxu0 0
      %1028 = vmatmul.mubr.bf16.gmra.mrb[0].mxu0 %v993
      %v1029 = vpop.f32.mrb[0].mxu0
      %v1030 = vadd.f32 0.0, %v1029
      %v1031 = vpop.f32.mrb[0].mxu0
      %v1032 = vpop.f32.mrb[0].mxu0
      %v1033 = vadd.f32 0.0, %v1032
      %v1034 = vpop.f32.mrb[0].mxu0
      %1035 = vdwg.mxu0
      %v1040 = vunpack.c.l.b16 %v714
      %v1041 = vunpack.c.l.b16 %v715
      %v1042 = vunpack.c.l.b16 %v716
      %v1043 = vunpack.c.l.b16 %v717
      %v1044 = vpack.c.b16 %v1041, %v1040
      %v1045 = vpack.c.b16 %v1043, %v1042
      %v1049 = vsel %vm730, %v850, 0
      %1051 = vmatprep.subr.bf16.mxu0 0
      %1052 = vmatpush1.bf16.msra.mxu0 %v1044
      %1053 = vmatprep.subr.bf16.mxu0 0
      %1054 = vmatpush1.bf16.msra.mxu0 %v1045
      %1055 = vmatprep.subr.bf16.mxu0 0
      %1056 = vmatpush1.bf16.msra.mxu0 0
      %1057 = vmatprep.subr.bf16.mxu0 0
      %1058 = vmatpush1.bf16.msra.mxu0 0
      %1059 = vmatprep.subr.bf16.mxu0 0
      %1060 = vmatpush1.bf16.msra.mxu0 0
      %1061 = vmatprep.subr.bf16.mxu0 0
      %1062 = vmatpush1.bf16.msra.mxu0 0
      %1063 = vmatprep.subr.bf16.mxu0 0
      %1064 = vmatpush1.bf16.msra.mxu0 0
      %1065 = vmatprep.subr.bf16.mxu0 0
      %1066 = vmatpush1.bf16.msra.mxu0 0
      %1067 = vmatprep.subr.bf16.mxu0 0
      %1068 = vmatpush1.bf16.msra.mxu0 0
      %1069 = vmatprep.subr.bf16.mxu0 0
      %1070 = vmatpush1.bf16.msra.mxu0 0
      %1071 = vmatprep.subr.bf16.mxu0 0
      %1072 = vmatpush1.bf16.msra.mxu0 0
      %1073 = vmatprep.subr.bf16.mxu0 0
      %1074 = vmatpush1.bf16.msra.mxu0 0
      %1075 = vmatprep.subr.bf16.mxu0 0
      %1076 = vmatpush1.bf16.msra.mxu0 0
      %1077 = vmatprep.subr.bf16.mxu0 0
      %1078 = vmatpush1.bf16.msra.mxu0 0
      %1079 = vmatprep.subr.bf16.mxu0 0
      %1080 = vmatpush1.bf16.msra.mxu0 0
      %1081 = vmatprep.subr.bf16.mxu0 0
      %1082 = vmatpush1.bf16.msra.mxu0 0
      %1083 = vmatprep.mubr.bf16.mxu0 0
      %1084 = vmatmul.mubr.bf16.gmra.mrb[0].mxu0 %v1049
      %v1085 = vpop.f32.mrb[0].mxu0
      %v1086 = vadd.f32 %v1030, %v1085
      %v1087 = vpop.f32.mrb[0].mxu0
      %v1088 = vpop.f32.mrb[0].mxu0
      %v1089 = vadd.f32 %v1033, %v1088
      %v1090 = vpop.f32.mrb[0].mxu0
      %1091 = vdwg.mxu0
      %1092 = vrot.lane.b32.xlu0 %v548, 64
      %v1093 = vpop.permute.xlu0 %1092
      %1094 = vrot.lane.b32.xlu0 %v706, 64
      %v1095 = vpop.permute.xlu0 %1094
      %v1097 = vsel %vm730, %v1093, 0
      %v1100 = vsel %vm730, %v1095, 0
      %1102 = vmatprep.subr.bf16.mxu0 0
      %1103 = vmatpush1.bf16.xpose.msra.mxu0 %v1100
      %1104 = vmatprep.subr.bf16.mxu0 0
      %1105 = vmatpush1.bf16.xpose.msra.mxu0 0
      %1106 = vmatprep.subr.bf16.mxu0 0
      %1107 = vmatpush1.bf16.xpose.msra.mxu0 0
      %1108 = vmatprep.subr.bf16.mxu0 0
      %1109 = vmatpush1.bf16.xpose.msra.mxu0 0
      %1110 = vmatprep.subr.bf16.mxu0 0
      %1111 = vmatpush1.bf16.xpose.msra.mxu0 0
      %1112 = vmatprep.subr.bf16.mxu0 0
      %1113 = vmatpush1.bf16.xpose.msra.mxu0 0
      %1114 = vmatprep.subr.bf16.mxu0 0
      %1115 = vmatpush1.bf16.xpose.msra.mxu0 0
      %1116 = vmatprep.subr.bf16.mxu0 0
      %1117 = vmatpush1.bf16.xpose.msra.mxu0 0
      %1118 = vmatprep.subr.bf16.mxu0 0
      %1119 = vmatpush1.bf16.xpose.msra.mxu0 0
      %1120 = vmatprep.subr.bf16.mxu0 0
      %1121 = vmatpush1.bf16.xpose.msra.mxu0 0
      %1122 = vmatprep.subr.bf16.mxu0 0
      %1123 = vmatpush1.bf16.xpose.msra.mxu0 0
      %1124 = vmatprep.subr.bf16.mxu0 0
      %1125 = vmatpush1.bf16.xpose.msra.mxu0 0
      %1126 = vmatprep.subr.bf16.mxu0 0
      %1127 = vmatpush1.bf16.xpose.msra.mxu0 0
      %1128 = vmatprep.subr.bf16.mxu0 0
      %1129 = vmatpush1.bf16.xpose.msra.mxu0 0
      %1130 = vmatprep.subr.bf16.mxu0 0
      %1131 = vmatpush1.bf16.xpose.msra.mxu0 0
      %1132 = vmatprep.subr.bf16.mxu0 0
      %1133 = vmatpush1.bf16.xpose.msra.mxu0 0
      %1134 = vmatprep.mubr.bf16.mxu0 0
      %1135 = vmatmul.mubr.bf16.gmra.mrb[0].mxu0 %v1097
      %v1136 = vpop.f32.mrb[0].mxu0
      %v1137 = vadd.f32 0.0, %v1136
      %v1138 = vpop.f32.mrb[0].mxu0
      %v1139 = vpop.f32.mrb[0].mxu0
      %v1140 = vadd.f32 0.0, %v1139
      %v1141 = vpop.f32.mrb[0].mxu0
      %1142 = vdwg.mxu0
      %v1143 = vmul.f32 %v1137, 0.17677669
      %v1144 = vmul.f32 %v1140, 0.17677669
      %v1145 = vadd.f32 %v1143, %v713
      %v1146 = vadd.f32 %v1144, %v713
      %v1147 = vsel %vm782, %v1145, -inf
      %1148 = vmax.xlane.f32.xlu0 %v1147
      %v1149 = vpop.xlane.xlu0 %1148
      %v1150 = vsel %vm782, %v1146, -inf
      %1151 = vmax.xlane.f32.xlu0 %v1150
      %v1152 = vpop.xlane.xlu0 %1151
      %v1153 = vsub.f32 %v1145, %v1149
      %v1154 = vsub.f32 %v1146, %v1152
      %v1155 = vmul.f32 %v1153, 1.442695
      %v1156 = vpow.pop %v1155
      %v1157 = vmul.f32 %v1154, 1.442695
      %v1158 = vpow.pop %v1157
      %v1159 = vsel %vm782, %v1156, 0.0
      %1160 = vadd.xlane.f32.xlu0 %v1159
      %v1161 = vpop.xlane.xlu0 %1160
      %v1162 = vsel %vm782, %v1158, 0.0
      %1163 = vadd.xlane.f32.xlu0 %v1162
      %v1164 = vpop.xlane.xlu0 %1163
      %v1165 = vrcp.pop %v1161
      %v1166 = vmul.f32 %v1156, %v1165
      %v1167 = vrcp.pop %v1164
      %v1168 = vmul.f32 %v1158, %v1167
      %v1169 = vpack.c.bf16 %v1168, %v1166
      %1170 = vrot.lane.b32.xlu0 %v707, 64
      %v1171 = vpop.permute.xlu0 %1170
      %v1174 = vsel %vm782, %v1169, 0
      %1176 = vmatprep.subr.bf16.mxu0 0
      %1177 = vmatpush1.bf16.msra.mxu0 %v1171
      %1178 = vmatprep.subr.bf16.mxu0 0
      %1179 = vmatpush1.bf16.msra.mxu0 0
      %1180 = vmatprep.subr.bf16.mxu0 0
      %1181 = vmatpush1.bf16.msra.mxu0 0
      %1182 = vmatprep.subr.bf16.mxu0 0
      %1183 = vmatpush1.bf16.msra.mxu0 0
      %1184 = vmatprep.subr.bf16.mxu0 0
      %1185 = vmatpush1.bf16.msra.mxu0 0
      %1186 = vmatprep.subr.bf16.mxu0 0
      %1187 = vmatpush1.bf16.msra.mxu0 0
      %1188 = vmatprep.subr.bf16.mxu0 0
      %1189 = vmatpush1.bf16.msra.mxu0 0
      %1190 = vmatprep.subr.bf16.mxu0 0
      %1191 = vmatpush1.bf16.msra.mxu0 0
      %1192 = vmatprep.subr.bf16.mxu0 0
      %1193 = vmatpush1.bf16.msra.mxu0 0
      %1194 = vmatprep.subr.bf16.mxu0 0
      %1195 = vmatpush1.bf16.msra.mxu0 0
      %1196 = vmatprep.subr.bf16.mxu0 0
      %1197 = vmatpush1.bf16.msra.mxu0 0
      %1198 = vmatprep.subr.bf16.mxu0 0
      %1199 = vmatpush1.bf16.msra.mxu0 0
      %1200 = vmatprep.subr.bf16.mxu0 0
      %1201 = vmatpush1.bf16.msra.mxu0 0
      %1202 = vmatprep.subr.bf16.mxu0 0
      %1203 = vmatpush1.bf16.msra.mxu0 0
      %1204 = vmatprep.subr.bf16.mxu0 0
      %1205 = vmatpush1.bf16.msra.mxu0 0
      %1206 = vmatprep.subr.bf16.mxu0 0
      %1207 = vmatpush1.bf16.msra.mxu0 0
      %1208 = vmatprep.mubr.bf16.mxu0 0
      %1209 = vmatmul.mubr.bf16.gmra.mrb[0].mxu0 %v1174
      %v1210 = vpop.f32.mrb[0].mxu0
      %v1211 = vadd.f32 0.0, %v1210
      %v1212 = vpop.f32.mrb[0].mxu0
      %v1213 = vpop.f32.mrb[0].mxu0
      %v1214 = vadd.f32 0.0, %v1213
      %v1215 = vpop.f32.mrb[0].mxu0
      %1216 = vdwg.mxu0
      %v1217 = vpack.c.bf16 %v1214, %v1211
      %v1222 = vunpack.c.l.b16 %v722
      %v1223 = vunpack.c.l.b16 %v723
      %v1224 = vunpack.c.l.b16 %v724
      %v1225 = vunpack.c.l.b16 %v725
      %v1226 = vpack.c.b16 %v1223, %v1222
      %v1227 = vpack.c.b16 %v1225, %v1224
      %v1231 = vsel %vm730, %v1217, 0
      %1233 = vmatprep.subr.bf16.mxu0 0
      %1234 = vmatpush1.bf16.msra.mxu0 %v1226
      %1235 = vmatprep.subr.bf16.mxu0 0
      %1236 = vmatpush1.bf16.msra.mxu0 %v1227
      %1237 = vmatprep.subr.bf16.mxu0 0
      %1238 = vmatpush1.bf16.msra.mxu0 0
      %1239 = vmatprep.subr.bf16.mxu0 0
      %1240 = vmatpush1.bf16.msra.mxu0 0
      %1241 = vmatprep.subr.bf16.mxu0 0
      %1242 = vmatpush1.bf16.msra.mxu0 0
      %1243 = vmatprep.subr.bf16.mxu0 0
      %1244 = vmatpush1.bf16.msra.mxu0 0
      %1245 = vmatprep.subr.bf16.mxu0 0
      %1246 = vmatpush1.bf16.msra.mxu0 0
      %1247 = vmatprep.subr.bf16.mxu0 0
      %1248 = vmatpush1.bf16.msra.mxu0 0
      %1249 = vmatprep.subr.bf16.mxu0 0
      %1250 = vmatpush1.bf16.msra.mxu0 0
      %1251 = vmatprep.subr.bf16.mxu0 0
      %1252 = vmatpush1.bf16.msra.mxu0 0
      %1253 = vmatprep.subr.bf16.mxu0 0
      %1254 = vmatpush1.bf16.msra.mxu0 0
      %1255 = vmatprep.subr.bf16.mxu0 0
      %1256 = vmatpush1.bf16.msra.mxu0 0
      %1257 = vmatprep.subr.bf16.mxu0 0
      %1258 = vmatpush1.bf16.msra.mxu0 0
      %1259 = vmatprep.subr.bf16.mxu0 0
      %1260 = vmatpush1.bf16.msra.mxu0 0
      %1261 = vmatprep.subr.bf16.mxu0 0
      %1262 = vmatpush1.bf16.msra.mxu0 0
      %1263 = vmatprep.subr.bf16.mxu0 0
      %1264 = vmatpush1.bf16.msra.mxu0 0
      %1265 = vmatprep.mubr.bf16.mxu0 0
      %1266 = vmatmul.mubr.bf16.gmra.mrb[0].mxu0 %v1231
      %v1267 = vpop.f32.mrb[0].mxu0
      %v1268 = vadd.f32 0.0, %v1267
      %v1269 = vpop.f32.mrb[0].mxu0
      %v1270 = vpop.f32.mrb[0].mxu0
      %v1271 = vadd.f32 0.0, %v1270
      %v1272 = vpop.f32.mrb[0].mxu0
      %1273 = vdwg.mxu0
      %v1274 = vadd.f32 %v1086, %v1268
      %v1275 = vadd.f32 %v1089, %v1271
      %1276 = vrot.lane.b32.xlu0 %v548, 32
      %v1277 = vpop.permute.xlu0 %1276
      %1278 = vrot.lane.b32.xlu0 %v706, 32
      %v1279 = vpop.permute.xlu0 %1278
      %v1281 = vsel %vm730, %v1277, 0
      %v1284 = vsel %vm730, %v1279, 0
      %1286 = vmatprep.subr.bf16.mxu0 0
      %1287 = vmatpush1.bf16.xpose.msra.mxu0 %v1284
      %1288 = vmatprep.subr.bf16.mxu0 0
      %1289 = vmatpush1.bf16.xpose.msra.mxu0 0
      %1290 = vmatprep.subr.bf16.mxu0 0
      %1291 = vmatpush1.bf16.xpose.msra.mxu0 0
      %1292 = vmatprep.subr.bf16.mxu0 0
      %1293 = vmatpush1.bf16.xpose.msra.mxu0 0
      %1294 = vmatprep.subr.bf16.mxu0 0
      %1295 = vmatpush1.bf16.xpose.msra.mxu0 0
      %1296 = vmatprep.subr.bf16.mxu0 0
      %1297 = vmatpush1.bf16.xpose.msra.mxu0 0
      %1298 = vmatprep.subr.bf16.mxu0 0
      %1299 = vmatpush1.bf16.xpose.msra.mxu0 0
      %1300 = vmatprep.subr.bf16.mxu0 0
      %1301 = vmatpush1.bf16.xpose.msra.mxu0 0
      %1302 = vmatprep.subr.bf16.mxu0 0
      %1303 = vmatpush1.bf16.xpose.msra.mxu0 0
      %1304 = vmatprep.subr.bf16.mxu0 0
      %1305 = vmatpush1.bf16.xpose.msra.mxu0 0
      %1306 = vmatprep.subr.bf16.mxu0 0
      %1307 = vmatpush1.bf16.xpose.msra.mxu0 0
      %1308 = vmatprep.subr.bf16.mxu0 0
      %1309 = vmatpush1.bf16.xpose.msra.mxu0 0
      %1310 = vmatprep.subr.bf16.mxu0 0
      %1311 = vmatpush1.bf16.xpose.msra.mxu0 0
      %1312 = vmatprep.subr.bf16.mxu0 0
      %1313 = vmatpush1.bf16.xpose.msra.mxu0 0
      %1314 = vmatprep.subr.bf16.mxu0 0
      %1315 = vmatpush1.bf16.xpose.msra.mxu0 0
      %1316 = vmatprep.subr.bf16.mxu0 0
      %1317 = vmatpush1.bf16.xpose.msra.mxu0 0
      %1318 = vmatprep.mubr.bf16.mxu0 0
      %1319 = vmatmul.mubr.bf16.gmra.mrb[0].mxu0 %v1281
      %v1320 = vpop.f32.mrb[0].mxu0
      %v1321 = vadd.f32 0.0, %v1320
      %v1322 = vpop.f32.mrb[0].mxu0
      %v1323 = vpop.f32.mrb[0].mxu0
      %v1324 = vadd.f32 0.0, %v1323
      %v1325 = vpop.f32.mrb[0].mxu0
      %1326 = vdwg.mxu0
      %v1327 = vmul.f32 %v1321, 0.17677669
      %v1328 = vmul.f32 %v1324, 0.17677669
      %v1329 = vadd.f32 %v1327, %v713
      %v1330 = vadd.f32 %v1328, %v713
      %v1331 = vsel %vm782, %v1329, -inf
      %1332 = vmax.xlane.f32.xlu0 %v1331
      %v1333 = vpop.xlane.xlu0 %1332
      %v1334 = vsel %vm782, %v1330, -inf
      %1335 = vmax.xlane.f32.xlu0 %v1334
      %v1336 = vpop.xlane.xlu0 %1335
      %v1337 = vsub.f32 %v1329, %v1333
      %v1338 = vsub.f32 %v1330, %v1336
      %v1339 = vmul.f32 %v1337, 1.442695
      %v1340 = vpow.pop %v1339
      %v1341 = vmul.f32 %v1338, 1.442695
      %v1342 = vpow.pop %v1341
      %v1343 = vsel %vm782, %v1340, 0.0
      %1344 = vadd.xlane.f32.xlu0 %v1343
      %v1345 = vpop.xlane.xlu0 %1344
      %v1346 = vsel %vm782, %v1342, 0.0
      %1347 = vadd.xlane.f32.xlu0 %v1346
      %v1348 = vpop.xlane.xlu0 %1347
      %v1349 = vrcp.pop %v1345
      %v1350 = vmul.f32 %v1340, %v1349
      %v1351 = vrcp.pop %v1348
      %v1352 = vmul.f32 %v1342, %v1351
      %v1353 = vpack.c.bf16 %v1352, %v1350
      %1354 = vrot.lane.b32.xlu0 %v707, 32
      %v1355 = vpop.permute.xlu0 %1354
      %v1358 = vsel %vm782, %v1353, 0
      %1360 = vmatprep.subr.bf16.mxu0 0
      %1361 = vmatpush1.bf16.msra.mxu0 %v1355
      %1362 = vmatprep.subr.bf16.mxu0 0
      %1363 = vmatpush1.bf16.msra.mxu0 0
      %1364 = vmatprep.subr.bf16.mxu0 0
      %1365 = vmatpush1.bf16.msra.mxu0 0
      %1366 = vmatprep.subr.bf16.mxu0 0
      %1367 = vmatpush1.bf16.msra.mxu0 0
      %1368 = vmatprep.subr.bf16.mxu0 0
      %1369 = vmatpush1.bf16.msra.mxu0 0
      %1370 = vmatprep.subr.bf16.mxu0 0
      %1371 = vmatpush1.bf16.msra.mxu0 0
      %1372 = vmatprep.subr.bf16.mxu0 0
      %1373 = vmatpush1.bf16.msra.mxu0 0
      %1374 = vmatprep.subr.bf16.mxu0 0
      %1375 = vmatpush1.bf16.msra.mxu0 0
      %1376 = vmatprep.subr.bf16.mxu0 0
      %1377 = vmatpush1.bf16.msra.mxu0 0
      %1378 = vmatprep.subr.bf16.mxu0 0
      %1379 = vmatpush1.bf16.msra.mxu0 0
      %1380 = vmatprep.subr.bf16.mxu0 0
      %1381 = vmatpush1.bf16.msra.mxu0 0
      %1382 = vmatprep.subr.bf16.mxu0 0
      %1383 = vmatpush1.bf16.msra.mxu0 0
      %1384 = vmatprep.subr.bf16.mxu0 0
      %1385 = vmatpush1.bf16.msra.mxu0 0
      %1386 = vmatprep.subr.bf16.mxu0 0
      %1387 = vmatpush1.bf16.msra.mxu0 0
      %1388 = vmatprep.subr.bf16.mxu0 0
      %1389 = vmatpush1.bf16.msra.mxu0 0
      %1390 = vmatprep.subr.bf16.mxu0 0
      %1391 = vmatpush1.bf16.msra.mxu0 0
      %1392 = vmatprep.mubr.bf16.mxu0 0
      %1393 = vmatmul.mubr.bf16.gmra.mrb[0].mxu0 %v1358
      %v1394 = vpop.f32.mrb[0].mxu0
      %v1395 = vadd.f32 0.0, %v1394
      %v1396 = vpop.f32.mrb[0].mxu0
      %v1397 = vpop.f32.mrb[0].mxu0
      %v1398 = vadd.f32 0.0, %v1397
      %v1399 = vpop.f32.mrb[0].mxu0
      %1400 = vdwg.mxu0
      %v1401 = vpack.c.bf16 %v1398, %v1395
      %v1406 = vunpack.c.l.b16 %v726
      %v1407 = vunpack.c.l.b16 %v727
      %v1408 = vunpack.c.l.b16 %v728
      %v1409 = vunpack.c.l.b16 %v729
      %v1410 = vpack.c.b16 %v1407, %v1406
      %v1411 = vpack.c.b16 %v1409, %v1408
      %v1415 = vsel %vm730, %v1401, 0
      %1417 = vmatprep.subr.bf16.mxu0 0
      %1418 = vmatpush1.bf16.msra.mxu0 %v1410
      %1419 = vmatprep.subr.bf16.mxu0 0
      %1420 = vmatpush1.bf16.msra.mxu0 %v1411
      %1421 = vmatprep.subr.bf16.mxu0 0
      %1422 = vmatpush1.bf16.msra.mxu0 0
      %1423 = vmatprep.subr.bf16.mxu0 0
      %1424 = vmatpush1.bf16.msra.mxu0 0
      %1425 = vmatprep.subr.bf16.mxu0 0
      %1426 = vmatpush1.bf16.msra.mxu0 0
      %1427 = vmatprep.subr.bf16.mxu0 0
      %1428 = vmatpush1.bf16.msra.mxu0 0
      %1429 = vmatprep.subr.bf16.mxu0 0
      %1430 = vmatpush1.bf16.msra.mxu0 0
      %1431 = vmatprep.subr.bf16.mxu0 0
      %1432 = vmatpush1.bf16.msra.mxu0 0
      %1433 = vmatprep.subr.bf16.mxu0 0
      %1434 = vmatpush1.bf16.msra.mxu0 0
      %1435 = vmatprep.subr.bf16.mxu0 0
      %1436 = vmatpush1.bf16.msra.mxu0 0
      %1437 = vmatprep.subr.bf16.mxu0 0
      %1438 = vmatpush1.bf16.msra.mxu0 0
      %1439 = vmatprep.subr.bf16.mxu0 0
      %1440 = vmatpush1.bf16.msra.mxu0 0
      %1441 = vmatprep.subr.bf16.mxu0 0
      %1442 = vmatpush1.bf16.msra.mxu0 0
      %1443 = vmatprep.subr.bf16.mxu0 0
      %1444 = vmatpush1.bf16.msra.mxu0 0
      %1445 = vmatprep.subr.bf16.mxu0 0
      %1446 = vmatpush1.bf16.msra.mxu0 0
      %1447 = vmatprep.subr.bf16.mxu0 0
      %1448 = vmatpush1.bf16.msra.mxu0 0
      %1449 = vmatprep.mubr.bf16.mxu0 0
      %1450 = vmatmul.mubr.bf16.gmra.mrb[0].mxu0 %v1415
      %v1451 = vpop.f32.mrb[0].mxu0
      %v1452 = vadd.f32 0.0, %v1451
      %v1453 = vpop.f32.mrb[0].mxu0
      %v1454 = vpop.f32.mrb[0].mxu0
      %v1455 = vadd.f32 0.0, %v1454
      %v1456 = vpop.f32.mrb[0].mxu0
      %1457 = vdwg.mxu0
      %v1458 = vadd.f32 %v1274, %v1452
      %v1459 = vadd.f32 %v1275, %v1455
      %v1460 = vadd.f32 %v390, %v1458
      %v1461 = vadd.f32 %v391, %v1459
      %v1462 = vld [vmem:[%s10] sm:$0x1]
      %v1464 = vlaneseq
      %v1465 = vshrl.u32 %v1464, 7
      %v1466 = vsub.s32 0, %v1465
      %v1467 = vrot.slane %v1462, %v1466
      %v1469 = vadd.f32 %v1460, %v1467
      %v1470 = vadd.f32 %v1461, %v1467
      %v1471 = vpack.c.bf16 %v1470, %v1469
      %v1473 = vunpack.c.l.b16 %v1471
      %v1474 = vunpack.c.h.b16 %v1471
      %v1475 = vpack.c.b16 %v1473, %v1473
      %v1476 = vpack.c.b16 %v1474, %v1474
      %1479 = vst [vmem:[%s386] sm:$0xf] %v1475
      %1480 = vst [vmem:[%s386 + $0x4] sm:$0xf] %v1476
      %p1481 = scmp.lt.s32.totalorder %s28, 1
      %s1482 = scalar_select %p1481, %s28, 1
      %s1483 = smul.addr %s1482, 2
      %s1484 = smul.addr %s1483, 4
      %s1485 = scalar_lea.vmem %s11, %s1484
      // Predicated region
      $region61: #{transformer_forward.19} parent=59 // pred_check
        %p1486 = pneg %p266
      $region62: #{transformer_forward.19} parent=59 // pred_check_branch
        %1488 = sbr.rel (%p1486) target = $region64
      $region63: #{transformer_forward.19} parent=59 // pred_region
        _
      $region64: #{transformer_forward.19} parent=59 // pred_fallthru
        _
    $region60: #{transformer_forward.19} parent=5 // pred_fallthru
      _
    %p1489 = scmp.le.s32.totalorder 2, %s23
    // Predicated region
    $region65: #{transformer_forward.19} parent=5 // pred_check
      %p1490 = pneg %p1489
    $region66: #{transformer_forward.19} parent=5 // pred_check_branch
      %1492 = sbr.rel (%p1490) target = $region68
    $region67: #{transformer_forward.19} parent=5 // pred_region
      %s1493 = ssub.s32 %s23, 2
      // Predicated region
      $region69: #{transformer_forward.19} parent=67 // pred_check
        %p1494 = pneg %p272
      $region70: #{transformer_forward.19} parent=67 // pred_check_branch
        %1496 = sbr.rel (%p1494) target = $region72
      $region71: #{transformer_forward.19} parent=67 // pred_region
        %p1497 = scmp.lt.s32.totalorder %s29, 1
        %s1498 = scalar_select %p1497, %s29, 1
        %s1499 = smul.addr %s1498, 2
        %s1500 = smul.addr %s1499, 4
        %s1501 = scalar_lea.vmem %s11, %s1500
      $region72: #{transformer_forward.19} parent=67 // pred_fallthru
        _
    $region68: #{transformer_forward.19} parent=5 // pred_fallthru
      _
  $region6: #{transformer_forward.19} parent=0 // loop_footer
    %s27 = sadd.s32 1, %s23
  $region7: #{transformer_forward.19} parent=0 // loop_footer_branch
    %22 = sbr.rel target = $region3
  $region8: #{transformer_forward.19} parent=0 // loop_exit
    _

// kernel: transformer_forward.25
$region0: #{transformer_forward.25}
  #allocation0 [shape = 'u32[]', space=smem, size = 0x4, offset = 0x4, fixed_abs, tag = 'smem constant byte address 0x4 - core index']
  #allocation1 [shape = 'u32[144,128]{1,0:T(1,128)}', space=vmem, size = 0x12000, scoped, tag = 'internal scratch']
  %s0 = inlined_call_operand.vmem [shape: bf16[32,128], index: 0, kind: input, shape index: {}]
  %s1 = inlined_call_operand.vmem [shape: f32[1,128], index: 1, kind: input, shape index: {}]
  %s2 = inlined_call_operand.vmem [shape: f32[1,128], index: 2, kind: input, shape index: {}]
  %s3 = inlined_call_operand.vmem [shape: bf16[256,128], index: 3, kind: input, shape index: {}]
  %s4 = inlined_call_operand.vmem [shape: f32[32,1], index: 4, kind: input, shape index: {}]
  %s5 = inlined_call_operand.hbm [shape: f32[32,256], index: 5, kind: output, shape index: {}]
  %s6 = sld [smem:[#allocation0]]
  $region53: #{transformer_forward.25} parent=0
    _
  %s8 = ssub.s32 1, %s6
  %s9 = scalar_select 0, %s8, %s6
  $region1: #{transformer_forward.25} parent=0
    #allocation2 [shape = 'u8[16384]{0}', space=vmem, size = 0x4000, scoped, tag = 'output window, operand 0']
    #allocation3 [shape = 's32[2]{0}', space=sflag, size = 0x8, scoped, tag = 'scoped memory for transformer_forward.25']
    %10 = vsyncpa [#allocation3], 0
    %s11 = scalar_lea.sflag [#allocation3], 1
    %12 = vsyncpa %s11, 0
    loop: start=0, step=1, limit=6
    $region2: #{transformer_forward.25} parent=1 // loop_pre_header
      _
    $region3: #{transformer_forward.25} parent=1 // loop_header
      %s14 = sphi 0, %s18
      %p15 = scmp.ge.s32.totalorder %s14, 6
      %s21 = sphi 0, %s33
      %s22 = sphi 0, %s29
      %s23 = sphi 0, %s21
      %s24 = sphi 0, %s22
      %s25 = sphi 0, %s23
      %s26 = sphi 0, %s24
      %s36 = sphi 0, %s38
      %s39 = sphi 0, %s36
      %s40 = sphi 0, %s39
      %s56 = sphi 0, %s40
      %s60 = sphi 0, %s60
      %s62 = sphi 0, %s60
      %s63 = sphi 0, %s62
      %s77 = sphi 0, %s63
      %s81 = sphi 0, %s81
      %s83 = sphi 0, %s81
      %s84 = sphi 0, %s83
      %s98 = sphi 0, %s84
      %s104 = sphi 0, %s106
      %s107 = sphi 0, %s104
      %s108 = sphi 0, %s107
      %s124 = sphi 0, %s108
      %s130 = sphi 0, %s132
      %s133 = sphi 0, %s130
      %s134 = sphi 0, %s133
      %s150 = sphi 0, %s134
      %s158 = sphi 0, %s160
      %s161 = sphi 0, %s158
      %s162 = sphi 0, %s161
      %s178 = sphi 0, %s162
    $region4: #{transformer_forward.25} parent=1 // loop_header_branch
      %17 = sbr.rel (%p15) target = $region8
    $region5: #{transformer_forward.25} parent=1 // loop_body
      %s19 = ssub.s32 %s14, 1
      %s20 = ssub.s32 %s14, 2
      %s27 = sadd.s32 1, %s22
      %p28 = scmp.ge.s32.totalorder %s27, 2
      %s29 = scalar_select %p28, 0, %s27
      %s30 = sadd.s32 1, %s21
      %s31 = scalar_select %p28, %s30, %s21
      %p32 = scmp.ge.s32.totalorder %s31, 2
      %s33 = scalar_select %p32, 0, %s31
      %s34 = ssub.s32 %s21, %s33
      %p35 = scmp.eq.s32.totalorder %s34, 0
      %s37 = sadd.s32 %s36, 1
      %s38 = scalar_select %p35, %s36, %s37
      %p41 = pneg %p35
      %p42 = scmp.eq.s32.totalorder %s14, 3
      %p43 = por %p41, %p42
      %p44 = scmp.ne.s32.totalorder %s36, %s39
      %p45 = scmp.eq.s32.totalorder %s14, 0
      %p46 = por %p44, %p45
      %p47 = scmp.ne.s32.totalorder %s36, %s39
      %p48 = scmp.eq.s32.totalorder %s19, 3
      %p49 = por %p47, %p48
      %p50 = scmp.ne.s32.totalorder %s39, %s40
      %p51 = scmp.eq.s32.totalorder %s19, 0
      %p52 = por %p50, %p51
      %p53 = scmp.ne.s32.totalorder %s39, %s40
      %p54 = scmp.eq.s32.totalorder %s20, 3
      %p55 = por %p53, %p54
      %p57 = scmp.ne.s32.totalorder %s40, %s56
      %p58 = scmp.eq.s32.totalorder %s20, 0
      %p59 = por %p57, %p58
      %s61 = sadd.s32 %s60, 1
      %p64 = scmp.eq.s32.totalorder %s14, 3
      %p65 = scmp.ne.s32.totalorder %s60, %s62
      %p66 = scmp.eq.s32.totalorder %s14, 0
      %p67 = por %p65, %p66
      %p68 = scmp.ne.s32.totalorder %s60, %s62
      %p69 = scmp.eq.s32.totalorder %s19, 3
      %p70 = por %p68, %p69
      %p71 = scmp.ne.s32.totalorder %s62, %s63
      %p72 = scmp.eq.s32.totalorder %s19, 0
      %p73 = por %p71, %p72
      %p74 = scmp.ne.s32.totalorder %s62, %s63
      %p75 = scmp.eq.s32.totalorder %s20, 3
      %p76 = por %p74, %p75
      %p78 = scmp.ne.s32.totalorder %s63, %s77
      %p79 = scmp.eq.s32.totalorder %s20, 0
      %p80 = por %p78, %p79
      %s82 = sadd.s32 %s81, 1
      %p85 = scmp.eq.s32.totalorder %s14, 3
      %p86 = scmp.ne.s32.totalorder %s81, %s83
      %p87 = scmp.eq.s32.totalorder %s14, 0
      %p88 = por %p86, %p87
      %p89 = scmp.ne.s32.totalorder %s81, %s83
      %p90 = scmp.eq.s32.totalorder %s19, 3
      %p91 = por %p89, %p90
      %p92 = scmp.ne.s32.totalorder %s83, %s84
      %p93 = scmp.eq.s32.totalorder %s19, 0
      %p94 = por %p92, %p93
      %p95 = scmp.ne.s32.totalorder %s83, %s84
      %p96 = scmp.eq.s32.totalorder %s20, 3
      %p97 = por %p95, %p96
      %p99 = scmp.ne.s32.totalorder %s84, %s98
      %p100 = scmp.eq.s32.totalorder %s20, 0
      %p101 = por %p99, %p100
      %s102 = ssub.s32 %s22, %s29
      %p103 = scmp.eq.s32.totalorder %s102, 0
      %s105 = sadd.s32 %s104, 1
      %s106 = scalar_select %p103, %s104, %s105
      %p109 = pneg %p103
      %p110 = scmp.eq.s32.totalorder %s14, 3
      %p111 = por %p109, %p110
      %p112 = scmp.ne.s32.totalorder %s104, %s107
      %p113 = scmp.eq.s32.totalorder %s14, 0
      %p114 = por %p112, %p113
      %p115 = scmp.ne.s32.totalorder %s104, %s107
      %p116 = scmp.eq.s32.totalorder %s19, 3
      %p117 = por %p115, %p116
      %p118 = scmp.ne.s32.totalorder %s107, %s108
      %p119 = scmp.eq.s32.totalorder %s19, 0
      %p120 = por %p118, %p119
      %p121 = scmp.ne.s32.totalorder %s107, %s108
      %p122 = scmp.eq.s32.totalorder %s20, 3
      %p123 = por %p121, %p122
      %p125 = scmp.ne.s32.totalorder %s108, %s124
      %p126 = scmp.eq.s32.totalorder %s20, 0
      %p127 = por %p125, %p126
      %s128 = ssub.s32 %s21, %s33
      %p129 = scmp.eq.s32.totalorder %s128, 0
      %s131 = sadd.s32 %s130, 1
      %s132 = scalar_select %p129, %s130, %s131
      %p135 = pneg %p129
      %p136 = scmp.eq.s32.totalorder %s14, 3
      %p137 = por %p135, %p136
      %p138 = scmp.ne.s32.totalorder %s130, %s133
      %p139 = scmp.eq.s32.totalorder %s14, 0
      %p140 = por %p138, %p139
      %p141 = scmp.ne.s32.totalorder %s130, %s133
      %p142 = scmp.eq.s32.totalorder %s19, 3
      %p143 = por %p141, %p142
      %p144 = scmp.ne.s32.totalorder %s133, %s134
      %p145 = scmp.eq.s32.totalorder %s19, 0
      %p146 = por %p144, %p145
      %p147 = scmp.ne.s32.totalorder %s133, %s134
      %p148 = scmp.eq.s32.totalorder %s20, 3
      %p149 = por %p147, %p148
      %p151 = scmp.ne.s32.totalorder %s134, %s150
      %p152 = scmp.eq.s32.totalorder %s20, 0
      %p153 = por %p151, %p152
      %s154 = ssub.s32 %s21, %s33
      %s155 = ssub.s32 %s22, %s29
      %s156 = sor.u32 %s154, %s155
      %p157 = scmp.eq.s32.totalorder %s156, 0
      %s159 = sadd.s32 %s158, 1
      %s160 = scalar_select %p157, %s158, %s159
      %p163 = pneg %p157
      %p164 = scmp.eq.s32.totalorder %s14, 3
      %p165 = por %p163, %p164
      %p166 = scmp.ne.s32.totalorder %s158, %s161
      %p167 = scmp.eq.s32.totalorder %s14, 0
      %p168 = por %p166, %p167
      %p169 = scmp.ne.s32.totalorder %s158, %s161
      %p170 = scmp.eq.s32.totalorder %s19, 3
      %p171 = por %p169, %p170
      %p172 = scmp.ne.s32.totalorder %s161, %s162
      %p173 = scmp.eq.s32.totalorder %s19, 0
      %p174 = por %p172, %p173
      %p175 = scmp.ne.s32.totalorder %s161, %s162
      %p176 = scmp.eq.s32.totalorder %s20, 3
      %p177 = por %p175, %p176
      %p179 = scmp.ne.s32.totalorder %s162, %s178
      %p180 = scmp.eq.s32.totalorder %s20, 0
      %p181 = por %p179, %p180
      %p182 = scmp.le.s32.totalorder 1, %s14
      %p183 = scmp.lt.s32.totalorder %s14, 5
      %p184 = pnand %p182, %p183
      %p185 = pneg %p184
      // Predicated region
      $region9: #{transformer_forward.25} parent=5 // pred_check
        _
      $region10: #{transformer_forward.25} parent=5 // pred_check_branch
        %187 = sbr.rel (%p184) target = $region12
      $region11: #{transformer_forward.25} parent=5 // pred_region
        %s188 = ssub.s32 %s14, 1
        // Predicated region
        $region13: #{transformer_forward.25} parent=11 // pred_check
          %p189 = pneg %p73
        $region14: #{transformer_forward.25} parent=11 // pred_check_branch
          %191 = sbr.rel (%p189) target = $region16
        $region15: #{transformer_forward.25} parent=11 // pred_region
          _
        $region16: #{transformer_forward.25} parent=11 // pred_fallthru
          _
        // Predicated region
        $region17: #{transformer_forward.25} parent=11 // pred_check
          %p192 = pneg %p94
        $region18: #{transformer_forward.25} parent=11 // pred_check_branch
          %194 = sbr.rel (%p192) target = $region20
        $region19: #{transformer_forward.25} parent=11 // pred_region
          _
        $region20: #{transformer_forward.25} parent=11 // pred_fallthru
          _
      $region12: #{transformer_forward.25} parent=5 // pred_fallthru
        _
      %p195 = scmp.lt.s32.totalorder %s14, 4
      // Predicated region
      $region21: #{transformer_forward.25} parent=5 // pred_check
        %p196 = pneg %p195
      $region22: #{transformer_forward.25} parent=5 // pred_check_branch
        %198 = sbr.rel (%p196) target = $region24
      $region23: #{transformer_forward.25} parent=5 // pred_region
        // Predicated region
        $region25: #{transformer_forward.25} parent=23 // pred_check
          %p199 = pneg %p46
        $region26: #{transformer_forward.25} parent=23 // pred_check_branch
          %201 = sbr.rel (%p199) target = $region28
        $region27: #{transformer_forward.25} parent=23 // pred_region
          %s202 = smul.u32 2, %s21
          %p203 = scmp.lt.s32.totalorder %s202, 3
          %s204 = scalar_select %p203, %s202, 3
          %s205 = smul.addr %s204, 4
          %s206 = scalar_lea.vmem %s0, %s205
          %s207 = smul.u32 2, %s21
        $region28: #{transformer_forward.25} parent=23 // pred_fallthru
          _
        // Predicated region
        $region29: #{transformer_forward.25} parent=23 // pred_check
          %p208 = pneg %p114
        $region30: #{transformer_forward.25} parent=23 // pred_check_branch
          %210 = sbr.rel (%p208) target = $region32
        $region31: #{transformer_forward.25} parent=23 // pred_region
          %s211 = smul.u32 16, %s22
          %p212 = scmp.lt.s32.totalorder %s211, 31
          %s213 = scalar_select %p212, %s211, 31
          %s214 = smul.addr %s213, 4
          %s215 = scalar_lea.vmem %s3, %s214
          %s216 = smul.u32 16, %s22
        $region32: #{transformer_forward.25} parent=23 // pred_fallthru
          _
        // Predicated region
        $region33: #{transformer_forward.25} parent=23 // pred_check
          %p217 = pneg %p140
        $region34: #{transformer_forward.25} parent=23 // pred_check_branch
          %219 = sbr.rel (%p217) target = $region36
        $region35: #{transformer_forward.25} parent=23 // pred_region
          %s220 = smul.u32 2, %s21
          %p221 = scmp.lt.s32.totalorder %s220, 3
          %s222 = scalar_select %p221, %s220, 3
          %s223 = smul.addr %s222, 8
          %s224 = scalar_lea.vmem %s4, %s223
          %s225 = smul.u32 2, %s21
        $region36: #{transformer_forward.25} parent=23 // pred_fallthru
          _
      $region24: #{transformer_forward.25} parent=5 // pred_fallthru
        _
      %p226 = scmp.le.s32.totalorder 1, %s14
      %p227 = scmp.lt.s32.totalorder %s14, 5
      %p228 = pnand %p226, %p227
      %p229 = pneg %p228
      // Predicated region
      $region37: #{transformer_forward.25} parent=5 // pred_check
        _
      $region38: #{transformer_forward.25} parent=5 // pred_check_branch
        %231 = sbr.rel (%p228) target = $region40
      $region39: #{transformer_forward.25} parent=5 // pred_region
        %s232 = ssub.s32 %s14, 1
        %s233 = smul.u32 2, %s23
        %p234 = scmp.lt.s32.totalorder %s233, 3
        %s235 = scalar_select %p234, %s233, 3
        %s236 = smul.addr %s235, 4
        %s237 = scalar_lea.vmem %s0, %s236
        %p238 = pneg %p52
        %p239 = pneg %p49
        %p240 = pneg %p73
        %p241 = pneg %p70
        %p242 = pneg %p94
        %p243 = pneg %p91
        %s244 = smul.u32 16, %s24
        %p245 = scmp.lt.s32.totalorder %s244, 31
        %s246 = scalar_select %p245, %s244, 31
        %s247 = smul.addr %s246, 4
        %s248 = scalar_lea.vmem %s3, %s247
        %p249 = pneg %p120
        %p250 = pneg %p117
        %s251 = smul.u32 2, %s23
        %p252 = scmp.lt.s32.totalorder %s251, 3
        %s253 = scalar_select %p252, %s251, 3
        %s254 = smul.addr %s253, 8
        %s255 = scalar_lea.vmem %s4, %s254
        %p256 = pneg %p146
        %p257 = pneg %p143
        %p258 = pneg %p174
        %p259 = pneg %p171
        %s260 = sand.u32 %s161, 1
        %s261 = scalar_lea.sflag [#allocation3], %s260
        %s262 = sand.u32 %s161, 1
        %s263 = smul.addr %s262, 16
        %s264 = scalar_lea.vmem [#allocation2], %s263
        %s265 = smul.u32 2, %s23
        %p266 = scmp.lt.s32.totalorder %s265, 3
        %s267 = scalar_select %p266, %s265, 3
        %s268 = smul.addr %s267, 4
        %s269 = scalar_lea.vmem %s0, %s268
        %s270 = smul.u32 2, %s23
        %s271 = smul.u32 16, %s24
        %p272 = scmp.lt.s32.totalorder %s271, 31
        %s273 = scalar_select %p272, %s271, 31
        %s274 = smul.addr %s273, 4
        %s275 = scalar_lea.vmem %s3, %s274
        %s276 = smul.u32 16, %s24
        %s277 = smul.u32 2, %s23
        %p278 = scmp.lt.s32.totalorder %s277, 3
        %s279 = scalar_select %p278, %s277, 3
        %s280 = smul.addr %s279, 8
        %s281 = scalar_lea.vmem %s4, %s280
        %s282 = smul.u32 2, %s23
        %s283 = smul.u32 2, %s23
        %v285 = vld [vmem:[%s269] sm:$0xf]
        %v286 = vld [vmem:[%s269 + $0x4] sm:$0xf]
        %v287 = vld [vmem:[%s1] sm:$0x1]
        %v288 = vld [vmem:[%s2] sm:$0x1]
        %v289 = vunpack.c.l.bf16 %v285
        %v290 = vunpack.c.l.bf16 %v286
        %291 = vadd.xlane.f32.xlu0 %v289
        %v292 = vpop.xlane.xlu0 %291
        %293 = vadd.xlane.f32.xlu0 %v290
        %v294 = vpop.xlane.xlu0 %293
        %v295 = vrcp.pop 128.0
        %v296 = vmul.f32 %v292, %v295
        %v297 = vmul.f32 %v294, %v295
        %v298 = vsub.f32 %v289, %v296
        %v299 = vsub.f32 %v290, %v297
        %v300 = vmul.f32 %v298, %v298
        %v301 = vmul.f32 %v299, %v299
        %302 = vadd.xlane.f32.xlu0 %v300
        %v303 = vpop.xlane.xlu0 %302
        %304 = vadd.xlane.f32.xlu0 %v301
        %v305 = vpop.xlane.xlu0 %304
        %v306 = vmul.f32 %v303, %v295
        %v307 = vmul.f32 %v305, %v295
        %v308 = vadd.f32 %v306, 1e-06
        %v309 = vadd.f32 %v307, 1e-06
        %v310 = vrsqrt.pop %v308
        %v311 = vrsqrt.pop %v309
        %v312 = vmul.f32 %v298, %v310
        %v313 = vmul.f32 %v299, %v311
        %v315 = vlaneseq
        %v316 = vshrl.u32 %v315, 7
        %v317 = vsub.s32 0, %v316
        %v318 = vrot.slane %v287, %v317
        %v320 = vmul.f32 %v312, %v318
        %v321 = vmul.f32 %v313, %v318
        %v323 = vlaneseq
        %v324 = vshrl.u32 %v323, 7
        %v325 = vsub.s32 0, %v324
        %v326 = vrot.slane %v288, %v325
        %v328 = vadd.f32 %v320, %v326
        %v329 = vadd.f32 %v321, %v326
        %v330 = vpack.c.bf16 %v329, %v328
        %v331 = vld [vmem:[%s275] sm:$0xf]
        %v332 = vld [vmem:[%s275 + $0x4] sm:$0xf]
        %v333 = vld [vmem:[%s275 + $0x8] sm:$0xf]
        %v334 = vld [vmem:[%s275 + $0xc] sm:$0xf]
        %v335 = vld [vmem:[%s275 + $0x10] sm:$0xf]
        %v336 = vld [vmem:[%s275 + $0x14] sm:$0xf]
        %v337 = vld [vmem:[%s275 + $0x18] sm:$0xf]
        %v338 = vld [vmem:[%s275 + $0x1c] sm:$0xf]
        %v339 = vld [vmem:[%s275 + $0x20] sm:$0xf]
        %v340 = vld [vmem:[%s275 + $0x24] sm:$0xf]
        %v341 = vld [vmem:[%s275 + $0x28] sm:$0xf]
        %v342 = vld [vmem:[%s275 + $0x2c] sm:$0xf]
        %v343 = vld [vmem:[%s275 + $0x30] sm:$0xf]
        %v344 = vld [vmem:[%s275 + $0x34] sm:$0xf]
        %v345 = vld [vmem:[%s275 + $0x38] sm:$0xf]
        %v346 = vld [vmem:[%s275 + $0x3c] sm:$0xf]
        %v363 = vunpack.c.l.b16 %v331
        %v364 = vunpack.c.l.b16 %v332
        %v365 = vunpack.c.l.b16 %v333
        %v366 = vunpack.c.l.b16 %v334
        %v367 = vunpack.c.l.b16 %v335
        %v368 = vunpack.c.l.b16 %v336
        %v369 = vunpack.c.l.b16 %v337
        %v370 = vunpack.c.l.b16 %v338
        %v371 = vunpack.c.l.b16 %v339
        %v372 = vunpack.c.l.b16 %v340
        %v373 = vunpack.c.l.b16 %v341
        %v374 = vunpack.c.l.b16 %v342
        %v375 = vunpack.c.l.b16 %v343
        %v376 = vunpack.c.l.b16 %v344
        %v377 = vunpack.c.l.b16 %v345
        %v378 = vunpack.c.l.b16 %v346
        %v379 = vpack.c.b16 %v364, %v363
        %v380 = vpack.c.b16 %v366, %v365
        %v381 = vpack.c.b16 %v368, %v367
        %v382 = vpack.c.b16 %v370, %v369
        %v383 = vpack.c.b16 %v372, %v371
        %v384 = vpack.c.b16 %v374, %v373
        %v385 = vpack.c.b16 %v376, %v375
        %v386 = vpack.c.b16 %v378, %v377
        %395 = vmatprep.subr.bf16.mxu0 0
        %396 = vmatpush1.bf16.xpose.msra.mxu0 %v379
        %397 = vmatprep.subr.bf16.mxu0 0
        %398 = vmatpush1.bf16.xpose.msra.mxu0 %v380
        %399 = vmatprep.subr.bf16.mxu0 0
        %400 = vmatpush1.bf16.xpose.msra.mxu0 %v381
        %401 = vmatprep.subr.bf16.mxu0 0
        %402 = vmatpush1.bf16.xpose.msra.mxu0 %v382
        %403 = vmatprep.subr.bf16.mxu0 0
        %404 = vmatpush1.bf16.xpose.msra.mxu0 %v383
        %405 = vmatprep.subr.bf16.mxu0 0
        %406 = vmatpush1.bf16.xpose.msra.mxu0 %v384
        %407 = vmatprep.subr.bf16.mxu0 0
        %408 = vmatpush1.bf16.xpose.msra.mxu0 %v385
        %409 = vmatprep.subr.bf16.mxu0 0
        %410 = vmatpush1.bf16.xpose.msra.mxu0 %v386
        %411 = vmatprep.subr.bf16.mxu0 0
        %412 = vmatpush1.bf16.xpose.msra.mxu0 0
        %413 = vmatprep.subr.bf16.mxu0 0
        %414 = vmatpush1.bf16.xpose.msra.mxu0 0
        %415 = vmatprep.subr.bf16.mxu0 0
        %416 = vmatpush1.bf16.xpose.msra.mxu0 0
        %417 = vmatprep.subr.bf16.mxu0 0
        %418 = vmatpush1.bf16.xpose.msra.mxu0 0
        %419 = vmatprep.subr.bf16.mxu0 0
        %420 = vmatpush1.bf16.xpose.msra.mxu0 0
        %421 = vmatprep.subr.bf16.mxu0 0
        %422 = vmatpush1.bf16.xpose.msra.mxu0 0
        %423 = vmatprep.subr.bf16.mxu0 0
        %424 = vmatpush1.bf16.xpose.msra.mxu0 0
        %425 = vmatprep.subr.bf16.mxu0 0
        %426 = vmatpush1.bf16.xpose.msra.mxu0 0
        %427 = vmatprep.mubr.bf16.mxu0 0
        %428 = vmatmul.mubr.bf16.gmra.mrb[0].mxu0 %v330
        %v429 = vpop.f32.mrb[0].mxu0
        %v430 = vadd.f32 0.0, %v429
        %v431 = vpop.f32.mrb[0].mxu0
        %v432 = vpop.f32.mrb[0].mxu0
        %v433 = vadd.f32 0.0, %v432
        %v434 = vpop.f32.mrb[0].mxu0
        %435 = vdwg.mxu0
        %v436 = vld [vmem:[%s281] sm:$0xff]
        %v437 = vld [vmem:[%s281 + $0x8] sm:$0xff]
        %439 = vset.pattern.permute.xlu0 0
        %440 = vperm.xlu0 %439, %v436
        %v441 = vpop.permute.xlu0 %440
        %444 = vset.pattern.permute.xlu0 0
        %445 = vperm.xlu0 %444, %v437
        %v446 = vpop.permute.xlu0 %445
        %v448 = vsub.f32 %v430, %v441
        %v449 = vsub.f32 %v433, %v446
        %450 = vst [vmem:[%s264] sm:$0xff] %v448
        %451 = vst [vmem:[%s264 + $0x8] sm:$0xff] %v449
        %s452 = sand.u32 %s161, 1
        %s453 = scalar_lea.sflag [#allocation3], %s452
        %s454 = sand.u32 %s161, 1
        %s455 = smul.addr %s454, 16
        %s456 = scalar_lea.vmem [#allocation2], %s455
        // Predicated region
        $region41: #{transformer_forward.25} parent=39 // pred_check
          %p457 = pneg %p171
        $region42: #{transformer_forward.25} parent=39 // pred_check_branch
          %459 = sbr.rel (%p457) target = $region44
        $region43: #{transformer_forward.25} parent=39 // pred_region
          %s460 = smul.u32 2, %s23
          %s462 = ssub.s32 256, 256
          %463 = vsyncadd %s453, %s462
          %s464 = smul.addr %s460, 2
          %s465 = sadd.s32 %s24, %s464
          %s466 = smul.addr %s465, 128
          %s467 = scalar_lea.hbm %s5, %s466
          %s468 = sshll.u32 %s456, 4
          %s469 = int_to_ptr.vmem [resolvable:$true] %s468
          %474 = dma.vmem_to_hbm [thread:$0]  %s469, 256, %s467, %s453, 128, 256, 8
        $region44: #{transformer_forward.25} parent=39 // pred_fallthru
          _
      $region40: #{transformer_forward.25} parent=5 // pred_fallthru
        _
      %p475 = scmp.le.s32.totalorder 2, %s14
      // Predicated region
      $region45: #{transformer_forward.25} parent=5 // pred_check
        %p476 = pneg %p475
      $region46: #{transformer_forward.25} parent=5 // pred_check_branch
        %478 = sbr.rel (%p476) target = $region48
      $region47: #{transformer_forward.25} parent=5 // pred_region
        %s479 = ssub.s32 %s14, 2
        // Predicated region
        $region49: #{transformer_forward.25} parent=47 // pred_check
          %p480 = pneg %p177
        $region50: #{transformer_forward.25} parent=47 // pred_check_branch
          %482 = sbr.rel (%p480) target = $region52
        $region51: #{transformer_forward.25} parent=47 // pred_region
          %s483 = sand.u32 %s162, 1
          %s484 = scalar_lea.sflag [#allocation3], %s483
          %s485 = sand.u32 %s162, 1
          %s486 = smul.addr %s485, 16
          %s487 = scalar_lea.vmem [#allocation2], %s486
          %488 = dma.done %s484, 256
        $region52: #{transformer_forward.25} parent=47 // pred_fallthru
          _
      $region48: #{transformer_forward.25} parent=5 // pred_fallthru
        _
    $region6: #{transformer_forward.25} parent=1 // loop_footer
      %s18 = sadd.s32 1, %s14
    $region7: #{transformer_forward.25} parent=1 // loop_footer_branch
      %13 = sbr.rel target = $region3
    $region8: #{transformer_forward.25} parent=1 // loop_exit
      _
    %489 = vsyncpa [#allocation3], 1
    %s490 = scalar_lea.sflag [#allocation3], 1
    %491 = vsyncpa %s490, 1

// kernel: transformer_forward.24
$region0: #{transformer_forward.24}
  #allocation0 [shape = 'u32[]', space=smem, size = 0x4, offset = 0x4, fixed_abs, tag = 'smem constant byte address 0x4 - core index']
  #allocation1 [shape = 'u32[144,128]{1,0:T(1,128)}', space=vmem, size = 0x12000, scoped, tag = 'internal scratch']
  #allocation2 [shape = 'bf16[16,128]{1,0:T(16,128)(2,1)}', space=vmem, size = 0x1000, scoped, tag = 'scratch operand']
  #allocation3 [shape = 'f32[16,1]{1,0:T(8,128)}', space=vmem, size = 0x2000, scoped, tag = 'scratch operand']
  #allocation4 [shape = 'f32[16,1]{1,0:T(8,128)}', space=vmem, size = 0x2000, scoped, tag = 'scratch operand']
  %s0 = inlined_call_operand.vmem [shape: bf16[32,128], index: 0, kind: input, shape index: {}]
  %s1 = inlined_call_operand.vmem [shape: f32[1,128], index: 1, kind: input, shape index: {}]
  %s2 = inlined_call_operand.vmem [shape: f32[1,128], index: 2, kind: input, shape index: {}]
  %s3 = inlined_call_operand.vmem [shape: bf16[256,128], index: 3, kind: input, shape index: {}]
  %s4 = inlined_call_operand.vmem [shape: f32[32,1], index: 4, kind: output, shape index: {}]
  %s5 = sld [smem:[#allocation0]]
  $region57: #{transformer_forward.24} parent=0
    _
  %s7 = ssub.s32 1, %s5
  %s8 = scalar_select 0, %s7, %s5
  loop: start=0, step=1, limit=6
  $region2: #{transformer_forward.24} parent=0 // loop_pre_header
    _
  $region3: #{transformer_forward.24} parent=0 // loop_header
    %s10 = sphi 0, %s14
    %p11 = scmp.ge.s32.totalorder %s10, 6
    %s17 = sphi 0, %s29
    %s18 = sphi 0, %s25
    %s19 = sphi 0, %s17
    %s20 = sphi 0, %s18
    %s21 = sphi 0, %s19
    %s22 = sphi 0, %s20
    %s32 = sphi 0, %s34
    %s35 = sphi 0, %s32
    %s36 = sphi 0, %s35
    %s52 = sphi 0, %s36
    %s56 = sphi 0, %s56
    %s58 = sphi 0, %s56
    %s59 = sphi 0, %s58
    %s73 = sphi 0, %s59
    %s77 = sphi 0, %s77
    %s79 = sphi 0, %s77
    %s80 = sphi 0, %s79
    %s94 = sphi 0, %s80
    %s100 = sphi 0, %s102
    %s103 = sphi 0, %s100
    %s104 = sphi 0, %s103
    %s120 = sphi 0, %s104
    %s126 = sphi 0, %s128
    %s129 = sphi 0, %s126
    %s130 = sphi 0, %s129
    %s146 = sphi 0, %s130
  $region4: #{transformer_forward.24} parent=0 // loop_header_branch
    %13 = sbr.rel (%p11) target = $region8
  $region5: #{transformer_forward.24} parent=0 // loop_body
    %s15 = ssub.s32 %s10, 1
    %s16 = ssub.s32 %s10, 2
    %s23 = sadd.s32 1, %s18
    %p24 = scmp.ge.s32.totalorder %s23, 2
    %s25 = scalar_select %p24, 0, %s23
    %s26 = sadd.s32 1, %s17
    %s27 = scalar_select %p24, %s26, %s17
    %p28 = scmp.ge.s32.totalorder %s27, 2
    %s29 = scalar_select %p28, 0, %s27
    %s30 = ssub.s32 %s17, %s29
    %p31 = scmp.eq.s32.totalorder %s30, 0
    %s33 = sadd.s32 %s32, 1
    %s34 = scalar_select %p31, %s32, %s33
    %p37 = pneg %p31
    %p38 = scmp.eq.s32.totalorder %s10, 3
    %p39 = por %p37, %p38
    %p40 = scmp.ne.s32.totalorder %s32, %s35
    %p41 = scmp.eq.s32.totalorder %s10, 0
    %p42 = por %p40, %p41
    %p43 = scmp.ne.s32.totalorder %s32, %s35
    %p44 = scmp.eq.s32.totalorder %s15, 3
    %p45 = por %p43, %p44
    %p46 = scmp.ne.s32.totalorder %s35, %s36
    %p47 = scmp.eq.s32.totalorder %s15, 0
    %p48 = por %p46, %p47
    %p49 = scmp.ne.s32.totalorder %s35, %s36
    %p50 = scmp.eq.s32.totalorder %s16, 3
    %p51 = por %p49, %p50
    %p53 = scmp.ne.s32.totalorder %s36, %s52
    %p54 = scmp.eq.s32.totalorder %s16, 0
    %p55 = por %p53, %p54
    %s57 = sadd.s32 %s56, 1
    %p60 = scmp.eq.s32.totalorder %s10, 3
    %p61 = scmp.ne.s32.totalorder %s56, %s58
    %p62 = scmp.eq.s32.totalorder %s10, 0
    %p63 = por %p61, %p62
    %p64 = scmp.ne.s32.totalorder %s56, %s58
    %p65 = scmp.eq.s32.totalorder %s15, 3
    %p66 = por %p64, %p65
    %p67 = scmp.ne.s32.totalorder %s58, %s59
    %p68 = scmp.eq.s32.totalorder %s15, 0
    %p69 = por %p67, %p68
    %p70 = scmp.ne.s32.totalorder %s58, %s59
    %p71 = scmp.eq.s32.totalorder %s16, 3
    %p72 = por %p70, %p71
    %p74 = scmp.ne.s32.totalorder %s59, %s73
    %p75 = scmp.eq.s32.totalorder %s16, 0
    %p76 = por %p74, %p75
    %s78 = sadd.s32 %s77, 1
    %p81 = scmp.eq.s32.totalorder %s10, 3
    %p82 = scmp.ne.s32.totalorder %s77, %s79
    %p83 = scmp.eq.s32.totalorder %s10, 0
    %p84 = por %p82, %p83
    %p85 = scmp.ne.s32.totalorder %s77, %s79
    %p86 = scmp.eq.s32.totalorder %s15, 3
    %p87 = por %p85, %p86
    %p88 = scmp.ne.s32.totalorder %s79, %s80
    %p89 = scmp.eq.s32.totalorder %s15, 0
    %p90 = por %p88, %p89
    %p91 = scmp.ne.s32.totalorder %s79, %s80
    %p92 = scmp.eq.s32.totalorder %s16, 3
    %p93 = por %p91, %p92
    %p95 = scmp.ne.s32.totalorder %s80, %s94
    %p96 = scmp.eq.s32.totalorder %s16, 0
    %p97 = por %p95, %p96
    %s98 = ssub.s32 %s18, %s25
    %p99 = scmp.eq.s32.totalorder %s98, 0
    %s101 = sadd.s32 %s100, 1
    %s102 = scalar_select %p99, %s100, %s101
    %p105 = pneg %p99
    %p106 = scmp.eq.s32.totalorder %s10, 3
    %p107 = por %p105, %p106
    %p108 = scmp.ne.s32.totalorder %s100, %s103
    %p109 = scmp.eq.s32.totalorder %s10, 0
    %p110 = por %p108, %p109
    %p111 = scmp.ne.s32.totalorder %s100, %s103
    %p112 = scmp.eq.s32.totalorder %s15, 3
    %p113 = por %p111, %p112
    %p114 = scmp.ne.s32.totalorder %s103, %s104
    %p115 = scmp.eq.s32.totalorder %s15, 0
    %p116 = por %p114, %p115
    %p117 = scmp.ne.s32.totalorder %s103, %s104
    %p118 = scmp.eq.s32.totalorder %s16, 3
    %p119 = por %p117, %p118
    %p121 = scmp.ne.s32.totalorder %s104, %s120
    %p122 = scmp.eq.s32.totalorder %s16, 0
    %p123 = por %p121, %p122
    %s124 = ssub.s32 %s17, %s29
    %p125 = scmp.eq.s32.totalorder %s124, 0
    %s127 = sadd.s32 %s126, 1
    %s128 = scalar_select %p125, %s126, %s127
    %p131 = pneg %p125
    %p132 = scmp.eq.s32.totalorder %s10, 3
    %p133 = por %p131, %p132
    %p134 = scmp.ne.s32.totalorder %s126, %s129
    %p135 = scmp.eq.s32.totalorder %s10, 0
    %p136 = por %p134, %p135
    %p137 = scmp.ne.s32.totalorder %s126, %s129
    %p138 = scmp.eq.s32.totalorder %s15, 3
    %p139 = por %p137, %p138
    %p140 = scmp.ne.s32.totalorder %s129, %s130
    %p141 = scmp.eq.s32.totalorder %s15, 0
    %p142 = por %p140, %p141
    %p143 = scmp.ne.s32.totalorder %s129, %s130
    %p144 = scmp.eq.s32.totalorder %s16, 3
    %p145 = por %p143, %p144
    %p147 = scmp.ne.s32.totalorder %s130, %s146
    %p148 = scmp.eq.s32.totalorder %s16, 0
    %p149 = por %p147, %p148
    %p150 = scmp.le.s32.totalorder 1, %s10
    %p151 = scmp.lt.s32.totalorder %s10, 5
    %p152 = pnand %p150, %p151
    %p153 = pneg %p152
    // Predicated region
    $region9: #{transformer_forward.24} parent=5 // pred_check
      _
    $region10: #{transformer_forward.24} parent=5 // pred_check_branch
      %155 = sbr.rel (%p152) target = $region12
    $region11: #{transformer_forward.24} parent=5 // pred_region
      %s156 = ssub.s32 %s10, 1
      // Predicated region
      $region13: #{transformer_forward.24} parent=11 // pred_check
        %p157 = pneg %p69
      $region14: #{transformer_forward.24} parent=11 // pred_check_branch
        %159 = sbr.rel (%p157) target = $region16
      $region15: #{transformer_forward.24} parent=11 // pred_region
        _
      $region16: #{transformer_forward.24} parent=11 // pred_fallthru
        _
      // Predicated region
      $region17: #{transformer_forward.24} parent=11 // pred_check
        %p160 = pneg %p90
      $region18: #{transformer_forward.24} parent=11 // pred_check_branch
        %162 = sbr.rel (%p160) target = $region20
      $region19: #{transformer_forward.24} parent=11 // pred_region
        _
      $region20: #{transformer_forward.24} parent=11 // pred_fallthru
        _
    $region12: #{transformer_forward.24} parent=5 // pred_fallthru
      _
    %p163 = scmp.lt.s32.totalorder %s10, 4
    // Predicated region
    $region21: #{transformer_forward.24} parent=5 // pred_check
      %p164 = pneg %p163
    $region22: #{transformer_forward.24} parent=5 // pred_check_branch
      %166 = sbr.rel (%p164) target = $region24
    $region23: #{transformer_forward.24} parent=5 // pred_region
      // Predicated region
      $region25: #{transformer_forward.24} parent=23 // pred_check
        %p167 = pneg %p42
      $region26: #{transformer_forward.24} parent=23 // pred_check_branch
        %169 = sbr.rel (%p167) target = $region28
      $region27: #{transformer_forward.24} parent=23 // pred_region
        %s170 = smul.u32 2, %s17
        %p171 = scmp.lt.s32.totalorder %s170, 3
        %s172 = scalar_select %p171, %s170, 3
        %s173 = smul.addr %s172, 4
        %s174 = scalar_lea.vmem %s0, %s173
        %s175 = smul.u32 2, %s17
      $region28: #{transformer_forward.24} parent=23 // pred_fallthru
        _
      // Predicated region
      $region29: #{transformer_forward.24} parent=23 // pred_check
        %p176 = pneg %p110
      $region30: #{transformer_forward.24} parent=23 // pred_check_branch
        %178 = sbr.rel (%p176) target = $region32
      $region31: #{transformer_forward.24} parent=23 // pred_region
        %s179 = smul.u32 16, %s18
        %p180 = scmp.lt.s32.totalorder %s179, 31
        %s181 = scalar_select %p180, %s179, 31
        %s182 = smul.addr %s181, 4
        %s183 = scalar_lea.vmem %s3, %s182
        %s184 = smul.u32 16, %s18
      $region32: #{transformer_forward.24} parent=23 // pred_fallthru
        _
    $region24: #{transformer_forward.24} parent=5 // pred_fallthru
      _
    %p185 = scmp.le.s32.totalorder 1, %s10
    %p186 = scmp.lt.s32.totalorder %s10, 5
    %p187 = pnand %p185, %p186
    %p188 = pneg %p187
    // Predicated region
    $region33: #{transformer_forward.24} parent=5 // pred_check
      _
    $region34: #{transformer_forward.24} parent=5 // pred_check_branch
      %190 = sbr.rel (%p187) target = $region36
    $region35: #{transformer_forward.24} parent=5 // pred_region
      %s191 = ssub.s32 %s10, 1
      %s192 = smul.u32 2, %s19
      %p193 = scmp.lt.s32.totalorder %s192, 3
      %s194 = scalar_select %p193, %s192, 3
      %s195 = smul.addr %s194, 4
      %s196 = scalar_lea.vmem %s0, %s195
      %p197 = pneg %p48
      %p198 = pneg %p45
      %p199 = pneg %p69
      %p200 = pneg %p66
      %p201 = pneg %p90
      %p202 = pneg %p87
      %s203 = smul.u32 16, %s20
      %p204 = scmp.lt.s32.totalorder %s203, 31
      %s205 = scalar_select %p204, %s203, 31
      %s206 = smul.addr %s205, 4
      %s207 = scalar_lea.vmem %s3, %s206
      %p208 = pneg %p116
      %p209 = pneg %p113
      %p210 = pneg %p142
      %p211 = pneg %p139
      %s212 = smul.u32 2, %s19
      %p213 = scmp.lt.s32.totalorder %s212, 3
      %s214 = scalar_select %p213, %s212, 3
      %s215 = smul.addr %s214, 8
      %s216 = scalar_lea.vmem %s4, %s215
      %s217 = smul.u32 2, %s19
      %p218 = scmp.lt.s32.totalorder %s217, 3
      %s219 = scalar_select %p218, %s217, 3
      %s220 = smul.addr %s219, 4
      %s221 = scalar_lea.vmem %s0, %s220
      %s222 = smul.u32 2, %s19
      %s223 = smul.u32 16, %s20
      %p224 = scmp.lt.s32.totalorder %s223, 31
      %s225 = scalar_select %p224, %s223, 31
      %s226 = smul.addr %s225, 4
      %s227 = scalar_lea.vmem %s3, %s226
      %s228 = smul.u32 16, %s20
      %s229 = smul.u32 2, %s19
      %p230 = scmp.lt.s32.totalorder %s229, 3
      %s231 = scalar_select %p230, %s229, 3
      %s232 = smul.addr %s231, 8
      %s233 = scalar_lea.vmem %s4, %s232
      %s234 = smul.u32 2, %s19
      %p236 = scmp.eq.s32.totalorder %s20, 0
      // Predicated region
      $region37: #{transformer_forward.24} parent=35 // pred_check
        %p237 = pneg %p236
      $region38: #{transformer_forward.24} parent=35 // pred_check_branch
        %239 = sbr.rel (%p237) target = $region40
      $region39: #{transformer_forward.24} parent=35 // pred_region
        %v240 = vld [vmem:[%s221] sm:$0xf]
        %v241 = vld [vmem:[%s221 + $0x4] sm:$0xf]
        %v242 = vld [vmem:[%s1] sm:$0x1]
        %v243 = vld [vmem:[%s2] sm:$0x1]
        %v244 = vunpack.c.l.bf16 %v240
        %v245 = vunpack.c.l.bf16 %v241
        %246 = vadd.xlane.f32.xlu0 %v244
        %v247 = vpop.xlane.xlu0 %246
        %248 = vadd.xlane.f32.xlu0 %v245
        %v249 = vpop.xlane.xlu0 %248
        %v250 = vrcp.pop 128.0
        %v251 = vmul.f32 %v247, %v250
        %v252 = vmul.f32 %v249, %v250
        %v253 = vsub.f32 %v244, %v251
        %v254 = vsub.f32 %v245, %v252
        %v255 = vmul.f32 %v253, %v253
        %v256 = vmul.f32 %v254, %v254
        %257 = vadd.xlane.f32.xlu0 %v255
        %v258 = vpop.xlane.xlu0 %257
        %259 = vadd.xlane.f32.xlu0 %v256
        %v260 = vpop.xlane.xlu0 %259
        %v261 = vmul.f32 %v258, %v250
        %v262 = vmul.f32 %v260, %v250
        %v263 = vadd.f32 %v261, 1e-06
        %v264 = vadd.f32 %v262, 1e-06
        %v265 = vrsqrt.pop %v263
        %v266 = vrsqrt.pop %v264
        %v267 = vmul.f32 %v253, %v265
        %v268 = vmul.f32 %v254, %v266
        %v270 = vlaneseq
        %v271 = vshrl.u32 %v270, 7
        %v272 = vsub.s32 0, %v271
        %v273 = vrot.slane %v242, %v272
        %v275 = vmul.f32 %v267, %v273
        %v276 = vmul.f32 %v268, %v273
        %v278 = vlaneseq
        %v279 = vshrl.u32 %v278, 7
        %v280 = vsub.s32 0, %v279
        %v281 = vrot.slane %v243, %v280
        %v283 = vadd.f32 %v275, %v281
        %v284 = vadd.f32 %v276, %v281
        %v285 = vpack.c.bf16 %v284, %v283
        %286 = vst [vmem:[#allocation2] sm:$0xff] %v285
        %vm287 = vcmask 7168
        %288 = vst.msk [vmem:[#allocation3] sm:$0xff] %vm287, -inf
        %289 = vst.msk [vmem:[#allocation3 + $0x8] sm:$0xff] %vm287, -inf
        %290 = vst.msk [vmem:[#allocation4] sm:$0xff] %vm287, 0.0
        %291 = vst.msk [vmem:[#allocation4 + $0x8] sm:$0xff] %vm287, 0.0
      $region40: #{transformer_forward.24} parent=35 // pred_fallthru
        _
      %v292 = vld [vmem:[#allocation2] sm:$0xff]
      %v293 = vld [vmem:[%s227] sm:$0xf]
      %v294 = vld [vmem:[%s227 + $0x4] sm:$0xf]
      %v295 = vld [vmem:[%s227 + $0x8] sm:$0xf]
      %v296 = vld [vmem:[%s227 + $0xc] sm:$0xf]
      %v297 = vld [vmem:[%s227 + $0x10] sm:$0xf]
      %v298 = vld [vmem:[%s227 + $0x14] sm:$0xf]
      %v299 = vld [vmem:[%s227 + $0x18] sm:$0xf]
      %v300 = vld [vmem:[%s227 + $0x1c] sm:$0xf]
      %v301 = vld [vmem:[%s227 + $0x20] sm:$0xf]
      %v302 = vld [vmem:[%s227 + $0x24] sm:$0xf]
      %v303 = vld [vmem:[%s227 + $0x28] sm:$0xf]
      %v304 = vld [vmem:[%s227 + $0x2c] sm:$0xf]
      %v305 = vld [vmem:[%s227 + $0x30] sm:$0xf]
      %v306 = vld [vmem:[%s227 + $0x34] sm:$0xf]
      %v307 = vld [vmem:[%s227 + $0x38] sm:$0xf]
      %v308 = vld [vmem:[%s227 + $0x3c] sm:$0xf]
      %v325 = vunpack.c.l.b16 %v293
      %v326 = vunpack.c.l.b16 %v294
      %v327 = vunpack.c.l.b16 %v295
      %v328 = vunpack.c.l.b16 %v296
      %v329 = vunpack.c.l.b16 %v297
      %v330 = vunpack.c.l.b16 %v298
      %v331 = vunpack.c.l.b16 %v299
      %v332 = vunpack.c.l.b16 %v300
      %v333 = vunpack.c.l.b16 %v301
      %v334 = vunpack.c.l.b16 %v302
      %v335 = vunpack.c.l.b16 %v303
      %v336 = vunpack.c.l.b16 %v304
      %v337 = vunpack.c.l.b16 %v305
      %v338 = vunpack.c.l.b16 %v306
      %v339 = vunpack.c.l.b16 %v307
      %v340 = vunpack.c.l.b16 %v308
      %v341 = vpack.c.b16 %v326, %v325
      %v342 = vpack.c.b16 %v328, %v327
      %v343 = vpack.c.b16 %v330, %v329
      %v344 = vpack.c.b16 %v332, %v331
      %v345 = vpack.c.b16 %v334, %v333
      %v346 = vpack.c.b16 %v336, %v335
      %v347 = vpack.c.b16 %v338, %v337
      %v348 = vpack.c.b16 %v340, %v339
      %357 = vmatprep.subr.bf16.mxu0 0
      %358 = vmatpush1.bf16.xpose.msra.mxu0 %v341
      %359 = vmatprep.subr.bf16.mxu0 0
      %360 = vmatpush1.bf16.xpose.msra.mxu0 %v342
      %361 = vmatprep.subr.bf16.mxu0 0
      %362 = vmatpush1.bf16.xpose.msra.mxu0 %v343
      %363 = vmatprep.subr.bf16.mxu0 0
      %364 = vmatpush1.bf16.xpose.msra.mxu0 %v344
      %365 = vmatprep.subr.bf16.mxu0 0
      %366 = vmatpush1.bf16.xpose.msra.mxu0 %v345
      %367 = vmatprep.subr.bf16.mxu0 0
      %368 = vmatpush1.bf16.xpose.msra.mxu0 %v346
      %369 = vmatprep.subr.bf16.mxu0 0
      %370 = vmatpush1.bf16.xpose.msra.mxu0 %v347
      %371 = vmatprep.subr.bf16.mxu0 0
      %372 = vmatpush1.bf16.xpose.msra.mxu0 %v348
      %373 = vmatprep.subr.bf16.mxu0 0
      %374 = vmatpush1.bf16.xpose.msra.mxu0 0
      %375 = vmatprep.subr.bf16.mxu0 0
      %376 = vmatpush1.bf16.xpose.msra.mxu0 0
      %377 = vmatprep.subr.bf16.mxu0 0
      %378 = vmatpush1.bf16.xpose.msra.mxu0 0
      %379 = vmatprep.subr.bf16.mxu0 0
      %380 = vmatpush1.bf16.xpose.msra.mxu0 0
      %381 = vmatprep.subr.bf16.mxu0 0
      %382 = vmatpush1.bf16.xpose.msra.mxu0 0
      %383 = vmatprep.subr.bf16.mxu0 0
      %384 = vmatpush1.bf16.xpose.msra.mxu0 0
      %385 = vmatprep.subr.bf16.mxu0 0
      %386 = vmatpush1.bf16.xpose.msra.mxu0 0
      %387 = vmatprep.subr.bf16.mxu0 0
      %388 = vmatpush1.bf16.xpose.msra.mxu0 0
      %389 = vmatprep.mubr.bf16.mxu0 0
      %390 = vmatmul.mubr.bf16.gmra.mrb[0].mxu0 %v292
      %v391 = vpop.f32.mrb[0].mxu0
      %v392 = vadd.f32 0.0, %v391
      %v393 = vpop.f32.mrb[0].mxu0
      %v394 = vpop.f32.mrb[0].mxu0
      %v395 = vadd.f32 0.0, %v394
      %v396 = vpop.f32.mrb[0].mxu0
      %397 = vdwg.mxu0
      %v398 = vld [vmem:[#allocation3] sm:$0xff]
      %v399 = vld [vmem:[#allocation3 + $0x8] sm:$0xff]
      %400 = vmax.xlane.f32.xlu0 %v392
      %v401 = vpop.xlane.xlu0 %400
      %402 = vmax.xlane.f32.xlu0 %v395
      %v403 = vpop.xlane.xlu0 %402
      %v404 = vmax.f32 %v398, %v401
      %v405 = vmax.f32 %v399, %v403
      %v406 = vld [vmem:[#allocation4] sm:$0xff]
      %v407 = vld [vmem:[#allocation4 + $0x8] sm:$0xff]
      %v408 = vsub.f32 %v398, %v404
      %v409 = vsub.f32 %v399, %v405
      %v410 = vmul.f32 %v408, 1.442695
      %v411 = vpow.pop %v410
      %v412 = vmul.f32 %v409, 1.442695
      %v413 = vpow.pop %v412
      %v414 = vmul.f32 %v406, %v411
      %v415 = vmul.f32 %v407, %v413
      %417 = vset.pattern.permute.xlu0 0
      %418 = vperm.xlu0 %417, %v404
      %v419 = vpop.permute.xlu0 %418
      %422 = vset.pattern.permute.xlu0 0
      %423 = vperm.xlu0 %422, %v405
      %v424 = vpop.permute.xlu0 %423
      %v426 = vsub.f32 %v392, %v419
      %v427 = vsub.f32 %v395, %v424
      %v428 = vmul.f32 %v426, 1.442695
      %v429 = vpow.pop %v428
      %v430 = vmul.f32 %v427, 1.442695
      %v431 = vpow.pop %v430
      %432 = vadd.xlane.f32.xlu0 %v429
      %v433 = vpop.xlane.xlu0 %432
      %434 = vadd.xlane.f32.xlu0 %v431
      %v435 = vpop.xlane.xlu0 %434
      %v436 = vadd.f32 %v414, %v433
      %v437 = vadd.f32 %v415, %v435
      %vm438 = vcmask 7168
      %439 = vst.msk [vmem:[#allocation4] sm:$0xff] %vm438, %v436
      %440 = vst.msk [vmem:[#allocation4 + $0x8] sm:$0xff] %vm438, %v437
      %441 = vst.msk [vmem:[#allocation3] sm:$0xff] %vm438, %v404
      %442 = vst.msk [vmem:[#allocation3 + $0x8] sm:$0xff] %vm438, %v405
      %p443 = scmp.eq.s32.totalorder %s20, 1
      // Predicated region
      $region41: #{transformer_forward.24} parent=35 // pred_check
        %p444 = pneg %p443
      $region42: #{transformer_forward.24} parent=35 // pred_check_branch
        %446 = sbr.rel (%p444) target = $region44
      $region43: #{transformer_forward.24} parent=35 // pred_region
        %v447 = vld [vmem:[#allocation3] sm:$0xff]
        %v448 = vld [vmem:[#allocation3 + $0x8] sm:$0xff]
        %v449 = vld [vmem:[#allocation4] sm:$0xff]
        %v450 = vld [vmem:[#allocation4 + $0x8] sm:$0xff]
        %v451 = vlog2.pop %v449
        %v452 = vmul.f32 %v451, 0.6931472
        %v453 = vlog2.pop %v450
        %v454 = vmul.f32 %v453, 0.6931472
        %v455 = vadd.f32 %v447, %v452
        %v456 = vadd.f32 %v448, %v454
        %457 = vst.msk [vmem:[%s233] sm:$0xff] %vm438, %v455
        %458 = vst.msk [vmem:[%s233 + $0x8] sm:$0xff] %vm438, %v456
      $region44: #{transformer_forward.24} parent=35 // pred_fallthru
        _
      %s459 = smul.u32 2, %s19
      %p460 = scmp.lt.s32.totalorder %s459, 3
      %s461 = scalar_select %p460, %s459, 3
      %s462 = smul.addr %s461, 8
      %s463 = scalar_lea.vmem %s4, %s462
      // Predicated region
      $region45: #{transformer_forward.24} parent=35 // pred_check
        %p464 = pneg %p139
      $region46: #{transformer_forward.24} parent=35 // pred_check_branch
        %466 = sbr.rel (%p464) target = $region48
      $region47: #{transformer_forward.24} parent=35 // pred_region
        %s467 = smul.u32 2, %s19
      $region48: #{transformer_forward.24} parent=35 // pred_fallthru
        _
    $region36: #{transformer_forward.24} parent=5 // pred_fallthru
      _
    %p468 = scmp.le.s32.totalorder 2, %s10
    // Predicated region
    $region49: #{transformer_forward.24} parent=5 // pred_check
      %p469 = pneg %p468
    $region50: #{transformer_forward.24} parent=5 // pred_check_branch
      %471 = sbr.rel (%p469) target = $region52
    $region51: #{transformer_forward.24} parent=5 // pred_region
      %s472 = ssub.s32 %s10, 2
      // Predicated region
      $region53: #{transformer_forward.24} parent=51 // pred_check
        %p473 = pneg %p145
      $region54: #{transformer_forward.24} parent=51 // pred_check_branch
        %475 = sbr.rel (%p473) target = $region56
      $region55: #{transformer_forward.24} parent=51 // pred_region
        %s476 = smul.u32 2, %s21
        %p477 = scmp.lt.s32.totalorder %s476, 3
        %s478 = scalar_select %p477, %s476, 3
        %s479 = smul.addr %s478, 8
        %s480 = scalar_lea.vmem %s4, %s479
      $region56: #{transformer_forward.24} parent=51 // pred_fallthru
        _
    $region52: #{transformer_forward.24} parent=5 // pred_fallthru
      _
  $region6: #{transformer_forward.24} parent=0 // loop_footer
    %s14 = sadd.s32 1, %s10
  $region7: #{transformer_forward.24} parent=0 // loop_footer_branch
    %9 = sbr.rel target = $region3
  $region8: #{transformer_forward.24} parent=0 // loop_exit
    _

</llo_original>
